<compile_context>
chip_gen: v6e
topology: v6e:2x2x1
jax: 0.10.0
libtpu: 0.0.40
codegen_flags: <defaults>
</compile_context>

<pallas_src>
import jax
import jax.numpy as jnp
from jax import lax
from jax.experimental import pallas as pl
from jax.experimental.pallas import tpu as pltpu

K = 4        # ConvTranspose2d kernel_size
STRIDE = 2
PAD = 1


# ----------------------------------------------------------------------------
# fused decoder kernel (one batch element per grid step)
# ----------------------------------------------------------------------------
def _decoder_kernel(x_ref,
                    B1_ref, S1_ref, b1_ref,
                    B2_ref, S2_ref, b2_ref,
                    B3_ref, S3_ref, b3_ref,
                    o_ref):

    def deconv(a, B_ref, S_ref, b_ref, act):
        # a: (H, W*Cin) activation of one batch element (lane dim = W*Cin).
        h2 = S_ref.shape[1]                    # = 2*H
        wc_out = B_ref.shape[1] // K           # = 2*W*Cout
        # stage 1: width+channel transform; all 4 kernel rows stacked into one
        # lane-dense RHS -> single (H, W*Cin) x (W*Cin, 4*2W*Cout) MXU matmul.
        r = jnp.dot(a, B_ref[...], preferred_element_type=jnp.float32)
        # stage 2: 0/1 row-scatter matmuls place/accumulate the kernel-row
        # contributions into the 2H output rows (exact; interleave is implicit).
        # Bias folded into the accumulator init (broadcast of tiled bias row).
        acc = jnp.broadcast_to(b_ref[...], (h2, wc_out)).astype(jnp.float32)
        for ky in range(K):                    # static, fully unrolled
            acc = acc + jnp.dot(S_ref[ky],
                                r[:, ky * wc_out:(ky + 1) * wc_out],
                                preferred_element_type=jnp.float32)
        if act == "relu":
            return jnp.maximum(acc, 0.0)
        return 1.0 / (1.0 + jnp.exp(-acc))     # sigmoid: exp + recip -> EUP

    a = x_ref[...]                                             # (H0,  W0*64)
    a = deconv(a, B1_ref, S1_ref, b1_ref, "relu")              # (2H0, 2W0*32)
    a = deconv(a, B2_ref, S2_ref, b2_ref, "relu")              # (4H0, 4W0*16)
    o_ref[...] = deconv(a, B3_ref, S3_ref, b3_ref, "sigmoid")  # (8H0, 8W0*1)


# ----------------------------------------------------------------------------
# one-time weight packing (hoisted out of the forward path)
# ----------------------------------------------------------------------------
def _band_matrix(w_t, w_in):
    """PyTorch ConvT weight (Cin,Cout,K,K) -> banded width/channel transform,
    all K kernel rows stacked along columns: (W*Cin, K*2W*Cout)."""
    cin, cout = w_t.shape[0], w_t.shape[1]
    w_out = STRIDE * w_in
    ix = jnp.arange(w_in)[:, None]
    ox = jnp.arange(w_out)[None, :]
    kx = ox - STRIDE * ix + PAD                            # (W, 2W)
    valid = ((kx >= 0) & (kx < K)).astype(w_t.dtype)
    kxc = jnp.clip(kx, 0, K - 1)
    blocks = []
    for ky in range(K):
        wk = w_t[:, :, ky, :]                              # (Cin, Cout, K)
        band = wk[:, :, kxc] * valid[None, None]           # (Cin, Cout, W, 2W)
        band = jnp.transpose(band, (2, 0, 3, 1))           # (W, Cin, 2W, Cout)
        blocks.append(band.reshape(w_in * cin, w_out * cout))
    return jnp.concatenate(blocks, axis=1)                 # (W*Cin, K*2W*Cout)


def _row_scatter(h_in):
    """0/1 matrices S[ky, oy, iy] = 1 iff oy = 2*iy - 1 + ky."""
    h_out = STRIDE * h_in
    oy = jnp.arange(h_out)[:, None]
    iy = jnp.arange(h_in)[None, :]
    return jnp.stack(
        [(oy == STRIDE * iy - PAD + ky).astype(jnp.float32) for ky in range(K)],
        axis=0)                                            # (K, 2H, H)


def pack_params(params, h_in, w_in):
    packed = []
    h, w = h_in, w_in
    for w_t, b in params:
        cout = w_t.shape[1]
        packed.append((_band_matrix(w_t, w),
                       _row_scatter(h),
                       jnp.tile(b, STRIDE * w).reshape(1, STRIDE * w * cout)))
        h, w = STRIDE * h, STRIDE * w
    return packed


def init_params(key, output_channels=1):
    chans = [(64, 32), (32, 16), (16, output_channels)]
    params = []
    for i, (cin, cout) in enumerate(chans):
        kw, kb = jax.random.split(jax.random.fold_in(key, i))
        w = 0.05 * jax.random.normal(kw, (cin, cout, K, K), jnp.float32)
        b = 0.05 * jax.random.normal(kb, (cout,), jnp.float32)
        params.append((w, b))
    return params


# ----------------------------------------------------------------------------
# forward pass (single fused pallas_call)
# ----------------------------------------------------------------------------
@jax.jit
def vae_decoder_forward(x_nchw, packed):
    (B1, S1, b1), (B2, S2, b2), (B3, S3, b3) = packed
    N, c0, H, W = x_nchw.shape
    Hout, Wout = (STRIDE ** 3) * H, (STRIDE ** 3) * W
    cout = b3.shape[1] // Wout

    # NCHW -> (rows, width*channels); channels on the fast (lane) axis.
    x2d = jnp.transpose(x_nchw, (0, 2, 3, 1)).reshape(N * H, W * c0)

    out2d = pl.pallas_call(
        _decoder_kernel,
        out_shape=jax.ShapeDtypeStruct((N * Hout, Wout * cout), jnp.float32),
        grid=(N,),
        in_specs=[
            pl.BlockSpec((H, W * c0), lambda i: (i, 0)),
            # Packed weights: constant block index -> fetched once, resident.
            pl.BlockSpec(B1.shape, lambda i: (0, 0)),
            pl.BlockSpec(S1.shape, lambda i: (0, 0, 0)),
            pl.BlockSpec(b1.shape, lambda i: (0, 0)),
            pl.BlockSpec(B2.shape, lambda i: (0, 0)),
            pl.BlockSpec(S2.shape, lambda i: (0, 0, 0)),
            pl.BlockSpec(b2.shape, lambda i: (0, 0)),
            pl.BlockSpec(B3.shape, lambda i: (0, 0)),
            pl.BlockSpec(S3.shape, lambda i: (0, 0, 0)),
            pl.BlockSpec(b3.shape, lambda i: (0, 0)),
        ],
        out_specs=pl.BlockSpec((Hout, Wout * cout), lambda i: (i, 0)),
        compiler_params=pltpu.CompilerParams(
            dimension_semantics=("parallel",),          # 2 TCs on v7x
            vmem_limit_bytes=48 * 1024 * 1024),
    )(x2d, B1, S1, b1, B2, S2, b2, B3, S3, b3)

    # (rows, width*channels) -> NCHW
    return jnp.transpose(out2d.reshape(N, Hout, Wout, cout), (0, 3, 1, 2))


# ----------------------------------------------------------------------------
# pure-XLA reference (ConvTranspose2d == lhs-dilated conv with flipped kernel)
# ----------------------------------------------------------------------------
def vae_decoder_reference(x_nchw, params):
    x = x_nchw
    for (w_t, b), act in zip(params, ["relu", "relu", "sigmoid"]):
        w_oihw = jnp.transpose(w_t[:, :, ::-1, ::-1], (1, 0, 2, 3))
        y = lax.conv_general_dilated(
            x, w_oihw, window_strides=(1, 1),
            padding=[(K - 1 - PAD, K - 1 - PAD)] * 2,
            lhs_dilation=(STRIDE, STRIDE), rhs_dilation=(1, 1),
            dimension_numbers=("NCHW", "OIHW", "NCHW"))
        y = y + b[None, :, None, None]
        x = jnp.maximum(y, 0.0) if act == "relu" else jax.nn.sigmoid(y)
    return x


if __name__ == "__main__":
    key = jax.random.PRNGKey(0)
    k_x, k_p = jax.random.split(key)

    # latent input: (batch=2, channels=64, 8, 8)  ->  output (2, 1, 64, 64)
    x = jax.random.normal(k_x, (2, 64, 8, 8), jnp.float32)
    params = init_params(k_p, output_channels=1)
    packed = pack_params(params, h_in=8, w_in=8)    # packed once, not per call

    out = jax.block_until_ready(vae_decoder_forward(x, packed))
    ref = jax.block_until_ready(vae_decoder_reference(x, params))

    assert out.shape == (2, 1, 64, 64), out.shape
    assert jnp.allclose(out, ref, atol=2e-4, rtol=2e-4), (
        float(jnp.max(jnp.abs(out - ref))))

    print("KERNEL_OK")
</pallas_src>

<mosaic_0001>
module attributes {stable_mosaic.version = 11 : i64} {
  func.func @_decoder_kernel(%arg0: i32, %arg1: memref<8x512xf32, #tpu.memory_space<vmem>>, %arg2: memref<512x2048xf32, #tpu.memory_space<vmem>>, %arg3: memref<4x16x8xf32, #tpu.memory_space<vmem>>, %arg4: memref<1x512xf32, #tpu.memory_space<vmem>>, %arg5: memref<512x2048xf32, #tpu.memory_space<vmem>>, %arg6: memref<4x32x16xf32, #tpu.memory_space<vmem>>, %arg7: memref<1x512xf32, #tpu.memory_space<vmem>>, %arg8: memref<512x256xf32, #tpu.memory_space<vmem>>, %arg9: memref<4x64x32xf32, #tpu.memory_space<vmem>>, %arg10: memref<1x64xf32, #tpu.memory_space<vmem>>, %arg11: memref<64x64xf32, #tpu.memory_space<vmem>>) attributes {dimension_semantics = [#tpu.dimension_semantics<parallel>], iteration_bounds = array<i64: 2>, scalar_prefetch = 0 : i64, scratch_operands = 0 : i64, tpu.core_type = #tpu.core_type<tc>, window_params = [{transform_indices = @transform_0, window_bounds = array<i64: 8, 512>}, {pipeline_mode = #tpu.pipeline_mode<synchronous>, transform_indices = @transform_1, window_bounds = array<i64: 512, 2048>}, {pipeline_mode = #tpu.pipeline_mode<synchronous>, transform_indices = @transform_2, window_bounds = array<i64: 4, 16, 8>}, {pipeline_mode = #tpu.pipeline_mode<synchronous>, transform_indices = @transform_3, window_bounds = array<i64: 1, 512>}, {pipeline_mode = #tpu.pipeline_mode<synchronous>, transform_indices = @transform_4, window_bounds = array<i64: 512, 2048>}, {pipeline_mode = #tpu.pipeline_mode<synchronous>, transform_indices = @transform_5, window_bounds = array<i64: 4, 32, 16>}, {pipeline_mode = #tpu.pipeline_mode<synchronous>, transform_indices = @transform_6, window_bounds = array<i64: 1, 512>}, {pipeline_mode = #tpu.pipeline_mode<synchronous>, transform_indices = @transform_7, window_bounds = array<i64: 512, 256>}, {pipeline_mode = #tpu.pipeline_mode<synchronous>, transform_indices = @transform_8, window_bounds = array<i64: 4, 64, 32>}, {pipeline_mode = #tpu.pipeline_mode<synchronous>, transform_indices = @transform_9, window_bounds = array<i64: 1, 64>}, {transform_indices = @transform_10, window_bounds = array<i64: 64, 64>}]} {
    %c0 = arith.constant 0 : index
    %c0_0 = arith.constant 0 : index
    %0 = vector.load %arg1[%c0, %c0_0] : memref<8x512xf32, #tpu.memory_space<vmem>>, vector<8x512xf32>
    %c0_1 = arith.constant 0 : index
    %c0_2 = arith.constant 0 : index
    %1 = vector.load %arg2[%c0_1, %c0_2] : memref<512x2048xf32, #tpu.memory_space<vmem>>, vector<512x2048xf32>
    %cst = arith.constant dense<0.000000e+00> : vector<8x2048xf32>
    %2 = tpu.matmul %0, %1, %cst {dimension_numbers = #tpu.dot_dimension_numbers<[1], [0], [0], [1], [0, 0, 1, 1], [], []>} : vector<8x512xf32>, vector<512x2048xf32>, vector<8x2048xf32> -> vector<8x2048xf32>
    %c0_3 = arith.constant 0 : index
    %c0_4 = arith.constant 0 : index
    %3 = vector.load %arg4[%c0_3, %c0_4] : memref<1x512xf32, #tpu.memory_space<vmem>>, vector<1x512xf32>
    %4 = vector.shape_cast %3 : vector<1x512xf32> to vector<1x512xf32>
    %5 = vector.broadcast %4 : vector<1x512xf32> to vector<16x512xf32>
    %c0_5 = arith.constant 0 : index
    %c0_6 = arith.constant 0 : index
    %c0_7 = arith.constant 0 : index
    %6 = vector.load %arg3[%c0_5, %c0_6, %c0_7] : memref<4x16x8xf32, #tpu.memory_space<vmem>>, vector<1x16x8xf32>
    %7 = vector.shape_cast %6 : vector<1x16x8xf32> to vector<16x8xf32>
    %8 = vector.extract_strided_slice %2 {offsets = [0, 0], sizes = [8, 512], strides = [1, 1]} : vector<8x2048xf32> to vector<8x512xf32>
    %cst_8 = arith.constant dense<0.000000e+00> : vector<16x512xf32>
    %9 = tpu.matmul %7, %8, %cst_8 {dimension_numbers = #tpu.dot_dimension_numbers<[1], [0], [0], [1], [0, 0, 1, 1], [], []>} : vector<16x8xf32>, vector<8x512xf32>, vector<16x512xf32> -> vector<16x512xf32>
    %10 = arith.addf %5, %9 : vector<16x512xf32>
    %c1 = arith.constant 1 : index
    %c0_9 = arith.constant 0 : index
    %c0_10 = arith.constant 0 : index
    %11 = vector.load %arg3[%c1, %c0_9, %c0_10] : memref<4x16x8xf32, #tpu.memory_space<vmem>>, vector<1x16x8xf32>
    %12 = vector.shape_cast %11 : vector<1x16x8xf32> to vector<16x8xf32>
    %13 = vector.extract_strided_slice %2 {offsets = [0, 512], sizes = [8, 512], strides = [1, 1]} : vector<8x2048xf32> to vector<8x512xf32>
    %cst_11 = arith.constant dense<0.000000e+00> : vector<16x512xf32>
    %14 = tpu.matmul %12, %13, %cst_11 {dimension_numbers = #tpu.dot_dimension_numbers<[1], [0], [0], [1], [0, 0, 1, 1], [], []>} : vector<16x8xf32>, vector<8x512xf32>, vector<16x512xf32> -> vector<16x512xf32>
    %15 = arith.addf %10, %14 : vector<16x512xf32>
    %c2 = arith.constant 2 : index
    %c0_12 = arith.constant 0 : index
    %c0_13 = arith.constant 0 : index
    %16 = vector.load %arg3[%c2, %c0_12, %c0_13] : memref<4x16x8xf32, #tpu.memory_space<vmem>>, vector<1x16x8xf32>
    %17 = vector.shape_cast %16 : vector<1x16x8xf32> to vector<16x8xf32>
    %18 = vector.extract_strided_slice %2 {offsets = [0, 1024], sizes = [8, 512], strides = [1, 1]} : vector<8x2048xf32> to vector<8x512xf32>
    %cst_14 = arith.constant dense<0.000000e+00> : vector<16x512xf32>
    %19 = tpu.matmul %17, %18, %cst_14 {dimension_numbers = #tpu.dot_dimension_numbers<[1], [0], [0], [1], [0, 0, 1, 1], [], []>} : vector<16x8xf32>, vector<8x512xf32>, vector<16x512xf32> -> vector<16x512xf32>
    %20 = arith.addf %15, %19 : vector<16x512xf32>
    %c3 = arith.constant 3 : index
    %c0_15 = arith.constant 0 : index
    %c0_16 = arith.constant 0 : index
    %21 = vector.load %arg3[%c3, %c0_15, %c0_16] : memref<4x16x8xf32, #tpu.memory_space<vmem>>, vector<1x16x8xf32>
    %22 = vector.shape_cast %21 : vector<1x16x8xf32> to vector<16x8xf32>
    %23 = vector.extract_strided_slice %2 {offsets = [0, 1536], sizes = [8, 512], strides = [1, 1]} : vector<8x2048xf32> to vector<8x512xf32>
    %cst_17 = arith.constant dense<0.000000e+00> : vector<16x512xf32>
    %24 = tpu.matmul %22, %23, %cst_17 {dimension_numbers = #tpu.dot_dimension_numbers<[1], [0], [0], [1], [0, 0, 1, 1], [], []>} : vector<16x8xf32>, vector<8x512xf32>, vector<16x512xf32> -> vector<16x512xf32>
    %25 = arith.addf %20, %24 : vector<16x512xf32>
    %cst_18 = arith.constant 0.000000e+00 : f32
    %26 = vector.broadcast %cst_18 : f32 to vector<16x512xf32>
    %27 = arith.maximumf %25, %26 : vector<16x512xf32>
    %c0_19 = arith.constant 0 : index
    %c0_20 = arith.constant 0 : index
    %28 = vector.load %arg5[%c0_19, %c0_20] : memref<512x2048xf32, #tpu.memory_space<vmem>>, vector<512x2048xf32>
    %cst_21 = arith.constant dense<0.000000e+00> : vector<16x2048xf32>
    %29 = tpu.matmul %27, %28, %cst_21 {dimension_numbers = #tpu.dot_dimension_numbers<[1], [0], [0], [1], [0, 0, 1, 1], [], []>} : vector<16x512xf32>, vector<512x2048xf32>, vector<16x2048xf32> -> vector<16x2048xf32>
    %c0_22 = arith.constant 0 : index
    %c0_23 = arith.constant 0 : index
    %30 = vector.load %arg7[%c0_22, %c0_23] : memref<1x512xf32, #tpu.memory_space<vmem>>, vector<1x512xf32>
    %31 = vector.shape_cast %30 : vector<1x512xf32> to vector<1x512xf32>
    %32 = vector.broadcast %31 : vector<1x512xf32> to vector<32x512xf32>
    %c0_24 = arith.constant 0 : index
    %c0_25 = arith.constant 0 : index
    %c0_26 = arith.constant 0 : index
    %33 = vector.load %arg6[%c0_24, %c0_25, %c0_26] : memref<4x32x16xf32, #tpu.memory_space<vmem>>, vector<1x32x16xf32>
    %34 = vector.shape_cast %33 : vector<1x32x16xf32> to vector<32x16xf32>
    %35 = vector.extract_strided_slice %29 {offsets = [0, 0], sizes = [16, 512], strides = [1, 1]} : vector<16x2048xf32> to vector<16x512xf32>
    %cst_27 = arith.constant dense<0.000000e+00> : vector<32x512xf32>
    %36 = tpu.matmul %34, %35, %cst_27 {dimension_numbers = #tpu.dot_dimension_numbers<[1], [0], [0], [1], [0, 0, 1, 1], [], []>} : vector<32x16xf32>, vector<16x512xf32>, vector<32x512xf32> -> vector<32x512xf32>
    %37 = arith.addf %32, %36 : vector<32x512xf32>
    %c1_28 = arith.constant 1 : index
    %c0_29 = arith.constant 0 : index
    %c0_30 = arith.constant 0 : index
    %38 = vector.load %arg6[%c1_28, %c0_29, %c0_30] : memref<4x32x16xf32, #tpu.memory_space<vmem>>, vector<1x32x16xf32>
    %39 = vector.shape_cast %38 : vector<1x32x16xf32> to vector<32x16xf32>
    %40 = vector.extract_strided_slice %29 {offsets = [0, 512], sizes = [16, 512], strides = [1, 1]} : vector<16x2048xf32> to vector<16x512xf32>
    %cst_31 = arith.constant dense<0.000000e+00> : vector<32x512xf32>
    %41 = tpu.matmul %39, %40, %cst_31 {dimension_numbers = #tpu.dot_dimension_numbers<[1], [0], [0], [1], [0, 0, 1, 1], [], []>} : vector<32x16xf32>, vector<16x512xf32>, vector<32x512xf32> -> vector<32x512xf32>
    %42 = arith.addf %37, %41 : vector<32x512xf32>
    %c2_32 = arith.constant 2 : index
    %c0_33 = arith.constant 0 : index
    %c0_34 = arith.constant 0 : index
    %43 = vector.load %arg6[%c2_32, %c0_33, %c0_34] : memref<4x32x16xf32, #tpu.memory_space<vmem>>, vector<1x32x16xf32>
    %44 = vector.shape_cast %43 : vector<1x32x16xf32> to vector<32x16xf32>
    %45 = vector.extract_strided_slice %29 {offsets = [0, 1024], sizes = [16, 512], strides = [1, 1]} : vector<16x2048xf32> to vector<16x512xf32>
    %cst_35 = arith.constant dense<0.000000e+00> : vector<32x512xf32>
    %46 = tpu.matmul %44, %45, %cst_35 {dimension_numbers = #tpu.dot_dimension_numbers<[1], [0], [0], [1], [0, 0, 1, 1], [], []>} : vector<32x16xf32>, vector<16x512xf32>, vector<32x512xf32> -> vector<32x512xf32>
    %47 = arith.addf %42, %46 : vector<32x512xf32>
    %c3_36 = arith.constant 3 : index
    %c0_37 = arith.constant 0 : index
    %c0_38 = arith.constant 0 : index
    %48 = vector.load %arg6[%c3_36, %c0_37, %c0_38] : memref<4x32x16xf32, #tpu.memory_space<vmem>>, vector<1x32x16xf32>
    %49 = vector.shape_cast %48 : vector<1x32x16xf32> to vector<32x16xf32>
    %50 = vector.extract_strided_slice %29 {offsets = [0, 1536], sizes = [16, 512], strides = [1, 1]} : vector<16x2048xf32> to vector<16x512xf32>
    %cst_39 = arith.constant dense<0.000000e+00> : vector<32x512xf32>
    %51 = tpu.matmul %49, %50, %cst_39 {dimension_numbers = #tpu.dot_dimension_numbers<[1], [0], [0], [1], [0, 0, 1, 1], [], []>} : vector<32x16xf32>, vector<16x512xf32>, vector<32x512xf32> -> vector<32x512xf32>
    %52 = arith.addf %47, %51 : vector<32x512xf32>
    %cst_40 = arith.constant 0.000000e+00 : f32
    %53 = vector.broadcast %cst_40 : f32 to vector<32x512xf32>
    %54 = arith.maximumf %52, %53 : vector<32x512xf32>
    %c0_41 = arith.constant 0 : index
    %c0_42 = arith.constant 0 : index
    %55 = vector.load %arg8[%c0_41, %c0_42] : memref<512x256xf32, #tpu.memory_space<vmem>>, vector<512x256xf32>
    %cst_43 = arith.constant dense<0.000000e+00> : vector<32x256xf32>
    %56 = tpu.matmul %54, %55, %cst_43 {dimension_numbers = #tpu.dot_dimension_numbers<[1], [0], [0], [1], [0, 0, 1, 1], [], []>} : vector<32x512xf32>, vector<512x256xf32>, vector<32x256xf32> -> vector<32x256xf32>
    %c0_44 = arith.constant 0 : index
    %c0_45 = arith.constant 0 : index
    %57 = vector.load %arg10[%c0_44, %c0_45] : memref<1x64xf32, #tpu.memory_space<vmem>>, vector<1x64xf32>
    %58 = vector.shape_cast %57 : vector<1x64xf32> to vector<1x64xf32>
    %59 = vector.broadcast %58 : vector<1x64xf32> to vector<64x64xf32>
    %c0_46 = arith.constant 0 : index
    %c0_47 = arith.constant 0 : index
    %c0_48 = arith.constant 0 : index
    %60 = vector.load %arg9[%c0_46, %c0_47, %c0_48] : memref<4x64x32xf32, #tpu.memory_space<vmem>>, vector<1x64x32xf32>
    %61 = vector.shape_cast %60 : vector<1x64x32xf32> to vector<64x32xf32>
    %62 = vector.extract_strided_slice %56 {offsets = [0, 0], sizes = [32, 64], strides = [1, 1]} : vector<32x256xf32> to vector<32x64xf32>
    %cst_49 = arith.constant dense<0.000000e+00> : vector<64x64xf32>
    %63 = tpu.matmul %61, %62, %cst_49 {dimension_numbers = #tpu.dot_dimension_numbers<[1], [0], [0], [1], [0, 0, 1, 1], [], []>} : vector<64x32xf32>, vector<32x64xf32>, vector<64x64xf32> -> vector<64x64xf32>
    %64 = arith.addf %59, %63 : vector<64x64xf32>
    %c1_50 = arith.constant 1 : index
    %c0_51 = arith.constant 0 : index
    %c0_52 = arith.constant 0 : index
    %65 = vector.load %arg9[%c1_50, %c0_51, %c0_52] : memref<4x64x32xf32, #tpu.memory_space<vmem>>, vector<1x64x32xf32>
    %66 = vector.shape_cast %65 : vector<1x64x32xf32> to vector<64x32xf32>
    %67 = vector.extract_strided_slice %56 {offsets = [0, 64], sizes = [32, 64], strides = [1, 1]} : vector<32x256xf32> to vector<32x64xf32>
    %cst_53 = arith.constant dense<0.000000e+00> : vector<64x64xf32>
    %68 = tpu.matmul %66, %67, %cst_53 {dimension_numbers = #tpu.dot_dimension_numbers<[1], [0], [0], [1], [0, 0, 1, 1], [], []>} : vector<64x32xf32>, vector<32x64xf32>, vector<64x64xf32> -> vector<64x64xf32>
    %69 = arith.addf %64, %68 : vector<64x64xf32>
    %c2_54 = arith.constant 2 : index
    %c0_55 = arith.constant 0 : index
    %c0_56 = arith.constant 0 : index
    %70 = vector.load %arg9[%c2_54, %c0_55, %c0_56] : memref<4x64x32xf32, #tpu.memory_space<vmem>>, vector<1x64x32xf32>
    %71 = vector.shape_cast %70 : vector<1x64x32xf32> to vector<64x32xf32>
    %72 = vector.extract_strided_slice %56 {offsets = [0, 128], sizes = [32, 64], strides = [1, 1]} : vector<32x256xf32> to vector<32x64xf32>
    %cst_57 = arith.constant dense<0.000000e+00> : vector<64x64xf32>
    %73 = tpu.matmul %71, %72, %cst_57 {dimension_numbers = #tpu.dot_dimension_numbers<[1], [0], [0], [1], [0, 0, 1, 1], [], []>} : vector<64x32xf32>, vector<32x64xf32>, vector<64x64xf32> -> vector<64x64xf32>
    %74 = arith.addf %69, %73 : vector<64x64xf32>
    %c3_58 = arith.constant 3 : index
    %c0_59 = arith.constant 0 : index
    %c0_60 = arith.constant 0 : index
    %75 = vector.load %arg9[%c3_58, %c0_59, %c0_60] : memref<4x64x32xf32, #tpu.memory_space<vmem>>, vector<1x64x32xf32>
    %76 = vector.shape_cast %75 : vector<1x64x32xf32> to vector<64x32xf32>
    %77 = vector.extract_strided_slice %56 {offsets = [0, 192], sizes = [32, 64], strides = [1, 1]} : vector<32x256xf32> to vector<32x64xf32>
    %cst_61 = arith.constant dense<0.000000e+00> : vector<64x64xf32>
    %78 = tpu.matmul %76, %77, %cst_61 {dimension_numbers = #tpu.dot_dimension_numbers<[1], [0], [0], [1], [0, 0, 1, 1], [], []>} : vector<64x32xf32>, vector<32x64xf32>, vector<64x64xf32> -> vector<64x64xf32>
    %79 = arith.addf %74, %78 : vector<64x64xf32>
    %cst_62 = arith.constant 0.000000e+00 : f32
    %80 = vector.broadcast %cst_62 : f32 to vector<64x64xf32>
    %81 = arith.subf %80, %79 : vector<64x64xf32>
    %82 = math.exp %81 : vector<64x64xf32>
    %cst_63 = arith.constant 1.000000e+00 : f32
    %83 = vector.broadcast %cst_63 : f32 to vector<64x64xf32>
    %84 = arith.addf %83, %82 : vector<64x64xf32>
    %cst_64 = arith.constant 1.000000e+00 : f32
    %85 = vector.broadcast %cst_64 : f32 to vector<64x64xf32>
    %86 = arith.divf %85, %84 : vector<64x64xf32>
    %c0_65 = arith.constant 0 : index
    %c0_66 = arith.constant 0 : index
    %87 = vector.load %arg11[%c0_65, %c0_66] : memref<64x64xf32, #tpu.memory_space<vmem>>, vector<64x64xf32>
    tpu.vector_store %arg11[%c0_65, %c0_66], %86 {strides = array<i32>} : memref<64x64xf32, #tpu.memory_space<vmem>>, vector<64x64xf32>,
    return
  }
  func.func @transform_0(%arg0: i32) -> (i32, i32) {
    %c0_i32 = arith.constant 0 : i32
    %c0_i32_0 = arith.constant 0 : i32
    return %arg0, %c0_i32 : i32, i32
  }
  func.func @transform_1(%arg0: i32) -> (i32, i32) {
    %c0_i32 = arith.constant 0 : i32
    %c0_i32_0 = arith.constant 0 : i32
    %c0_i32_1 = arith.constant 0 : i32
    return %c0_i32, %c0_i32_0 : i32, i32
  }
  func.func @transform_2(%arg0: i32) -> (i32, i32, i32) {
    %c0_i32 = arith.constant 0 : i32
    %c0_i32_0 = arith.constant 0 : i32
    %c0_i32_1 = arith.constant 0 : i32
    %c0_i32_2 = arith.constant 0 : i32
    return %c0_i32, %c0_i32_0, %c0_i32_1 : i32, i32, i32
  }
  func.func @transform_3(%arg0: i32) -> (i32, i32) {
    %c0_i32 = arith.constant 0 : i32
    %c0_i32_0 = arith.constant 0 : i32
    %c0_i32_1 = arith.constant 0 : i32
    return %c0_i32, %c0_i32_0 : i32, i32
  }
  func.func @transform_4(%arg0: i32) -> (i32, i32) {
    %c0_i32 = arith.constant 0 : i32
    %c0_i32_0 = arith.constant 0 : i32
    %c0_i32_1 = arith.constant 0 : i32
    return %c0_i32, %c0_i32_0 : i32, i32
  }
  func.func @transform_5(%arg0: i32) -> (i32, i32, i32) {
    %c0_i32 = arith.constant 0 : i32
    %c0_i32_0 = arith.constant 0 : i32
    %c0_i32_1 = arith.constant 0 : i32
    %c0_i32_2 = arith.constant 0 : i32
    return %c0_i32, %c0_i32_0, %c0_i32_1 : i32, i32, i32
  }
  func.func @transform_6(%arg0: i32) -> (i32, i32) {
    %c0_i32 = arith.constant 0 : i32
    %c0_i32_0 = arith.constant 0 : i32
    %c0_i32_1 = arith.constant 0 : i32
    return %c0_i32, %c0_i32_0 : i32, i32
  }
  func.func @transform_7(%arg0: i32) -> (i32, i32) {
    %c0_i32 = arith.constant 0 : i32
    %c0_i32_0 = arith.constant 0 : i32
    %c0_i32_1 = arith.constant 0 : i32
    return %c0_i32, %c0_i32_0 : i32, i32
  }
  func.func @transform_8(%arg0: i32) -> (i32, i32, i32) {
    %c0_i32 = arith.constant 0 : i32
    %c0_i32_0 = arith.constant 0 : i32
    %c0_i32_1 = arith.constant 0 : i32
    %c0_i32_2 = arith.constant 0 : i32
    return %c0_i32, %c0_i32_0, %c0_i32_1 : i32, i32, i32
  }
  func.func @transform_9(%arg0: i32) -> (i32, i32) {
    %c0_i32 = arith.constant 0 : i32
    %c0_i32_0 = arith.constant 0 : i32
    %c0_i32_1 = arith.constant 0 : i32
    return %c0_i32, %c0_i32_0 : i32, i32
  }
  func.func @transform_10(%arg0: i32) -> (i32, i32) {
    %c0_i32 = arith.constant 0 : i32
    %c0_i32_0 = arith.constant 0 : i32
    return %arg0, %c0_i32 : i32, i32
  }
}

</mosaic_0001>

<llo_original>
// kernel: vae_decoder_forward.1
$region0: #{vae_decoder_forward.1}
  #allocation0 [shape = 'u32[]', space=smem, size = 0x4, offset = 0x4, fixed_abs, tag = 'smem constant byte address 0x4 - core index']
  #allocation1 [shape = 'u32[144,128]{1,0:T(1,128)}', space=vmem, size = 0x12000, scoped, tag = 'internal scratch']
  %s0 = inlined_call_operand.vmem [shape: f32[16,512], index: 0, kind: input, shape index: {}]
  %s1 = inlined_call_operand.hbm [shape: f32[512,2048], index: 1, kind: input, shape index: {}]
  %s2 = inlined_call_operand.vmem [shape: f32[4,16,8], index: 2, kind: input, shape index: {}]
  %s3 = inlined_call_operand.hbm [shape: f32[1,512], index: 3, kind: input, shape index: {}]
  %s4 = inlined_call_operand.hbm [shape: f32[512,2048], index: 4, kind: input, shape index: {}]
  %s5 = inlined_call_operand.vmem [shape: f32[4,32,16], index: 5, kind: input, shape index: {}]
  %s6 = inlined_call_operand.hbm [shape: f32[1,512], index: 6, kind: input, shape index: {}]
  %s7 = inlined_call_operand.hbm [shape: f32[512,256], index: 7, kind: input, shape index: {}]
  %s8 = inlined_call_operand.vmem [shape: f32[4,64,32], index: 8, kind: input, shape index: {}]
  %s9 = inlined_call_operand.hbm [shape: f32[1,64], index: 9, kind: input, shape index: {}]
  %s10 = inlined_call_operand.hbm [shape: f32[128,64], index: 10, kind: output, shape index: {}]
  %s11 = sld [smem:[#allocation0]]
  $region97: #{vae_decoder_forward.1} parent=0
    _
  %s13 = ssub.s32 1, %s11
  %s14 = scalar_select 0, %s13, %s11
  $region1: #{vae_decoder_forward.1} parent=0
    #allocation2 [shape = 'u8[4194304]{0}', space=vmem, size = 0x400000, scoped, tag = 'input window, operand 1, single buffered']
    #allocation3 [shape = 's32[2]{0}', space=sflag, size = 0x8, scoped, tag = 'scoped memory for vae_decoder_forward.1']
    #allocation4 [shape = 's32[2]{0}', space=sflag, size = 0x8, scoped, tag = 'scoped memory for vae_decoder_forward.1']
    #allocation5 [shape = 'u8[2048]{0}', space=vmem, size = 0x800, scoped, tag = 'input window, operand 3, single buffered']
    #allocation6 [shape = 's32[1]{0}', space=sflag, size = 0x4, scoped, tag = 'scoped memory for vae_decoder_forward.1']
    #allocation7 [shape = 'u8[4194304]{0}', space=vmem, size = 0x400000, scoped, tag = 'input window, operand 4, single buffered']
    #allocation8 [shape = 'u8[2048]{0}', space=vmem, size = 0x800, scoped, tag = 'input window, operand 6, single buffered']
    #allocation9 [shape = 's32[1]{0}', space=sflag, size = 0x4, scoped, tag = 'scoped memory for vae_decoder_forward.1']
    #allocation10 [shape = 'u8[524288]{0}', space=vmem, size = 0x80000, scoped, tag = 'input window, operand 7, single buffered']
    #allocation11 [shape = 'u8[512]{0}', space=vmem, size = 0x400, scoped, tag = 'input window, operand 9, single buffered']
    #allocation12 [shape = 's32[1]{0}', space=sflag, size = 0x4, scoped, tag = 'scoped memory for vae_decoder_forward.1']
    #allocation13 [shape = 'u8[65536]{0}', space=vmem, size = 0x10000, scoped, tag = 'output window, operand 0']
    %15 = vsyncpa [#allocation3], 0
    %16 = vsyncpa [#allocation6], 0
    %17 = vsyncpa [#allocation9], 0
    %18 = vsyncpa [#allocation12], 0
    %19 = vsyncpa [#allocation4], 0
    %s20 = scalar_lea.sflag [#allocation4], 1
    %21 = vsyncpa %s20, 0
    loop: start=0, step=1, limit=4
    $region2: #{vae_decoder_forward.1} parent=1 // loop_pre_header
      _
    $region3: #{vae_decoder_forward.1} parent=1 // loop_header
      %s23 = sphi 0, %s27
      %p24 = scmp.ge.s32.totalorder %s23, 4
      %s33 = sphi 0, %s35
      %s36 = sphi 0, %s33
      %s37 = sphi 0, %s36
      %s53 = sphi 0, %s37
      %s57 = sphi 0, %s57
      %s59 = sphi 0, %s57
      %s60 = sphi 0, %s59
      %s74 = sphi 0, %s60
      %s78 = sphi 0, %s78
      %s80 = sphi 0, %s78
      %s81 = sphi 0, %s80
      %s95 = sphi 0, %s81
      %s99 = sphi 0, %s99
      %s101 = sphi 0, %s99
      %s102 = sphi 0, %s101
      %s116 = sphi 0, %s102
      %s120 = sphi 0, %s120
      %s122 = sphi 0, %s120
      %s123 = sphi 0, %s122
      %s137 = sphi 0, %s123
      %s141 = sphi 0, %s141
      %s143 = sphi 0, %s141
      %s144 = sphi 0, %s143
      %s158 = sphi 0, %s144
      %s162 = sphi 0, %s162
      %s164 = sphi 0, %s162
      %s165 = sphi 0, %s164
      %s179 = sphi 0, %s165
      %s183 = sphi 0, %s183
      %s185 = sphi 0, %s183
      %s186 = sphi 0, %s185
      %s200 = sphi 0, %s186
      %s204 = sphi 0, %s204
      %s206 = sphi 0, %s204
      %s207 = sphi 0, %s206
      %s221 = sphi 0, %s207
      %s225 = sphi 0, %s225
      %s227 = sphi 0, %s225
      %s228 = sphi 0, %s227
      %s242 = sphi 0, %s228
      %s248 = sphi 0, %s250
      %s251 = sphi 0, %s248
      %s252 = sphi 0, %s251
      %s268 = sphi 0, %s252
    $region4: #{vae_decoder_forward.1} parent=1 // loop_header_branch
      %26 = sbr.rel (%p24) target = $region8
    $region5: #{vae_decoder_forward.1} parent=1 // loop_body
      %s28 = ssub.s32 %s23, 1
      %s29 = ssub.s32 %s23, 2
      %s30 = sadd.s32 %s23, 1
      %s31 = ssub.s32 %s23, %s30
      %p32 = scmp.eq.s32.totalorder %s31, 0
      %s34 = sadd.s32 %s33, 1
      %s35 = scalar_select %p32, %s33, %s34
      %p38 = pneg %p32
      %p39 = scmp.eq.s32.totalorder %s23, 1
      %p40 = por %p38, %p39
      %p41 = scmp.ne.s32.totalorder %s33, %s36
      %p42 = scmp.eq.s32.totalorder %s23, 0
      %p43 = por %p41, %p42
      %p44 = scmp.ne.s32.totalorder %s33, %s36
      %p45 = scmp.eq.s32.totalorder %s28, 1
      %p46 = por %p44, %p45
      %p47 = scmp.ne.s32.totalorder %s36, %s37
      %p48 = scmp.eq.s32.totalorder %s28, 0
      %p49 = por %p47, %p48
      %p50 = scmp.ne.s32.totalorder %s36, %s37
      %p51 = scmp.eq.s32.totalorder %s29, 1
      %p52 = por %p50, %p51
      %p54 = scmp.ne.s32.totalorder %s37, %s53
      %p55 = scmp.eq.s32.totalorder %s29, 0
      %p56 = por %p54, %p55
      %s58 = sadd.s32 %s57, 1
      %p61 = scmp.eq.s32.totalorder %s23, 1
      %p62 = scmp.ne.s32.totalorder %s57, %s59
      %p63 = scmp.eq.s32.totalorder %s23, 0
      %p64 = por %p62, %p63
      %p65 = scmp.ne.s32.totalorder %s57, %s59
      %p66 = scmp.eq.s32.totalorder %s28, 1
      %p67 = por %p65, %p66
      %p68 = scmp.ne.s32.totalorder %s59, %s60
      %p69 = scmp.eq.s32.totalorder %s28, 0
      %p70 = por %p68, %p69
      %p71 = scmp.ne.s32.totalorder %s59, %s60
      %p72 = scmp.eq.s32.totalorder %s29, 1
      %p73 = por %p71, %p72
      %p75 = scmp.ne.s32.totalorder %s60, %s74
      %p76 = scmp.eq.s32.totalorder %s29, 0
      %p77 = por %p75, %p76
      %s79 = sadd.s32 %s78, 1
      %p82 = scmp.eq.s32.totalorder %s23, 1
      %p83 = scmp.ne.s32.totalorder %s78, %s80
      %p84 = scmp.eq.s32.totalorder %s23, 0
      %p85 = por %p83, %p84
      %p86 = scmp.ne.s32.totalorder %s78, %s80
      %p87 = scmp.eq.s32.totalorder %s28, 1
      %p88 = por %p86, %p87
      %p89 = scmp.ne.s32.totalorder %s80, %s81
      %p90 = scmp.eq.s32.totalorder %s28, 0
      %p91 = por %p89, %p90
      %p92 = scmp.ne.s32.totalorder %s80, %s81
      %p93 = scmp.eq.s32.totalorder %s29, 1
      %p94 = por %p92, %p93
      %p96 = scmp.ne.s32.totalorder %s81, %s95
      %p97 = scmp.eq.s32.totalorder %s29, 0
      %p98 = por %p96, %p97
      %s100 = sadd.s32 %s99, 1
      %p103 = scmp.eq.s32.totalorder %s23, 1
      %p104 = scmp.ne.s32.totalorder %s99, %s101
      %p105 = scmp.eq.s32.totalorder %s23, 0
      %p106 = por %p104, %p105
      %p107 = scmp.ne.s32.totalorder %s99, %s101
      %p108 = scmp.eq.s32.totalorder %s28, 1
      %p109 = por %p107, %p108
      %p110 = scmp.ne.s32.totalorder %s101, %s102
      %p111 = scmp.eq.s32.totalorder %s28, 0
      %p112 = por %p110, %p111
      %p113 = scmp.ne.s32.totalorder %s101, %s102
      %p114 = scmp.eq.s32.totalorder %s29, 1
      %p115 = por %p113, %p114
      %p117 = scmp.ne.s32.totalorder %s102, %s116
      %p118 = scmp.eq.s32.totalorder %s29, 0
      %p119 = por %p117, %p118
      %s121 = sadd.s32 %s120, 1
      %p124 = scmp.eq.s32.totalorder %s23, 1
      %p125 = scmp.ne.s32.totalorder %s120, %s122
      %p126 = scmp.eq.s32.totalorder %s23, 0
      %p127 = por %p125, %p126
      %p128 = scmp.ne.s32.totalorder %s120, %s122
      %p129 = scmp.eq.s32.totalorder %s28, 1
      %p130 = por %p128, %p129
      %p131 = scmp.ne.s32.totalorder %s122, %s123
      %p132 = scmp.eq.s32.totalorder %s28, 0
      %p133 = por %p131, %p132
      %p134 = scmp.ne.s32.totalorder %s122, %s123
      %p135 = scmp.eq.s32.totalorder %s29, 1
      %p136 = por %p134, %p135
      %p138 = scmp.ne.s32.totalorder %s123, %s137
      %p139 = scmp.eq.s32.totalorder %s29, 0
      %p140 = por %p138, %p139
      %s142 = sadd.s32 %s141, 1
      %p145 = scmp.eq.s32.totalorder %s23, 1
      %p146 = scmp.ne.s32.totalorder %s141, %s143
      %p147 = scmp.eq.s32.totalorder %s23, 0
      %p148 = por %p146, %p147
      %p149 = scmp.ne.s32.totalorder %s141, %s143
      %p150 = scmp.eq.s32.totalorder %s28, 1
      %p151 = por %p149, %p150
      %p152 = scmp.ne.s32.totalorder %s143, %s144
      %p153 = scmp.eq.s32.totalorder %s28, 0
      %p154 = por %p152, %p153
      %p155 = scmp.ne.s32.totalorder %s143, %s144
      %p156 = scmp.eq.s32.totalorder %s29, 1
      %p157 = por %p155, %p156
      %p159 = scmp.ne.s32.totalorder %s144, %s158
      %p160 = scmp.eq.s32.totalorder %s29, 0
      %p161 = por %p159, %p160
      %s163 = sadd.s32 %s162, 1
      %p166 = scmp.eq.s32.totalorder %s23, 1
      %p167 = scmp.ne.s32.totalorder %s162, %s164
      %p168 = scmp.eq.s32.totalorder %s23, 0
      %p169 = por %p167, %p168
      %p170 = scmp.ne.s32.totalorder %s162, %s164
      %p171 = scmp.eq.s32.totalorder %s28, 1
      %p172 = por %p170, %p171
      %p173 = scmp.ne.s32.totalorder %s164, %s165
      %p174 = scmp.eq.s32.totalorder %s28, 0
      %p175 = por %p173, %p174
      %p176 = scmp.ne.s32.totalorder %s164, %s165
      %p177 = scmp.eq.s32.totalorder %s29, 1
      %p178 = por %p176, %p177
      %p180 = scmp.ne.s32.totalorder %s165, %s179
      %p181 = scmp.eq.s32.totalorder %s29, 0
      %p182 = por %p180, %p181
      %s184 = sadd.s32 %s183, 1
      %p187 = scmp.eq.s32.totalorder %s23, 1
      %p188 = scmp.ne.s32.totalorder %s183, %s185
      %p189 = scmp.eq.s32.totalorder %s23, 0
      %p190 = por %p188, %p189
      %p191 = scmp.ne.s32.totalorder %s183, %s185
      %p192 = scmp.eq.s32.totalorder %s28, 1
      %p193 = por %p191, %p192
      %p194 = scmp.ne.s32.totalorder %s185, %s186
      %p195 = scmp.eq.s32.totalorder %s28, 0
      %p196 = por %p194, %p195
      %p197 = scmp.ne.s32.totalorder %s185, %s186
      %p198 = scmp.eq.s32.totalorder %s29, 1
      %p199 = por %p197, %p198
      %p201 = scmp.ne.s32.totalorder %s186, %s200
      %p202 = scmp.eq.s32.totalorder %s29, 0
      %p203 = por %p201, %p202
      %s205 = sadd.s32 %s204, 1
      %p208 = scmp.eq.s32.totalorder %s23, 1
      %p209 = scmp.ne.s32.totalorder %s204, %s206
      %p210 = scmp.eq.s32.totalorder %s23, 0
      %p211 = por %p209, %p210
      %p212 = scmp.ne.s32.totalorder %s204, %s206
      %p213 = scmp.eq.s32.totalorder %s28, 1
      %p214 = por %p212, %p213
      %p215 = scmp.ne.s32.totalorder %s206, %s207
      %p216 = scmp.eq.s32.totalorder %s28, 0
      %p217 = por %p215, %p216
      %p218 = scmp.ne.s32.totalorder %s206, %s207
      %p219 = scmp.eq.s32.totalorder %s29, 1
      %p220 = por %p218, %p219
      %p222 = scmp.ne.s32.totalorder %s207, %s221
      %p223 = scmp.eq.s32.totalorder %s29, 0
      %p224 = por %p222, %p223
      %s226 = sadd.s32 %s225, 1
      %p229 = scmp.eq.s32.totalorder %s23, 1
      %p230 = scmp.ne.s32.totalorder %s225, %s227
      %p231 = scmp.eq.s32.totalorder %s23, 0
      %p232 = por %p230, %p231
      %p233 = scmp.ne.s32.totalorder %s225, %s227
      %p234 = scmp.eq.s32.totalorder %s28, 1
      %p235 = por %p233, %p234
      %p236 = scmp.ne.s32.totalorder %s227, %s228
      %p237 = scmp.eq.s32.totalorder %s28, 0
      %p238 = por %p236, %p237
      %p239 = scmp.ne.s32.totalorder %s227, %s228
      %p240 = scmp.eq.s32.totalorder %s29, 1
      %p241 = por %p239, %p240
      %p243 = scmp.ne.s32.totalorder %s228, %s242
      %p244 = scmp.eq.s32.totalorder %s29, 0
      %p245 = por %p243, %p244
      %s246 = ssub.s32 %s23, %s30
      %p247 = scmp.eq.s32.totalorder %s246, 0
      %s249 = sadd.s32 %s248, 1
      %s250 = scalar_select %p247, %s248, %s249
      %p253 = pneg %p247
      %p254 = scmp.eq.s32.totalorder %s23, 1
      %p255 = por %p253, %p254
      %p256 = scmp.ne.s32.totalorder %s248, %s251
      %p257 = scmp.eq.s32.totalorder %s23, 0
      %p258 = por %p256, %p257
      %p259 = scmp.ne.s32.totalorder %s248, %s251
      %p260 = scmp.eq.s32.totalorder %s28, 1
      %p261 = por %p259, %p260
      %p262 = scmp.ne.s32.totalorder %s251, %s252
      %p263 = scmp.eq.s32.totalorder %s28, 0
      %p264 = por %p262, %p263
      %p265 = scmp.ne.s32.totalorder %s251, %s252
      %p266 = scmp.eq.s32.totalorder %s29, 1
      %p267 = por %p265, %p266
      %p269 = scmp.ne.s32.totalorder %s252, %s268
      %p270 = scmp.eq.s32.totalorder %s29, 0
      %p271 = por %p269, %p270
      %p272 = scmp.le.s32.totalorder 1, %s23
      %p273 = scmp.lt.s32.totalorder %s23, 3
      %p274 = pnand %p272, %p273
      %p275 = pneg %p274
      // Predicated region
      $region9: #{vae_decoder_forward.1} parent=5 // pred_check
        _
      $region10: #{vae_decoder_forward.1} parent=5 // pred_check_branch
        %277 = sbr.rel (%p274) target = $region12
      $region11: #{vae_decoder_forward.1} parent=5 // pred_region
        %s278 = ssub.s32 %s23, 1
        // Predicated region
        $region13: #{vae_decoder_forward.1} parent=11 // pred_check
          %p279 = pneg %p70
        $region14: #{vae_decoder_forward.1} parent=11 // pred_check_branch
          %281 = sbr.rel (%p279) target = $region16
        $region15: #{vae_decoder_forward.1} parent=11 // pred_region
          %s283 = ssub.s32 131072, 131072
          %284 = vsyncadd [#allocation3], %s283
          %s285 = sshll.u32 [#allocation2], 4
          %s286 = int_to_ptr.vmem [resolvable:$true] %s285
          %291 = dma.hbm_to_vmem [thread:$0]  %s1, 131072, %s286, [#allocation3], 2048, 2048, 128
        $region16: #{vae_decoder_forward.1} parent=11 // pred_fallthru
          _
        // Predicated region
        $region17: #{vae_decoder_forward.1} parent=11 // pred_check
          %p292 = pneg %p91
        $region18: #{vae_decoder_forward.1} parent=11 // pred_check_branch
          %294 = sbr.rel (%p292) target = $region20
        $region19: #{vae_decoder_forward.1} parent=11 // pred_region
          _
        $region20: #{vae_decoder_forward.1} parent=11 // pred_fallthru
          _
        // Predicated region
        $region21: #{vae_decoder_forward.1} parent=11 // pred_check
          %p295 = pneg %p112
        $region22: #{vae_decoder_forward.1} parent=11 // pred_check_branch
          %297 = sbr.rel (%p295) target = $region24
        $region23: #{vae_decoder_forward.1} parent=11 // pred_region
          %s299 = ssub.s32 64, 64
          %300 = vsyncadd [#allocation6], %s299
          %s302 = sshll.u32 [#allocation5], 4
          %s303 = int_to_ptr.vmem [resolvable:$true] %s302
          %305 = dma.hbm_to_vmem [thread:$0]  %s3, 64, %s303, [#allocation6]
        $region24: #{vae_decoder_forward.1} parent=11 // pred_fallthru
          _
        // Predicated region
        $region25: #{vae_decoder_forward.1} parent=11 // pred_check
          %p306 = pneg %p133
        $region26: #{vae_decoder_forward.1} parent=11 // pred_check_branch
          %308 = sbr.rel (%p306) target = $region28
        $region27: #{vae_decoder_forward.1} parent=11 // pred_region
          %s310 = ssub.s32 131072, 131072
          %311 = vsyncadd [#allocation6], %s310
          %s312 = sshll.u32 [#allocation7], 4
          %s313 = int_to_ptr.vmem [resolvable:$true] %s312
          %318 = dma.hbm_to_vmem [thread:$0]  %s4, 131072, %s313, [#allocation6], 2048, 2048, 128
        $region28: #{vae_decoder_forward.1} parent=11 // pred_fallthru
          _
        // Predicated region
        $region29: #{vae_decoder_forward.1} parent=11 // pred_check
          %p319 = pneg %p154
        $region30: #{vae_decoder_forward.1} parent=11 // pred_check_branch
          %321 = sbr.rel (%p319) target = $region32
        $region31: #{vae_decoder_forward.1} parent=11 // pred_region
          _
        $region32: #{vae_decoder_forward.1} parent=11 // pred_fallthru
          _
        // Predicated region
        $region33: #{vae_decoder_forward.1} parent=11 // pred_check
          %p322 = pneg %p175
        $region34: #{vae_decoder_forward.1} parent=11 // pred_check_branch
          %324 = sbr.rel (%p322) target = $region36
        $region35: #{vae_decoder_forward.1} parent=11 // pred_region
          %s326 = ssub.s32 64, 64
          %327 = vsyncadd [#allocation9], %s326
          %s329 = sshll.u32 [#allocation8], 4
          %s330 = int_to_ptr.vmem [resolvable:$true] %s329
          %332 = dma.hbm_to_vmem [thread:$0]  %s6, 64, %s330, [#allocation9]
        $region36: #{vae_decoder_forward.1} parent=11 // pred_fallthru
          _
        // Predicated region
        $region37: #{vae_decoder_forward.1} parent=11 // pred_check
          %p333 = pneg %p196
        $region38: #{vae_decoder_forward.1} parent=11 // pred_check_branch
          %335 = sbr.rel (%p333) target = $region40
        $region39: #{vae_decoder_forward.1} parent=11 // pred_region
          %s337 = ssub.s32 16384, 16384
          %338 = vsyncadd [#allocation9], %s337
          %s339 = sshll.u32 [#allocation10], 4
          %s340 = int_to_ptr.vmem [resolvable:$true] %s339
          %345 = dma.hbm_to_vmem [thread:$0]  %s7, 16384, %s340, [#allocation9], 256, 256, 16
        $region40: #{vae_decoder_forward.1} parent=11 // pred_fallthru
          _
        // Predicated region
        $region41: #{vae_decoder_forward.1} parent=11 // pred_check
          %p346 = pneg %p217
        $region42: #{vae_decoder_forward.1} parent=11 // pred_check_branch
          %348 = sbr.rel (%p346) target = $region44
        $region43: #{vae_decoder_forward.1} parent=11 // pred_region
          _
        $region44: #{vae_decoder_forward.1} parent=11 // pred_fallthru
          _
        // Predicated region
        $region45: #{vae_decoder_forward.1} parent=11 // pred_check
          %p349 = pneg %p238
        $region46: #{vae_decoder_forward.1} parent=11 // pred_check_branch
          %351 = sbr.rel (%p349) target = $region48
        $region47: #{vae_decoder_forward.1} parent=11 // pred_region
          %s353 = ssub.s32 16, 16
          %354 = vsyncadd [#allocation12], %s353
          %s356 = sshll.u32 [#allocation11], 4
          %s357 = int_to_ptr.vmem [resolvable:$true] %s356
          %359 = dma.hbm_to_vmem [thread:$0]  %s9, 16, %s357, [#allocation12]
        $region48: #{vae_decoder_forward.1} parent=11 // pred_fallthru
          _
      $region12: #{vae_decoder_forward.1} parent=5 // pred_fallthru
        _
      %p360 = scmp.lt.s32.totalorder %s23, 2
      // Predicated region
      $region49: #{vae_decoder_forward.1} parent=5 // pred_check
        %p361 = pneg %p360
      $region50: #{vae_decoder_forward.1} parent=5 // pred_check_branch
        %363 = sbr.rel (%p361) target = $region52
      $region51: #{vae_decoder_forward.1} parent=5 // pred_region
        // Predicated region
        $region53: #{vae_decoder_forward.1} parent=51 // pred_check
          %p364 = pneg %p43
        $region54: #{vae_decoder_forward.1} parent=51 // pred_check_branch
          %366 = sbr.rel (%p364) target = $region56
        $region55: #{vae_decoder_forward.1} parent=51 // pred_region
          %p367 = scmp.lt.s32.totalorder %s23, 1
          %s368 = scalar_select %p367, %s23, 1
          %s369 = smul.addr %s368, 4
          %s370 = smul.addr %s369, 8
          %s371 = scalar_lea.vmem %s0, %s370
        $region56: #{vae_decoder_forward.1} parent=51 // pred_fallthru
          _
      $region52: #{vae_decoder_forward.1} parent=5 // pred_fallthru
        _
      %p372 = scmp.le.s32.totalorder 1, %s23
      %p373 = scmp.lt.s32.totalorder %s23, 3
      %p374 = pnand %p372, %p373
      %p375 = pneg %p374
      // Predicated region
      $region57: #{vae_decoder_forward.1} parent=5 // pred_check
        _
      $region58: #{vae_decoder_forward.1} parent=5 // pred_check_branch
        %377 = sbr.rel (%p374) target = $region60
      $region59: #{vae_decoder_forward.1} parent=5 // pred_region
        %s378 = ssub.s32 %s23, 1
        // Predicated region
        $region61: #{vae_decoder_forward.1} parent=59 // pred_check
          %p379 = pneg %p70
        $region62: #{vae_decoder_forward.1} parent=59 // pred_check_branch
          %381 = sbr.rel (%p379) target = $region64
        $region63: #{vae_decoder_forward.1} parent=59 // pred_region
          %382 = dma.done [#allocation3], 131072
        $region64: #{vae_decoder_forward.1} parent=59 // pred_fallthru
          _
        // Predicated region
        $region65: #{vae_decoder_forward.1} parent=59 // pred_check
          %p383 = pneg %p112
        $region66: #{vae_decoder_forward.1} parent=59 // pred_check_branch
          %385 = sbr.rel (%p383) target = $region68
        $region67: #{vae_decoder_forward.1} parent=59 // pred_region
          %386 = dma.done [#allocation6], 64
        $region68: #{vae_decoder_forward.1} parent=59 // pred_fallthru
          _
        // Predicated region
        $region69: #{vae_decoder_forward.1} parent=59 // pred_check
          %p387 = pneg %p133
        $region70: #{vae_decoder_forward.1} parent=59 // pred_check_branch
          %389 = sbr.rel (%p387) target = $region72
        $region71: #{vae_decoder_forward.1} parent=59 // pred_region
          %390 = dma.done [#allocation6], 131072
        $region72: #{vae_decoder_forward.1} parent=59 // pred_fallthru
          _
        // Predicated region
        $region73: #{vae_decoder_forward.1} parent=59 // pred_check
          %p391 = pneg %p175
        $region74: #{vae_decoder_forward.1} parent=59 // pred_check_branch
          %393 = sbr.rel (%p391) target = $region76
        $region75: #{vae_decoder_forward.1} parent=59 // pred_region
          %394 = dma.done [#allocation9], 64
        $region76: #{vae_decoder_forward.1} parent=59 // pred_fallthru
          _
        // Predicated region
        $region77: #{vae_decoder_forward.1} parent=59 // pred_check
          %p395 = pneg %p196
        $region78: #{vae_decoder_forward.1} parent=59 // pred_check_branch
          %397 = sbr.rel (%p395) target = $region80
        $region79: #{vae_decoder_forward.1} parent=59 // pred_region
          %398 = dma.done [#allocation9], 16384
        $region80: #{vae_decoder_forward.1} parent=59 // pred_fallthru
          _
        // Predicated region
        $region81: #{vae_decoder_forward.1} parent=59 // pred_check
          %p399 = pneg %p238
        $region82: #{vae_decoder_forward.1} parent=59 // pred_check_branch
          %401 = sbr.rel (%p399) target = $region84
        $region83: #{vae_decoder_forward.1} parent=59 // pred_region
          %402 = dma.done [#allocation12], 16
        $region84: #{vae_decoder_forward.1} parent=59 // pred_fallthru
          _
        %p403 = scmp.lt.s32.totalorder %s28, 1
        %s404 = scalar_select %p403, %s28, 1
        %s405 = smul.addr %s404, 4
        %s406 = smul.addr %s405, 8
        %s407 = scalar_lea.vmem %s0, %s406
        %p408 = pneg %p49
        %p409 = pneg %p46
        %p410 = pneg %p70
        %p411 = pneg %p67
        %p412 = pneg %p91
        %p413 = pneg %p88
        %p414 = pneg %p112
        %p415 = pneg %p109
        %p416 = pneg %p133
        %p417 = pneg %p130
        %p418 = pneg %p154
        %p419 = pneg %p151
        %p420 = pneg %p175
        %p421 = pneg %p172
        %p422 = pneg %p196
        %p423 = pneg %p193
        %p424 = pneg %p217
        %p425 = pneg %p214
        %p426 = pneg %p238
        %p427 = pneg %p235
        %p428 = pneg %p264
        %p429 = pneg %p261
        %s430 = sand.u32 %s251, 1
        %s431 = scalar_lea.sflag [#allocation4], %s430
        %s432 = sand.u32 %s251, 1
        %s433 = smul.addr %s432, 64
        %s434 = scalar_lea.vmem [#allocation13], %s433
        %p435 = scmp.lt.s32.totalorder %s28, 1
        %s436 = scalar_select %p435, %s28, 1
        %s437 = smul.addr %s436, 4
        %s438 = smul.addr %s437, 8
        %s439 = scalar_lea.vmem %s0, %s438
        %s440 = smul.u32 8, %s28
        %v441 = vld [vmem:[%s439] sm:$0xff]
        %v442 = vld [vmem:[%s439 + $0x8] sm:$0xff]
        %v443 = vld [vmem:[%s439 + $0x10] sm:$0xff]
        %v444 = vld [vmem:[%s439 + $0x18] sm:$0xff]
        %v445 = vld [vmem:[#allocation2] sm:$0xff]
        %v446 = vld [vmem:[#allocation2 + $0x8] sm:$0xff]
        %v447 = vld [vmem:[#allocation2 + $0x10] sm:$0xff]
        %v448 = vld [vmem:[#allocation2 + $0x18] sm:$0xff]
        %v449 = vld [vmem:[#allocation2 + $0x20] sm:$0xff]
        %v450 = vld [vmem:[#allocation2 + $0x28] sm:$0xff]
        %v451 = vld [vmem:[#allocation2 + $0x30] sm:$0xff]
        %v452 = vld [vmem:[#allocation2 + $0x38] sm:$0xff]
        %v453 = vld [vmem:[#allocation2 + $0x40] sm:$0xff]
        %v454 = vld [vmem:[#allocation2 + $0x48] sm:$0xff]
        %v455 = vld [vmem:[#allocation2 + $0x50] sm:$0xff]
        %v456 = vld [vmem:[#allocation2 + $0x58] sm:$0xff]
        %v457 = vld [vmem:[#allocation2 + $0x60] sm:$0xff]
        %v458 = vld [vmem:[#allocation2 + $0x68] sm:$0xff]
        %v459 = vld [vmem:[#allocation2 + $0x70] sm:$0xff]
        %v460 = vld [vmem:[#allocation2 + $0x78] sm:$0xff]
        %v461 = vld [vmem:[#allocation2 + $0x80] sm:$0xff]
        %v462 = vld [vmem:[#allocation2 + $0x88] sm:$0xff]
        %v463 = vld [vmem:[#allocation2 + $0x90] sm:$0xff]
        %v464 = vld [vmem:[#allocation2 + $0x98] sm:$0xff]
        %v465 = vld [vmem:[#allocation2 + $0xa0] sm:$0xff]
        %v466 = vld [vmem:[#allocation2 + $0xa8] sm:$0xff]
        %v467 = vld [vmem:[#allocation2 + $0xb0] sm:$0xff]
        %v468 = vld [vmem:[#allocation2 + $0xb8] sm:$0xff]
        %v469 = vld [vmem:[#allocation2 + $0xc0] sm:$0xff]
        %v470 = vld [vmem:[#allocation2 + $0xc8] sm:$0xff]
        %v471 = vld [vmem:[#allocation2 + $0xd0] sm:$0xff]
        %v472 = vld [vmem:[#allocation2 + $0xd8] sm:$0xff]
        %v473 = vld [vmem:[#allocation2 + $0xe0] sm:$0xff]
        %v474 = vld [vmem:[#allocation2 + $0xe8] sm:$0xff]
        %v475 = vld [vmem:[#allocation2 + $0xf0] sm:$0xff]
        %v476 = vld [vmem:[#allocation2 + $0xf8] sm:$0xff]
        %v477 = vld [vmem:[#allocation2 + $0x100] sm:$0xff]
        %v478 = vld [vmem:[#allocation2 + $0x108] sm:$0xff]
        %v479 = vld [vmem:[#allocation2 + $0x110] sm:$0xff]
        %v480 = vld [vmem:[#allocation2 + $0x118] sm:$0xff]
        %v481 = vld [vmem:[#allocation2 + $0x120] sm:$0xff]
        %v482 = vld [vmem:[#allocation2 + $0x128] sm:$0xff]
        %v483 = vld [vmem:[#allocation2 + $0x130] sm:$0xff]
        %v484 = vld [vmem:[#allocation2 + $0x138] sm:$0xff]
        %v485 = vld [vmem:[#allocation2 + $0x140] sm:$0xff]
        %v486 = vld [vmem:[#allocation2 + $0x148] sm:$0xff]
        %v487 = vld [vmem:[#allocation2 + $0x150] sm:$0xff]
        %v488 = vld [vmem:[#allocation2 + $0x158] sm:$0xff]
        %v489 = vld [vmem:[#allocation2 + $0x160] sm:$0xff]
        %v490 = vld [vmem:[#allocation2 + $0x168] sm:$0xff]
        %v491 = vld [vmem:[#allocation2 + $0x170] sm:$0xff]
        %v492 = vld [vmem:[#allocation2 + $0x178] sm:$0xff]
        %v493 = vld [vmem:[#allocation2 + $0x180] sm:$0xff]
        %v494 = vld [vmem:[#allocation2 + $0x188] sm:$0xff]
        %v495 = vld [vmem:[#allocation2 + $0x190] sm:$0xff]
        %v496 = vld [vmem:[#allocation2 + $0x198] sm:$0xff]
        %v497 = vld [vmem:[#allocation2 + $0x1a0] sm:$0xff]
        %v498 = vld [vmem:[#allocation2 + $0x1a8] sm:$0xff]
        %v499 = vld [vmem:[#allocation2 + $0x1b0] sm:$0xff]
        %v500 = vld [vmem:[#allocation2 + $0x1b8] sm:$0xff]
        %v501 = vld [vmem:[#allocation2 + $0x1c0] sm:$0xff]
        %v502 = vld [vmem:[#allocation2 + $0x1c8] sm:$0xff]
        %v503 = vld [vmem:[#allocation2 + $0x1d0] sm:$0xff]
        %v504 = vld [vmem:[#allocation2 + $0x1d8] sm:$0xff]
        %v505 = vld [vmem:[#allocation2 + $0x1e0] sm:$0xff]
        %v506 = vld [vmem:[#allocation2 + $0x1e8] sm:$0xff]
        %v507 = vld [vmem:[#allocation2 + $0x1f0] sm:$0xff]
        %v508 = vld [vmem:[#allocation2 + $0x1f8] sm:$0xff]
        %v509 = vld [vmem:[#allocation2 + $0x200] sm:$0xff]
        %v510 = vld [vmem:[#allocation2 + $0x208] sm:$0xff]
        %v511 = vld [vmem:[#allocation2 + $0x210] sm:$0xff]
        %v512 = vld [vmem:[#allocation2 + $0x218] sm:$0xff]
        %v513 = vld [vmem:[#allocation2 + $0x220] sm:$0xff]
        %v514 = vld [vmem:[#allocation2 + $0x228] sm:$0xff]
        %v515 = vld [vmem:[#allocation2 + $0x230] sm:$0xff]
        %v516 = vld [vmem:[#allocation2 + $0x238] sm:$0xff]
        %v517 = vld [vmem:[#allocation2 + $0x240] sm:$0xff]
        %v518 = vld [vmem:[#allocation2 + $0x248] sm:$0xff]
        %v519 = vld [vmem:[#allocation2 + $0x250] sm:$0xff]
        %v520 = vld [vmem:[#allocation2 + $0x258] sm:$0xff]
        %v521 = vld [vmem:[#allocation2 + $0x260] sm:$0xff]
        %v522 = vld [vmem:[#allocation2 + $0x268] sm:$0xff]
        %v523 = vld [vmem:[#allocation2 + $0x270] sm:$0xff]
        %v524 = vld [vmem:[#allocation2 + $0x278] sm:$0xff]
        %v525 = vld [vmem:[#allocation2 + $0x280] sm:$0xff]
        %v526 = vld [vmem:[#allocation2 + $0x288] sm:$0xff]
        %v527 = vld [vmem:[#allocation2 + $0x290] sm:$0xff]
        %v528 = vld [vmem:[#allocation2 + $0x298] sm:$0xff]
        %v529 = vld [vmem:[#allocation2 + $0x2a0] sm:$0xff]
        %v530 = vld [vmem:[#allocation2 + $0x2a8] sm:$0xff]
        %v531 = vld [vmem:[#allocation2 + $0x2b0] sm:$0xff]
        %v532 = vld [vmem:[#allocation2 + $0x2b8] sm:$0xff]
        %v533 = vld [vmem:[#allocation2 + $0x2c0] sm:$0xff]
        %v534 = vld [vmem:[#allocation2 + $0x2c8] sm:$0xff]
        %v535 = vld [vmem:[#allocation2 + $0x2d0] sm:$0xff]
        %v536 = vld [vmem:[#allocation2 + $0x2d8] sm:$0xff]
        %v537 = vld [vmem:[#allocation2 + $0x2e0] sm:$0xff]
        %v538 = vld [vmem:[#allocation2 + $0x2e8] sm:$0xff]
        %v539 = vld [vmem:[#allocation2 + $0x2f0] sm:$0xff]
        %v540 = vld [vmem:[#allocation2 + $0x2f8] sm:$0xff]
        %v541 = vld [vmem:[#allocation2 + $0x300] sm:$0xff]
        %v542 = vld [vmem:[#allocation2 + $0x308] sm:$0xff]
        %v543 = vld [vmem:[#allocation2 + $0x310] sm:$0xff]
        %v544 = vld [vmem:[#allocation2 + $0x318] sm:$0xff]
        %v545 = vld [vmem:[#allocation2 + $0x320] sm:$0xff]
        %v546 = vld [vmem:[#allocation2 + $0x328] sm:$0xff]
        %v547 = vld [vmem:[#allocation2 + $0x330] sm:$0xff]
        %v548 = vld [vmem:[#allocation2 + $0x338] sm:$0xff]
        %v549 = vld [vmem:[#allocation2 + $0x340] sm:$0xff]
        %v550 = vld [vmem:[#allocation2 + $0x348] sm:$0xff]
        %v551 = vld [vmem:[#allocation2 + $0x350] sm:$0xff]
        %v552 = vld [vmem:[#allocation2 + $0x358] sm:$0xff]
        %v553 = vld [vmem:[#allocation2 + $0x360] sm:$0xff]
        %v554 = vld [vmem:[#allocation2 + $0x368] sm:$0xff]
        %v555 = vld [vmem:[#allocation2 + $0x370] sm:$0xff]
        %v556 = vld [vmem:[#allocation2 + $0x378] sm:$0xff]
        %v557 = vld [vmem:[#allocation2 + $0x380] sm:$0xff]
        %v558 = vld [vmem:[#allocation2 + $0x388] sm:$0xff]
        %v559 = vld [vmem:[#allocation2 + $0x390] sm:$0xff]
        %v560 = vld [vmem:[#allocation2 + $0x398] sm:$0xff]
        %v561 = vld [vmem:[#allocation2 + $0x3a0] sm:$0xff]
        %v562 = vld [vmem:[#allocation2 + $0x3a8] sm:$0xff]
        %v563 = vld [vmem:[#allocation2 + $0x3b0] sm:$0xff]
        %v564 = vld [vmem:[#allocation2 + $0x3b8] sm:$0xff]
        %v565 = vld [vmem:[#allocation2 + $0x3c0] sm:$0xff]
        %v566 = vld [vmem:[#allocation2 + $0x3c8] sm:$0xff]
        %v567 = vld [vmem:[#allocation2 + $0x3d0] sm:$0xff]
        %v568 = vld [vmem:[#allocation2 + $0x3d8] sm:$0xff]
        %v569 = vld [vmem:[#allocation2 + $0x3e0] sm:$0xff]
        %v570 = vld [vmem:[#allocation2 + $0x3e8] sm:$0xff]
        %v571 = vld [vmem:[#allocation2 + $0x3f0] sm:$0xff]
        %v572 = vld [vmem:[#allocation2 + $0x3f8] sm:$0xff]
        %v573 = vld [vmem:[#allocation2 + $0x400] sm:$0xff]
        %v574 = vld [vmem:[#allocation2 + $0x408] sm:$0xff]
        %v575 = vld [vmem:[#allocation2 + $0x410] sm:$0xff]
        %v576 = vld [vmem:[#allocation2 + $0x418] sm:$0xff]
        %v577 = vld [vmem:[#allocation2 + $0x420] sm:$0xff]
        %v578 = vld [vmem:[#allocation2 + $0x428] sm:$0xff]
        %v579 = vld [vmem:[#allocation2 + $0x430] sm:$0xff]
        %v580 = vld [vmem:[#allocation2 + $0x438] sm:$0xff]
        %v581 = vld [vmem:[#allocation2 + $0x440] sm:$0xff]
        %v582 = vld [vmem:[#allocation2 + $0x448] sm:$0xff]
        %v583 = vld [vmem:[#allocation2 + $0x450] sm:$0xff]
        %v584 = vld [vmem:[#allocation2 + $0x458] sm:$0xff]
        %v585 = vld [vmem:[#allocation2 + $0x460] sm:$0xff]
        %v586 = vld [vmem:[#allocation2 + $0x468] sm:$0xff]
        %v587 = vld [vmem:[#allocation2 + $0x470] sm:$0xff]
        %v588 = vld [vmem:[#allocation2 + $0x478] sm:$0xff]
        %v589 = vld [vmem:[#allocation2 + $0x480] sm:$0xff]
        %v590 = vld [vmem:[#allocation2 + $0x488] sm:$0xff]
        %v591 = vld [vmem:[#allocation2 + $0x490] sm:$0xff]
        %v592 = vld [vmem:[#allocation2 + $0x498] sm:$0xff]
        %v593 = vld [vmem:[#allocation2 + $0x4a0] sm:$0xff]
        %v594 = vld [vmem:[#allocation2 + $0x4a8] sm:$0xff]
        %v595 = vld [vmem:[#allocation2 + $0x4b0] sm:$0xff]
        %v596 = vld [vmem:[#allocation2 + $0x4b8] sm:$0xff]
        %v597 = vld [vmem:[#allocation2 + $0x4c0] sm:$0xff]
        %v598 = vld [vmem:[#allocation2 + $0x4c8] sm:$0xff]
        %v599 = vld [vmem:[#allocation2 + $0x4d0] sm:$0xff]
        %v600 = vld [vmem:[#allocation2 + $0x4d8] sm:$0xff]
        %v601 = vld [vmem:[#allocation2 + $0x4e0] sm:$0xff]
        %v602 = vld [vmem:[#allocation2 + $0x4e8] sm:$0xff]
        %v603 = vld [vmem:[#allocation2 + $0x4f0] sm:$0xff]
        %v604 = vld [vmem:[#allocation2 + $0x4f8] sm:$0xff]
        %v605 = vld [vmem:[#allocation2 + $0x500] sm:$0xff]
        %v606 = vld [vmem:[#allocation2 + $0x508] sm:$0xff]
        %v607 = vld [vmem:[#allocation2 + $0x510] sm:$0xff]
        %v608 = vld [vmem:[#allocation2 + $0x518] sm:$0xff]
        %v609 = vld [vmem:[#allocation2 + $0x520] sm:$0xff]
        %v610 = vld [vmem:[#allocation2 + $0x528] sm:$0xff]
        %v611 = vld [vmem:[#allocation2 + $0x530] sm:$0xff]
        %v612 = vld [vmem:[#allocation2 + $0x538] sm:$0xff]
        %v613 = vld [vmem:[#allocation2 + $0x540] sm:$0xff]
        %v614 = vld [vmem:[#allocation2 + $0x548] sm:$0xff]
        %v615 = vld [vmem:[#allocation2 + $0x550] sm:$0xff]
        %v616 = vld [vmem:[#allocation2 + $0x558] sm:$0xff]
        %v617 = vld [vmem:[#allocation2 + $0x560] sm:$0xff]
        %v618 = vld [vmem:[#allocation2 + $0x568] sm:$0xff]
        %v619 = vld [vmem:[#allocation2 + $0x570] sm:$0xff]
        %v620 = vld [vmem:[#allocation2 + $0x578] sm:$0xff]
        %v621 = vld [vmem:[#allocation2 + $0x580] sm:$0xff]
        %v622 = vld [vmem:[#allocation2 + $0x588] sm:$0xff]
        %v623 = vld [vmem:[#allocation2 + $0x590] sm:$0xff]
        %v624 = vld [vmem:[#allocation2 + $0x598] sm:$0xff]
        %v625 = vld [vmem:[#allocation2 + $0x5a0] sm:$0xff]
        %v626 = vld [vmem:[#allocation2 + $0x5a8] sm:$0xff]
        %v627 = vld [vmem:[#allocation2 + $0x5b0] sm:$0xff]
        %v628 = vld [vmem:[#allocation2 + $0x5b8] sm:$0xff]
        %v629 = vld [vmem:[#allocation2 + $0x5c0] sm:$0xff]
        %v630 = vld [vmem:[#allocation2 + $0x5c8] sm:$0xff]
        %v631 = vld [vmem:[#allocation2 + $0x5d0] sm:$0xff]
        %v632 = vld [vmem:[#allocation2 + $0x5d8] sm:$0xff]
        %v633 = vld [vmem:[#allocation2 + $0x5e0] sm:$0xff]
        %v634 = vld [vmem:[#allocation2 + $0x5e8] sm:$0xff]
        %v635 = vld [vmem:[#allocation2 + $0x5f0] sm:$0xff]
        %v636 = vld [vmem:[#allocation2 + $0x5f8] sm:$0xff]
        %v637 = vld [vmem:[#allocation2 + $0x600] sm:$0xff]
        %v638 = vld [vmem:[#allocation2 + $0x608] sm:$0xff]
        %v639 = vld [vmem:[#allocation2 + $0x610] sm:$0xff]
        %v640 = vld [vmem:[#allocation2 + $0x618] sm:$0xff]
        %v641 = vld [vmem:[#allocation2 + $0x620] sm:$0xff]
        %v642 = vld [vmem:[#allocation2 + $0x628] sm:$0xff]
        %v643 = vld [vmem:[#allocation2 + $0x630] sm:$0xff]
        %v644 = vld [vmem:[#allocation2 + $0x638] sm:$0xff]
        %v645 = vld [vmem:[#allocation2 + $0x640] sm:$0xff]
        %v646 = vld [vmem:[#allocation2 + $0x648] sm:$0xff]
        %v647 = vld [vmem:[#allocation2 + $0x650] sm:$0xff]
        %v648 = vld [vmem:[#allocation2 + $0x658] sm:$0xff]
        %v649 = vld [vmem:[#allocation2 + $0x660] sm:$0xff]
        %v650 = vld [vmem:[#allocation2 + $0x668] sm:$0xff]
        %v651 = vld [vmem:[#allocation2 + $0x670] sm:$0xff]
        %v652 = vld [vmem:[#allocation2 + $0x678] sm:$0xff]
        %v653 = vld [vmem:[#allocation2 + $0x680] sm:$0xff]
        %v654 = vld [vmem:[#allocation2 + $0x688] sm:$0xff]
        %v655 = vld [vmem:[#allocation2 + $0x690] sm:$0xff]
        %v656 = vld [vmem:[#allocation2 + $0x698] sm:$0xff]
        %v657 = vld [vmem:[#allocation2 + $0x6a0] sm:$0xff]
        %v658 = vld [vmem:[#allocation2 + $0x6a8] sm:$0xff]
        %v659 = vld [vmem:[#allocation2 + $0x6b0] sm:$0xff]
        %v660 = vld [vmem:[#allocation2 + $0x6b8] sm:$0xff]
        %v661 = vld [vmem:[#allocation2 + $0x6c0] sm:$0xff]
        %v662 = vld [vmem:[#allocation2 + $0x6c8] sm:$0xff]
        %v663 = vld [vmem:[#allocation2 + $0x6d0] sm:$0xff]
        %v664 = vld [vmem:[#allocation2 + $0x6d8] sm:$0xff]
        %v665 = vld [vmem:[#allocation2 + $0x6e0] sm:$0xff]
        %v666 = vld [vmem:[#allocation2 + $0x6e8] sm:$0xff]
        %v667 = vld [vmem:[#allocation2 + $0x6f0] sm:$0xff]
        %v668 = vld [vmem:[#allocation2 + $0x6f8] sm:$0xff]
        %v669 = vld [vmem:[#allocation2 + $0x700] sm:$0xff]
        %v670 = vld [vmem:[#allocation2 + $0x708] sm:$0xff]
        %v671 = vld [vmem:[#allocation2 + $0x710] sm:$0xff]
        %v672 = vld [vmem:[#allocation2 + $0x718] sm:$0xff]
        %v673 = vld [vmem:[#allocation2 + $0x720] sm:$0xff]
        %v674 = vld [vmem:[#allocation2 + $0x728] sm:$0xff]
        %v675 = vld [vmem:[#allocation2 + $0x730] sm:$0xff]
        %v676 = vld [vmem:[#allocation2 + $0x738] sm:$0xff]
        %v677 = vld [vmem:[#allocation2 + $0x740] sm:$0xff]
        %v678 = vld [vmem:[#allocation2 + $0x748] sm:$0xff]
        %v679 = vld [vmem:[#allocation2 + $0x750] sm:$0xff]
        %v680 = vld [vmem:[#allocation2 + $0x758] sm:$0xff]
        %v681 = vld [vmem:[#allocation2 + $0x760] sm:$0xff]
        %v682 = vld [vmem:[#allocation2 + $0x768] sm:$0xff]
        %v683 = vld [vmem:[#allocation2 + $0x770] sm:$0xff]
        %v684 = vld [vmem:[#allocation2 + $0x778] sm:$0xff]
        %v685 = vld [vmem:[#allocation2 + $0x780] sm:$0xff]
        %v686 = vld [vmem:[#allocation2 + $0x788] sm:$0xff]
        %v687 = vld [vmem:[#allocation2 + $0x790] sm:$0xff]
        %v688 = vld [vmem:[#allocation2 + $0x798] sm:$0xff]
        %v689 = vld [vmem:[#allocation2 + $0x7a0] sm:$0xff]
        %v690 = vld [vmem:[#allocation2 + $0x7a8] sm:$0xff]
        %v691 = vld [vmem:[#allocation2 + $0x7b0] sm:$0xff]
        %v692 = vld [vmem:[#allocation2 + $0x7b8] sm:$0xff]
        %v693 = vld [vmem:[#allocation2 + $0x7c0] sm:$0xff]
        %v694 = vld [vmem:[#allocation2 + $0x7c8] sm:$0xff]
        %v695 = vld [vmem:[#allocation2 + $0x7d0] sm:$0xff]
        %v696 = vld [vmem:[#allocation2 + $0x7d8] sm:$0xff]
        %v697 = vld [vmem:[#allocation2 + $0x7e0] sm:$0xff]
        %v698 = vld [vmem:[#allocation2 + $0x7e8] sm:$0xff]
        %v699 = vld [vmem:[#allocation2 + $0x7f0] sm:$0xff]
        %v700 = vld [vmem:[#allocation2 + $0x7f8] sm:$0xff]
        %v701 = vld [vmem:[#allocation2 + $0x800] sm:$0xff]
        %v702 = vld [vmem:[#allocation2 + $0x808] sm:$0xff]
        %v703 = vld [vmem:[#allocation2 + $0x810] sm:$0xff]
        %v704 = vld [vmem:[#allocation2 + $0x818] sm:$0xff]
        %v705 = vld [vmem:[#allocation2 + $0x820] sm:$0xff]
        %v706 = vld [vmem:[#allocation2 + $0x828] sm:$0xff]
        %v707 = vld [vmem:[#allocation2 + $0x830] sm:$0xff]
        %v708 = vld [vmem:[#allocation2 + $0x838] sm:$0xff]
        %v709 = vld [vmem:[#allocation2 + $0x840] sm:$0xff]
        %v710 = vld [vmem:[#allocation2 + $0x848] sm:$0xff]
        %v711 = vld [vmem:[#allocation2 + $0x850] sm:$0xff]
        %v712 = vld [vmem:[#allocation2 + $0x858] sm:$0xff]
        %v713 = vld [vmem:[#allocation2 + $0x860] sm:$0xff]
        %v714 = vld [vmem:[#allocation2 + $0x868] sm:$0xff]
        %v715 = vld [vmem:[#allocation2 + $0x870] sm:$0xff]
        %v716 = vld [vmem:[#allocation2 + $0x878] sm:$0xff]
        %v717 = vld [vmem:[#allocation2 + $0x880] sm:$0xff]
        %v718 = vld [vmem:[#allocation2 + $0x888] sm:$0xff]
        %v719 = vld [vmem:[#allocation2 + $0x890] sm:$0xff]
        %v720 = vld [vmem:[#allocation2 + $0x898] sm:$0xff]
        %v721 = vld [vmem:[#allocation2 + $0x8a0] sm:$0xff]
        %v722 = vld [vmem:[#allocation2 + $0x8a8] sm:$0xff]
        %v723 = vld [vmem:[#allocation2 + $0x8b0] sm:$0xff]
        %v724 = vld [vmem:[#allocation2 + $0x8b8] sm:$0xff]
        %v725 = vld [vmem:[#allocation2 + $0x8c0] sm:$0xff]
        %v726 = vld [vmem:[#allocation2 + $0x8c8] sm:$0xff]
        %v727 = vld [vmem:[#allocation2 + $0x8d0] sm:$0xff]
        %v728 = vld [vmem:[#allocation2 + $0x8d8] sm:$0xff]
        %v729 = vld [vmem:[#allocation2 + $0x8e0] sm:$0xff]
        %v730 = vld [vmem:[#allocation2 + $0x8e8] sm:$0xff]
        %v731 = vld [vmem:[#allocation2 + $0x8f0] sm:$0xff]
        %v732 = vld [vmem:[#allocation2 + $0x8f8] sm:$0xff]
        %v733 = vld [vmem:[#allocation2 + $0x900] sm:$0xff]
        %v734 = vld [vmem:[#allocation2 + $0x908] sm:$0xff]
        %v735 = vld [vmem:[#allocation2 + $0x910] sm:$0xff]
        %v736 = vld [vmem:[#allocation2 + $0x918] sm:$0xff]
        %v737 = vld [vmem:[#allocation2 + $0x920] sm:$0xff]
        %v738 = vld [vmem:[#allocation2 + $0x928] sm:$0xff]
        %v739 = vld [vmem:[#allocation2 + $0x930] sm:$0xff]
        %v740 = vld [vmem:[#allocation2 + $0x938] sm:$0xff]
        %v741 = vld [vmem:[#allocation2 + $0x940] sm:$0xff]
        %v742 = vld [vmem:[#allocation2 + $0x948] sm:$0xff]
        %v743 = vld [vmem:[#allocation2 + $0x950] sm:$0xff]
        %v744 = vld [vmem:[#allocation2 + $0x958] sm:$0xff]
        %v745 = vld [vmem:[#allocation2 + $0x960] sm:$0xff]
        %v746 = vld [vmem:[#allocation2 + $0x968] sm:$0xff]
        %v747 = vld [vmem:[#allocation2 + $0x970] sm:$0xff]
        %v748 = vld [vmem:[#allocation2 + $0x978] sm:$0xff]
        %v749 = vld [vmem:[#allocation2 + $0x980] sm:$0xff]
        %v750 = vld [vmem:[#allocation2 + $0x988] sm:$0xff]
        %v751 = vld [vmem:[#allocation2 + $0x990] sm:$0xff]
        %v752 = vld [vmem:[#allocation2 + $0x998] sm:$0xff]
        %v753 = vld [vmem:[#allocation2 + $0x9a0] sm:$0xff]
        %v754 = vld [vmem:[#allocation2 + $0x9a8] sm:$0xff]
        %v755 = vld [vmem:[#allocation2 + $0x9b0] sm:$0xff]
        %v756 = vld [vmem:[#allocation2 + $0x9b8] sm:$0xff]
        %v757 = vld [vmem:[#allocation2 + $0x9c0] sm:$0xff]
        %v758 = vld [vmem:[#allocation2 + $0x9c8] sm:$0xff]
        %v759 = vld [vmem:[#allocation2 + $0x9d0] sm:$0xff]
        %v760 = vld [vmem:[#allocation2 + $0x9d8] sm:$0xff]
        %v761 = vld [vmem:[#allocation2 + $0x9e0] sm:$0xff]
        %v762 = vld [vmem:[#allocation2 + $0x9e8] sm:$0xff]
        %v763 = vld [vmem:[#allocation2 + $0x9f0] sm:$0xff]
        %v764 = vld [vmem:[#allocation2 + $0x9f8] sm:$0xff]
        %v765 = vld [vmem:[#allocation2 + $0xa00] sm:$0xff]
        %v766 = vld [vmem:[#allocation2 + $0xa08] sm:$0xff]
        %v767 = vld [vmem:[#allocation2 + $0xa10] sm:$0xff]
        %v768 = vld [vmem:[#allocation2 + $0xa18] sm:$0xff]
        %v769 = vld [vmem:[#allocation2 + $0xa20] sm:$0xff]
        %v770 = vld [vmem:[#allocation2 + $0xa28] sm:$0xff]
        %v771 = vld [vmem:[#allocation2 + $0xa30] sm:$0xff]
        %v772 = vld [vmem:[#allocation2 + $0xa38] sm:$0xff]
        %v773 = vld [vmem:[#allocation2 + $0xa40] sm:$0xff]
        %v774 = vld [vmem:[#allocation2 + $0xa48] sm:$0xff]
        %v775 = vld [vmem:[#allocation2 + $0xa50] sm:$0xff]
        %v776 = vld [vmem:[#allocation2 + $0xa58] sm:$0xff]
        %v777 = vld [vmem:[#allocation2 + $0xa60] sm:$0xff]
        %v778 = vld [vmem:[#allocation2 + $0xa68] sm:$0xff]
        %v779 = vld [vmem:[#allocation2 + $0xa70] sm:$0xff]
        %v780 = vld [vmem:[#allocation2 + $0xa78] sm:$0xff]
        %v781 = vld [vmem:[#allocation2 + $0xa80] sm:$0xff]
        %v782 = vld [vmem:[#allocation2 + $0xa88] sm:$0xff]
        %v783 = vld [vmem:[#allocation2 + $0xa90] sm:$0xff]
        %v784 = vld [vmem:[#allocation2 + $0xa98] sm:$0xff]
        %v785 = vld [vmem:[#allocation2 + $0xaa0] sm:$0xff]
        %v786 = vld [vmem:[#allocation2 + $0xaa8] sm:$0xff]
        %v787 = vld [vmem:[#allocation2 + $0xab0] sm:$0xff]
        %v788 = vld [vmem:[#allocation2 + $0xab8] sm:$0xff]
        %v789 = vld [vmem:[#allocation2 + $0xac0] sm:$0xff]
        %v790 = vld [vmem:[#allocation2 + $0xac8] sm:$0xff]
        %v791 = vld [vmem:[#allocation2 + $0xad0] sm:$0xff]
        %v792 = vld [vmem:[#allocation2 + $0xad8] sm:$0xff]
        %v793 = vld [vmem:[#allocation2 + $0xae0] sm:$0xff]
        %v794 = vld [vmem:[#allocation2 + $0xae8] sm:$0xff]
        %v795 = vld [vmem:[#allocation2 + $0xaf0] sm:$0xff]
        %v796 = vld [vmem:[#allocation2 + $0xaf8] sm:$0xff]
        %v797 = vld [vmem:[#allocation2 + $0xb00] sm:$0xff]
        %v798 = vld [vmem:[#allocation2 + $0xb08] sm:$0xff]
        %v799 = vld [vmem:[#allocation2 + $0xb10] sm:$0xff]
        %v800 = vld [vmem:[#allocation2 + $0xb18] sm:$0xff]
        %v801 = vld [vmem:[#allocation2 + $0xb20] sm:$0xff]
        %v802 = vld [vmem:[#allocation2 + $0xb28] sm:$0xff]
        %v803 = vld [vmem:[#allocation2 + $0xb30] sm:$0xff]
        %v804 = vld [vmem:[#allocation2 + $0xb38] sm:$0xff]
        %v805 = vld [vmem:[#allocation2 + $0xb40] sm:$0xff]
        %v806 = vld [vmem:[#allocation2 + $0xb48] sm:$0xff]
        %v807 = vld [vmem:[#allocation2 + $0xb50] sm:$0xff]
        %v808 = vld [vmem:[#allocation2 + $0xb58] sm:$0xff]
        %v809 = vld [vmem:[#allocation2 + $0xb60] sm:$0xff]
        %v810 = vld [vmem:[#allocation2 + $0xb68] sm:$0xff]
        %v811 = vld [vmem:[#allocation2 + $0xb70] sm:$0xff]
        %v812 = vld [vmem:[#allocation2 + $0xb78] sm:$0xff]
        %v813 = vld [vmem:[#allocation2 + $0xb80] sm:$0xff]
        %v814 = vld [vmem:[#allocation2 + $0xb88] sm:$0xff]
        %v815 = vld [vmem:[#allocation2 + $0xb90] sm:$0xff]
        %v816 = vld [vmem:[#allocation2 + $0xb98] sm:$0xff]
        %v817 = vld [vmem:[#allocation2 + $0xba0] sm:$0xff]
        %v818 = vld [vmem:[#allocation2 + $0xba8] sm:$0xff]
        %v819 = vld [vmem:[#allocation2 + $0xbb0] sm:$0xff]
        %v820 = vld [vmem:[#allocation2 + $0xbb8] sm:$0xff]
        %v821 = vld [vmem:[#allocation2 + $0xbc0] sm:$0xff]
        %v822 = vld [vmem:[#allocation2 + $0xbc8] sm:$0xff]
        %v823 = vld [vmem:[#allocation2 + $0xbd0] sm:$0xff]
        %v824 = vld [vmem:[#allocation2 + $0xbd8] sm:$0xff]
        %v825 = vld [vmem:[#allocation2 + $0xbe0] sm:$0xff]
        %v826 = vld [vmem:[#allocation2 + $0xbe8] sm:$0xff]
        %v827 = vld [vmem:[#allocation2 + $0xbf0] sm:$0xff]
        %v828 = vld [vmem:[#allocation2 + $0xbf8] sm:$0xff]
        %v829 = vld [vmem:[#allocation2 + $0xc00] sm:$0xff]
        %v830 = vld [vmem:[#allocation2 + $0xc08] sm:$0xff]
        %v831 = vld [vmem:[#allocation2 + $0xc10] sm:$0xff]
        %v832 = vld [vmem:[#allocation2 + $0xc18] sm:$0xff]
        %v833 = vld [vmem:[#allocation2 + $0xc20] sm:$0xff]
        %v834 = vld [vmem:[#allocation2 + $0xc28] sm:$0xff]
        %v835 = vld [vmem:[#allocation2 + $0xc30] sm:$0xff]
        %v836 = vld [vmem:[#allocation2 + $0xc38] sm:$0xff]
        %v837 = vld [vmem:[#allocation2 + $0xc40] sm:$0xff]
        %v838 = vld [vmem:[#allocation2 + $0xc48] sm:$0xff]
        %v839 = vld [vmem:[#allocation2 + $0xc50] sm:$0xff]
        %v840 = vld [vmem:[#allocation2 + $0xc58] sm:$0xff]
        %v841 = vld [vmem:[#allocation2 + $0xc60] sm:$0xff]
        %v842 = vld [vmem:[#allocation2 + $0xc68] sm:$0xff]
        %v843 = vld [vmem:[#allocation2 + $0xc70] sm:$0xff]
        %v844 = vld [vmem:[#allocation2 + $0xc78] sm:$0xff]
        %v845 = vld [vmem:[#allocation2 + $0xc80] sm:$0xff]
        %v846 = vld [vmem:[#allocation2 + $0xc88] sm:$0xff]
        %v847 = vld [vmem:[#allocation2 + $0xc90] sm:$0xff]
        %v848 = vld [vmem:[#allocation2 + $0xc98] sm:$0xff]
        %v849 = vld [vmem:[#allocation2 + $0xca0] sm:$0xff]
        %v850 = vld [vmem:[#allocation2 + $0xca8] sm:$0xff]
        %v851 = vld [vmem:[#allocation2 + $0xcb0] sm:$0xff]
        %v852 = vld [vmem:[#allocation2 + $0xcb8] sm:$0xff]
        %v853 = vld [vmem:[#allocation2 + $0xcc0] sm:$0xff]
        %v854 = vld [vmem:[#allocation2 + $0xcc8] sm:$0xff]
        %v855 = vld [vmem:[#allocation2 + $0xcd0] sm:$0xff]
        %v856 = vld [vmem:[#allocation2 + $0xcd8] sm:$0xff]
        %v857 = vld [vmem:[#allocation2 + $0xce0] sm:$0xff]
        %v858 = vld [vmem:[#allocation2 + $0xce8] sm:$0xff]
        %v859 = vld [vmem:[#allocation2 + $0xcf0] sm:$0xff]
        %v860 = vld [vmem:[#allocation2 + $0xcf8] sm:$0xff]
        %v861 = vld [vmem:[#allocation2 + $0xd00] sm:$0xff]
        %v862 = vld [vmem:[#allocation2 + $0xd08] sm:$0xff]
        %v863 = vld [vmem:[#allocation2 + $0xd10] sm:$0xff]
        %v864 = vld [vmem:[#allocation2 + $0xd18] sm:$0xff]
        %v865 = vld [vmem:[#allocation2 + $0xd20] sm:$0xff]
        %v866 = vld [vmem:[#allocation2 + $0xd28] sm:$0xff]
        %v867 = vld [vmem:[#allocation2 + $0xd30] sm:$0xff]
        %v868 = vld [vmem:[#allocation2 + $0xd38] sm:$0xff]
        %v869 = vld [vmem:[#allocation2 + $0xd40] sm:$0xff]
        %v870 = vld [vmem:[#allocation2 + $0xd48] sm:$0xff]
        %v871 = vld [vmem:[#allocation2 + $0xd50] sm:$0xff]
        %v872 = vld [vmem:[#allocation2 + $0xd58] sm:$0xff]
        %v873 = vld [vmem:[#allocation2 + $0xd60] sm:$0xff]
        %v874 = vld [vmem:[#allocation2 + $0xd68] sm:$0xff]
        %v875 = vld [vmem:[#allocation2 + $0xd70] sm:$0xff]
        %v876 = vld [vmem:[#allocation2 + $0xd78] sm:$0xff]
        %v877 = vld [vmem:[#allocation2 + $0xd80] sm:$0xff]
        %v878 = vld [vmem:[#allocation2 + $0xd88] sm:$0xff]
        %v879 = vld [vmem:[#allocation2 + $0xd90] sm:$0xff]
        %v880 = vld [vmem:[#allocation2 + $0xd98] sm:$0xff]
        %v881 = vld [vmem:[#allocation2 + $0xda0] sm:$0xff]
        %v882 = vld [vmem:[#allocation2 + $0xda8] sm:$0xff]
        %v883 = vld [vmem:[#allocation2 + $0xdb0] sm:$0xff]
        %v884 = vld [vmem:[#allocation2 + $0xdb8] sm:$0xff]
        %v885 = vld [vmem:[#allocation2 + $0xdc0] sm:$0xff]
        %v886 = vld [vmem:[#allocation2 + $0xdc8] sm:$0xff]
        %v887 = vld [vmem:[#allocation2 + $0xdd0] sm:$0xff]
        %v888 = vld [vmem:[#allocation2 + $0xdd8] sm:$0xff]
        %v889 = vld [vmem:[#allocation2 + $0xde0] sm:$0xff]
        %v890 = vld [vmem:[#allocation2 + $0xde8] sm:$0xff]
        %v891 = vld [vmem:[#allocation2 + $0xdf0] sm:$0xff]
        %v892 = vld [vmem:[#allocation2 + $0xdf8] sm:$0xff]
        %v893 = vld [vmem:[#allocation2 + $0xe00] sm:$0xff]
        %v894 = vld [vmem:[#allocation2 + $0xe08] sm:$0xff]
        %v895 = vld [vmem:[#allocation2 + $0xe10] sm:$0xff]
        %v896 = vld [vmem:[#allocation2 + $0xe18] sm:$0xff]
        %v897 = vld [vmem:[#allocation2 + $0xe20] sm:$0xff]
        %v898 = vld [vmem:[#allocation2 + $0xe28] sm:$0xff]
        %v899 = vld [vmem:[#allocation2 + $0xe30] sm:$0xff]
        %v900 = vld [vmem:[#allocation2 + $0xe38] sm:$0xff]
        %v901 = vld [vmem:[#allocation2 + $0xe40] sm:$0xff]
        %v902 = vld [vmem:[#allocation2 + $0xe48] sm:$0xff]
        %v903 = vld [vmem:[#allocation2 + $0xe50] sm:$0xff]
        %v904 = vld [vmem:[#allocation2 + $0xe58] sm:$0xff]
        %v905 = vld [vmem:[#allocation2 + $0xe60] sm:$0xff]
        %v906 = vld [vmem:[#allocation2 + $0xe68] sm:$0xff]
        %v907 = vld [vmem:[#allocation2 + $0xe70] sm:$0xff]
        %v908 = vld [vmem:[#allocation2 + $0xe78] sm:$0xff]
        %v909 = vld [vmem:[#allocation2 + $0xe80] sm:$0xff]
        %v910 = vld [vmem:[#allocation2 + $0xe88] sm:$0xff]
        %v911 = vld [vmem:[#allocation2 + $0xe90] sm:$0xff]
        %v912 = vld [vmem:[#allocation2 + $0xe98] sm:$0xff]
        %v913 = vld [vmem:[#allocation2 + $0xea0] sm:$0xff]
        %v914 = vld [vmem:[#allocation2 + $0xea8] sm:$0xff]
        %v915 = vld [vmem:[#allocation2 + $0xeb0] sm:$0xff]
        %v916 = vld [vmem:[#allocation2 + $0xeb8] sm:$0xff]
        %v917 = vld [vmem:[#allocation2 + $0xec0] sm:$0xff]
        %v918 = vld [vmem:[#allocation2 + $0xec8] sm:$0xff]
        %v919 = vld [vmem:[#allocation2 + $0xed0] sm:$0xff]
        %v920 = vld [vmem:[#allocation2 + $0xed8] sm:$0xff]
        %v921 = vld [vmem:[#allocation2 + $0xee0] sm:$0xff]
        %v922 = vld [vmem:[#allocation2 + $0xee8] sm:$0xff]
        %v923 = vld [vmem:[#allocation2 + $0xef0] sm:$0xff]
        %v924 = vld [vmem:[#allocation2 + $0xef8] sm:$0xff]
        %v925 = vld [vmem:[#allocation2 + $0xf00] sm:$0xff]
        %v926 = vld [vmem:[#allocation2 + $0xf08] sm:$0xff]
        %v927 = vld [vmem:[#allocation2 + $0xf10] sm:$0xff]
        %v928 = vld [vmem:[#allocation2 + $0xf18] sm:$0xff]
        %v929 = vld [vmem:[#allocation2 + $0xf20] sm:$0xff]
        %v930 = vld [vmem:[#allocation2 + $0xf28] sm:$0xff]
        %v931 = vld [vmem:[#allocation2 + $0xf30] sm:$0xff]
        %v932 = vld [vmem:[#allocation2 + $0xf38] sm:$0xff]
        %v933 = vld [vmem:[#allocation2 + $0xf40] sm:$0xff]
        %v934 = vld [vmem:[#allocation2 + $0xf48] sm:$0xff]
        %v935 = vld [vmem:[#allocation2 + $0xf50] sm:$0xff]
        %v936 = vld [vmem:[#allocation2 + $0xf58] sm:$0xff]
        %v937 = vld [vmem:[#allocation2 + $0xf60] sm:$0xff]
        %v938 = vld [vmem:[#allocation2 + $0xf68] sm:$0xff]
        %v939 = vld [vmem:[#allocation2 + $0xf70] sm:$0xff]
        %v940 = vld [vmem:[#allocation2 + $0xf78] sm:$0xff]
        %v941 = vld [vmem:[#allocation2 + $0xf80] sm:$0xff]
        %v942 = vld [vmem:[#allocation2 + $0xf88] sm:$0xff]
        %v943 = vld [vmem:[#allocation2 + $0xf90] sm:$0xff]
        %v944 = vld [vmem:[#allocation2 + $0xf98] sm:$0xff]
        %v945 = vld [vmem:[#allocation2 + $0xfa0] sm:$0xff]
        %v946 = vld [vmem:[#allocation2 + $0xfa8] sm:$0xff]
        %v947 = vld [vmem:[#allocation2 + $0xfb0] sm:$0xff]
        %v948 = vld [vmem:[#allocation2 + $0xfb8] sm:$0xff]
        %v949 = vld [vmem:[#allocation2 + $0xfc0] sm:$0xff]
        %v950 = vld [vmem:[#allocation2 + $0xfc8] sm:$0xff]
        %v951 = vld [vmem:[#allocation2 + $0xfd0] sm:$0xff]
        %v952 = vld [vmem:[#allocation2 + $0xfd8] sm:$0xff]
        %v953 = vld [vmem:[#allocation2 + $0xfe0] sm:$0xff]
        %v954 = vld [vmem:[#allocation2 + $0xfe8] sm:$0xff]
        %v955 = vld [vmem:[#allocation2 + $0xff0] sm:$0xff]
        %v956 = vld [vmem:[#allocation2 + $0xff8] sm:$0xff]
        %v957 = vld [vmem:[#allocation2 + $0x1000] sm:$0xff]
        %v958 = vld [vmem:[#allocation2 + $0x1008] sm:$0xff]
        %v959 = vld [vmem:[#allocation2 + $0x1010] sm:$0xff]
        %v960 = vld [vmem:[#allocation2 + $0x1018] sm:$0xff]
        %v961 = vld [vmem:[#allocation2 + $0x1020] sm:$0xff]
        %v962 = vld [vmem:[#allocation2 + $0x1028] sm:$0xff]
        %v963 = vld [vmem:[#allocation2 + $0x1030] sm:$0xff]
        %v964 = vld [vmem:[#allocation2 + $0x1038] sm:$0xff]
        %v965 = vld [vmem:[#allocation2 + $0x1040] sm:$0xff]
        %v966 = vld [vmem:[#allocation2 + $0x1048] sm:$0xff]
        %v967 = vld [vmem:[#allocation2 + $0x1050] sm:$0xff]
        %v968 = vld [vmem:[#allocation2 + $0x1058] sm:$0xff]
        %v969 = vld [vmem:[#allocation2 + $0x1060] sm:$0xff]
        %v970 = vld [vmem:[#allocation2 + $0x1068] sm:$0xff]
        %v971 = vld [vmem:[#allocation2 + $0x1070] sm:$0xff]
        %v972 = vld [vmem:[#allocation2 + $0x1078] sm:$0xff]
        %v973 = vld [vmem:[#allocation2 + $0x1080] sm:$0xff]
        %v974 = vld [vmem:[#allocation2 + $0x1088] sm:$0xff]
        %v975 = vld [vmem:[#allocation2 + $0x1090] sm:$0xff]
        %v976 = vld [vmem:[#allocation2 + $0x1098] sm:$0xff]
        %v977 = vld [vmem:[#allocation2 + $0x10a0] sm:$0xff]
        %v978 = vld [vmem:[#allocation2 + $0x10a8] sm:$0xff]
        %v979 = vld [vmem:[#allocation2 + $0x10b0] sm:$0xff]
        %v980 = vld [vmem:[#allocation2 + $0x10b8] sm:$0xff]
        %v981 = vld [vmem:[#allocation2 + $0x10c0] sm:$0xff]
        %v982 = vld [vmem:[#allocation2 + $0x10c8] sm:$0xff]
        %v983 = vld [vmem:[#allocation2 + $0x10d0] sm:$0xff]
        %v984 = vld [vmem:[#allocation2 + $0x10d8] sm:$0xff]
        %v985 = vld [vmem:[#allocation2 + $0x10e0] sm:$0xff]
        %v986 = vld [vmem:[#allocation2 + $0x10e8] sm:$0xff]
        %v987 = vld [vmem:[#allocation2 + $0x10f0] sm:$0xff]
        %v988 = vld [vmem:[#allocation2 + $0x10f8] sm:$0xff]
        %v989 = vld [vmem:[#allocation2 + $0x1100] sm:$0xff]
        %v990 = vld [vmem:[#allocation2 + $0x1108] sm:$0xff]
        %v991 = vld [vmem:[#allocation2 + $0x1110] sm:$0xff]
        %v992 = vld [vmem:[#allocation2 + $0x1118] sm:$0xff]
        %v993 = vld [vmem:[#allocation2 + $0x1120] sm:$0xff]
        %v994 = vld [vmem:[#allocation2 + $0x1128] sm:$0xff]
        %v995 = vld [vmem:[#allocation2 + $0x1130] sm:$0xff]
        %v996 = vld [vmem:[#allocation2 + $0x1138] sm:$0xff]
        %v997 = vld [vmem:[#allocation2 + $0x1140] sm:$0xff]
        %v998 = vld [vmem:[#allocation2 + $0x1148] sm:$0xff]
        %v999 = vld [vmem:[#allocation2 + $0x1150] sm:$0xff]
        %v1000 = vld [vmem:[#allocation2 + $0x1158] sm:$0xff]
        %v1001 = vld [vmem:[#allocation2 + $0x1160] sm:$0xff]
        %v1002 = vld [vmem:[#allocation2 + $0x1168] sm:$0xff]
        %v1003 = vld [vmem:[#allocation2 + $0x1170] sm:$0xff]
        %v1004 = vld [vmem:[#allocation2 + $0x1178] sm:$0xff]
        %v1005 = vld [vmem:[#allocation2 + $0x1180] sm:$0xff]
        %v1006 = vld [vmem:[#allocation2 + $0x1188] sm:$0xff]
        %v1007 = vld [vmem:[#allocation2 + $0x1190] sm:$0xff]
        %v1008 = vld [vmem:[#allocation2 + $0x1198] sm:$0xff]
        %v1009 = vld [vmem:[#allocation2 + $0x11a0] sm:$0xff]
        %v1010 = vld [vmem:[#allocation2 + $0x11a8] sm:$0xff]
        %v1011 = vld [vmem:[#allocation2 + $0x11b0] sm:$0xff]
        %v1012 = vld [vmem:[#allocation2 + $0x11b8] sm:$0xff]
        %v1013 = vld [vmem:[#allocation2 + $0x11c0] sm:$0xff]
        %v1014 = vld [vmem:[#allocation2 + $0x11c8] sm:$0xff]
        %v1015 = vld [vmem:[#allocation2 + $0x11d0] sm:$0xff]
        %v1016 = vld [vmem:[#allocation2 + $0x11d8] sm:$0xff]
        %v1017 = vld [vmem:[#allocation2 + $0x11e0] sm:$0xff]
        %v1018 = vld [vmem:[#allocation2 + $0x11e8] sm:$0xff]
        %v1019 = vld [vmem:[#allocation2 + $0x11f0] sm:$0xff]
        %v1020 = vld [vmem:[#allocation2 + $0x11f8] sm:$0xff]
        %v1021 = vld [vmem:[#allocation2 + $0x1200] sm:$0xff]
        %v1022 = vld [vmem:[#allocation2 + $0x1208] sm:$0xff]
        %v1023 = vld [vmem:[#allocation2 + $0x1210] sm:$0xff]
        %v1024 = vld [vmem:[#allocation2 + $0x1218] sm:$0xff]
        %v1025 = vld [vmem:[#allocation2 + $0x1220] sm:$0xff]
        %v1026 = vld [vmem:[#allocation2 + $0x1228] sm:$0xff]
        %v1027 = vld [vmem:[#allocation2 + $0x1230] sm:$0xff]
        %v1028 = vld [vmem:[#allocation2 + $0x1238] sm:$0xff]
        %v1029 = vld [vmem:[#allocation2 + $0x1240] sm:$0xff]
        %v1030 = vld [vmem:[#allocation2 + $0x1248] sm:$0xff]
        %v1031 = vld [vmem:[#allocation2 + $0x1250] sm:$0xff]
        %v1032 = vld [vmem:[#allocation2 + $0x1258] sm:$0xff]
        %v1033 = vld [vmem:[#allocation2 + $0x1260] sm:$0xff]
        %v1034 = vld [vmem:[#allocation2 + $0x1268] sm:$0xff]
        %v1035 = vld [vmem:[#allocation2 + $0x1270] sm:$0xff]
        %v1036 = vld [vmem:[#allocation2 + $0x1278] sm:$0xff]
        %v1037 = vld [vmem:[#allocation2 + $0x1280] sm:$0xff]
        %v1038 = vld [vmem:[#allocation2 + $0x1288] sm:$0xff]
        %v1039 = vld [vmem:[#allocation2 + $0x1290] sm:$0xff]
        %v1040 = vld [vmem:[#allocation2 + $0x1298] sm:$0xff]
        %v1041 = vld [vmem:[#allocation2 + $0x12a0] sm:$0xff]
        %v1042 = vld [vmem:[#allocation2 + $0x12a8] sm:$0xff]
        %v1043 = vld [vmem:[#allocation2 + $0x12b0] sm:$0xff]
        %v1044 = vld [vmem:[#allocation2 + $0x12b8] sm:$0xff]
        %v1045 = vld [vmem:[#allocation2 + $0x12c0] sm:$0xff]
        %v1046 = vld [vmem:[#allocation2 + $0x12c8] sm:$0xff]
        %v1047 = vld [vmem:[#allocation2 + $0x12d0] sm:$0xff]
        %v1048 = vld [vmem:[#allocation2 + $0x12d8] sm:$0xff]
        %v1049 = vld [vmem:[#allocation2 + $0x12e0] sm:$0xff]
        %v1050 = vld [vmem:[#allocation2 + $0x12e8] sm:$0xff]
        %v1051 = vld [vmem:[#allocation2 + $0x12f0] sm:$0xff]
        %v1052 = vld [vmem:[#allocation2 + $0x12f8] sm:$0xff]
        %v1053 = vld [vmem:[#allocation2 + $0x1300] sm:$0xff]
        %v1054 = vld [vmem:[#allocation2 + $0x1308] sm:$0xff]
        %v1055 = vld [vmem:[#allocation2 + $0x1310] sm:$0xff]
        %v1056 = vld [vmem:[#allocation2 + $0x1318] sm:$0xff]
        %v1057 = vld [vmem:[#allocation2 + $0x1320] sm:$0xff]
        %v1058 = vld [vmem:[#allocation2 + $0x1328] sm:$0xff]
        %v1059 = vld [vmem:[#allocation2 + $0x1330] sm:$0xff]
        %v1060 = vld [vmem:[#allocation2 + $0x1338] sm:$0xff]
        %v1061 = vld [vmem:[#allocation2 + $0x1340] sm:$0xff]
        %v1062 = vld [vmem:[#allocation2 + $0x1348] sm:$0xff]
        %v1063 = vld [vmem:[#allocation2 + $0x1350] sm:$0xff]
        %v1064 = vld [vmem:[#allocation2 + $0x1358] sm:$0xff]
        %v1065 = vld [vmem:[#allocation2 + $0x1360] sm:$0xff]
        %v1066 = vld [vmem:[#allocation2 + $0x1368] sm:$0xff]
        %v1067 = vld [vmem:[#allocation2 + $0x1370] sm:$0xff]
        %v1068 = vld [vmem:[#allocation2 + $0x1378] sm:$0xff]
        %v1069 = vld [vmem:[#allocation2 + $0x1380] sm:$0xff]
        %v1070 = vld [vmem:[#allocation2 + $0x1388] sm:$0xff]
        %v1071 = vld [vmem:[#allocation2 + $0x1390] sm:$0xff]
        %v1072 = vld [vmem:[#allocation2 + $0x1398] sm:$0xff]
        %v1073 = vld [vmem:[#allocation2 + $0x13a0] sm:$0xff]
        %v1074 = vld [vmem:[#allocation2 + $0x13a8] sm:$0xff]
        %v1075 = vld [vmem:[#allocation2 + $0x13b0] sm:$0xff]
        %v1076 = vld [vmem:[#allocation2 + $0x13b8] sm:$0xff]
        %v1077 = vld [vmem:[#allocation2 + $0x13c0] sm:$0xff]
        %v1078 = vld [vmem:[#allocation2 + $0x13c8] sm:$0xff]
        %v1079 = vld [vmem:[#allocation2 + $0x13d0] sm:$0xff]
        %v1080 = vld [vmem:[#allocation2 + $0x13d8] sm:$0xff]
        %v1081 = vld [vmem:[#allocation2 + $0x13e0] sm:$0xff]
        %v1082 = vld [vmem:[#allocation2 + $0x13e8] sm:$0xff]
        %v1083 = vld [vmem:[#allocation2 + $0x13f0] sm:$0xff]
        %v1084 = vld [vmem:[#allocation2 + $0x13f8] sm:$0xff]
        %v1085 = vld [vmem:[#allocation2 + $0x1400] sm:$0xff]
        %v1086 = vld [vmem:[#allocation2 + $0x1408] sm:$0xff]
        %v1087 = vld [vmem:[#allocation2 + $0x1410] sm:$0xff]
        %v1088 = vld [vmem:[#allocation2 + $0x1418] sm:$0xff]
        %v1089 = vld [vmem:[#allocation2 + $0x1420] sm:$0xff]
        %v1090 = vld [vmem:[#allocation2 + $0x1428] sm:$0xff]
        %v1091 = vld [vmem:[#allocation2 + $0x1430] sm:$0xff]
        %v1092 = vld [vmem:[#allocation2 + $0x1438] sm:$0xff]
        %v1093 = vld [vmem:[#allocation2 + $0x1440] sm:$0xff]
        %v1094 = vld [vmem:[#allocation2 + $0x1448] sm:$0xff]
        %v1095 = vld [vmem:[#allocation2 + $0x1450] sm:$0xff]
        %v1096 = vld [vmem:[#allocation2 + $0x1458] sm:$0xff]
        %v1097 = vld [vmem:[#allocation2 + $0x1460] sm:$0xff]
        %v1098 = vld [vmem:[#allocation2 + $0x1468] sm:$0xff]
        %v1099 = vld [vmem:[#allocation2 + $0x1470] sm:$0xff]
        %v1100 = vld [vmem:[#allocation2 + $0x1478] sm:$0xff]
        %v1101 = vld [vmem:[#allocation2 + $0x1480] sm:$0xff]
        %v1102 = vld [vmem:[#allocation2 + $0x1488] sm:$0xff]
        %v1103 = vld [vmem:[#allocation2 + $0x1490] sm:$0xff]
        %v1104 = vld [vmem:[#allocation2 + $0x1498] sm:$0xff]
        %v1105 = vld [vmem:[#allocation2 + $0x14a0] sm:$0xff]
        %v1106 = vld [vmem:[#allocation2 + $0x14a8] sm:$0xff]
        %v1107 = vld [vmem:[#allocation2 + $0x14b0] sm:$0xff]
        %v1108 = vld [vmem:[#allocation2 + $0x14b8] sm:$0xff]
        %v1109 = vld [vmem:[#allocation2 + $0x14c0] sm:$0xff]
        %v1110 = vld [vmem:[#allocation2 + $0x14c8] sm:$0xff]
        %v1111 = vld [vmem:[#allocation2 + $0x14d0] sm:$0xff]
        %v1112 = vld [vmem:[#allocation2 + $0x14d8] sm:$0xff]
        %v1113 = vld [vmem:[#allocation2 + $0x14e0] sm:$0xff]
        %v1114 = vld [vmem:[#allocation2 + $0x14e8] sm:$0xff]
        %v1115 = vld [vmem:[#allocation2 + $0x14f0] sm:$0xff]
        %v1116 = vld [vmem:[#allocation2 + $0x14f8] sm:$0xff]
        %v1117 = vld [vmem:[#allocation2 + $0x1500] sm:$0xff]
        %v1118 = vld [vmem:[#allocation2 + $0x1508] sm:$0xff]
        %v1119 = vld [vmem:[#allocation2 + $0x1510] sm:$0xff]
        %v1120 = vld [vmem:[#allocation2 + $0x1518] sm:$0xff]
        %v1121 = vld [vmem:[#allocation2 + $0x1520] sm:$0xff]
        %v1122 = vld [vmem:[#allocation2 + $0x1528] sm:$0xff]
        %v1123 = vld [vmem:[#allocation2 + $0x1530] sm:$0xff]
        %v1124 = vld [vmem:[#allocation2 + $0x1538] sm:$0xff]
        %v1125 = vld [vmem:[#allocation2 + $0x1540] sm:$0xff]
        %v1126 = vld [vmem:[#allocation2 + $0x1548] sm:$0xff]
        %v1127 = vld [vmem:[#allocation2 + $0x1550] sm:$0xff]
        %v1128 = vld [vmem:[#allocation2 + $0x1558] sm:$0xff]
        %v1129 = vld [vmem:[#allocation2 + $0x1560] sm:$0xff]
        %v1130 = vld [vmem:[#allocation2 + $0x1568] sm:$0xff]
        %v1131 = vld [vmem:[#allocation2 + $0x1570] sm:$0xff]
        %v1132 = vld [vmem:[#allocation2 + $0x1578] sm:$0xff]
        %v1133 = vld [vmem:[#allocation2 + $0x1580] sm:$0xff]
        %v1134 = vld [vmem:[#allocation2 + $0x1588] sm:$0xff]
        %v1135 = vld [vmem:[#allocation2 + $0x1590] sm:$0xff]
        %v1136 = vld [vmem:[#allocation2 + $0x1598] sm:$0xff]
        %v1137 = vld [vmem:[#allocation2 + $0x15a0] sm:$0xff]
        %v1138 = vld [vmem:[#allocation2 + $0x15a8] sm:$0xff]
        %v1139 = vld [vmem:[#allocation2 + $0x15b0] sm:$0xff]
        %v1140 = vld [vmem:[#allocation2 + $0x15b8] sm:$0xff]
        %v1141 = vld [vmem:[#allocation2 + $0x15c0] sm:$0xff]
        %v1142 = vld [vmem:[#allocation2 + $0x15c8] sm:$0xff]
        %v1143 = vld [vmem:[#allocation2 + $0x15d0] sm:$0xff]
        %v1144 = vld [vmem:[#allocation2 + $0x15d8] sm:$0xff]
        %v1145 = vld [vmem:[#allocation2 + $0x15e0] sm:$0xff]
        %v1146 = vld [vmem:[#allocation2 + $0x15e8] sm:$0xff]
        %v1147 = vld [vmem:[#allocation2 + $0x15f0] sm:$0xff]
        %v1148 = vld [vmem:[#allocation2 + $0x15f8] sm:$0xff]
        %v1149 = vld [vmem:[#allocation2 + $0x1600] sm:$0xff]
        %v1150 = vld [vmem:[#allocation2 + $0x1608] sm:$0xff]
        %v1151 = vld [vmem:[#allocation2 + $0x1610] sm:$0xff]
        %v1152 = vld [vmem:[#allocation2 + $0x1618] sm:$0xff]
        %v1153 = vld [vmem:[#allocation2 + $0x1620] sm:$0xff]
        %v1154 = vld [vmem:[#allocation2 + $0x1628] sm:$0xff]
        %v1155 = vld [vmem:[#allocation2 + $0x1630] sm:$0xff]
        %v1156 = vld [vmem:[#allocation2 + $0x1638] sm:$0xff]
        %v1157 = vld [vmem:[#allocation2 + $0x1640] sm:$0xff]
        %v1158 = vld [vmem:[#allocation2 + $0x1648] sm:$0xff]
        %v1159 = vld [vmem:[#allocation2 + $0x1650] sm:$0xff]
        %v1160 = vld [vmem:[#allocation2 + $0x1658] sm:$0xff]
        %v1161 = vld [vmem:[#allocation2 + $0x1660] sm:$0xff]
        %v1162 = vld [vmem:[#allocation2 + $0x1668] sm:$0xff]
        %v1163 = vld [vmem:[#allocation2 + $0x1670] sm:$0xff]
        %v1164 = vld [vmem:[#allocation2 + $0x1678] sm:$0xff]
        %v1165 = vld [vmem:[#allocation2 + $0x1680] sm:$0xff]
        %v1166 = vld [vmem:[#allocation2 + $0x1688] sm:$0xff]
        %v1167 = vld [vmem:[#allocation2 + $0x1690] sm:$0xff]
        %v1168 = vld [vmem:[#allocation2 + $0x1698] sm:$0xff]
        %v1169 = vld [vmem:[#allocation2 + $0x16a0] sm:$0xff]
        %v1170 = vld [vmem:[#allocation2 + $0x16a8] sm:$0xff]
        %v1171 = vld [vmem:[#allocation2 + $0x16b0] sm:$0xff]
        %v1172 = vld [vmem:[#allocation2 + $0x16b8] sm:$0xff]
        %v1173 = vld [vmem:[#allocation2 + $0x16c0] sm:$0xff]
        %v1174 = vld [vmem:[#allocation2 + $0x16c8] sm:$0xff]
        %v1175 = vld [vmem:[#allocation2 + $0x16d0] sm:$0xff]
        %v1176 = vld [vmem:[#allocation2 + $0x16d8] sm:$0xff]
        %v1177 = vld [vmem:[#allocation2 + $0x16e0] sm:$0xff]
        %v1178 = vld [vmem:[#allocation2 + $0x16e8] sm:$0xff]
        %v1179 = vld [vmem:[#allocation2 + $0x16f0] sm:$0xff]
        %v1180 = vld [vmem:[#allocation2 + $0x16f8] sm:$0xff]
        %v1181 = vld [vmem:[#allocation2 + $0x1700] sm:$0xff]
        %v1182 = vld [vmem:[#allocation2 + $0x1708] sm:$0xff]
        %v1183 = vld [vmem:[#allocation2 + $0x1710] sm:$0xff]
        %v1184 = vld [vmem:[#allocation2 + $0x1718] sm:$0xff]
        %v1185 = vld [vmem:[#allocation2 + $0x1720] sm:$0xff]
        %v1186 = vld [vmem:[#allocation2 + $0x1728] sm:$0xff]
        %v1187 = vld [vmem:[#allocation2 + $0x1730] sm:$0xff]
        %v1188 = vld [vmem:[#allocation2 + $0x1738] sm:$0xff]
        %v1189 = vld [vmem:[#allocation2 + $0x1740] sm:$0xff]
        %v1190 = vld [vmem:[#allocation2 + $0x1748] sm:$0xff]
        %v1191 = vld [vmem:[#allocation2 + $0x1750] sm:$0xff]
        %v1192 = vld [vmem:[#allocation2 + $0x1758] sm:$0xff]
        %v1193 = vld [vmem:[#allocation2 + $0x1760] sm:$0xff]
        %v1194 = vld [vmem:[#allocation2 + $0x1768] sm:$0xff]
        %v1195 = vld [vmem:[#allocation2 + $0x1770] sm:$0xff]
        %v1196 = vld [vmem:[#allocation2 + $0x1778] sm:$0xff]
        %v1197 = vld [vmem:[#allocation2 + $0x1780] sm:$0xff]
        %v1198 = vld [vmem:[#allocation2 + $0x1788] sm:$0xff]
        %v1199 = vld [vmem:[#allocation2 + $0x1790] sm:$0xff]
        %v1200 = vld [vmem:[#allocation2 + $0x1798] sm:$0xff]
        %v1201 = vld [vmem:[#allocation2 + $0x17a0] sm:$0xff]
        %v1202 = vld [vmem:[#allocation2 + $0x17a8] sm:$0xff]
        %v1203 = vld [vmem:[#allocation2 + $0x17b0] sm:$0xff]
        %v1204 = vld [vmem:[#allocation2 + $0x17b8] sm:$0xff]
        %v1205 = vld [vmem:[#allocation2 + $0x17c0] sm:$0xff]
        %v1206 = vld [vmem:[#allocation2 + $0x17c8] sm:$0xff]
        %v1207 = vld [vmem:[#allocation2 + $0x17d0] sm:$0xff]
        %v1208 = vld [vmem:[#allocation2 + $0x17d8] sm:$0xff]
        %v1209 = vld [vmem:[#allocation2 + $0x17e0] sm:$0xff]
        %v1210 = vld [vmem:[#allocation2 + $0x17e8] sm:$0xff]
        %v1211 = vld [vmem:[#allocation2 + $0x17f0] sm:$0xff]
        %v1212 = vld [vmem:[#allocation2 + $0x17f8] sm:$0xff]
        %v1213 = vld [vmem:[#allocation2 + $0x1800] sm:$0xff]
        %v1214 = vld [vmem:[#allocation2 + $0x1808] sm:$0xff]
        %v1215 = vld [vmem:[#allocation2 + $0x1810] sm:$0xff]
        %v1216 = vld [vmem:[#allocation2 + $0x1818] sm:$0xff]
        %v1217 = vld [vmem:[#allocation2 + $0x1820] sm:$0xff]
        %v1218 = vld [vmem:[#allocation2 + $0x1828] sm:$0xff]
        %v1219 = vld [vmem:[#allocation2 + $0x1830] sm:$0xff]
        %v1220 = vld [vmem:[#allocation2 + $0x1838] sm:$0xff]
        %v1221 = vld [vmem:[#allocation2 + $0x1840] sm:$0xff]
        %v1222 = vld [vmem:[#allocation2 + $0x1848] sm:$0xff]
        %v1223 = vld [vmem:[#allocation2 + $0x1850] sm:$0xff]
        %v1224 = vld [vmem:[#allocation2 + $0x1858] sm:$0xff]
        %v1225 = vld [vmem:[#allocation2 + $0x1860] sm:$0xff]
        %v1226 = vld [vmem:[#allocation2 + $0x1868] sm:$0xff]
        %v1227 = vld [vmem:[#allocation2 + $0x1870] sm:$0xff]
        %v1228 = vld [vmem:[#allocation2 + $0x1878] sm:$0xff]
        %v1229 = vld [vmem:[#allocation2 + $0x1880] sm:$0xff]
        %v1230 = vld [vmem:[#allocation2 + $0x1888] sm:$0xff]
        %v1231 = vld [vmem:[#allocation2 + $0x1890] sm:$0xff]
        %v1232 = vld [vmem:[#allocation2 + $0x1898] sm:$0xff]
        %v1233 = vld [vmem:[#allocation2 + $0x18a0] sm:$0xff]
        %v1234 = vld [vmem:[#allocation2 + $0x18a8] sm:$0xff]
        %v1235 = vld [vmem:[#allocation2 + $0x18b0] sm:$0xff]
        %v1236 = vld [vmem:[#allocation2 + $0x18b8] sm:$0xff]
        %v1237 = vld [vmem:[#allocation2 + $0x18c0] sm:$0xff]
        %v1238 = vld [vmem:[#allocation2 + $0x18c8] sm:$0xff]
        %v1239 = vld [vmem:[#allocation2 + $0x18d0] sm:$0xff]
        %v1240 = vld [vmem:[#allocation2 + $0x18d8] sm:$0xff]
        %v1241 = vld [vmem:[#allocation2 + $0x18e0] sm:$0xff]
        %v1242 = vld [vmem:[#allocation2 + $0x18e8] sm:$0xff]
        %v1243 = vld [vmem:[#allocation2 + $0x18f0] sm:$0xff]
        %v1244 = vld [vmem:[#allocation2 + $0x18f8] sm:$0xff]
        %v1245 = vld [vmem:[#allocation2 + $0x1900] sm:$0xff]
        %v1246 = vld [vmem:[#allocation2 + $0x1908] sm:$0xff]
        %v1247 = vld [vmem:[#allocation2 + $0x1910] sm:$0xff]
        %v1248 = vld [vmem:[#allocation2 + $0x1918] sm:$0xff]
        %v1249 = vld [vmem:[#allocation2 + $0x1920] sm:$0xff]
        %v1250 = vld [vmem:[#allocation2 + $0x1928] sm:$0xff]
        %v1251 = vld [vmem:[#allocation2 + $0x1930] sm:$0xff]
        %v1252 = vld [vmem:[#allocation2 + $0x1938] sm:$0xff]
        %v1253 = vld [vmem:[#allocation2 + $0x1940] sm:$0xff]
        %v1254 = vld [vmem:[#allocation2 + $0x1948] sm:$0xff]
        %v1255 = vld [vmem:[#allocation2 + $0x1950] sm:$0xff]
        %v1256 = vld [vmem:[#allocation2 + $0x1958] sm:$0xff]
        %v1257 = vld [vmem:[#allocation2 + $0x1960] sm:$0xff]
        %v1258 = vld [vmem:[#allocation2 + $0x1968] sm:$0xff]
        %v1259 = vld [vmem:[#allocation2 + $0x1970] sm:$0xff]
        %v1260 = vld [vmem:[#allocation2 + $0x1978] sm:$0xff]
        %v1261 = vld [vmem:[#allocation2 + $0x1980] sm:$0xff]
        %v1262 = vld [vmem:[#allocation2 + $0x1988] sm:$0xff]
        %v1263 = vld [vmem:[#allocation2 + $0x1990] sm:$0xff]
        %v1264 = vld [vmem:[#allocation2 + $0x1998] sm:$0xff]
        %v1265 = vld [vmem:[#allocation2 + $0x19a0] sm:$0xff]
        %v1266 = vld [vmem:[#allocation2 + $0x19a8] sm:$0xff]
        %v1267 = vld [vmem:[#allocation2 + $0x19b0] sm:$0xff]
        %v1268 = vld [vmem:[#allocation2 + $0x19b8] sm:$0xff]
        %v1269 = vld [vmem:[#allocation2 + $0x19c0] sm:$0xff]
        %v1270 = vld [vmem:[#allocation2 + $0x19c8] sm:$0xff]
        %v1271 = vld [vmem:[#allocation2 + $0x19d0] sm:$0xff]
        %v1272 = vld [vmem:[#allocation2 + $0x19d8] sm:$0xff]
        %v1273 = vld [vmem:[#allocation2 + $0x19e0] sm:$0xff]
        %v1274 = vld [vmem:[#allocation2 + $0x19e8] sm:$0xff]
        %v1275 = vld [vmem:[#allocation2 + $0x19f0] sm:$0xff]
        %v1276 = vld [vmem:[#allocation2 + $0x19f8] sm:$0xff]
        %v1277 = vld [vmem:[#allocation2 + $0x1a00] sm:$0xff]
        %v1278 = vld [vmem:[#allocation2 + $0x1a08] sm:$0xff]
        %v1279 = vld [vmem:[#allocation2 + $0x1a10] sm:$0xff]
        %v1280 = vld [vmem:[#allocation2 + $0x1a18] sm:$0xff]
        %v1281 = vld [vmem:[#allocation2 + $0x1a20] sm:$0xff]
        %v1282 = vld [vmem:[#allocation2 + $0x1a28] sm:$0xff]
        %v1283 = vld [vmem:[#allocation2 + $0x1a30] sm:$0xff]
        %v1284 = vld [vmem:[#allocation2 + $0x1a38] sm:$0xff]
        %v1285 = vld [vmem:[#allocation2 + $0x1a40] sm:$0xff]
        %v1286 = vld [vmem:[#allocation2 + $0x1a48] sm:$0xff]
        %v1287 = vld [vmem:[#allocation2 + $0x1a50] sm:$0xff]
        %v1288 = vld [vmem:[#allocation2 + $0x1a58] sm:$0xff]
        %v1289 = vld [vmem:[#allocation2 + $0x1a60] sm:$0xff]
        %v1290 = vld [vmem:[#allocation2 + $0x1a68] sm:$0xff]
        %v1291 = vld [vmem:[#allocation2 + $0x1a70] sm:$0xff]
        %v1292 = vld [vmem:[#allocation2 + $0x1a78] sm:$0xff]
        %v1293 = vld [vmem:[#allocation2 + $0x1a80] sm:$0xff]
        %v1294 = vld [vmem:[#allocation2 + $0x1a88] sm:$0xff]
        %v1295 = vld [vmem:[#allocation2 + $0x1a90] sm:$0xff]
        %v1296 = vld [vmem:[#allocation2 + $0x1a98] sm:$0xff]
        %v1297 = vld [vmem:[#allocation2 + $0x1aa0] sm:$0xff]
        %v1298 = vld [vmem:[#allocation2 + $0x1aa8] sm:$0xff]
        %v1299 = vld [vmem:[#allocation2 + $0x1ab0] sm:$0xff]
        %v1300 = vld [vmem:[#allocation2 + $0x1ab8] sm:$0xff]
        %v1301 = vld [vmem:[#allocation2 + $0x1ac0] sm:$0xff]
        %v1302 = vld [vmem:[#allocation2 + $0x1ac8] sm:$0xff]
        %v1303 = vld [vmem:[#allocation2 + $0x1ad0] sm:$0xff]
        %v1304 = vld [vmem:[#allocation2 + $0x1ad8] sm:$0xff]
        %v1305 = vld [vmem:[#allocation2 + $0x1ae0] sm:$0xff]
        %v1306 = vld [vmem:[#allocation2 + $0x1ae8] sm:$0xff]
        %v1307 = vld [vmem:[#allocation2 + $0x1af0] sm:$0xff]
        %v1308 = vld [vmem:[#allocation2 + $0x1af8] sm:$0xff]
        %v1309 = vld [vmem:[#allocation2 + $0x1b00] sm:$0xff]
        %v1310 = vld [vmem:[#allocation2 + $0x1b08] sm:$0xff]
        %v1311 = vld [vmem:[#allocation2 + $0x1b10] sm:$0xff]
        %v1312 = vld [vmem:[#allocation2 + $0x1b18] sm:$0xff]
        %v1313 = vld [vmem:[#allocation2 + $0x1b20] sm:$0xff]
        %v1314 = vld [vmem:[#allocation2 + $0x1b28] sm:$0xff]
        %v1315 = vld [vmem:[#allocation2 + $0x1b30] sm:$0xff]
        %v1316 = vld [vmem:[#allocation2 + $0x1b38] sm:$0xff]
        %v1317 = vld [vmem:[#allocation2 + $0x1b40] sm:$0xff]
        %v1318 = vld [vmem:[#allocation2 + $0x1b48] sm:$0xff]
        %v1319 = vld [vmem:[#allocation2 + $0x1b50] sm:$0xff]
        %v1320 = vld [vmem:[#allocation2 + $0x1b58] sm:$0xff]
        %v1321 = vld [vmem:[#allocation2 + $0x1b60] sm:$0xff]
        %v1322 = vld [vmem:[#allocation2 + $0x1b68] sm:$0xff]
        %v1323 = vld [vmem:[#allocation2 + $0x1b70] sm:$0xff]
        %v1324 = vld [vmem:[#allocation2 + $0x1b78] sm:$0xff]
        %v1325 = vld [vmem:[#allocation2 + $0x1b80] sm:$0xff]
        %v1326 = vld [vmem:[#allocation2 + $0x1b88] sm:$0xff]
        %v1327 = vld [vmem:[#allocation2 + $0x1b90] sm:$0xff]
        %v1328 = vld [vmem:[#allocation2 + $0x1b98] sm:$0xff]
        %v1329 = vld [vmem:[#allocation2 + $0x1ba0] sm:$0xff]
        %v1330 = vld [vmem:[#allocation2 + $0x1ba8] sm:$0xff]
        %v1331 = vld [vmem:[#allocation2 + $0x1bb0] sm:$0xff]
        %v1332 = vld [vmem:[#allocation2 + $0x1bb8] sm:$0xff]
        %v1333 = vld [vmem:[#allocation2 + $0x1bc0] sm:$0xff]
        %v1334 = vld [vmem:[#allocation2 + $0x1bc8] sm:$0xff]
        %v1335 = vld [vmem:[#allocation2 + $0x1bd0] sm:$0xff]
        %v1336 = vld [vmem:[#allocation2 + $0x1bd8] sm:$0xff]
        %v1337 = vld [vmem:[#allocation2 + $0x1be0] sm:$0xff]
        %v1338 = vld [vmem:[#allocation2 + $0x1be8] sm:$0xff]
        %v1339 = vld [vmem:[#allocation2 + $0x1bf0] sm:$0xff]
        %v1340 = vld [vmem:[#allocation2 + $0x1bf8] sm:$0xff]
        %v1341 = vld [vmem:[#allocation2 + $0x1c00] sm:$0xff]
        %v1342 = vld [vmem:[#allocation2 + $0x1c08] sm:$0xff]
        %v1343 = vld [vmem:[#allocation2 + $0x1c10] sm:$0xff]
        %v1344 = vld [vmem:[#allocation2 + $0x1c18] sm:$0xff]
        %v1345 = vld [vmem:[#allocation2 + $0x1c20] sm:$0xff]
        %v1346 = vld [vmem:[#allocation2 + $0x1c28] sm:$0xff]
        %v1347 = vld [vmem:[#allocation2 + $0x1c30] sm:$0xff]
        %v1348 = vld [vmem:[#allocation2 + $0x1c38] sm:$0xff]
        %v1349 = vld [vmem:[#allocation2 + $0x1c40] sm:$0xff]
        %v1350 = vld [vmem:[#allocation2 + $0x1c48] sm:$0xff]
        %v1351 = vld [vmem:[#allocation2 + $0x1c50] sm:$0xff]
        %v1352 = vld [vmem:[#allocation2 + $0x1c58] sm:$0xff]
        %v1353 = vld [vmem:[#allocation2 + $0x1c60] sm:$0xff]
        %v1354 = vld [vmem:[#allocation2 + $0x1c68] sm:$0xff]
        %v1355 = vld [vmem:[#allocation2 + $0x1c70] sm:$0xff]
        %v1356 = vld [vmem:[#allocation2 + $0x1c78] sm:$0xff]
        %v1357 = vld [vmem:[#allocation2 + $0x1c80] sm:$0xff]
        %v1358 = vld [vmem:[#allocation2 + $0x1c88] sm:$0xff]
        %v1359 = vld [vmem:[#allocation2 + $0x1c90] sm:$0xff]
        %v1360 = vld [vmem:[#allocation2 + $0x1c98] sm:$0xff]
        %v1361 = vld [vmem:[#allocation2 + $0x1ca0] sm:$0xff]
        %v1362 = vld [vmem:[#allocation2 + $0x1ca8] sm:$0xff]
        %v1363 = vld [vmem:[#allocation2 + $0x1cb0] sm:$0xff]
        %v1364 = vld [vmem:[#allocation2 + $0x1cb8] sm:$0xff]
        %v1365 = vld [vmem:[#allocation2 + $0x1cc0] sm:$0xff]
        %v1366 = vld [vmem:[#allocation2 + $0x1cc8] sm:$0xff]
        %v1367 = vld [vmem:[#allocation2 + $0x1cd0] sm:$0xff]
        %v1368 = vld [vmem:[#allocation2 + $0x1cd8] sm:$0xff]
        %v1369 = vld [vmem:[#allocation2 + $0x1ce0] sm:$0xff]
        %v1370 = vld [vmem:[#allocation2 + $0x1ce8] sm:$0xff]
        %v1371 = vld [vmem:[#allocation2 + $0x1cf0] sm:$0xff]
        %v1372 = vld [vmem:[#allocation2 + $0x1cf8] sm:$0xff]
        %v1373 = vld [vmem:[#allocation2 + $0x1d00] sm:$0xff]
        %v1374 = vld [vmem:[#allocation2 + $0x1d08] sm:$0xff]
        %v1375 = vld [vmem:[#allocation2 + $0x1d10] sm:$0xff]
        %v1376 = vld [vmem:[#allocation2 + $0x1d18] sm:$0xff]
        %v1377 = vld [vmem:[#allocation2 + $0x1d20] sm:$0xff]
        %v1378 = vld [vmem:[#allocation2 + $0x1d28] sm:$0xff]
        %v1379 = vld [vmem:[#allocation2 + $0x1d30] sm:$0xff]
        %v1380 = vld [vmem:[#allocation2 + $0x1d38] sm:$0xff]
        %v1381 = vld [vmem:[#allocation2 + $0x1d40] sm:$0xff]
        %v1382 = vld [vmem:[#allocation2 + $0x1d48] sm:$0xff]
        %v1383 = vld [vmem:[#allocation2 + $0x1d50] sm:$0xff]
        %v1384 = vld [vmem:[#allocation2 + $0x1d58] sm:$0xff]
        %v1385 = vld [vmem:[#allocation2 + $0x1d60] sm:$0xff]
        %v1386 = vld [vmem:[#allocation2 + $0x1d68] sm:$0xff]
        %v1387 = vld [vmem:[#allocation2 + $0x1d70] sm:$0xff]
        %v1388 = vld [vmem:[#allocation2 + $0x1d78] sm:$0xff]
        %v1389 = vld [vmem:[#allocation2 + $0x1d80] sm:$0xff]
        %v1390 = vld [vmem:[#allocation2 + $0x1d88] sm:$0xff]
        %v1391 = vld [vmem:[#allocation2 + $0x1d90] sm:$0xff]
        %v1392 = vld [vmem:[#allocation2 + $0x1d98] sm:$0xff]
        %v1393 = vld [vmem:[#allocation2 + $0x1da0] sm:$0xff]
        %v1394 = vld [vmem:[#allocation2 + $0x1da8] sm:$0xff]
        %v1395 = vld [vmem:[#allocation2 + $0x1db0] sm:$0xff]
        %v1396 = vld [vmem:[#allocation2 + $0x1db8] sm:$0xff]
        %v1397 = vld [vmem:[#allocation2 + $0x1dc0] sm:$0xff]
        %v1398 = vld [vmem:[#allocation2 + $0x1dc8] sm:$0xff]
        %v1399 = vld [vmem:[#allocation2 + $0x1dd0] sm:$0xff]
        %v1400 = vld [vmem:[#allocation2 + $0x1dd8] sm:$0xff]
        %v1401 = vld [vmem:[#allocation2 + $0x1de0] sm:$0xff]
        %v1402 = vld [vmem:[#allocation2 + $0x1de8] sm:$0xff]
        %v1403 = vld [vmem:[#allocation2 + $0x1df0] sm:$0xff]
        %v1404 = vld [vmem:[#allocation2 + $0x1df8] sm:$0xff]
        %v1405 = vld [vmem:[#allocation2 + $0x1e00] sm:$0xff]
        %v1406 = vld [vmem:[#allocation2 + $0x1e08] sm:$0xff]
        %v1407 = vld [vmem:[#allocation2 + $0x1e10] sm:$0xff]
        %v1408 = vld [vmem:[#allocation2 + $0x1e18] sm:$0xff]
        %v1409 = vld [vmem:[#allocation2 + $0x1e20] sm:$0xff]
        %v1410 = vld [vmem:[#allocation2 + $0x1e28] sm:$0xff]
        %v1411 = vld [vmem:[#allocation2 + $0x1e30] sm:$0xff]
        %v1412 = vld [vmem:[#allocation2 + $0x1e38] sm:$0xff]
        %v1413 = vld [vmem:[#allocation2 + $0x1e40] sm:$0xff]
        %v1414 = vld [vmem:[#allocation2 + $0x1e48] sm:$0xff]
        %v1415 = vld [vmem:[#allocation2 + $0x1e50] sm:$0xff]
        %v1416 = vld [vmem:[#allocation2 + $0x1e58] sm:$0xff]
        %v1417 = vld [vmem:[#allocation2 + $0x1e60] sm:$0xff]
        %v1418 = vld [vmem:[#allocation2 + $0x1e68] sm:$0xff]
        %v1419 = vld [vmem:[#allocation2 + $0x1e70] sm:$0xff]
        %v1420 = vld [vmem:[#allocation2 + $0x1e78] sm:$0xff]
        %v1421 = vld [vmem:[#allocation2 + $0x1e80] sm:$0xff]
        %v1422 = vld [vmem:[#allocation2 + $0x1e88] sm:$0xff]
        %v1423 = vld [vmem:[#allocation2 + $0x1e90] sm:$0xff]
        %v1424 = vld [vmem:[#allocation2 + $0x1e98] sm:$0xff]
        %v1425 = vld [vmem:[#allocation2 + $0x1ea0] sm:$0xff]
        %v1426 = vld [vmem:[#allocation2 + $0x1ea8] sm:$0xff]
        %v1427 = vld [vmem:[#allocation2 + $0x1eb0] sm:$0xff]
        %v1428 = vld [vmem:[#allocation2 + $0x1eb8] sm:$0xff]
        %v1429 = vld [vmem:[#allocation2 + $0x1ec0] sm:$0xff]
        %v1430 = vld [vmem:[#allocation2 + $0x1ec8] sm:$0xff]
        %v1431 = vld [vmem:[#allocation2 + $0x1ed0] sm:$0xff]
        %v1432 = vld [vmem:[#allocation2 + $0x1ed8] sm:$0xff]
        %v1433 = vld [vmem:[#allocation2 + $0x1ee0] sm:$0xff]
        %v1434 = vld [vmem:[#allocation2 + $0x1ee8] sm:$0xff]
        %v1435 = vld [vmem:[#allocation2 + $0x1ef0] sm:$0xff]
        %v1436 = vld [vmem:[#allocation2 + $0x1ef8] sm:$0xff]
        %v1437 = vld [vmem:[#allocation2 + $0x1f00] sm:$0xff]
        %v1438 = vld [vmem:[#allocation2 + $0x1f08] sm:$0xff]
        %v1439 = vld [vmem:[#allocation2 + $0x1f10] sm:$0xff]
        %v1440 = vld [vmem:[#allocation2 + $0x1f18] sm:$0xff]
        %v1441 = vld [vmem:[#allocation2 + $0x1f20] sm:$0xff]
        %v1442 = vld [vmem:[#allocation2 + $0x1f28] sm:$0xff]
        %v1443 = vld [vmem:[#allocation2 + $0x1f30] sm:$0xff]
        %v1444 = vld [vmem:[#allocation2 + $0x1f38] sm:$0xff]
        %v1445 = vld [vmem:[#allocation2 + $0x1f40] sm:$0xff]
        %v1446 = vld [vmem:[#allocation2 + $0x1f48] sm:$0xff]
        %v1447 = vld [vmem:[#allocation2 + $0x1f50] sm:$0xff]
        %v1448 = vld [vmem:[#allocation2 + $0x1f58] sm:$0xff]
        %v1449 = vld [vmem:[#allocation2 + $0x1f60] sm:$0xff]
        %v1450 = vld [vmem:[#allocation2 + $0x1f68] sm:$0xff]
        %v1451 = vld [vmem:[#allocation2 + $0x1f70] sm:$0xff]
        %v1452 = vld [vmem:[#allocation2 + $0x1f78] sm:$0xff]
        %v1453 = vld [vmem:[#allocation2 + $0x1f80] sm:$0xff]
        %v1454 = vld [vmem:[#allocation2 + $0x1f88] sm:$0xff]
        %v1455 = vld [vmem:[#allocation2 + $0x1f90] sm:$0xff]
        %v1456 = vld [vmem:[#allocation2 + $0x1f98] sm:$0xff]
        %v1457 = vld [vmem:[#allocation2 + $0x1fa0] sm:$0xff]
        %v1458 = vld [vmem:[#allocation2 + $0x1fa8] sm:$0xff]
        %v1459 = vld [vmem:[#allocation2 + $0x1fb0] sm:$0xff]
        %v1460 = vld [vmem:[#allocation2 + $0x1fb8] sm:$0xff]
        %v1461 = vld [vmem:[#allocation2 + $0x1fc0] sm:$0xff]
        %v1462 = vld [vmem:[#allocation2 + $0x1fc8] sm:$0xff]
        %v1463 = vld [vmem:[#allocation2 + $0x1fd0] sm:$0xff]
        %v1464 = vld [vmem:[#allocation2 + $0x1fd8] sm:$0xff]
        %v1465 = vld [vmem:[#allocation2 + $0x1fe0] sm:$0xff]
        %v1466 = vld [vmem:[#allocation2 + $0x1fe8] sm:$0xff]
        %v1467 = vld [vmem:[#allocation2 + $0x1ff0] sm:$0xff]
        %v1468 = vld [vmem:[#allocation2 + $0x1ff8] sm:$0xff]
        %1469 = vmatprep.subr.mxu0 %v686
        %1470 = vmatpush1.msra.mxu0 %v685
        %1471 = vmatprep.subr.mxu0 %v670
        %1472 = vmatpush1.msra.mxu0 %v669
        %1473 = vmatprep.subr.mxu0 %v654
        %1474 = vmatpush1.msra.mxu0 %v653
        %1475 = vmatprep.subr.mxu0 %v638
        %1476 = vmatpush1.msra.mxu0 %v637
        %1477 = vmatprep.subr.mxu0 %v622
        %1478 = vmatpush1.msra.mxu0 %v621
        %1479 = vmatprep.subr.mxu0 %v606
        %1480 = vmatpush1.msra.mxu0 %v605
        %1481 = vmatprep.subr.mxu0 %v590
        %1482 = vmatpush1.msra.mxu0 %v589
        %1483 = vmatprep.subr.mxu0 %v574
        %1484 = vmatpush1.msra.mxu0 %v573
        %1485 = vmatprep.subr.mxu0 %v558
        %1486 = vmatpush1.msra.mxu0 %v557
        %1487 = vmatprep.subr.mxu0 %v542
        %1488 = vmatpush1.msra.mxu0 %v541
        %1489 = vmatprep.subr.mxu0 %v526
        %1490 = vmatpush1.msra.mxu0 %v525
        %1491 = vmatprep.subr.mxu0 %v510
        %1492 = vmatpush1.msra.mxu0 %v509
        %1493 = vmatprep.subr.mxu0 %v494
        %1494 = vmatpush1.msra.mxu0 %v493
        %1495 = vmatprep.subr.mxu0 %v478
        %1496 = vmatpush1.msra.mxu0 %v477
        %1497 = vmatprep.subr.mxu0 %v462
        %1498 = vmatpush1.msra.mxu0 %v461
        %1499 = vmatprep.subr.mxu0 %v446
        %1500 = vmatpush1.msra.mxu0 %v445
        %1501 = vmatprep.subr.mxu0 %v942
        %1502 = vmatpush2.msra.mxu0 %v941
        %1503 = vmatprep.subr.mxu0 %v926
        %1504 = vmatpush2.msra.mxu0 %v925
        %1505 = vmatprep.subr.mxu0 %v910
        %1506 = vmatpush2.msra.mxu0 %v909
        %1507 = vmatprep.subr.mxu0 %v894
        %1508 = vmatpush2.msra.mxu0 %v893
        %1509 = vmatprep.subr.mxu0 %v878
        %1510 = vmatpush2.msra.mxu0 %v877
        %1511 = vmatprep.subr.mxu0 %v862
        %1512 = vmatpush2.msra.mxu0 %v861
        %1513 = vmatprep.subr.mxu0 %v846
        %1514 = vmatpush2.msra.mxu0 %v845
        %1515 = vmatprep.subr.mxu0 %v830
        %1516 = vmatpush2.msra.mxu0 %v829
        %1517 = vmatprep.subr.mxu0 %v814
        %1518 = vmatpush2.msra.mxu0 %v813
        %1519 = vmatprep.subr.mxu0 %v798
        %1520 = vmatpush2.msra.mxu0 %v797
        %1521 = vmatprep.subr.mxu0 %v782
        %1522 = vmatpush2.msra.mxu0 %v781
        %1523 = vmatprep.subr.mxu0 %v766
        %1524 = vmatpush2.msra.mxu0 %v765
        %1525 = vmatprep.subr.mxu0 %v750
        %1526 = vmatpush2.msra.mxu0 %v749
        %1527 = vmatprep.subr.mxu0 %v734
        %1528 = vmatpush2.msra.mxu0 %v733
        %1529 = vmatprep.subr.mxu0 %v718
        %1530 = vmatpush2.msra.mxu0 %v717
        %1531 = vmatprep.subr.mxu0 %v702
        %1532 = vmatpush2.msra.mxu0 %v701
        %1533 = vmatprep.mubr.f32.mxu0 %v442
        %1534 = vmatmul.mubr.f32.gmra.mxu0 %v441
        %v1535 = vpop.f32.mrf.mxu0
        %v1536 = vadd.f32 0.0, %v1535
        %v1537 = vpop.f32.mrf.mxu0
        %v1538 = vadd.f32 0.0, %v1537
        %1539 = vdwg.mxu0
        %1540 = vmatprep.subr.mxu0 %v1198
        %1541 = vmatpush1.msra.mxu0 %v1197
        %1542 = vmatprep.subr.mxu0 %v1182
        %1543 = vmatpush1.msra.mxu0 %v1181
        %1544 = vmatprep.subr.mxu0 %v1166
        %1545 = vmatpush1.msra.mxu0 %v1165
        %1546 = vmatprep.subr.mxu0 %v1150
        %1547 = vmatpush1.msra.mxu0 %v1149
        %1548 = vmatprep.subr.mxu0 %v1134
        %1549 = vmatpush1.msra.mxu0 %v1133
        %1550 = vmatprep.subr.mxu0 %v1118
        %1551 = vmatpush1.msra.mxu0 %v1117
        %1552 = vmatprep.subr.mxu0 %v1102
        %1553 = vmatpush1.msra.mxu0 %v1101
        %1554 = vmatprep.subr.mxu0 %v1086
        %1555 = vmatpush1.msra.mxu0 %v1085
        %1556 = vmatprep.subr.mxu0 %v1070
        %1557 = vmatpush1.msra.mxu0 %v1069
        %1558 = vmatprep.subr.mxu0 %v1054
        %1559 = vmatpush1.msra.mxu0 %v1053
        %1560 = vmatprep.subr.mxu0 %v1038
        %1561 = vmatpush1.msra.mxu0 %v1037
        %1562 = vmatprep.subr.mxu0 %v1022
        %1563 = vmatpush1.msra.mxu0 %v1021
        %1564 = vmatprep.subr.mxu0 %v1006
        %1565 = vmatpush1.msra.mxu0 %v1005
        %1566 = vmatprep.subr.mxu0 %v990
        %1567 = vmatpush1.msra.mxu0 %v989
        %1568 = vmatprep.subr.mxu0 %v974
        %1569 = vmatpush1.msra.mxu0 %v973
        %1570 = vmatprep.subr.mxu0 %v958
        %1571 = vmatpush1.msra.mxu0 %v957
        %1572 = vmatprep.subr.mxu0 %v1454
        %1573 = vmatpush2.msra.mxu0 %v1453
        %1574 = vmatprep.subr.mxu0 %v1438
        %1575 = vmatpush2.msra.mxu0 %v1437
        %1576 = vmatprep.subr.mxu0 %v1422
        %1577 = vmatpush2.msra.mxu0 %v1421
        %1578 = vmatprep.subr.mxu0 %v1406
        %1579 = vmatpush2.msra.mxu0 %v1405
        %1580 = vmatprep.subr.mxu0 %v1390
        %1581 = vmatpush2.msra.mxu0 %v1389
        %1582 = vmatprep.subr.mxu0 %v1374
        %1583 = vmatpush2.msra.mxu0 %v1373
        %1584 = vmatprep.subr.mxu0 %v1358
        %1585 = vmatpush2.msra.mxu0 %v1357
        %1586 = vmatprep.subr.mxu0 %v1342
        %1587 = vmatpush2.msra.mxu0 %v1341
        %1588 = vmatprep.subr.mxu0 %v1326
        %1589 = vmatpush2.msra.mxu0 %v1325
        %1590 = vmatprep.subr.mxu0 %v1310
        %1591 = vmatpush2.msra.mxu0 %v1309
        %1592 = vmatprep.subr.mxu0 %v1294
        %1593 = vmatpush2.msra.mxu0 %v1293
        %1594 = vmatprep.subr.mxu0 %v1278
        %1595 = vmatpush2.msra.mxu0 %v1277
        %1596 = vmatprep.subr.mxu0 %v1262
        %1597 = vmatpush2.msra.mxu0 %v1261
        %1598 = vmatprep.subr.mxu0 %v1246
        %1599 = vmatpush2.msra.mxu0 %v1245
        %1600 = vmatprep.subr.mxu0 %v1230
        %1601 = vmatpush2.msra.mxu0 %v1229
        %1602 = vmatprep.subr.mxu0 %v1214
        %1603 = vmatpush2.msra.mxu0 %v1213
        %1604 = vmatprep.mubr.f32.mxu0 %v444
        %1605 = vmatmul.mubr.f32.gmra.mxu0 %v443
        %v1606 = vpop.f32.mrf.mxu0
        %v1607 = vadd.f32 %v1536, %v1606
        %v1608 = vpop.f32.mrf.mxu0
        %v1609 = vadd.f32 %v1538, %v1608
        %1610 = vdwg.mxu0
        %1611 = vmatprep.subr.mxu0 %v688
        %1612 = vmatpush1.msra.mxu0 %v687
        %1613 = vmatprep.subr.mxu0 %v672
        %1614 = vmatpush1.msra.mxu0 %v671
        %1615 = vmatprep.subr.mxu0 %v656
        %1616 = vmatpush1.msra.mxu0 %v655
        %1617 = vmatprep.subr.mxu0 %v640
        %1618 = vmatpush1.msra.mxu0 %v639
        %1619 = vmatprep.subr.mxu0 %v624
        %1620 = vmatpush1.msra.mxu0 %v623
        %1621 = vmatprep.subr.mxu0 %v608
        %1622 = vmatpush1.msra.mxu0 %v607
        %1623 = vmatprep.subr.mxu0 %v592
        %1624 = vmatpush1.msra.mxu0 %v591
        %1625 = vmatprep.subr.mxu0 %v576
        %1626 = vmatpush1.msra.mxu0 %v575
        %1627 = vmatprep.subr.mxu0 %v560
        %1628 = vmatpush1.msra.mxu0 %v559
        %1629 = vmatprep.subr.mxu0 %v544
        %1630 = vmatpush1.msra.mxu0 %v543
        %1631 = vmatprep.subr.mxu0 %v528
        %1632 = vmatpush1.msra.mxu0 %v527
        %1633 = vmatprep.subr.mxu0 %v512
        %1634 = vmatpush1.msra.mxu0 %v511
        %1635 = vmatprep.subr.mxu0 %v496
        %1636 = vmatpush1.msra.mxu0 %v495
        %1637 = vmatprep.subr.mxu0 %v480
        %1638 = vmatpush1.msra.mxu0 %v479
        %1639 = vmatprep.subr.mxu0 %v464
        %1640 = vmatpush1.msra.mxu0 %v463
        %1641 = vmatprep.subr.mxu0 %v448
        %1642 = vmatpush1.msra.mxu0 %v447
        %1643 = vmatprep.subr.mxu0 %v944
        %1644 = vmatpush2.msra.mxu0 %v943
        %1645 = vmatprep.subr.mxu0 %v928
        %1646 = vmatpush2.msra.mxu0 %v927
        %1647 = vmatprep.subr.mxu0 %v912
        %1648 = vmatpush2.msra.mxu0 %v911
        %1649 = vmatprep.subr.mxu0 %v896
        %1650 = vmatpush2.msra.mxu0 %v895
        %1651 = vmatprep.subr.mxu0 %v880
        %1652 = vmatpush2.msra.mxu0 %v879
        %1653 = vmatprep.subr.mxu0 %v864
        %1654 = vmatpush2.msra.mxu0 %v863
        %1655 = vmatprep.subr.mxu0 %v848
        %1656 = vmatpush2.msra.mxu0 %v847
        %1657 = vmatprep.subr.mxu0 %v832
        %1658 = vmatpush2.msra.mxu0 %v831
        %1659 = vmatprep.subr.mxu0 %v816
        %1660 = vmatpush2.msra.mxu0 %v815
        %1661 = vmatprep.subr.mxu0 %v800
        %1662 = vmatpush2.msra.mxu0 %v799
        %1663 = vmatprep.subr.mxu0 %v784
        %1664 = vmatpush2.msra.mxu0 %v783
        %1665 = vmatprep.subr.mxu0 %v768
        %1666 = vmatpush2.msra.mxu0 %v767
        %1667 = vmatprep.subr.mxu0 %v752
        %1668 = vmatpush2.msra.mxu0 %v751
        %1669 = vmatprep.subr.mxu0 %v736
        %1670 = vmatpush2.msra.mxu0 %v735
        %1671 = vmatprep.subr.mxu0 %v720
        %1672 = vmatpush2.msra.mxu0 %v719
        %1673 = vmatprep.subr.mxu0 %v704
        %1674 = vmatpush2.msra.mxu0 %v703
        %1675 = vmatprep.mubr.f32.mxu0 %v442
        %1676 = vmatmul.mubr.f32.gmra.mxu0 %v441
        %v1677 = vpop.f32.mrf.mxu0
        %v1678 = vadd.f32 0.0, %v1677
        %v1679 = vpop.f32.mrf.mxu0
        %v1680 = vadd.f32 0.0, %v1679
        %1681 = vdwg.mxu0
        %1682 = vmatprep.subr.mxu0 %v1200
        %1683 = vmatpush1.msra.mxu0 %v1199
        %1684 = vmatprep.subr.mxu0 %v1184
        %1685 = vmatpush1.msra.mxu0 %v1183
        %1686 = vmatprep.subr.mxu0 %v1168
        %1687 = vmatpush1.msra.mxu0 %v1167
        %1688 = vmatprep.subr.mxu0 %v1152
        %1689 = vmatpush1.msra.mxu0 %v1151
        %1690 = vmatprep.subr.mxu0 %v1136
        %1691 = vmatpush1.msra.mxu0 %v1135
        %1692 = vmatprep.subr.mxu0 %v1120
        %1693 = vmatpush1.msra.mxu0 %v1119
        %1694 = vmatprep.subr.mxu0 %v1104
        %1695 = vmatpush1.msra.mxu0 %v1103
        %1696 = vmatprep.subr.mxu0 %v1088
        %1697 = vmatpush1.msra.mxu0 %v1087
        %1698 = vmatprep.subr.mxu0 %v1072
        %1699 = vmatpush1.msra.mxu0 %v1071
        %1700 = vmatprep.subr.mxu0 %v1056
        %1701 = vmatpush1.msra.mxu0 %v1055
        %1702 = vmatprep.subr.mxu0 %v1040
        %1703 = vmatpush1.msra.mxu0 %v1039
        %1704 = vmatprep.subr.mxu0 %v1024
        %1705 = vmatpush1.msra.mxu0 %v1023
        %1706 = vmatprep.subr.mxu0 %v1008
        %1707 = vmatpush1.msra.mxu0 %v1007
        %1708 = vmatprep.subr.mxu0 %v992
        %1709 = vmatpush1.msra.mxu0 %v991
        %1710 = vmatprep.subr.mxu0 %v976
        %1711 = vmatpush1.msra.mxu0 %v975
        %1712 = vmatprep.subr.mxu0 %v960
        %1713 = vmatpush1.msra.mxu0 %v959
        %1714 = vmatprep.subr.mxu0 %v1456
        %1715 = vmatpush2.msra.mxu0 %v1455
        %1716 = vmatprep.subr.mxu0 %v1440
        %1717 = vmatpush2.msra.mxu0 %v1439
        %1718 = vmatprep.subr.mxu0 %v1424
        %1719 = vmatpush2.msra.mxu0 %v1423
        %1720 = vmatprep.subr.mxu0 %v1408
        %1721 = vmatpush2.msra.mxu0 %v1407
        %1722 = vmatprep.subr.mxu0 %v1392
        %1723 = vmatpush2.msra.mxu0 %v1391
        %1724 = vmatprep.subr.mxu0 %v1376
        %1725 = vmatpush2.msra.mxu0 %v1375
        %1726 = vmatprep.subr.mxu0 %v1360
        %1727 = vmatpush2.msra.mxu0 %v1359
        %1728 = vmatprep.subr.mxu0 %v1344
        %1729 = vmatpush2.msra.mxu0 %v1343
        %1730 = vmatprep.subr.mxu0 %v1328
        %1731 = vmatpush2.msra.mxu0 %v1327
        %1732 = vmatprep.subr.mxu0 %v1312
        %1733 = vmatpush2.msra.mxu0 %v1311
        %1734 = vmatprep.subr.mxu0 %v1296
        %1735 = vmatpush2.msra.mxu0 %v1295
        %1736 = vmatprep.subr.mxu0 %v1280
        %1737 = vmatpush2.msra.mxu0 %v1279
        %1738 = vmatprep.subr.mxu0 %v1264
        %1739 = vmatpush2.msra.mxu0 %v1263
        %1740 = vmatprep.subr.mxu0 %v1248
        %1741 = vmatpush2.msra.mxu0 %v1247
        %1742 = vmatprep.subr.mxu0 %v1232
        %1743 = vmatpush2.msra.mxu0 %v1231
        %1744 = vmatprep.subr.mxu0 %v1216
        %1745 = vmatpush2.msra.mxu0 %v1215
        %1746 = vmatprep.mubr.f32.mxu0 %v444
        %1747 = vmatmul.mubr.f32.gmra.mxu0 %v443
        %v1748 = vpop.f32.mrf.mxu0
        %v1749 = vadd.f32 %v1678, %v1748
        %v1750 = vpop.f32.mrf.mxu0
        %v1751 = vadd.f32 %v1680, %v1750
        %1752 = vdwg.mxu0
        %1753 = vmatprep.subr.mxu0 %v690
        %1754 = vmatpush1.msra.mxu0 %v689
        %1755 = vmatprep.subr.mxu0 %v674
        %1756 = vmatpush1.msra.mxu0 %v673
        %1757 = vmatprep.subr.mxu0 %v658
        %1758 = vmatpush1.msra.mxu0 %v657
        %1759 = vmatprep.subr.mxu0 %v642
        %1760 = vmatpush1.msra.mxu0 %v641
        %1761 = vmatprep.subr.mxu0 %v626
        %1762 = vmatpush1.msra.mxu0 %v625
        %1763 = vmatprep.subr.mxu0 %v610
        %1764 = vmatpush1.msra.mxu0 %v609
        %1765 = vmatprep.subr.mxu0 %v594
        %1766 = vmatpush1.msra.mxu0 %v593
        %1767 = vmatprep.subr.mxu0 %v578
        %1768 = vmatpush1.msra.mxu0 %v577
        %1769 = vmatprep.subr.mxu0 %v562
        %1770 = vmatpush1.msra.mxu0 %v561
        %1771 = vmatprep.subr.mxu0 %v546
        %1772 = vmatpush1.msra.mxu0 %v545
        %1773 = vmatprep.subr.mxu0 %v530
        %1774 = vmatpush1.msra.mxu0 %v529
        %1775 = vmatprep.subr.mxu0 %v514
        %1776 = vmatpush1.msra.mxu0 %v513
        %1777 = vmatprep.subr.mxu0 %v498
        %1778 = vmatpush1.msra.mxu0 %v497
        %1779 = vmatprep.subr.mxu0 %v482
        %1780 = vmatpush1.msra.mxu0 %v481
        %1781 = vmatprep.subr.mxu0 %v466
        %1782 = vmatpush1.msra.mxu0 %v465
        %1783 = vmatprep.subr.mxu0 %v450
        %1784 = vmatpush1.msra.mxu0 %v449
        %1785 = vmatprep.subr.mxu0 %v946
        %1786 = vmatpush2.msra.mxu0 %v945
        %1787 = vmatprep.subr.mxu0 %v930
        %1788 = vmatpush2.msra.mxu0 %v929
        %1789 = vmatprep.subr.mxu0 %v914
        %1790 = vmatpush2.msra.mxu0 %v913
        %1791 = vmatprep.subr.mxu0 %v898
        %1792 = vmatpush2.msra.mxu0 %v897
        %1793 = vmatprep.subr.mxu0 %v882
        %1794 = vmatpush2.msra.mxu0 %v881
        %1795 = vmatprep.subr.mxu0 %v866
        %1796 = vmatpush2.msra.mxu0 %v865
        %1797 = vmatprep.subr.mxu0 %v850
        %1798 = vmatpush2.msra.mxu0 %v849
        %1799 = vmatprep.subr.mxu0 %v834
        %1800 = vmatpush2.msra.mxu0 %v833
        %1801 = vmatprep.subr.mxu0 %v818
        %1802 = vmatpush2.msra.mxu0 %v817
        %1803 = vmatprep.subr.mxu0 %v802
        %1804 = vmatpush2.msra.mxu0 %v801
        %1805 = vmatprep.subr.mxu0 %v786
        %1806 = vmatpush2.msra.mxu0 %v785
        %1807 = vmatprep.subr.mxu0 %v770
        %1808 = vmatpush2.msra.mxu0 %v769
        %1809 = vmatprep.subr.mxu0 %v754
        %1810 = vmatpush2.msra.mxu0 %v753
        %1811 = vmatprep.subr.mxu0 %v738
        %1812 = vmatpush2.msra.mxu0 %v737
        %1813 = vmatprep.subr.mxu0 %v722
        %1814 = vmatpush2.msra.mxu0 %v721
        %1815 = vmatprep.subr.mxu0 %v706
        %1816 = vmatpush2.msra.mxu0 %v705
        %1817 = vmatprep.mubr.f32.mxu0 %v442
        %1818 = vmatmul.mubr.f32.gmra.mxu0 %v441
        %v1819 = vpop.f32.mrf.mxu0
        %v1820 = vadd.f32 0.0, %v1819
        %v1821 = vpop.f32.mrf.mxu0
        %v1822 = vadd.f32 0.0, %v1821
        %1823 = vdwg.mxu0
        %1824 = vmatprep.subr.mxu0 %v1202
        %1825 = vmatpush1.msra.mxu0 %v1201
        %1826 = vmatprep.subr.mxu0 %v1186
        %1827 = vmatpush1.msra.mxu0 %v1185
        %1828 = vmatprep.subr.mxu0 %v1170
        %1829 = vmatpush1.msra.mxu0 %v1169
        %1830 = vmatprep.subr.mxu0 %v1154
        %1831 = vmatpush1.msra.mxu0 %v1153
        %1832 = vmatprep.subr.mxu0 %v1138
        %1833 = vmatpush1.msra.mxu0 %v1137
        %1834 = vmatprep.subr.mxu0 %v1122
        %1835 = vmatpush1.msra.mxu0 %v1121
        %1836 = vmatprep.subr.mxu0 %v1106
        %1837 = vmatpush1.msra.mxu0 %v1105
        %1838 = vmatprep.subr.mxu0 %v1090
        %1839 = vmatpush1.msra.mxu0 %v1089
        %1840 = vmatprep.subr.mxu0 %v1074
        %1841 = vmatpush1.msra.mxu0 %v1073
        %1842 = vmatprep.subr.mxu0 %v1058
        %1843 = vmatpush1.msra.mxu0 %v1057
        %1844 = vmatprep.subr.mxu0 %v1042
        %1845 = vmatpush1.msra.mxu0 %v1041
        %1846 = vmatprep.subr.mxu0 %v1026
        %1847 = vmatpush1.msra.mxu0 %v1025
        %1848 = vmatprep.subr.mxu0 %v1010
        %1849 = vmatpush1.msra.mxu0 %v1009
        %1850 = vmatprep.subr.mxu0 %v994
        %1851 = vmatpush1.msra.mxu0 %v993
        %1852 = vmatprep.subr.mxu0 %v978
        %1853 = vmatpush1.msra.mxu0 %v977
        %1854 = vmatprep.subr.mxu0 %v962
        %1855 = vmatpush1.msra.mxu0 %v961
        %1856 = vmatprep.subr.mxu0 %v1458
        %1857 = vmatpush2.msra.mxu0 %v1457
        %1858 = vmatprep.subr.mxu0 %v1442
        %1859 = vmatpush2.msra.mxu0 %v1441
        %1860 = vmatprep.subr.mxu0 %v1426
        %1861 = vmatpush2.msra.mxu0 %v1425
        %1862 = vmatprep.subr.mxu0 %v1410
        %1863 = vmatpush2.msra.mxu0 %v1409
        %1864 = vmatprep.subr.mxu0 %v1394
        %1865 = vmatpush2.msra.mxu0 %v1393
        %1866 = vmatprep.subr.mxu0 %v1378
        %1867 = vmatpush2.msra.mxu0 %v1377
        %1868 = vmatprep.subr.mxu0 %v1362
        %1869 = vmatpush2.msra.mxu0 %v1361
        %1870 = vmatprep.subr.mxu0 %v1346
        %1871 = vmatpush2.msra.mxu0 %v1345
        %1872 = vmatprep.subr.mxu0 %v1330
        %1873 = vmatpush2.msra.mxu0 %v1329
        %1874 = vmatprep.subr.mxu0 %v1314
        %1875 = vmatpush2.msra.mxu0 %v1313
        %1876 = vmatprep.subr.mxu0 %v1298
        %1877 = vmatpush2.msra.mxu0 %v1297
        %1878 = vmatprep.subr.mxu0 %v1282
        %1879 = vmatpush2.msra.mxu0 %v1281
        %1880 = vmatprep.subr.mxu0 %v1266
        %1881 = vmatpush2.msra.mxu0 %v1265
        %1882 = vmatprep.subr.mxu0 %v1250
        %1883 = vmatpush2.msra.mxu0 %v1249
        %1884 = vmatprep.subr.mxu0 %v1234
        %1885 = vmatpush2.msra.mxu0 %v1233
        %1886 = vmatprep.subr.mxu0 %v1218
        %1887 = vmatpush2.msra.mxu0 %v1217
        %1888 = vmatprep.mubr.f32.mxu0 %v444
        %1889 = vmatmul.mubr.f32.gmra.mxu0 %v443
        %v1890 = vpop.f32.mrf.mxu0
        %v1891 = vadd.f32 %v1820, %v1890
        %v1892 = vpop.f32.mrf.mxu0
        %v1893 = vadd.f32 %v1822, %v1892
        %1894 = vdwg.mxu0
        %1895 = vmatprep.subr.mxu0 %v692
        %1896 = vmatpush1.msra.mxu0 %v691
        %1897 = vmatprep.subr.mxu0 %v676
        %1898 = vmatpush1.msra.mxu0 %v675
        %1899 = vmatprep.subr.mxu0 %v660
        %1900 = vmatpush1.msra.mxu0 %v659
        %1901 = vmatprep.subr.mxu0 %v644
        %1902 = vmatpush1.msra.mxu0 %v643
        %1903 = vmatprep.subr.mxu0 %v628
        %1904 = vmatpush1.msra.mxu0 %v627
        %1905 = vmatprep.subr.mxu0 %v612
        %1906 = vmatpush1.msra.mxu0 %v611
        %1907 = vmatprep.subr.mxu0 %v596
        %1908 = vmatpush1.msra.mxu0 %v595
        %1909 = vmatprep.subr.mxu0 %v580
        %1910 = vmatpush1.msra.mxu0 %v579
        %1911 = vmatprep.subr.mxu0 %v564
        %1912 = vmatpush1.msra.mxu0 %v563
        %1913 = vmatprep.subr.mxu0 %v548
        %1914 = vmatpush1.msra.mxu0 %v547
        %1915 = vmatprep.subr.mxu0 %v532
        %1916 = vmatpush1.msra.mxu0 %v531
        %1917 = vmatprep.subr.mxu0 %v516
        %1918 = vmatpush1.msra.mxu0 %v515
        %1919 = vmatprep.subr.mxu0 %v500
        %1920 = vmatpush1.msra.mxu0 %v499
        %1921 = vmatprep.subr.mxu0 %v484
        %1922 = vmatpush1.msra.mxu0 %v483
        %1923 = vmatprep.subr.mxu0 %v468
        %1924 = vmatpush1.msra.mxu0 %v467
        %1925 = vmatprep.subr.mxu0 %v452
        %1926 = vmatpush1.msra.mxu0 %v451
        %1927 = vmatprep.subr.mxu0 %v948
        %1928 = vmatpush2.msra.mxu0 %v947
        %1929 = vmatprep.subr.mxu0 %v932
        %1930 = vmatpush2.msra.mxu0 %v931
        %1931 = vmatprep.subr.mxu0 %v916
        %1932 = vmatpush2.msra.mxu0 %v915
        %1933 = vmatprep.subr.mxu0 %v900
        %1934 = vmatpush2.msra.mxu0 %v899
        %1935 = vmatprep.subr.mxu0 %v884
        %1936 = vmatpush2.msra.mxu0 %v883
        %1937 = vmatprep.subr.mxu0 %v868
        %1938 = vmatpush2.msra.mxu0 %v867
        %1939 = vmatprep.subr.mxu0 %v852
        %1940 = vmatpush2.msra.mxu0 %v851
        %1941 = vmatprep.subr.mxu0 %v836
        %1942 = vmatpush2.msra.mxu0 %v835
        %1943 = vmatprep.subr.mxu0 %v820
        %1944 = vmatpush2.msra.mxu0 %v819
        %1945 = vmatprep.subr.mxu0 %v804
        %1946 = vmatpush2.msra.mxu0 %v803
        %1947 = vmatprep.subr.mxu0 %v788
        %1948 = vmatpush2.msra.mxu0 %v787
        %1949 = vmatprep.subr.mxu0 %v772
        %1950 = vmatpush2.msra.mxu0 %v771
        %1951 = vmatprep.subr.mxu0 %v756
        %1952 = vmatpush2.msra.mxu0 %v755
        %1953 = vmatprep.subr.mxu0 %v740
        %1954 = vmatpush2.msra.mxu0 %v739
        %1955 = vmatprep.subr.mxu0 %v724
        %1956 = vmatpush2.msra.mxu0 %v723
        %1957 = vmatprep.subr.mxu0 %v708
        %1958 = vmatpush2.msra.mxu0 %v707
        %1959 = vmatprep.mubr.f32.mxu0 %v442
        %1960 = vmatmul.mubr.f32.gmra.mxu0 %v441
        %v1961 = vpop.f32.mrf.mxu0
        %v1962 = vadd.f32 0.0, %v1961
        %v1963 = vpop.f32.mrf.mxu0
        %v1964 = vadd.f32 0.0, %v1963
        %1965 = vdwg.mxu0
        %1966 = vmatprep.subr.mxu0 %v1204
        %1967 = vmatpush1.msra.mxu0 %v1203
        %1968 = vmatprep.subr.mxu0 %v1188
        %1969 = vmatpush1.msra.mxu0 %v1187
        %1970 = vmatprep.subr.mxu0 %v1172
        %1971 = vmatpush1.msra.mxu0 %v1171
        %1972 = vmatprep.subr.mxu0 %v1156
        %1973 = vmatpush1.msra.mxu0 %v1155
        %1974 = vmatprep.subr.mxu0 %v1140
        %1975 = vmatpush1.msra.mxu0 %v1139
        %1976 = vmatprep.subr.mxu0 %v1124
        %1977 = vmatpush1.msra.mxu0 %v1123
        %1978 = vmatprep.subr.mxu0 %v1108
        %1979 = vmatpush1.msra.mxu0 %v1107
        %1980 = vmatprep.subr.mxu0 %v1092
        %1981 = vmatpush1.msra.mxu0 %v1091
        %1982 = vmatprep.subr.mxu0 %v1076
        %1983 = vmatpush1.msra.mxu0 %v1075
        %1984 = vmatprep.subr.mxu0 %v1060
        %1985 = vmatpush1.msra.mxu0 %v1059
        %1986 = vmatprep.subr.mxu0 %v1044
        %1987 = vmatpush1.msra.mxu0 %v1043
        %1988 = vmatprep.subr.mxu0 %v1028
        %1989 = vmatpush1.msra.mxu0 %v1027
        %1990 = vmatprep.subr.mxu0 %v1012
        %1991 = vmatpush1.msra.mxu0 %v1011
        %1992 = vmatprep.subr.mxu0 %v996
        %1993 = vmatpush1.msra.mxu0 %v995
        %1994 = vmatprep.subr.mxu0 %v980
        %1995 = vmatpush1.msra.mxu0 %v979
        %1996 = vmatprep.subr.mxu0 %v964
        %1997 = vmatpush1.msra.mxu0 %v963
        %1998 = vmatprep.subr.mxu0 %v1460
        %1999 = vmatpush2.msra.mxu0 %v1459
        %2000 = vmatprep.subr.mxu0 %v1444
        %2001 = vmatpush2.msra.mxu0 %v1443
        %2002 = vmatprep.subr.mxu0 %v1428
        %2003 = vmatpush2.msra.mxu0 %v1427
        %2004 = vmatprep.subr.mxu0 %v1412
        %2005 = vmatpush2.msra.mxu0 %v1411
        %2006 = vmatprep.subr.mxu0 %v1396
        %2007 = vmatpush2.msra.mxu0 %v1395
        %2008 = vmatprep.subr.mxu0 %v1380
        %2009 = vmatpush2.msra.mxu0 %v1379
        %2010 = vmatprep.subr.mxu0 %v1364
        %2011 = vmatpush2.msra.mxu0 %v1363
        %2012 = vmatprep.subr.mxu0 %v1348
        %2013 = vmatpush2.msra.mxu0 %v1347
        %2014 = vmatprep.subr.mxu0 %v1332
        %2015 = vmatpush2.msra.mxu0 %v1331
        %2016 = vmatprep.subr.mxu0 %v1316
        %2017 = vmatpush2.msra.mxu0 %v1315
        %2018 = vmatprep.subr.mxu0 %v1300
        %2019 = vmatpush2.msra.mxu0 %v1299
        %2020 = vmatprep.subr.mxu0 %v1284
        %2021 = vmatpush2.msra.mxu0 %v1283
        %2022 = vmatprep.subr.mxu0 %v1268
        %2023 = vmatpush2.msra.mxu0 %v1267
        %2024 = vmatprep.subr.mxu0 %v1252
        %2025 = vmatpush2.msra.mxu0 %v1251
        %2026 = vmatprep.subr.mxu0 %v1236
        %2027 = vmatpush2.msra.mxu0 %v1235
        %2028 = vmatprep.subr.mxu0 %v1220
        %2029 = vmatpush2.msra.mxu0 %v1219
        %2030 = vmatprep.mubr.f32.mxu0 %v444
        %2031 = vmatmul.mubr.f32.gmra.mxu0 %v443
        %v2032 = vpop.f32.mrf.mxu0
        %v2033 = vadd.f32 %v1962, %v2032
        %v2034 = vpop.f32.mrf.mxu0
        %v2035 = vadd.f32 %v1964, %v2034
        %2036 = vdwg.mxu0
        %2037 = vmatprep.subr.mxu0 %v694
        %2038 = vmatpush1.msra.mxu0 %v693
        %2039 = vmatprep.subr.mxu0 %v678
        %2040 = vmatpush1.msra.mxu0 %v677
        %2041 = vmatprep.subr.mxu0 %v662
        %2042 = vmatpush1.msra.mxu0 %v661
        %2043 = vmatprep.subr.mxu0 %v646
        %2044 = vmatpush1.msra.mxu0 %v645
        %2045 = vmatprep.subr.mxu0 %v630
        %2046 = vmatpush1.msra.mxu0 %v629
        %2047 = vmatprep.subr.mxu0 %v614
        %2048 = vmatpush1.msra.mxu0 %v613
        %2049 = vmatprep.subr.mxu0 %v598
        %2050 = vmatpush1.msra.mxu0 %v597
        %2051 = vmatprep.subr.mxu0 %v582
        %2052 = vmatpush1.msra.mxu0 %v581
        %2053 = vmatprep.subr.mxu0 %v566
        %2054 = vmatpush1.msra.mxu0 %v565
        %2055 = vmatprep.subr.mxu0 %v550
        %2056 = vmatpush1.msra.mxu0 %v549
        %2057 = vmatprep.subr.mxu0 %v534
        %2058 = vmatpush1.msra.mxu0 %v533
        %2059 = vmatprep.subr.mxu0 %v518
        %2060 = vmatpush1.msra.mxu0 %v517
        %2061 = vmatprep.subr.mxu0 %v502
        %2062 = vmatpush1.msra.mxu0 %v501
        %2063 = vmatprep.subr.mxu0 %v486
        %2064 = vmatpush1.msra.mxu0 %v485
        %2065 = vmatprep.subr.mxu0 %v470
        %2066 = vmatpush1.msra.mxu0 %v469
        %2067 = vmatprep.subr.mxu0 %v454
        %2068 = vmatpush1.msra.mxu0 %v453
        %2069 = vmatprep.subr.mxu0 %v950
        %2070 = vmatpush2.msra.mxu0 %v949
        %2071 = vmatprep.subr.mxu0 %v934
        %2072 = vmatpush2.msra.mxu0 %v933
        %2073 = vmatprep.subr.mxu0 %v918
        %2074 = vmatpush2.msra.mxu0 %v917
        %2075 = vmatprep.subr.mxu0 %v902
        %2076 = vmatpush2.msra.mxu0 %v901
        %2077 = vmatprep.subr.mxu0 %v886
        %2078 = vmatpush2.msra.mxu0 %v885
        %2079 = vmatprep.subr.mxu0 %v870
        %2080 = vmatpush2.msra.mxu0 %v869
        %2081 = vmatprep.subr.mxu0 %v854
        %2082 = vmatpush2.msra.mxu0 %v853
        %2083 = vmatprep.subr.mxu0 %v838
        %2084 = vmatpush2.msra.mxu0 %v837
        %2085 = vmatprep.subr.mxu0 %v822
        %2086 = vmatpush2.msra.mxu0 %v821
        %2087 = vmatprep.subr.mxu0 %v806
        %2088 = vmatpush2.msra.mxu0 %v805
        %2089 = vmatprep.subr.mxu0 %v790
        %2090 = vmatpush2.msra.mxu0 %v789
        %2091 = vmatprep.subr.mxu0 %v774
        %2092 = vmatpush2.msra.mxu0 %v773
        %2093 = vmatprep.subr.mxu0 %v758
        %2094 = vmatpush2.msra.mxu0 %v757
        %2095 = vmatprep.subr.mxu0 %v742
        %2096 = vmatpush2.msra.mxu0 %v741
        %2097 = vmatprep.subr.mxu0 %v726
        %2098 = vmatpush2.msra.mxu0 %v725
        %2099 = vmatprep.subr.mxu0 %v710
        %2100 = vmatpush2.msra.mxu0 %v709
        %2101 = vmatprep.mubr.f32.mxu0 %v442
        %2102 = vmatmul.mubr.f32.gmra.mxu0 %v441
        %v2103 = vpop.f32.mrf.mxu0
        %v2104 = vadd.f32 0.0, %v2103
        %v2105 = vpop.f32.mrf.mxu0
        %v2106 = vadd.f32 0.0, %v2105
        %2107 = vdwg.mxu0
        %2108 = vmatprep.subr.mxu0 %v1206
        %2109 = vmatpush1.msra.mxu0 %v1205
        %2110 = vmatprep.subr.mxu0 %v1190
        %2111 = vmatpush1.msra.mxu0 %v1189
        %2112 = vmatprep.subr.mxu0 %v1174
        %2113 = vmatpush1.msra.mxu0 %v1173
        %2114 = vmatprep.subr.mxu0 %v1158
        %2115 = vmatpush1.msra.mxu0 %v1157
        %2116 = vmatprep.subr.mxu0 %v1142
        %2117 = vmatpush1.msra.mxu0 %v1141
        %2118 = vmatprep.subr.mxu0 %v1126
        %2119 = vmatpush1.msra.mxu0 %v1125
        %2120 = vmatprep.subr.mxu0 %v1110
        %2121 = vmatpush1.msra.mxu0 %v1109
        %2122 = vmatprep.subr.mxu0 %v1094
        %2123 = vmatpush1.msra.mxu0 %v1093
        %2124 = vmatprep.subr.mxu0 %v1078
        %2125 = vmatpush1.msra.mxu0 %v1077
        %2126 = vmatprep.subr.mxu0 %v1062
        %2127 = vmatpush1.msra.mxu0 %v1061
        %2128 = vmatprep.subr.mxu0 %v1046
        %2129 = vmatpush1.msra.mxu0 %v1045
        %2130 = vmatprep.subr.mxu0 %v1030
        %2131 = vmatpush1.msra.mxu0 %v1029
        %2132 = vmatprep.subr.mxu0 %v1014
        %2133 = vmatpush1.msra.mxu0 %v1013
        %2134 = vmatprep.subr.mxu0 %v998
        %2135 = vmatpush1.msra.mxu0 %v997
        %2136 = vmatprep.subr.mxu0 %v982
        %2137 = vmatpush1.msra.mxu0 %v981
        %2138 = vmatprep.subr.mxu0 %v966
        %2139 = vmatpush1.msra.mxu0 %v965
        %2140 = vmatprep.subr.mxu0 %v1462
        %2141 = vmatpush2.msra.mxu0 %v1461
        %2142 = vmatprep.subr.mxu0 %v1446
        %2143 = vmatpush2.msra.mxu0 %v1445
        %2144 = vmatprep.subr.mxu0 %v1430
        %2145 = vmatpush2.msra.mxu0 %v1429
        %2146 = vmatprep.subr.mxu0 %v1414
        %2147 = vmatpush2.msra.mxu0 %v1413
        %2148 = vmatprep.subr.mxu0 %v1398
        %2149 = vmatpush2.msra.mxu0 %v1397
        %2150 = vmatprep.subr.mxu0 %v1382
        %2151 = vmatpush2.msra.mxu0 %v1381
        %2152 = vmatprep.subr.mxu0 %v1366
        %2153 = vmatpush2.msra.mxu0 %v1365
        %2154 = vmatprep.subr.mxu0 %v1350
        %2155 = vmatpush2.msra.mxu0 %v1349
        %2156 = vmatprep.subr.mxu0 %v1334
        %2157 = vmatpush2.msra.mxu0 %v1333
        %2158 = vmatprep.subr.mxu0 %v1318
        %2159 = vmatpush2.msra.mxu0 %v1317
        %2160 = vmatprep.subr.mxu0 %v1302
        %2161 = vmatpush2.msra.mxu0 %v1301
        %2162 = vmatprep.subr.mxu0 %v1286
        %2163 = vmatpush2.msra.mxu0 %v1285
        %2164 = vmatprep.subr.mxu0 %v1270
        %2165 = vmatpush2.msra.mxu0 %v1269
        %2166 = vmatprep.subr.mxu0 %v1254
        %2167 = vmatpush2.msra.mxu0 %v1253
        %2168 = vmatprep.subr.mxu0 %v1238
        %2169 = vmatpush2.msra.mxu0 %v1237
        %2170 = vmatprep.subr.mxu0 %v1222
        %2171 = vmatpush2.msra.mxu0 %v1221
        %2172 = vmatprep.mubr.f32.mxu0 %v444
        %2173 = vmatmul.mubr.f32.gmra.mxu0 %v443
        %v2174 = vpop.f32.mrf.mxu0
        %v2175 = vadd.f32 %v2104, %v2174
        %v2176 = vpop.f32.mrf.mxu0
        %v2177 = vadd.f32 %v2106, %v2176
        %2178 = vdwg.mxu0
        %2179 = vmatprep.subr.mxu0 %v696
        %2180 = vmatpush1.msra.mxu0 %v695
        %2181 = vmatprep.subr.mxu0 %v680
        %2182 = vmatpush1.msra.mxu0 %v679
        %2183 = vmatprep.subr.mxu0 %v664
        %2184 = vmatpush1.msra.mxu0 %v663
        %2185 = vmatprep.subr.mxu0 %v648
        %2186 = vmatpush1.msra.mxu0 %v647
        %2187 = vmatprep.subr.mxu0 %v632
        %2188 = vmatpush1.msra.mxu0 %v631
        %2189 = vmatprep.subr.mxu0 %v616
        %2190 = vmatpush1.msra.mxu0 %v615
        %2191 = vmatprep.subr.mxu0 %v600
        %2192 = vmatpush1.msra.mxu0 %v599
        %2193 = vmatprep.subr.mxu0 %v584
        %2194 = vmatpush1.msra.mxu0 %v583
        %2195 = vmatprep.subr.mxu0 %v568
        %2196 = vmatpush1.msra.mxu0 %v567
        %2197 = vmatprep.subr.mxu0 %v552
        %2198 = vmatpush1.msra.mxu0 %v551
        %2199 = vmatprep.subr.mxu0 %v536
        %2200 = vmatpush1.msra.mxu0 %v535
        %2201 = vmatprep.subr.mxu0 %v520
        %2202 = vmatpush1.msra.mxu0 %v519
        %2203 = vmatprep.subr.mxu0 %v504
        %2204 = vmatpush1.msra.mxu0 %v503
        %2205 = vmatprep.subr.mxu0 %v488
        %2206 = vmatpush1.msra.mxu0 %v487
        %2207 = vmatprep.subr.mxu0 %v472
        %2208 = vmatpush1.msra.mxu0 %v471
        %2209 = vmatprep.subr.mxu0 %v456
        %2210 = vmatpush1.msra.mxu0 %v455
        %2211 = vmatprep.subr.mxu0 %v952
        %2212 = vmatpush2.msra.mxu0 %v951
        %2213 = vmatprep.subr.mxu0 %v936
        %2214 = vmatpush2.msra.mxu0 %v935
        %2215 = vmatprep.subr.mxu0 %v920
        %2216 = vmatpush2.msra.mxu0 %v919
        %2217 = vmatprep.subr.mxu0 %v904
        %2218 = vmatpush2.msra.mxu0 %v903
        %2219 = vmatprep.subr.mxu0 %v888
        %2220 = vmatpush2.msra.mxu0 %v887
        %2221 = vmatprep.subr.mxu0 %v872
        %2222 = vmatpush2.msra.mxu0 %v871
        %2223 = vmatprep.subr.mxu0 %v856
        %2224 = vmatpush2.msra.mxu0 %v855
        %2225 = vmatprep.subr.mxu0 %v840
        %2226 = vmatpush2.msra.mxu0 %v839
        %2227 = vmatprep.subr.mxu0 %v824
        %2228 = vmatpush2.msra.mxu0 %v823
        %2229 = vmatprep.subr.mxu0 %v808
        %2230 = vmatpush2.msra.mxu0 %v807
        %2231 = vmatprep.subr.mxu0 %v792
        %2232 = vmatpush2.msra.mxu0 %v791
        %2233 = vmatprep.subr.mxu0 %v776
        %2234 = vmatpush2.msra.mxu0 %v775
        %2235 = vmatprep.subr.mxu0 %v760
        %2236 = vmatpush2.msra.mxu0 %v759
        %2237 = vmatprep.subr.mxu0 %v744
        %2238 = vmatpush2.msra.mxu0 %v743
        %2239 = vmatprep.subr.mxu0 %v728
        %2240 = vmatpush2.msra.mxu0 %v727
        %2241 = vmatprep.subr.mxu0 %v712
        %2242 = vmatpush2.msra.mxu0 %v711
        %2243 = vmatprep.mubr.f32.mxu0 %v442
        %2244 = vmatmul.mubr.f32.gmra.mxu0 %v441
        %v2245 = vpop.f32.mrf.mxu0
        %v2246 = vadd.f32 0.0, %v2245
        %v2247 = vpop.f32.mrf.mxu0
        %v2248 = vadd.f32 0.0, %v2247
        %2249 = vdwg.mxu0
        %2250 = vmatprep.subr.mxu0 %v1208
        %2251 = vmatpush1.msra.mxu0 %v1207
        %2252 = vmatprep.subr.mxu0 %v1192
        %2253 = vmatpush1.msra.mxu0 %v1191
        %2254 = vmatprep.subr.mxu0 %v1176
        %2255 = vmatpush1.msra.mxu0 %v1175
        %2256 = vmatprep.subr.mxu0 %v1160
        %2257 = vmatpush1.msra.mxu0 %v1159
        %2258 = vmatprep.subr.mxu0 %v1144
        %2259 = vmatpush1.msra.mxu0 %v1143
        %2260 = vmatprep.subr.mxu0 %v1128
        %2261 = vmatpush1.msra.mxu0 %v1127
        %2262 = vmatprep.subr.mxu0 %v1112
        %2263 = vmatpush1.msra.mxu0 %v1111
        %2264 = vmatprep.subr.mxu0 %v1096
        %2265 = vmatpush1.msra.mxu0 %v1095
        %2266 = vmatprep.subr.mxu0 %v1080
        %2267 = vmatpush1.msra.mxu0 %v1079
        %2268 = vmatprep.subr.mxu0 %v1064
        %2269 = vmatpush1.msra.mxu0 %v1063
        %2270 = vmatprep.subr.mxu0 %v1048
        %2271 = vmatpush1.msra.mxu0 %v1047
        %2272 = vmatprep.subr.mxu0 %v1032
        %2273 = vmatpush1.msra.mxu0 %v1031
        %2274 = vmatprep.subr.mxu0 %v1016
        %2275 = vmatpush1.msra.mxu0 %v1015
        %2276 = vmatprep.subr.mxu0 %v1000
        %2277 = vmatpush1.msra.mxu0 %v999
        %2278 = vmatprep.subr.mxu0 %v984
        %2279 = vmatpush1.msra.mxu0 %v983
        %2280 = vmatprep.subr.mxu0 %v968
        %2281 = vmatpush1.msra.mxu0 %v967
        %2282 = vmatprep.subr.mxu0 %v1464
        %2283 = vmatpush2.msra.mxu0 %v1463
        %2284 = vmatprep.subr.mxu0 %v1448
        %2285 = vmatpush2.msra.mxu0 %v1447
        %2286 = vmatprep.subr.mxu0 %v1432
        %2287 = vmatpush2.msra.mxu0 %v1431
        %2288 = vmatprep.subr.mxu0 %v1416
        %2289 = vmatpush2.msra.mxu0 %v1415
        %2290 = vmatprep.subr.mxu0 %v1400
        %2291 = vmatpush2.msra.mxu0 %v1399
        %2292 = vmatprep.subr.mxu0 %v1384
        %2293 = vmatpush2.msra.mxu0 %v1383
        %2294 = vmatprep.subr.mxu0 %v1368
        %2295 = vmatpush2.msra.mxu0 %v1367
        %2296 = vmatprep.subr.mxu0 %v1352
        %2297 = vmatpush2.msra.mxu0 %v1351
        %2298 = vmatprep.subr.mxu0 %v1336
        %2299 = vmatpush2.msra.mxu0 %v1335
        %2300 = vmatprep.subr.mxu0 %v1320
        %2301 = vmatpush2.msra.mxu0 %v1319
        %2302 = vmatprep.subr.mxu0 %v1304
        %2303 = vmatpush2.msra.mxu0 %v1303
        %2304 = vmatprep.subr.mxu0 %v1288
        %2305 = vmatpush2.msra.mxu0 %v1287
        %2306 = vmatprep.subr.mxu0 %v1272
        %2307 = vmatpush2.msra.mxu0 %v1271
        %2308 = vmatprep.subr.mxu0 %v1256
        %2309 = vmatpush2.msra.mxu0 %v1255
        %2310 = vmatprep.subr.mxu0 %v1240
        %2311 = vmatpush2.msra.mxu0 %v1239
        %2312 = vmatprep.subr.mxu0 %v1224
        %2313 = vmatpush2.msra.mxu0 %v1223
        %2314 = vmatprep.mubr.f32.mxu0 %v444
        %2315 = vmatmul.mubr.f32.gmra.mxu0 %v443
        %v2316 = vpop.f32.mrf.mxu0
        %v2317 = vadd.f32 %v2246, %v2316
        %v2318 = vpop.f32.mrf.mxu0
        %v2319 = vadd.f32 %v2248, %v2318
        %2320 = vdwg.mxu0
        %2321 = vmatprep.subr.mxu0 %v698
        %2322 = vmatpush1.msra.mxu0 %v697
        %2323 = vmatprep.subr.mxu0 %v682
        %2324 = vmatpush1.msra.mxu0 %v681
        %2325 = vmatprep.subr.mxu0 %v666
        %2326 = vmatpush1.msra.mxu0 %v665
        %2327 = vmatprep.subr.mxu0 %v650
        %2328 = vmatpush1.msra.mxu0 %v649
        %2329 = vmatprep.subr.mxu0 %v634
        %2330 = vmatpush1.msra.mxu0 %v633
        %2331 = vmatprep.subr.mxu0 %v618
        %2332 = vmatpush1.msra.mxu0 %v617
        %2333 = vmatprep.subr.mxu0 %v602
        %2334 = vmatpush1.msra.mxu0 %v601
        %2335 = vmatprep.subr.mxu0 %v586
        %2336 = vmatpush1.msra.mxu0 %v585
        %2337 = vmatprep.subr.mxu0 %v570
        %2338 = vmatpush1.msra.mxu0 %v569
        %2339 = vmatprep.subr.mxu0 %v554
        %2340 = vmatpush1.msra.mxu0 %v553
        %2341 = vmatprep.subr.mxu0 %v538
        %2342 = vmatpush1.msra.mxu0 %v537
        %2343 = vmatprep.subr.mxu0 %v522
        %2344 = vmatpush1.msra.mxu0 %v521
        %2345 = vmatprep.subr.mxu0 %v506
        %2346 = vmatpush1.msra.mxu0 %v505
        %2347 = vmatprep.subr.mxu0 %v490
        %2348 = vmatpush1.msra.mxu0 %v489
        %2349 = vmatprep.subr.mxu0 %v474
        %2350 = vmatpush1.msra.mxu0 %v473
        %2351 = vmatprep.subr.mxu0 %v458
        %2352 = vmatpush1.msra.mxu0 %v457
        %2353 = vmatprep.subr.mxu0 %v954
        %2354 = vmatpush2.msra.mxu0 %v953
        %2355 = vmatprep.subr.mxu0 %v938
        %2356 = vmatpush2.msra.mxu0 %v937
        %2357 = vmatprep.subr.mxu0 %v922
        %2358 = vmatpush2.msra.mxu0 %v921
        %2359 = vmatprep.subr.mxu0 %v906
        %2360 = vmatpush2.msra.mxu0 %v905
        %2361 = vmatprep.subr.mxu0 %v890
        %2362 = vmatpush2.msra.mxu0 %v889
        %2363 = vmatprep.subr.mxu0 %v874
        %2364 = vmatpush2.msra.mxu0 %v873
        %2365 = vmatprep.subr.mxu0 %v858
        %2366 = vmatpush2.msra.mxu0 %v857
        %2367 = vmatprep.subr.mxu0 %v842
        %2368 = vmatpush2.msra.mxu0 %v841
        %2369 = vmatprep.subr.mxu0 %v826
        %2370 = vmatpush2.msra.mxu0 %v825
        %2371 = vmatprep.subr.mxu0 %v810
        %2372 = vmatpush2.msra.mxu0 %v809
        %2373 = vmatprep.subr.mxu0 %v794
        %2374 = vmatpush2.msra.mxu0 %v793
        %2375 = vmatprep.subr.mxu0 %v778
        %2376 = vmatpush2.msra.mxu0 %v777
        %2377 = vmatprep.subr.mxu0 %v762
        %2378 = vmatpush2.msra.mxu0 %v761
        %2379 = vmatprep.subr.mxu0 %v746
        %2380 = vmatpush2.msra.mxu0 %v745
        %2381 = vmatprep.subr.mxu0 %v730
        %2382 = vmatpush2.msra.mxu0 %v729
        %2383 = vmatprep.subr.mxu0 %v714
        %2384 = vmatpush2.msra.mxu0 %v713
        %2385 = vmatprep.mubr.f32.mxu0 %v442
        %2386 = vmatmul.mubr.f32.gmra.mxu0 %v441
        %v2387 = vpop.f32.mrf.mxu0
        %v2388 = vadd.f32 0.0, %v2387
        %v2389 = vpop.f32.mrf.mxu0
        %v2390 = vadd.f32 0.0, %v2389
        %2391 = vdwg.mxu0
        %2392 = vmatprep.subr.mxu0 %v1210
        %2393 = vmatpush1.msra.mxu0 %v1209
        %2394 = vmatprep.subr.mxu0 %v1194
        %2395 = vmatpush1.msra.mxu0 %v1193
        %2396 = vmatprep.subr.mxu0 %v1178
        %2397 = vmatpush1.msra.mxu0 %v1177
        %2398 = vmatprep.subr.mxu0 %v1162
        %2399 = vmatpush1.msra.mxu0 %v1161
        %2400 = vmatprep.subr.mxu0 %v1146
        %2401 = vmatpush1.msra.mxu0 %v1145
        %2402 = vmatprep.subr.mxu0 %v1130
        %2403 = vmatpush1.msra.mxu0 %v1129
        %2404 = vmatprep.subr.mxu0 %v1114
        %2405 = vmatpush1.msra.mxu0 %v1113
        %2406 = vmatprep.subr.mxu0 %v1098
        %2407 = vmatpush1.msra.mxu0 %v1097
        %2408 = vmatprep.subr.mxu0 %v1082
        %2409 = vmatpush1.msra.mxu0 %v1081
        %2410 = vmatprep.subr.mxu0 %v1066
        %2411 = vmatpush1.msra.mxu0 %v1065
        %2412 = vmatprep.subr.mxu0 %v1050
        %2413 = vmatpush1.msra.mxu0 %v1049
        %2414 = vmatprep.subr.mxu0 %v1034
        %2415 = vmatpush1.msra.mxu0 %v1033
        %2416 = vmatprep.subr.mxu0 %v1018
        %2417 = vmatpush1.msra.mxu0 %v1017
        %2418 = vmatprep.subr.mxu0 %v1002
        %2419 = vmatpush1.msra.mxu0 %v1001
        %2420 = vmatprep.subr.mxu0 %v986
        %2421 = vmatpush1.msra.mxu0 %v985
        %2422 = vmatprep.subr.mxu0 %v970
        %2423 = vmatpush1.msra.mxu0 %v969
        %2424 = vmatprep.subr.mxu0 %v1466
        %2425 = vmatpush2.msra.mxu0 %v1465
        %2426 = vmatprep.subr.mxu0 %v1450
        %2427 = vmatpush2.msra.mxu0 %v1449
        %2428 = vmatprep.subr.mxu0 %v1434
        %2429 = vmatpush2.msra.mxu0 %v1433
        %2430 = vmatprep.subr.mxu0 %v1418
        %2431 = vmatpush2.msra.mxu0 %v1417
        %2432 = vmatprep.subr.mxu0 %v1402
        %2433 = vmatpush2.msra.mxu0 %v1401
        %2434 = vmatprep.subr.mxu0 %v1386
        %2435 = vmatpush2.msra.mxu0 %v1385
        %2436 = vmatprep.subr.mxu0 %v1370
        %2437 = vmatpush2.msra.mxu0 %v1369
        %2438 = vmatprep.subr.mxu0 %v1354
        %2439 = vmatpush2.msra.mxu0 %v1353
        %2440 = vmatprep.subr.mxu0 %v1338
        %2441 = vmatpush2.msra.mxu0 %v1337
        %2442 = vmatprep.subr.mxu0 %v1322
        %2443 = vmatpush2.msra.mxu0 %v1321
        %2444 = vmatprep.subr.mxu0 %v1306
        %2445 = vmatpush2.msra.mxu0 %v1305
        %2446 = vmatprep.subr.mxu0 %v1290
        %2447 = vmatpush2.msra.mxu0 %v1289
        %2448 = vmatprep.subr.mxu0 %v1274
        %2449 = vmatpush2.msra.mxu0 %v1273
        %2450 = vmatprep.subr.mxu0 %v1258
        %2451 = vmatpush2.msra.mxu0 %v1257
        %2452 = vmatprep.subr.mxu0 %v1242
        %2453 = vmatpush2.msra.mxu0 %v1241
        %2454 = vmatprep.subr.mxu0 %v1226
        %2455 = vmatpush2.msra.mxu0 %v1225
        %2456 = vmatprep.mubr.f32.mxu0 %v444
        %2457 = vmatmul.mubr.f32.gmra.mxu0 %v443
        %v2458 = vpop.f32.mrf.mxu0
        %v2459 = vadd.f32 %v2388, %v2458
        %v2460 = vpop.f32.mrf.mxu0
        %v2461 = vadd.f32 %v2390, %v2460
        %2462 = vdwg.mxu0
        %2463 = vmatprep.subr.mxu0 %v700
        %2464 = vmatpush1.msra.mxu0 %v699
        %2465 = vmatprep.subr.mxu0 %v684
        %2466 = vmatpush1.msra.mxu0 %v683
        %2467 = vmatprep.subr.mxu0 %v668
        %2468 = vmatpush1.msra.mxu0 %v667
        %2469 = vmatprep.subr.mxu0 %v652
        %2470 = vmatpush1.msra.mxu0 %v651
        %2471 = vmatprep.subr.mxu0 %v636
        %2472 = vmatpush1.msra.mxu0 %v635
        %2473 = vmatprep.subr.mxu0 %v620
        %2474 = vmatpush1.msra.mxu0 %v619
        %2475 = vmatprep.subr.mxu0 %v604
        %2476 = vmatpush1.msra.mxu0 %v603
        %2477 = vmatprep.subr.mxu0 %v588
        %2478 = vmatpush1.msra.mxu0 %v587
        %2479 = vmatprep.subr.mxu0 %v572
        %2480 = vmatpush1.msra.mxu0 %v571
        %2481 = vmatprep.subr.mxu0 %v556
        %2482 = vmatpush1.msra.mxu0 %v555
        %2483 = vmatprep.subr.mxu0 %v540
        %2484 = vmatpush1.msra.mxu0 %v539
        %2485 = vmatprep.subr.mxu0 %v524
        %2486 = vmatpush1.msra.mxu0 %v523
        %2487 = vmatprep.subr.mxu0 %v508
        %2488 = vmatpush1.msra.mxu0 %v507
        %2489 = vmatprep.subr.mxu0 %v492
        %2490 = vmatpush1.msra.mxu0 %v491
        %2491 = vmatprep.subr.mxu0 %v476
        %2492 = vmatpush1.msra.mxu0 %v475
        %2493 = vmatprep.subr.mxu0 %v460
        %2494 = vmatpush1.msra.mxu0 %v459
        %2495 = vmatprep.subr.mxu0 %v956
        %2496 = vmatpush2.msra.mxu0 %v955
        %2497 = vmatprep.subr.mxu0 %v940
        %2498 = vmatpush2.msra.mxu0 %v939
        %2499 = vmatprep.subr.mxu0 %v924
        %2500 = vmatpush2.msra.mxu0 %v923
        %2501 = vmatprep.subr.mxu0 %v908
        %2502 = vmatpush2.msra.mxu0 %v907
        %2503 = vmatprep.subr.mxu0 %v892
        %2504 = vmatpush2.msra.mxu0 %v891
        %2505 = vmatprep.subr.mxu0 %v876
        %2506 = vmatpush2.msra.mxu0 %v875
        %2507 = vmatprep.subr.mxu0 %v860
        %2508 = vmatpush2.msra.mxu0 %v859
        %2509 = vmatprep.subr.mxu0 %v844
        %2510 = vmatpush2.msra.mxu0 %v843
        %2511 = vmatprep.subr.mxu0 %v828
        %2512 = vmatpush2.msra.mxu0 %v827
        %2513 = vmatprep.subr.mxu0 %v812
        %2514 = vmatpush2.msra.mxu0 %v811
        %2515 = vmatprep.subr.mxu0 %v796
        %2516 = vmatpush2.msra.mxu0 %v795
        %2517 = vmatprep.subr.mxu0 %v780
        %2518 = vmatpush2.msra.mxu0 %v779
        %2519 = vmatprep.subr.mxu0 %v764
        %2520 = vmatpush2.msra.mxu0 %v763
        %2521 = vmatprep.subr.mxu0 %v748
        %2522 = vmatpush2.msra.mxu0 %v747
        %2523 = vmatprep.subr.mxu0 %v732
        %2524 = vmatpush2.msra.mxu0 %v731
        %2525 = vmatprep.subr.mxu0 %v716
        %2526 = vmatpush2.msra.mxu0 %v715
        %2527 = vmatprep.mubr.f32.mxu0 %v442
        %2528 = vmatmul.mubr.f32.gmra.mxu0 %v441
        %v2529 = vpop.f32.mrf.mxu0
        %v2530 = vadd.f32 0.0, %v2529
        %v2531 = vpop.f32.mrf.mxu0
        %v2532 = vadd.f32 0.0, %v2531
        %2533 = vdwg.mxu0
        %2534 = vmatprep.subr.mxu0 %v1212
        %2535 = vmatpush1.msra.mxu0 %v1211
        %2536 = vmatprep.subr.mxu0 %v1196
        %2537 = vmatpush1.msra.mxu0 %v1195
        %2538 = vmatprep.subr.mxu0 %v1180
        %2539 = vmatpush1.msra.mxu0 %v1179
        %2540 = vmatprep.subr.mxu0 %v1164
        %2541 = vmatpush1.msra.mxu0 %v1163
        %2542 = vmatprep.subr.mxu0 %v1148
        %2543 = vmatpush1.msra.mxu0 %v1147
        %2544 = vmatprep.subr.mxu0 %v1132
        %2545 = vmatpush1.msra.mxu0 %v1131
        %2546 = vmatprep.subr.mxu0 %v1116
        %2547 = vmatpush1.msra.mxu0 %v1115
        %2548 = vmatprep.subr.mxu0 %v1100
        %2549 = vmatpush1.msra.mxu0 %v1099
        %2550 = vmatprep.subr.mxu0 %v1084
        %2551 = vmatpush1.msra.mxu0 %v1083
        %2552 = vmatprep.subr.mxu0 %v1068
        %2553 = vmatpush1.msra.mxu0 %v1067
        %2554 = vmatprep.subr.mxu0 %v1052
        %2555 = vmatpush1.msra.mxu0 %v1051
        %2556 = vmatprep.subr.mxu0 %v1036
        %2557 = vmatpush1.msra.mxu0 %v1035
        %2558 = vmatprep.subr.mxu0 %v1020
        %2559 = vmatpush1.msra.mxu0 %v1019
        %2560 = vmatprep.subr.mxu0 %v1004
        %2561 = vmatpush1.msra.mxu0 %v1003
        %2562 = vmatprep.subr.mxu0 %v988
        %2563 = vmatpush1.msra.mxu0 %v987
        %2564 = vmatprep.subr.mxu0 %v972
        %2565 = vmatpush1.msra.mxu0 %v971
        %2566 = vmatprep.subr.mxu0 %v1468
        %2567 = vmatpush2.msra.mxu0 %v1467
        %2568 = vmatprep.subr.mxu0 %v1452
        %2569 = vmatpush2.msra.mxu0 %v1451
        %2570 = vmatprep.subr.mxu0 %v1436
        %2571 = vmatpush2.msra.mxu0 %v1435
        %2572 = vmatprep.subr.mxu0 %v1420
        %2573 = vmatpush2.msra.mxu0 %v1419
        %2574 = vmatprep.subr.mxu0 %v1404
        %2575 = vmatpush2.msra.mxu0 %v1403
        %2576 = vmatprep.subr.mxu0 %v1388
        %2577 = vmatpush2.msra.mxu0 %v1387
        %2578 = vmatprep.subr.mxu0 %v1372
        %2579 = vmatpush2.msra.mxu0 %v1371
        %2580 = vmatprep.subr.mxu0 %v1356
        %2581 = vmatpush2.msra.mxu0 %v1355
        %2582 = vmatprep.subr.mxu0 %v1340
        %2583 = vmatpush2.msra.mxu0 %v1339
        %2584 = vmatprep.subr.mxu0 %v1324
        %2585 = vmatpush2.msra.mxu0 %v1323
        %2586 = vmatprep.subr.mxu0 %v1308
        %2587 = vmatpush2.msra.mxu0 %v1307
        %2588 = vmatprep.subr.mxu0 %v1292
        %2589 = vmatpush2.msra.mxu0 %v1291
        %2590 = vmatprep.subr.mxu0 %v1276
        %2591 = vmatpush2.msra.mxu0 %v1275
        %2592 = vmatprep.subr.mxu0 %v1260
        %2593 = vmatpush2.msra.mxu0 %v1259
        %2594 = vmatprep.subr.mxu0 %v1244
        %2595 = vmatpush2.msra.mxu0 %v1243
        %2596 = vmatprep.subr.mxu0 %v1228
        %2597 = vmatpush2.msra.mxu0 %v1227
        %2598 = vmatprep.mubr.f32.mxu0 %v444
        %2599 = vmatmul.mubr.f32.gmra.mxu0 %v443
        %v2600 = vpop.f32.mrf.mxu0
        %v2601 = vadd.f32 %v2530, %v2600
        %v2602 = vpop.f32.mrf.mxu0
        %v2603 = vadd.f32 %v2532, %v2602
        %2604 = vdwg.mxu0
        %v2605 = vld [vmem:[#allocation5] sm:$0xf]
        %v2607 = vlaneseq
        %v2608 = vshrl.u32 %v2607, 7
        %v2609 = vsub.s32 0, %v2608
        %v2610 = vrot.slane %v2605, %v2609
        %v2611 = vlaneseq
        %v2612 = vshrl.u32 %v2611, 7
        %v2613 = vsub.s32 1, %v2612
        %v2614 = vrot.slane %v2605, %v2613
        %v2615 = vlaneseq
        %v2616 = vshrl.u32 %v2615, 7
        %v2617 = vsub.s32 2, %v2616
        %v2618 = vrot.slane %v2605, %v2617
        %v2619 = vlaneseq
        %v2620 = vshrl.u32 %v2619, 7
        %v2621 = vsub.s32 3, %v2620
        %v2622 = vrot.slane %v2605, %v2621
        %v2627 = vld [vmem:[%s2] sm:$0xff]
        %v2628 = vld [vmem:[%s2 + $0x8] sm:$0xff]
        %vm2629 = vcmask 64512
        %v2631 = vsel %vm2629, %v2627, 0
        %v2634 = vsel %vm2629, %v2628, 0
        %2636 = vmatprep.subr.mxu0 0.0
        %2637 = vmatpush1.msra.mxu0 0.0
        %2638 = vmatprep.subr.mxu0 0.0
        %2639 = vmatpush1.msra.mxu0 0.0
        %2640 = vmatprep.subr.mxu0 0.0
        %2641 = vmatpush1.msra.mxu0 0.0
        %2642 = vmatprep.subr.mxu0 0.0
        %2643 = vmatpush1.msra.mxu0 0.0
        %2644 = vmatprep.subr.mxu0 0.0
        %2645 = vmatpush1.msra.mxu0 0.0
        %2646 = vmatprep.subr.mxu0 0.0
        %2647 = vmatpush1.msra.mxu0 0.0
        %2648 = vmatprep.subr.mxu0 0.0
        %2649 = vmatpush1.msra.mxu0 0.0
        %2650 = vmatprep.subr.mxu0 0.0
        %2651 = vmatpush1.msra.mxu0 0.0
        %2652 = vmatprep.subr.mxu0 0.0
        %2653 = vmatpush1.msra.mxu0 0.0
        %2654 = vmatprep.subr.mxu0 0.0
        %2655 = vmatpush1.msra.mxu0 0.0
        %2656 = vmatprep.subr.mxu0 0.0
        %2657 = vmatpush1.msra.mxu0 0.0
        %2658 = vmatprep.subr.mxu0 0.0
        %2659 = vmatpush1.msra.mxu0 0.0
        %2660 = vmatprep.subr.mxu0 0.0
        %2661 = vmatpush1.msra.mxu0 0.0
        %2662 = vmatprep.subr.mxu0 0.0
        %2663 = vmatpush1.msra.mxu0 0.0
        %2664 = vmatprep.subr.mxu0 0.0
        %2665 = vmatpush1.msra.mxu0 0.0
        %2666 = vmatprep.subr.mxu0 %v1609
        %2667 = vmatpush1.msra.mxu0 %v1607
        %2668 = vmatprep.subr.mxu0 0.0
        %2669 = vmatpush2.msra.mxu0 0.0
        %2670 = vmatprep.subr.mxu0 0.0
        %2671 = vmatpush2.msra.mxu0 0.0
        %2672 = vmatprep.subr.mxu0 0.0
        %2673 = vmatpush2.msra.mxu0 0.0
        %2674 = vmatprep.subr.mxu0 0.0
        %2675 = vmatpush2.msra.mxu0 0.0
        %2676 = vmatprep.subr.mxu0 0.0
        %2677 = vmatpush2.msra.mxu0 0.0
        %2678 = vmatprep.subr.mxu0 0.0
        %2679 = vmatpush2.msra.mxu0 0.0
        %2680 = vmatprep.subr.mxu0 0.0
        %2681 = vmatpush2.msra.mxu0 0.0
        %2682 = vmatprep.subr.mxu0 0.0
        %2683 = vmatpush2.msra.mxu0 0.0
        %2684 = vmatprep.subr.mxu0 0.0
        %2685 = vmatpush2.msra.mxu0 0.0
        %2686 = vmatprep.subr.mxu0 0.0
        %2687 = vmatpush2.msra.mxu0 0.0
        %2688 = vmatprep.subr.mxu0 0.0
        %2689 = vmatpush2.msra.mxu0 0.0
        %2690 = vmatprep.subr.mxu0 0.0
        %2691 = vmatpush2.msra.mxu0 0.0
        %2692 = vmatprep.subr.mxu0 0.0
        %2693 = vmatpush2.msra.mxu0 0.0
        %2694 = vmatprep.subr.mxu0 0.0
        %2695 = vmatpush2.msra.mxu0 0.0
        %2696 = vmatprep.subr.mxu0 0.0
        %2697 = vmatpush2.msra.mxu0 0.0
        %2698 = vmatprep.subr.mxu0 0.0
        %2699 = vmatpush2.msra.mxu0 0.0
        %2700 = vmatprep.mubr.f32.mxu0 0.0
        %2701 = vmatmul.mubr.f32.gmra.mxu0 %v2631
        %v2702 = vpop.f32.mrf.mxu0
        %v2703 = vadd.f32 0.0, %v2702
        %v2704 = vpop.f32.mrf.mxu0
        %v2705 = vadd.f32 0.0, %v2704
        %2706 = vmatprep.mubr.f32.mxu0 0.0
        %2707 = vmatmul.mubr.f32.gmra.mxu0 %v2634
        %v2708 = vpop.f32.mrf.mxu0
        %v2709 = vadd.f32 0.0, %v2708
        %v2710 = vpop.f32.mrf.mxu0
        %v2711 = vadd.f32 0.0, %v2710
        %2712 = vdwg.mxu0
        %2713 = vmatprep.subr.mxu0 0.0
        %2714 = vmatpush1.msra.mxu0 0.0
        %2715 = vmatprep.subr.mxu0 0.0
        %2716 = vmatpush1.msra.mxu0 0.0
        %2717 = vmatprep.subr.mxu0 0.0
        %2718 = vmatpush1.msra.mxu0 0.0
        %2719 = vmatprep.subr.mxu0 0.0
        %2720 = vmatpush1.msra.mxu0 0.0
        %2721 = vmatprep.subr.mxu0 0.0
        %2722 = vmatpush1.msra.mxu0 0.0
        %2723 = vmatprep.subr.mxu0 0.0
        %2724 = vmatpush1.msra.mxu0 0.0
        %2725 = vmatprep.subr.mxu0 0.0
        %2726 = vmatpush1.msra.mxu0 0.0
        %2727 = vmatprep.subr.mxu0 0.0
        %2728 = vmatpush1.msra.mxu0 0.0
        %2729 = vmatprep.subr.mxu0 0.0
        %2730 = vmatpush1.msra.mxu0 0.0
        %2731 = vmatprep.subr.mxu0 0.0
        %2732 = vmatpush1.msra.mxu0 0.0
        %2733 = vmatprep.subr.mxu0 0.0
        %2734 = vmatpush1.msra.mxu0 0.0
        %2735 = vmatprep.subr.mxu0 0.0
        %2736 = vmatpush1.msra.mxu0 0.0
        %2737 = vmatprep.subr.mxu0 0.0
        %2738 = vmatpush1.msra.mxu0 0.0
        %2739 = vmatprep.subr.mxu0 0.0
        %2740 = vmatpush1.msra.mxu0 0.0
        %2741 = vmatprep.subr.mxu0 0.0
        %2742 = vmatpush1.msra.mxu0 0.0
        %2743 = vmatprep.subr.mxu0 %v1751
        %2744 = vmatpush1.msra.mxu0 %v1749
        %2745 = vmatprep.subr.mxu0 0.0
        %2746 = vmatpush2.msra.mxu0 0.0
        %2747 = vmatprep.subr.mxu0 0.0
        %2748 = vmatpush2.msra.mxu0 0.0
        %2749 = vmatprep.subr.mxu0 0.0
        %2750 = vmatpush2.msra.mxu0 0.0
        %2751 = vmatprep.subr.mxu0 0.0
        %2752 = vmatpush2.msra.mxu0 0.0
        %2753 = vmatprep.subr.mxu0 0.0
        %2754 = vmatpush2.msra.mxu0 0.0
        %2755 = vmatprep.subr.mxu0 0.0
        %2756 = vmatpush2.msra.mxu0 0.0
        %2757 = vmatprep.subr.mxu0 0.0
        %2758 = vmatpush2.msra.mxu0 0.0
        %2759 = vmatprep.subr.mxu0 0.0
        %2760 = vmatpush2.msra.mxu0 0.0
        %2761 = vmatprep.subr.mxu0 0.0
        %2762 = vmatpush2.msra.mxu0 0.0
        %2763 = vmatprep.subr.mxu0 0.0
        %2764 = vmatpush2.msra.mxu0 0.0
        %2765 = vmatprep.subr.mxu0 0.0
        %2766 = vmatpush2.msra.mxu0 0.0
        %2767 = vmatprep.subr.mxu0 0.0
        %2768 = vmatpush2.msra.mxu0 0.0
        %2769 = vmatprep.subr.mxu0 0.0
        %2770 = vmatpush2.msra.mxu0 0.0
        %2771 = vmatprep.subr.mxu0 0.0
        %2772 = vmatpush2.msra.mxu0 0.0
        %2773 = vmatprep.subr.mxu0 0.0
        %2774 = vmatpush2.msra.mxu0 0.0
        %2775 = vmatprep.subr.mxu0 0.0
        %2776 = vmatpush2.msra.mxu0 0.0
        %2777 = vmatprep.mubr.f32.mxu0 0.0
        %2778 = vmatmul.mubr.f32.gmra.mxu0 %v2631
        %v2779 = vpop.f32.mrf.mxu0
        %v2780 = vadd.f32 0.0, %v2779
        %v2781 = vpop.f32.mrf.mxu0
        %v2782 = vadd.f32 0.0, %v2781
        %2783 = vmatprep.mubr.f32.mxu0 0.0
        %2784 = vmatmul.mubr.f32.gmra.mxu0 %v2634
        %v2785 = vpop.f32.mrf.mxu0
        %v2786 = vadd.f32 0.0, %v2785
        %v2787 = vpop.f32.mrf.mxu0
        %v2788 = vadd.f32 0.0, %v2787
        %2789 = vdwg.mxu0
        %v2790 = vadd.f32 %v2610, %v2703
        %v2791 = vadd.f32 %v2614, %v2705
        %v2792 = vadd.f32 %v2618, %v2780
        %v2793 = vadd.f32 %v2622, %v2782
        %v2794 = vadd.f32 %v2610, %v2709
        %v2795 = vadd.f32 %v2614, %v2711
        %v2796 = vadd.f32 %v2618, %v2786
        %v2797 = vadd.f32 %v2622, %v2788
        %s2798 = scalar_lea.vmem %s2, 16
        %v2799 = vld [vmem:[%s2798] sm:$0xff]
        %v2800 = vld [vmem:[%s2798 + $0x8] sm:$0xff]
        %v2802 = vsel %vm2629, %v2799, 0
        %v2805 = vsel %vm2629, %v2800, 0
        %2807 = vmatprep.subr.mxu0 0.0
        %2808 = vmatpush1.msra.mxu0 0.0
        %2809 = vmatprep.subr.mxu0 0.0
        %2810 = vmatpush1.msra.mxu0 0.0
        %2811 = vmatprep.subr.mxu0 0.0
        %2812 = vmatpush1.msra.mxu0 0.0
        %2813 = vmatprep.subr.mxu0 0.0
        %2814 = vmatpush1.msra.mxu0 0.0
        %2815 = vmatprep.subr.mxu0 0.0
        %2816 = vmatpush1.msra.mxu0 0.0
        %2817 = vmatprep.subr.mxu0 0.0
        %2818 = vmatpush1.msra.mxu0 0.0
        %2819 = vmatprep.subr.mxu0 0.0
        %2820 = vmatpush1.msra.mxu0 0.0
        %2821 = vmatprep.subr.mxu0 0.0
        %2822 = vmatpush1.msra.mxu0 0.0
        %2823 = vmatprep.subr.mxu0 0.0
        %2824 = vmatpush1.msra.mxu0 0.0
        %2825 = vmatprep.subr.mxu0 0.0
        %2826 = vmatpush1.msra.mxu0 0.0
        %2827 = vmatprep.subr.mxu0 0.0
        %2828 = vmatpush1.msra.mxu0 0.0
        %2829 = vmatprep.subr.mxu0 0.0
        %2830 = vmatpush1.msra.mxu0 0.0
        %2831 = vmatprep.subr.mxu0 0.0
        %2832 = vmatpush1.msra.mxu0 0.0
        %2833 = vmatprep.subr.mxu0 0.0
        %2834 = vmatpush1.msra.mxu0 0.0
        %2835 = vmatprep.subr.mxu0 0.0
        %2836 = vmatpush1.msra.mxu0 0.0
        %2837 = vmatprep.subr.mxu0 %v1893
        %2838 = vmatpush1.msra.mxu0 %v1891
        %2839 = vmatprep.subr.mxu0 0.0
        %2840 = vmatpush2.msra.mxu0 0.0
        %2841 = vmatprep.subr.mxu0 0.0
        %2842 = vmatpush2.msra.mxu0 0.0
        %2843 = vmatprep.subr.mxu0 0.0
        %2844 = vmatpush2.msra.mxu0 0.0
        %2845 = vmatprep.subr.mxu0 0.0
        %2846 = vmatpush2.msra.mxu0 0.0
        %2847 = vmatprep.subr.mxu0 0.0
        %2848 = vmatpush2.msra.mxu0 0.0
        %2849 = vmatprep.subr.mxu0 0.0
        %2850 = vmatpush2.msra.mxu0 0.0
        %2851 = vmatprep.subr.mxu0 0.0
        %2852 = vmatpush2.msra.mxu0 0.0
        %2853 = vmatprep.subr.mxu0 0.0
        %2854 = vmatpush2.msra.mxu0 0.0
        %2855 = vmatprep.subr.mxu0 0.0
        %2856 = vmatpush2.msra.mxu0 0.0
        %2857 = vmatprep.subr.mxu0 0.0
        %2858 = vmatpush2.msra.mxu0 0.0
        %2859 = vmatprep.subr.mxu0 0.0
        %2860 = vmatpush2.msra.mxu0 0.0
        %2861 = vmatprep.subr.mxu0 0.0
        %2862 = vmatpush2.msra.mxu0 0.0
        %2863 = vmatprep.subr.mxu0 0.0
        %2864 = vmatpush2.msra.mxu0 0.0
        %2865 = vmatprep.subr.mxu0 0.0
        %2866 = vmatpush2.msra.mxu0 0.0
        %2867 = vmatprep.subr.mxu0 0.0
        %2868 = vmatpush2.msra.mxu0 0.0
        %2869 = vmatprep.subr.mxu0 0.0
        %2870 = vmatpush2.msra.mxu0 0.0
        %2871 = vmatprep.mubr.f32.mxu0 0.0
        %2872 = vmatmul.mubr.f32.gmra.mxu0 %v2802
        %v2873 = vpop.f32.mrf.mxu0
        %v2874 = vadd.f32 0.0, %v2873
        %v2875 = vpop.f32.mrf.mxu0
        %v2876 = vadd.f32 0.0, %v2875
        %2877 = vmatprep.mubr.f32.mxu0 0.0
        %2878 = vmatmul.mubr.f32.gmra.mxu0 %v2805
        %v2879 = vpop.f32.mrf.mxu0
        %v2880 = vadd.f32 0.0, %v2879
        %v2881 = vpop.f32.mrf.mxu0
        %v2882 = vadd.f32 0.0, %v2881
        %2883 = vdwg.mxu0
        %2884 = vmatprep.subr.mxu0 0.0
        %2885 = vmatpush1.msra.mxu0 0.0
        %2886 = vmatprep.subr.mxu0 0.0
        %2887 = vmatpush1.msra.mxu0 0.0
        %2888 = vmatprep.subr.mxu0 0.0
        %2889 = vmatpush1.msra.mxu0 0.0
        %2890 = vmatprep.subr.mxu0 0.0
        %2891 = vmatpush1.msra.mxu0 0.0
        %2892 = vmatprep.subr.mxu0 0.0
        %2893 = vmatpush1.msra.mxu0 0.0
        %2894 = vmatprep.subr.mxu0 0.0
        %2895 = vmatpush1.msra.mxu0 0.0
        %2896 = vmatprep.subr.mxu0 0.0
        %2897 = vmatpush1.msra.mxu0 0.0
        %2898 = vmatprep.subr.mxu0 0.0
        %2899 = vmatpush1.msra.mxu0 0.0
        %2900 = vmatprep.subr.mxu0 0.0
        %2901 = vmatpush1.msra.mxu0 0.0
        %2902 = vmatprep.subr.mxu0 0.0
        %2903 = vmatpush1.msra.mxu0 0.0
        %2904 = vmatprep.subr.mxu0 0.0
        %2905 = vmatpush1.msra.mxu0 0.0
        %2906 = vmatprep.subr.mxu0 0.0
        %2907 = vmatpush1.msra.mxu0 0.0
        %2908 = vmatprep.subr.mxu0 0.0
        %2909 = vmatpush1.msra.mxu0 0.0
        %2910 = vmatprep.subr.mxu0 0.0
        %2911 = vmatpush1.msra.mxu0 0.0
        %2912 = vmatprep.subr.mxu0 0.0
        %2913 = vmatpush1.msra.mxu0 0.0
        %2914 = vmatprep.subr.mxu0 %v2035
        %2915 = vmatpush1.msra.mxu0 %v2033
        %2916 = vmatprep.subr.mxu0 0.0
        %2917 = vmatpush2.msra.mxu0 0.0
        %2918 = vmatprep.subr.mxu0 0.0
        %2919 = vmatpush2.msra.mxu0 0.0
        %2920 = vmatprep.subr.mxu0 0.0
        %2921 = vmatpush2.msra.mxu0 0.0
        %2922 = vmatprep.subr.mxu0 0.0
        %2923 = vmatpush2.msra.mxu0 0.0
        %2924 = vmatprep.subr.mxu0 0.0
        %2925 = vmatpush2.msra.mxu0 0.0
        %2926 = vmatprep.subr.mxu0 0.0
        %2927 = vmatpush2.msra.mxu0 0.0
        %2928 = vmatprep.subr.mxu0 0.0
        %2929 = vmatpush2.msra.mxu0 0.0
        %2930 = vmatprep.subr.mxu0 0.0
        %2931 = vmatpush2.msra.mxu0 0.0
        %2932 = vmatprep.subr.mxu0 0.0
        %2933 = vmatpush2.msra.mxu0 0.0
        %2934 = vmatprep.subr.mxu0 0.0
        %2935 = vmatpush2.msra.mxu0 0.0
        %2936 = vmatprep.subr.mxu0 0.0
        %2937 = vmatpush2.msra.mxu0 0.0
        %2938 = vmatprep.subr.mxu0 0.0
        %2939 = vmatpush2.msra.mxu0 0.0
        %2940 = vmatprep.subr.mxu0 0.0
        %2941 = vmatpush2.msra.mxu0 0.0
        %2942 = vmatprep.subr.mxu0 0.0
        %2943 = vmatpush2.msra.mxu0 0.0
        %2944 = vmatprep.subr.mxu0 0.0
        %2945 = vmatpush2.msra.mxu0 0.0
        %2946 = vmatprep.subr.mxu0 0.0
        %2947 = vmatpush2.msra.mxu0 0.0
        %2948 = vmatprep.mubr.f32.mxu0 0.0
        %2949 = vmatmul.mubr.f32.gmra.mxu0 %v2802
        %v2950 = vpop.f32.mrf.mxu0
        %v2951 = vadd.f32 0.0, %v2950
        %v2952 = vpop.f32.mrf.mxu0
        %v2953 = vadd.f32 0.0, %v2952
        %2954 = vmatprep.mubr.f32.mxu0 0.0
        %2955 = vmatmul.mubr.f32.gmra.mxu0 %v2805
        %v2956 = vpop.f32.mrf.mxu0
        %v2957 = vadd.f32 0.0, %v2956
        %v2958 = vpop.f32.mrf.mxu0
        %v2959 = vadd.f32 0.0, %v2958
        %2960 = vdwg.mxu0
        %v2961 = vadd.f32 %v2790, %v2874
        %v2962 = vadd.f32 %v2791, %v2876
        %v2963 = vadd.f32 %v2792, %v2951
        %v2964 = vadd.f32 %v2793, %v2953
        %v2965 = vadd.f32 %v2794, %v2880
        %v2966 = vadd.f32 %v2795, %v2882
        %v2967 = vadd.f32 %v2796, %v2957
        %v2968 = vadd.f32 %v2797, %v2959
        %s2969 = scalar_lea.vmem %s2, 32
        %v2970 = vld [vmem:[%s2969] sm:$0xff]
        %v2971 = vld [vmem:[%s2969 + $0x8] sm:$0xff]
        %v2973 = vsel %vm2629, %v2970, 0
        %v2976 = vsel %vm2629, %v2971, 0
        %2978 = vmatprep.subr.mxu0 0.0
        %2979 = vmatpush1.msra.mxu0 0.0
        %2980 = vmatprep.subr.mxu0 0.0
        %2981 = vmatpush1.msra.mxu0 0.0
        %2982 = vmatprep.subr.mxu0 0.0
        %2983 = vmatpush1.msra.mxu0 0.0
        %2984 = vmatprep.subr.mxu0 0.0
        %2985 = vmatpush1.msra.mxu0 0.0
        %2986 = vmatprep.subr.mxu0 0.0
        %2987 = vmatpush1.msra.mxu0 0.0
        %2988 = vmatprep.subr.mxu0 0.0
        %2989 = vmatpush1.msra.mxu0 0.0
        %2990 = vmatprep.subr.mxu0 0.0
        %2991 = vmatpush1.msra.mxu0 0.0
        %2992 = vmatprep.subr.mxu0 0.0
        %2993 = vmatpush1.msra.mxu0 0.0
        %2994 = vmatprep.subr.mxu0 0.0
        %2995 = vmatpush1.msra.mxu0 0.0
        %2996 = vmatprep.subr.mxu0 0.0
        %2997 = vmatpush1.msra.mxu0 0.0
        %2998 = vmatprep.subr.mxu0 0.0
        %2999 = vmatpush1.msra.mxu0 0.0
        %3000 = vmatprep.subr.mxu0 0.0
        %3001 = vmatpush1.msra.mxu0 0.0
        %3002 = vmatprep.subr.mxu0 0.0
        %3003 = vmatpush1.msra.mxu0 0.0
        %3004 = vmatprep.subr.mxu0 0.0
        %3005 = vmatpush1.msra.mxu0 0.0
        %3006 = vmatprep.subr.mxu0 0.0
        %3007 = vmatpush1.msra.mxu0 0.0
        %3008 = vmatprep.subr.mxu0 %v2177
        %3009 = vmatpush1.msra.mxu0 %v2175
        %3010 = vmatprep.subr.mxu0 0.0
        %3011 = vmatpush2.msra.mxu0 0.0
        %3012 = vmatprep.subr.mxu0 0.0
        %3013 = vmatpush2.msra.mxu0 0.0
        %3014 = vmatprep.subr.mxu0 0.0
        %3015 = vmatpush2.msra.mxu0 0.0
        %3016 = vmatprep.subr.mxu0 0.0
        %3017 = vmatpush2.msra.mxu0 0.0
        %3018 = vmatprep.subr.mxu0 0.0
        %3019 = vmatpush2.msra.mxu0 0.0
        %3020 = vmatprep.subr.mxu0 0.0
        %3021 = vmatpush2.msra.mxu0 0.0
        %3022 = vmatprep.subr.mxu0 0.0
        %3023 = vmatpush2.msra.mxu0 0.0
        %3024 = vmatprep.subr.mxu0 0.0
        %3025 = vmatpush2.msra.mxu0 0.0
        %3026 = vmatprep.subr.mxu0 0.0
        %3027 = vmatpush2.msra.mxu0 0.0
        %3028 = vmatprep.subr.mxu0 0.0
        %3029 = vmatpush2.msra.mxu0 0.0
        %3030 = vmatprep.subr.mxu0 0.0
        %3031 = vmatpush2.msra.mxu0 0.0
        %3032 = vmatprep.subr.mxu0 0.0
        %3033 = vmatpush2.msra.mxu0 0.0
        %3034 = vmatprep.subr.mxu0 0.0
        %3035 = vmatpush2.msra.mxu0 0.0
        %3036 = vmatprep.subr.mxu0 0.0
        %3037 = vmatpush2.msra.mxu0 0.0
        %3038 = vmatprep.subr.mxu0 0.0
        %3039 = vmatpush2.msra.mxu0 0.0
        %3040 = vmatprep.subr.mxu0 0.0
        %3041 = vmatpush2.msra.mxu0 0.0
        %3042 = vmatprep.mubr.f32.mxu0 0.0
        %3043 = vmatmul.mubr.f32.gmra.mxu0 %v2973
        %v3044 = vpop.f32.mrf.mxu0
        %v3045 = vadd.f32 0.0, %v3044
        %v3046 = vpop.f32.mrf.mxu0
        %v3047 = vadd.f32 0.0, %v3046
        %3048 = vmatprep.mubr.f32.mxu0 0.0
        %3049 = vmatmul.mubr.f32.gmra.mxu0 %v2976
        %v3050 = vpop.f32.mrf.mxu0
        %v3051 = vadd.f32 0.0, %v3050
        %v3052 = vpop.f32.mrf.mxu0
        %v3053 = vadd.f32 0.0, %v3052
        %3054 = vdwg.mxu0
        %3055 = vmatprep.subr.mxu0 0.0
        %3056 = vmatpush1.msra.mxu0 0.0
        %3057 = vmatprep.subr.mxu0 0.0
        %3058 = vmatpush1.msra.mxu0 0.0
        %3059 = vmatprep.subr.mxu0 0.0
        %3060 = vmatpush1.msra.mxu0 0.0
        %3061 = vmatprep.subr.mxu0 0.0
        %3062 = vmatpush1.msra.mxu0 0.0
        %3063 = vmatprep.subr.mxu0 0.0
        %3064 = vmatpush1.msra.mxu0 0.0
        %3065 = vmatprep.subr.mxu0 0.0
        %3066 = vmatpush1.msra.mxu0 0.0
        %3067 = vmatprep.subr.mxu0 0.0
        %3068 = vmatpush1.msra.mxu0 0.0
        %3069 = vmatprep.subr.mxu0 0.0
        %3070 = vmatpush1.msra.mxu0 0.0
        %3071 = vmatprep.subr.mxu0 0.0
        %3072 = vmatpush1.msra.mxu0 0.0
        %3073 = vmatprep.subr.mxu0 0.0
        %3074 = vmatpush1.msra.mxu0 0.0
        %3075 = vmatprep.subr.mxu0 0.0
        %3076 = vmatpush1.msra.mxu0 0.0
        %3077 = vmatprep.subr.mxu0 0.0
        %3078 = vmatpush1.msra.mxu0 0.0
        %3079 = vmatprep.subr.mxu0 0.0
        %3080 = vmatpush1.msra.mxu0 0.0
        %3081 = vmatprep.subr.mxu0 0.0
        %3082 = vmatpush1.msra.mxu0 0.0
        %3083 = vmatprep.subr.mxu0 0.0
        %3084 = vmatpush1.msra.mxu0 0.0
        %3085 = vmatprep.subr.mxu0 %v2319
        %3086 = vmatpush1.msra.mxu0 %v2317
        %3087 = vmatprep.subr.mxu0 0.0
        %3088 = vmatpush2.msra.mxu0 0.0
        %3089 = vmatprep.subr.mxu0 0.0
        %3090 = vmatpush2.msra.mxu0 0.0
        %3091 = vmatprep.subr.mxu0 0.0
        %3092 = vmatpush2.msra.mxu0 0.0
        %3093 = vmatprep.subr.mxu0 0.0
        %3094 = vmatpush2.msra.mxu0 0.0
        %3095 = vmatprep.subr.mxu0 0.0
        %3096 = vmatpush2.msra.mxu0 0.0
        %3097 = vmatprep.subr.mxu0 0.0
        %3098 = vmatpush2.msra.mxu0 0.0
        %3099 = vmatprep.subr.mxu0 0.0
        %3100 = vmatpush2.msra.mxu0 0.0
        %3101 = vmatprep.subr.mxu0 0.0
        %3102 = vmatpush2.msra.mxu0 0.0
        %3103 = vmatprep.subr.mxu0 0.0
        %3104 = vmatpush2.msra.mxu0 0.0
        %3105 = vmatprep.subr.mxu0 0.0
        %3106 = vmatpush2.msra.mxu0 0.0
        %3107 = vmatprep.subr.mxu0 0.0
        %3108 = vmatpush2.msra.mxu0 0.0
        %3109 = vmatprep.subr.mxu0 0.0
        %3110 = vmatpush2.msra.mxu0 0.0
        %3111 = vmatprep.subr.mxu0 0.0
        %3112 = vmatpush2.msra.mxu0 0.0
        %3113 = vmatprep.subr.mxu0 0.0
        %3114 = vmatpush2.msra.mxu0 0.0
        %3115 = vmatprep.subr.mxu0 0.0
        %3116 = vmatpush2.msra.mxu0 0.0
        %3117 = vmatprep.subr.mxu0 0.0
        %3118 = vmatpush2.msra.mxu0 0.0
        %3119 = vmatprep.mubr.f32.mxu0 0.0
        %3120 = vmatmul.mubr.f32.gmra.mxu0 %v2973
        %v3121 = vpop.f32.mrf.mxu0
        %v3122 = vadd.f32 0.0, %v3121
        %v3123 = vpop.f32.mrf.mxu0
        %v3124 = vadd.f32 0.0, %v3123
        %3125 = vmatprep.mubr.f32.mxu0 0.0
        %3126 = vmatmul.mubr.f32.gmra.mxu0 %v2976
        %v3127 = vpop.f32.mrf.mxu0
        %v3128 = vadd.f32 0.0, %v3127
        %v3129 = vpop.f32.mrf.mxu0
        %v3130 = vadd.f32 0.0, %v3129
        %3131 = vdwg.mxu0
        %v3132 = vadd.f32 %v2961, %v3045
        %v3133 = vadd.f32 %v2962, %v3047
        %v3134 = vadd.f32 %v2963, %v3122
        %v3135 = vadd.f32 %v2964, %v3124
        %v3136 = vadd.f32 %v2965, %v3051
        %v3137 = vadd.f32 %v2966, %v3053
        %v3138 = vadd.f32 %v2967, %v3128
        %v3139 = vadd.f32 %v2968, %v3130
        %s3140 = scalar_lea.vmem %s2, 48
        %v3141 = vld [vmem:[%s3140] sm:$0xff]
        %v3142 = vld [vmem:[%s3140 + $0x8] sm:$0xff]
        %v3144 = vsel %vm2629, %v3141, 0
        %v3147 = vsel %vm2629, %v3142, 0
        %3149 = vmatprep.subr.mxu0 0.0
        %3150 = vmatpush1.msra.mxu0 0.0
        %3151 = vmatprep.subr.mxu0 0.0
        %3152 = vmatpush1.msra.mxu0 0.0
        %3153 = vmatprep.subr.mxu0 0.0
        %3154 = vmatpush1.msra.mxu0 0.0
        %3155 = vmatprep.subr.mxu0 0.0
        %3156 = vmatpush1.msra.mxu0 0.0
        %3157 = vmatprep.subr.mxu0 0.0
        %3158 = vmatpush1.msra.mxu0 0.0
        %3159 = vmatprep.subr.mxu0 0.0
        %3160 = vmatpush1.msra.mxu0 0.0
        %3161 = vmatprep.subr.mxu0 0.0
        %3162 = vmatpush1.msra.mxu0 0.0
        %3163 = vmatprep.subr.mxu0 0.0
        %3164 = vmatpush1.msra.mxu0 0.0
        %3165 = vmatprep.subr.mxu0 0.0
        %3166 = vmatpush1.msra.mxu0 0.0
        %3167 = vmatprep.subr.mxu0 0.0
        %3168 = vmatpush1.msra.mxu0 0.0
        %3169 = vmatprep.subr.mxu0 0.0
        %3170 = vmatpush1.msra.mxu0 0.0
        %3171 = vmatprep.subr.mxu0 0.0
        %3172 = vmatpush1.msra.mxu0 0.0
        %3173 = vmatprep.subr.mxu0 0.0
        %3174 = vmatpush1.msra.mxu0 0.0
        %3175 = vmatprep.subr.mxu0 0.0
        %3176 = vmatpush1.msra.mxu0 0.0
        %3177 = vmatprep.subr.mxu0 0.0
        %3178 = vmatpush1.msra.mxu0 0.0
        %3179 = vmatprep.subr.mxu0 %v2461
        %3180 = vmatpush1.msra.mxu0 %v2459
        %3181 = vmatprep.subr.mxu0 0.0
        %3182 = vmatpush2.msra.mxu0 0.0
        %3183 = vmatprep.subr.mxu0 0.0
        %3184 = vmatpush2.msra.mxu0 0.0
        %3185 = vmatprep.subr.mxu0 0.0
        %3186 = vmatpush2.msra.mxu0 0.0
        %3187 = vmatprep.subr.mxu0 0.0
        %3188 = vmatpush2.msra.mxu0 0.0
        %3189 = vmatprep.subr.mxu0 0.0
        %3190 = vmatpush2.msra.mxu0 0.0
        %3191 = vmatprep.subr.mxu0 0.0
        %3192 = vmatpush2.msra.mxu0 0.0
        %3193 = vmatprep.subr.mxu0 0.0
        %3194 = vmatpush2.msra.mxu0 0.0
        %3195 = vmatprep.subr.mxu0 0.0
        %3196 = vmatpush2.msra.mxu0 0.0
        %3197 = vmatprep.subr.mxu0 0.0
        %3198 = vmatpush2.msra.mxu0 0.0
        %3199 = vmatprep.subr.mxu0 0.0
        %3200 = vmatpush2.msra.mxu0 0.0
        %3201 = vmatprep.subr.mxu0 0.0
        %3202 = vmatpush2.msra.mxu0 0.0
        %3203 = vmatprep.subr.mxu0 0.0
        %3204 = vmatpush2.msra.mxu0 0.0
        %3205 = vmatprep.subr.mxu0 0.0
        %3206 = vmatpush2.msra.mxu0 0.0
        %3207 = vmatprep.subr.mxu0 0.0
        %3208 = vmatpush2.msra.mxu0 0.0
        %3209 = vmatprep.subr.mxu0 0.0
        %3210 = vmatpush2.msra.mxu0 0.0
        %3211 = vmatprep.subr.mxu0 0.0
        %3212 = vmatpush2.msra.mxu0 0.0
        %3213 = vmatprep.mubr.f32.mxu0 0.0
        %3214 = vmatmul.mubr.f32.gmra.mxu0 %v3144
        %v3215 = vpop.f32.mrf.mxu0
        %v3216 = vadd.f32 0.0, %v3215
        %v3217 = vpop.f32.mrf.mxu0
        %v3218 = vadd.f32 0.0, %v3217
        %3219 = vmatprep.mubr.f32.mxu0 0.0
        %3220 = vmatmul.mubr.f32.gmra.mxu0 %v3147
        %v3221 = vpop.f32.mrf.mxu0
        %v3222 = vadd.f32 0.0, %v3221
        %v3223 = vpop.f32.mrf.mxu0
        %v3224 = vadd.f32 0.0, %v3223
        %3225 = vdwg.mxu0
        %3226 = vmatprep.subr.mxu0 0.0
        %3227 = vmatpush1.msra.mxu0 0.0
        %3228 = vmatprep.subr.mxu0 0.0
        %3229 = vmatpush1.msra.mxu0 0.0
        %3230 = vmatprep.subr.mxu0 0.0
        %3231 = vmatpush1.msra.mxu0 0.0
        %3232 = vmatprep.subr.mxu0 0.0
        %3233 = vmatpush1.msra.mxu0 0.0
        %3234 = vmatprep.subr.mxu0 0.0
        %3235 = vmatpush1.msra.mxu0 0.0
        %3236 = vmatprep.subr.mxu0 0.0
        %3237 = vmatpush1.msra.mxu0 0.0
        %3238 = vmatprep.subr.mxu0 0.0
        %3239 = vmatpush1.msra.mxu0 0.0
        %3240 = vmatprep.subr.mxu0 0.0
        %3241 = vmatpush1.msra.mxu0 0.0
        %3242 = vmatprep.subr.mxu0 0.0
        %3243 = vmatpush1.msra.mxu0 0.0
        %3244 = vmatprep.subr.mxu0 0.0
        %3245 = vmatpush1.msra.mxu0 0.0
        %3246 = vmatprep.subr.mxu0 0.0
        %3247 = vmatpush1.msra.mxu0 0.0
        %3248 = vmatprep.subr.mxu0 0.0
        %3249 = vmatpush1.msra.mxu0 0.0
        %3250 = vmatprep.subr.mxu0 0.0
        %3251 = vmatpush1.msra.mxu0 0.0
        %3252 = vmatprep.subr.mxu0 0.0
        %3253 = vmatpush1.msra.mxu0 0.0
        %3254 = vmatprep.subr.mxu0 0.0
        %3255 = vmatpush1.msra.mxu0 0.0
        %3256 = vmatprep.subr.mxu0 %v2603
        %3257 = vmatpush1.msra.mxu0 %v2601
        %3258 = vmatprep.subr.mxu0 0.0
        %3259 = vmatpush2.msra.mxu0 0.0
        %3260 = vmatprep.subr.mxu0 0.0
        %3261 = vmatpush2.msra.mxu0 0.0
        %3262 = vmatprep.subr.mxu0 0.0
        %3263 = vmatpush2.msra.mxu0 0.0
        %3264 = vmatprep.subr.mxu0 0.0
        %3265 = vmatpush2.msra.mxu0 0.0
        %3266 = vmatprep.subr.mxu0 0.0
        %3267 = vmatpush2.msra.mxu0 0.0
        %3268 = vmatprep.subr.mxu0 0.0
        %3269 = vmatpush2.msra.mxu0 0.0
        %3270 = vmatprep.subr.mxu0 0.0
        %3271 = vmatpush2.msra.mxu0 0.0
        %3272 = vmatprep.subr.mxu0 0.0
        %3273 = vmatpush2.msra.mxu0 0.0
        %3274 = vmatprep.subr.mxu0 0.0
        %3275 = vmatpush2.msra.mxu0 0.0
        %3276 = vmatprep.subr.mxu0 0.0
        %3277 = vmatpush2.msra.mxu0 0.0
        %3278 = vmatprep.subr.mxu0 0.0
        %3279 = vmatpush2.msra.mxu0 0.0
        %3280 = vmatprep.subr.mxu0 0.0
        %3281 = vmatpush2.msra.mxu0 0.0
        %3282 = vmatprep.subr.mxu0 0.0
        %3283 = vmatpush2.msra.mxu0 0.0
        %3284 = vmatprep.subr.mxu0 0.0
        %3285 = vmatpush2.msra.mxu0 0.0
        %3286 = vmatprep.subr.mxu0 0.0
        %3287 = vmatpush2.msra.mxu0 0.0
        %3288 = vmatprep.subr.mxu0 0.0
        %3289 = vmatpush2.msra.mxu0 0.0
        %3290 = vmatprep.mubr.f32.mxu0 0.0
        %3291 = vmatmul.mubr.f32.gmra.mxu0 %v3144
        %v3292 = vpop.f32.mrf.mxu0
        %v3293 = vadd.f32 0.0, %v3292
        %v3294 = vpop.f32.mrf.mxu0
        %v3295 = vadd.f32 0.0, %v3294
        %3296 = vmatprep.mubr.f32.mxu0 0.0
        %3297 = vmatmul.mubr.f32.gmra.mxu0 %v3147
        %v3298 = vpop.f32.mrf.mxu0
        %v3299 = vadd.f32 0.0, %v3298
        %v3300 = vpop.f32.mrf.mxu0
        %v3301 = vadd.f32 0.0, %v3300
        %3302 = vdwg.mxu0
        %v3303 = vadd.f32 %v3132, %v3216
        %v3304 = vadd.f32 %v3133, %v3218
        %v3305 = vadd.f32 %v3134, %v3293
        %v3306 = vadd.f32 %v3135, %v3295
        %v3307 = vadd.f32 %v3136, %v3222
        %v3308 = vadd.f32 %v3137, %v3224
        %v3309 = vadd.f32 %v3138, %v3299
        %v3310 = vadd.f32 %v3139, %v3301
        %v3311 = vmax.f32 %v3303, 0.0
        %v3312 = vmax.f32 %v3304, 0.0
        %v3313 = vmax.f32 %v3305, 0.0
        %v3314 = vmax.f32 %v3306, 0.0
        %v3315 = vmax.f32 %v3307, 0.0
        %v3316 = vmax.f32 %v3308, 0.0
        %v3317 = vmax.f32 %v3309, 0.0
        %v3318 = vmax.f32 %v3310, 0.0
        %v3319 = vld [vmem:[#allocation7] sm:$0xff]
        %v3320 = vld [vmem:[#allocation7 + $0x8] sm:$0xff]
        %v3321 = vld [vmem:[#allocation7 + $0x10] sm:$0xff]
        %v3322 = vld [vmem:[#allocation7 + $0x18] sm:$0xff]
        %v3323 = vld [vmem:[#allocation7 + $0x20] sm:$0xff]
        %v3324 = vld [vmem:[#allocation7 + $0x28] sm:$0xff]
        %v3325 = vld [vmem:[#allocation7 + $0x30] sm:$0xff]
        %v3326 = vld [vmem:[#allocation7 + $0x38] sm:$0xff]
        %v3327 = vld [vmem:[#allocation7 + $0x40] sm:$0xff]
        %v3328 = vld [vmem:[#allocation7 + $0x48] sm:$0xff]
        %v3329 = vld [vmem:[#allocation7 + $0x50] sm:$0xff]
        %v3330 = vld [vmem:[#allocation7 + $0x58] sm:$0xff]
        %v3331 = vld [vmem:[#allocation7 + $0x60] sm:$0xff]
        %v3332 = vld [vmem:[#allocation7 + $0x68] sm:$0xff]
        %v3333 = vld [vmem:[#allocation7 + $0x70] sm:$0xff]
        %v3334 = vld [vmem:[#allocation7 + $0x78] sm:$0xff]
        %v3335 = vld [vmem:[#allocation7 + $0x80] sm:$0xff]
        %v3336 = vld [vmem:[#allocation7 + $0x88] sm:$0xff]
        %v3337 = vld [vmem:[#allocation7 + $0x90] sm:$0xff]
        %v3338 = vld [vmem:[#allocation7 + $0x98] sm:$0xff]
        %v3339 = vld [vmem:[#allocation7 + $0xa0] sm:$0xff]
        %v3340 = vld [vmem:[#allocation7 + $0xa8] sm:$0xff]
        %v3341 = vld [vmem:[#allocation7 + $0xb0] sm:$0xff]
        %v3342 = vld [vmem:[#allocation7 + $0xb8] sm:$0xff]
        %v3343 = vld [vmem:[#allocation7 + $0xc0] sm:$0xff]
        %v3344 = vld [vmem:[#allocation7 + $0xc8] sm:$0xff]
        %v3345 = vld [vmem:[#allocation7 + $0xd0] sm:$0xff]
        %v3346 = vld [vmem:[#allocation7 + $0xd8] sm:$0xff]
        %v3347 = vld [vmem:[#allocation7 + $0xe0] sm:$0xff]
        %v3348 = vld [vmem:[#allocation7 + $0xe8] sm:$0xff]
        %v3349 = vld [vmem:[#allocation7 + $0xf0] sm:$0xff]
        %v3350 = vld [vmem:[#allocation7 + $0xf8] sm:$0xff]
        %v3351 = vld [vmem:[#allocation7 + $0x100] sm:$0xff]
        %v3352 = vld [vmem:[#allocation7 + $0x108] sm:$0xff]
        %v3353 = vld [vmem:[#allocation7 + $0x110] sm:$0xff]
        %v3354 = vld [vmem:[#allocation7 + $0x118] sm:$0xff]
        %v3355 = vld [vmem:[#allocation7 + $0x120] sm:$0xff]
        %v3356 = vld [vmem:[#allocation7 + $0x128] sm:$0xff]
        %v3357 = vld [vmem:[#allocation7 + $0x130] sm:$0xff]
        %v3358 = vld [vmem:[#allocation7 + $0x138] sm:$0xff]
        %v3359 = vld [vmem:[#allocation7 + $0x140] sm:$0xff]
        %v3360 = vld [vmem:[#allocation7 + $0x148] sm:$0xff]
        %v3361 = vld [vmem:[#allocation7 + $0x150] sm:$0xff]
        %v3362 = vld [vmem:[#allocation7 + $0x158] sm:$0xff]
        %v3363 = vld [vmem:[#allocation7 + $0x160] sm:$0xff]
        %v3364 = vld [vmem:[#allocation7 + $0x168] sm:$0xff]
        %v3365 = vld [vmem:[#allocation7 + $0x170] sm:$0xff]
        %v3366 = vld [vmem:[#allocation7 + $0x178] sm:$0xff]
        %v3367 = vld [vmem:[#allocation7 + $0x180] sm:$0xff]
        %v3368 = vld [vmem:[#allocation7 + $0x188] sm:$0xff]
        %v3369 = vld [vmem:[#allocation7 + $0x190] sm:$0xff]
        %v3370 = vld [vmem:[#allocation7 + $0x198] sm:$0xff]
        %v3371 = vld [vmem:[#allocation7 + $0x1a0] sm:$0xff]
        %v3372 = vld [vmem:[#allocation7 + $0x1a8] sm:$0xff]
        %v3373 = vld [vmem:[#allocation7 + $0x1b0] sm:$0xff]
        %v3374 = vld [vmem:[#allocation7 + $0x1b8] sm:$0xff]
        %v3375 = vld [vmem:[#allocation7 + $0x1c0] sm:$0xff]
        %v3376 = vld [vmem:[#allocation7 + $0x1c8] sm:$0xff]
        %v3377 = vld [vmem:[#allocation7 + $0x1d0] sm:$0xff]
        %v3378 = vld [vmem:[#allocation7 + $0x1d8] sm:$0xff]
        %v3379 = vld [vmem:[#allocation7 + $0x1e0] sm:$0xff]
        %v3380 = vld [vmem:[#allocation7 + $0x1e8] sm:$0xff]
        %v3381 = vld [vmem:[#allocation7 + $0x1f0] sm:$0xff]
        %v3382 = vld [vmem:[#allocation7 + $0x1f8] sm:$0xff]
        %v3383 = vld [vmem:[#allocation7 + $0x200] sm:$0xff]
        %v3384 = vld [vmem:[#allocation7 + $0x208] sm:$0xff]
        %v3385 = vld [vmem:[#allocation7 + $0x210] sm:$0xff]
        %v3386 = vld [vmem:[#allocation7 + $0x218] sm:$0xff]
        %v3387 = vld [vmem:[#allocation7 + $0x220] sm:$0xff]
        %v3388 = vld [vmem:[#allocation7 + $0x228] sm:$0xff]
        %v3389 = vld [vmem:[#allocation7 + $0x230] sm:$0xff]
        %v3390 = vld [vmem:[#allocation7 + $0x238] sm:$0xff]
        %v3391 = vld [vmem:[#allocation7 + $0x240] sm:$0xff]
        %v3392 = vld [vmem:[#allocation7 + $0x248] sm:$0xff]
        %v3393 = vld [vmem:[#allocation7 + $0x250] sm:$0xff]
        %v3394 = vld [vmem:[#allocation7 + $0x258] sm:$0xff]
        %v3395 = vld [vmem:[#allocation7 + $0x260] sm:$0xff]
        %v3396 = vld [vmem:[#allocation7 + $0x268] sm:$0xff]
        %v3397 = vld [vmem:[#allocation7 + $0x270] sm:$0xff]
        %v3398 = vld [vmem:[#allocation7 + $0x278] sm:$0xff]
        %v3399 = vld [vmem:[#allocation7 + $0x280] sm:$0xff]
        %v3400 = vld [vmem:[#allocation7 + $0x288] sm:$0xff]
        %v3401 = vld [vmem:[#allocation7 + $0x290] sm:$0xff]
        %v3402 = vld [vmem:[#allocation7 + $0x298] sm:$0xff]
        %v3403 = vld [vmem:[#allocation7 + $0x2a0] sm:$0xff]
        %v3404 = vld [vmem:[#allocation7 + $0x2a8] sm:$0xff]
        %v3405 = vld [vmem:[#allocation7 + $0x2b0] sm:$0xff]
        %v3406 = vld [vmem:[#allocation7 + $0x2b8] sm:$0xff]
        %v3407 = vld [vmem:[#allocation7 + $0x2c0] sm:$0xff]
        %v3408 = vld [vmem:[#allocation7 + $0x2c8] sm:$0xff]
        %v3409 = vld [vmem:[#allocation7 + $0x2d0] sm:$0xff]
        %v3410 = vld [vmem:[#allocation7 + $0x2d8] sm:$0xff]
        %v3411 = vld [vmem:[#allocation7 + $0x2e0] sm:$0xff]
        %v3412 = vld [vmem:[#allocation7 + $0x2e8] sm:$0xff]
        %v3413 = vld [vmem:[#allocation7 + $0x2f0] sm:$0xff]
        %v3414 = vld [vmem:[#allocation7 + $0x2f8] sm:$0xff]
        %v3415 = vld [vmem:[#allocation7 + $0x300] sm:$0xff]
        %v3416 = vld [vmem:[#allocation7 + $0x308] sm:$0xff]
        %v3417 = vld [vmem:[#allocation7 + $0x310] sm:$0xff]
        %v3418 = vld [vmem:[#allocation7 + $0x318] sm:$0xff]
        %v3419 = vld [vmem:[#allocation7 + $0x320] sm:$0xff]
        %v3420 = vld [vmem:[#allocation7 + $0x328] sm:$0xff]
        %v3421 = vld [vmem:[#allocation7 + $0x330] sm:$0xff]
        %v3422 = vld [vmem:[#allocation7 + $0x338] sm:$0xff]
        %v3423 = vld [vmem:[#allocation7 + $0x340] sm:$0xff]
        %v3424 = vld [vmem:[#allocation7 + $0x348] sm:$0xff]
        %v3425 = vld [vmem:[#allocation7 + $0x350] sm:$0xff]
        %v3426 = vld [vmem:[#allocation7 + $0x358] sm:$0xff]
        %v3427 = vld [vmem:[#allocation7 + $0x360] sm:$0xff]
        %v3428 = vld [vmem:[#allocation7 + $0x368] sm:$0xff]
        %v3429 = vld [vmem:[#allocation7 + $0x370] sm:$0xff]
        %v3430 = vld [vmem:[#allocation7 + $0x378] sm:$0xff]
        %v3431 = vld [vmem:[#allocation7 + $0x380] sm:$0xff]
        %v3432 = vld [vmem:[#allocation7 + $0x388] sm:$0xff]
        %v3433 = vld [vmem:[#allocation7 + $0x390] sm:$0xff]
        %v3434 = vld [vmem:[#allocation7 + $0x398] sm:$0xff]
        %v3435 = vld [vmem:[#allocation7 + $0x3a0] sm:$0xff]
        %v3436 = vld [vmem:[#allocation7 + $0x3a8] sm:$0xff]
        %v3437 = vld [vmem:[#allocation7 + $0x3b0] sm:$0xff]
        %v3438 = vld [vmem:[#allocation7 + $0x3b8] sm:$0xff]
        %v3439 = vld [vmem:[#allocation7 + $0x3c0] sm:$0xff]
        %v3440 = vld [vmem:[#allocation7 + $0x3c8] sm:$0xff]
        %v3441 = vld [vmem:[#allocation7 + $0x3d0] sm:$0xff]
        %v3442 = vld [vmem:[#allocation7 + $0x3d8] sm:$0xff]
        %v3443 = vld [vmem:[#allocation7 + $0x3e0] sm:$0xff]
        %v3444 = vld [vmem:[#allocation7 + $0x3e8] sm:$0xff]
        %v3445 = vld [vmem:[#allocation7 + $0x3f0] sm:$0xff]
        %v3446 = vld [vmem:[#allocation7 + $0x3f8] sm:$0xff]
        %v3447 = vld [vmem:[#allocation7 + $0x400] sm:$0xff]
        %v3448 = vld [vmem:[#allocation7 + $0x408] sm:$0xff]
        %v3449 = vld [vmem:[#allocation7 + $0x410] sm:$0xff]
        %v3450 = vld [vmem:[#allocation7 + $0x418] sm:$0xff]
        %v3451 = vld [vmem:[#allocation7 + $0x420] sm:$0xff]
        %v3452 = vld [vmem:[#allocation7 + $0x428] sm:$0xff]
        %v3453 = vld [vmem:[#allocation7 + $0x430] sm:$0xff]
        %v3454 = vld [vmem:[#allocation7 + $0x438] sm:$0xff]
        %v3455 = vld [vmem:[#allocation7 + $0x440] sm:$0xff]
        %v3456 = vld [vmem:[#allocation7 + $0x448] sm:$0xff]
        %v3457 = vld [vmem:[#allocation7 + $0x450] sm:$0xff]
        %v3458 = vld [vmem:[#allocation7 + $0x458] sm:$0xff]
        %v3459 = vld [vmem:[#allocation7 + $0x460] sm:$0xff]
        %v3460 = vld [vmem:[#allocation7 + $0x468] sm:$0xff]
        %v3461 = vld [vmem:[#allocation7 + $0x470] sm:$0xff]
        %v3462 = vld [vmem:[#allocation7 + $0x478] sm:$0xff]
        %v3463 = vld [vmem:[#allocation7 + $0x480] sm:$0xff]
        %v3464 = vld [vmem:[#allocation7 + $0x488] sm:$0xff]
        %v3465 = vld [vmem:[#allocation7 + $0x490] sm:$0xff]
        %v3466 = vld [vmem:[#allocation7 + $0x498] sm:$0xff]
        %v3467 = vld [vmem:[#allocation7 + $0x4a0] sm:$0xff]
        %v3468 = vld [vmem:[#allocation7 + $0x4a8] sm:$0xff]
        %v3469 = vld [vmem:[#allocation7 + $0x4b0] sm:$0xff]
        %v3470 = vld [vmem:[#allocation7 + $0x4b8] sm:$0xff]
        %v3471 = vld [vmem:[#allocation7 + $0x4c0] sm:$0xff]
        %v3472 = vld [vmem:[#allocation7 + $0x4c8] sm:$0xff]
        %v3473 = vld [vmem:[#allocation7 + $0x4d0] sm:$0xff]
        %v3474 = vld [vmem:[#allocation7 + $0x4d8] sm:$0xff]
        %v3475 = vld [vmem:[#allocation7 + $0x4e0] sm:$0xff]
        %v3476 = vld [vmem:[#allocation7 + $0x4e8] sm:$0xff]
        %v3477 = vld [vmem:[#allocation7 + $0x4f0] sm:$0xff]
        %v3478 = vld [vmem:[#allocation7 + $0x4f8] sm:$0xff]
        %v3479 = vld [vmem:[#allocation7 + $0x500] sm:$0xff]
        %v3480 = vld [vmem:[#allocation7 + $0x508] sm:$0xff]
        %v3481 = vld [vmem:[#allocation7 + $0x510] sm:$0xff]
        %v3482 = vld [vmem:[#allocation7 + $0x518] sm:$0xff]
        %v3483 = vld [vmem:[#allocation7 + $0x520] sm:$0xff]
        %v3484 = vld [vmem:[#allocation7 + $0x528] sm:$0xff]
        %v3485 = vld [vmem:[#allocation7 + $0x530] sm:$0xff]
        %v3486 = vld [vmem:[#allocation7 + $0x538] sm:$0xff]
        %v3487 = vld [vmem:[#allocation7 + $0x540] sm:$0xff]
        %v3488 = vld [vmem:[#allocation7 + $0x548] sm:$0xff]
        %v3489 = vld [vmem:[#allocation7 + $0x550] sm:$0xff]
        %v3490 = vld [vmem:[#allocation7 + $0x558] sm:$0xff]
        %v3491 = vld [vmem:[#allocation7 + $0x560] sm:$0xff]
        %v3492 = vld [vmem:[#allocation7 + $0x568] sm:$0xff]
        %v3493 = vld [vmem:[#allocation7 + $0x570] sm:$0xff]
        %v3494 = vld [vmem:[#allocation7 + $0x578] sm:$0xff]
        %v3495 = vld [vmem:[#allocation7 + $0x580] sm:$0xff]
        %v3496 = vld [vmem:[#allocation7 + $0x588] sm:$0xff]
        %v3497 = vld [vmem:[#allocation7 + $0x590] sm:$0xff]
        %v3498 = vld [vmem:[#allocation7 + $0x598] sm:$0xff]
        %v3499 = vld [vmem:[#allocation7 + $0x5a0] sm:$0xff]
        %v3500 = vld [vmem:[#allocation7 + $0x5a8] sm:$0xff]
        %v3501 = vld [vmem:[#allocation7 + $0x5b0] sm:$0xff]
        %v3502 = vld [vmem:[#allocation7 + $0x5b8] sm:$0xff]
        %v3503 = vld [vmem:[#allocation7 + $0x5c0] sm:$0xff]
        %v3504 = vld [vmem:[#allocation7 + $0x5c8] sm:$0xff]
        %v3505 = vld [vmem:[#allocation7 + $0x5d0] sm:$0xff]
        %v3506 = vld [vmem:[#allocation7 + $0x5d8] sm:$0xff]
        %v3507 = vld [vmem:[#allocation7 + $0x5e0] sm:$0xff]
        %v3508 = vld [vmem:[#allocation7 + $0x5e8] sm:$0xff]
        %v3509 = vld [vmem:[#allocation7 + $0x5f0] sm:$0xff]
        %v3510 = vld [vmem:[#allocation7 + $0x5f8] sm:$0xff]
        %v3511 = vld [vmem:[#allocation7 + $0x600] sm:$0xff]
        %v3512 = vld [vmem:[#allocation7 + $0x608] sm:$0xff]
        %v3513 = vld [vmem:[#allocation7 + $0x610] sm:$0xff]
        %v3514 = vld [vmem:[#allocation7 + $0x618] sm:$0xff]
        %v3515 = vld [vmem:[#allocation7 + $0x620] sm:$0xff]
        %v3516 = vld [vmem:[#allocation7 + $0x628] sm:$0xff]
        %v3517 = vld [vmem:[#allocation7 + $0x630] sm:$0xff]
        %v3518 = vld [vmem:[#allocation7 + $0x638] sm:$0xff]
        %v3519 = vld [vmem:[#allocation7 + $0x640] sm:$0xff]
        %v3520 = vld [vmem:[#allocation7 + $0x648] sm:$0xff]
        %v3521 = vld [vmem:[#allocation7 + $0x650] sm:$0xff]
        %v3522 = vld [vmem:[#allocation7 + $0x658] sm:$0xff]
        %v3523 = vld [vmem:[#allocation7 + $0x660] sm:$0xff]
        %v3524 = vld [vmem:[#allocation7 + $0x668] sm:$0xff]
        %v3525 = vld [vmem:[#allocation7 + $0x670] sm:$0xff]
        %v3526 = vld [vmem:[#allocation7 + $0x678] sm:$0xff]
        %v3527 = vld [vmem:[#allocation7 + $0x680] sm:$0xff]
        %v3528 = vld [vmem:[#allocation7 + $0x688] sm:$0xff]
        %v3529 = vld [vmem:[#allocation7 + $0x690] sm:$0xff]
        %v3530 = vld [vmem:[#allocation7 + $0x698] sm:$0xff]
        %v3531 = vld [vmem:[#allocation7 + $0x6a0] sm:$0xff]
        %v3532 = vld [vmem:[#allocation7 + $0x6a8] sm:$0xff]
        %v3533 = vld [vmem:[#allocation7 + $0x6b0] sm:$0xff]
        %v3534 = vld [vmem:[#allocation7 + $0x6b8] sm:$0xff]
        %v3535 = vld [vmem:[#allocation7 + $0x6c0] sm:$0xff]
        %v3536 = vld [vmem:[#allocation7 + $0x6c8] sm:$0xff]
        %v3537 = vld [vmem:[#allocation7 + $0x6d0] sm:$0xff]
        %v3538 = vld [vmem:[#allocation7 + $0x6d8] sm:$0xff]
        %v3539 = vld [vmem:[#allocation7 + $0x6e0] sm:$0xff]
        %v3540 = vld [vmem:[#allocation7 + $0x6e8] sm:$0xff]
        %v3541 = vld [vmem:[#allocation7 + $0x6f0] sm:$0xff]
        %v3542 = vld [vmem:[#allocation7 + $0x6f8] sm:$0xff]
        %v3543 = vld [vmem:[#allocation7 + $0x700] sm:$0xff]
        %v3544 = vld [vmem:[#allocation7 + $0x708] sm:$0xff]
        %v3545 = vld [vmem:[#allocation7 + $0x710] sm:$0xff]
        %v3546 = vld [vmem:[#allocation7 + $0x718] sm:$0xff]
        %v3547 = vld [vmem:[#allocation7 + $0x720] sm:$0xff]
        %v3548 = vld [vmem:[#allocation7 + $0x728] sm:$0xff]
        %v3549 = vld [vmem:[#allocation7 + $0x730] sm:$0xff]
        %v3550 = vld [vmem:[#allocation7 + $0x738] sm:$0xff]
        %v3551 = vld [vmem:[#allocation7 + $0x740] sm:$0xff]
        %v3552 = vld [vmem:[#allocation7 + $0x748] sm:$0xff]
        %v3553 = vld [vmem:[#allocation7 + $0x750] sm:$0xff]
        %v3554 = vld [vmem:[#allocation7 + $0x758] sm:$0xff]
        %v3555 = vld [vmem:[#allocation7 + $0x760] sm:$0xff]
        %v3556 = vld [vmem:[#allocation7 + $0x768] sm:$0xff]
        %v3557 = vld [vmem:[#allocation7 + $0x770] sm:$0xff]
        %v3558 = vld [vmem:[#allocation7 + $0x778] sm:$0xff]
        %v3559 = vld [vmem:[#allocation7 + $0x780] sm:$0xff]
        %v3560 = vld [vmem:[#allocation7 + $0x788] sm:$0xff]
        %v3561 = vld [vmem:[#allocation7 + $0x790] sm:$0xff]
        %v3562 = vld [vmem:[#allocation7 + $0x798] sm:$0xff]
        %v3563 = vld [vmem:[#allocation7 + $0x7a0] sm:$0xff]
        %v3564 = vld [vmem:[#allocation7 + $0x7a8] sm:$0xff]
        %v3565 = vld [vmem:[#allocation7 + $0x7b0] sm:$0xff]
        %v3566 = vld [vmem:[#allocation7 + $0x7b8] sm:$0xff]
        %v3567 = vld [vmem:[#allocation7 + $0x7c0] sm:$0xff]
        %v3568 = vld [vmem:[#allocation7 + $0x7c8] sm:$0xff]
        %v3569 = vld [vmem:[#allocation7 + $0x7d0] sm:$0xff]
        %v3570 = vld [vmem:[#allocation7 + $0x7d8] sm:$0xff]
        %v3571 = vld [vmem:[#allocation7 + $0x7e0] sm:$0xff]
        %v3572 = vld [vmem:[#allocation7 + $0x7e8] sm:$0xff]
        %v3573 = vld [vmem:[#allocation7 + $0x7f0] sm:$0xff]
        %v3574 = vld [vmem:[#allocation7 + $0x7f8] sm:$0xff]
        %v3575 = vld [vmem:[#allocation7 + $0x800] sm:$0xff]
        %v3576 = vld [vmem:[#allocation7 + $0x808] sm:$0xff]
        %v3577 = vld [vmem:[#allocation7 + $0x810] sm:$0xff]
        %v3578 = vld [vmem:[#allocation7 + $0x818] sm:$0xff]
        %v3579 = vld [vmem:[#allocation7 + $0x820] sm:$0xff]
        %v3580 = vld [vmem:[#allocation7 + $0x828] sm:$0xff]
        %v3581 = vld [vmem:[#allocation7 + $0x830] sm:$0xff]
        %v3582 = vld [vmem:[#allocation7 + $0x838] sm:$0xff]
        %v3583 = vld [vmem:[#allocation7 + $0x840] sm:$0xff]
        %v3584 = vld [vmem:[#allocation7 + $0x848] sm:$0xff]
        %v3585 = vld [vmem:[#allocation7 + $0x850] sm:$0xff]
        %v3586 = vld [vmem:[#allocation7 + $0x858] sm:$0xff]
        %v3587 = vld [vmem:[#allocation7 + $0x860] sm:$0xff]
        %v3588 = vld [vmem:[#allocation7 + $0x868] sm:$0xff]
        %v3589 = vld [vmem:[#allocation7 + $0x870] sm:$0xff]
        %v3590 = vld [vmem:[#allocation7 + $0x878] sm:$0xff]
        %v3591 = vld [vmem:[#allocation7 + $0x880] sm:$0xff]
        %v3592 = vld [vmem:[#allocation7 + $0x888] sm:$0xff]
        %v3593 = vld [vmem:[#allocation7 + $0x890] sm:$0xff]
        %v3594 = vld [vmem:[#allocation7 + $0x898] sm:$0xff]
        %v3595 = vld [vmem:[#allocation7 + $0x8a0] sm:$0xff]
        %v3596 = vld [vmem:[#allocation7 + $0x8a8] sm:$0xff]
        %v3597 = vld [vmem:[#allocation7 + $0x8b0] sm:$0xff]
        %v3598 = vld [vmem:[#allocation7 + $0x8b8] sm:$0xff]
        %v3599 = vld [vmem:[#allocation7 + $0x8c0] sm:$0xff]
        %v3600 = vld [vmem:[#allocation7 + $0x8c8] sm:$0xff]
        %v3601 = vld [vmem:[#allocation7 + $0x8d0] sm:$0xff]
        %v3602 = vld [vmem:[#allocation7 + $0x8d8] sm:$0xff]
        %v3603 = vld [vmem:[#allocation7 + $0x8e0] sm:$0xff]
        %v3604 = vld [vmem:[#allocation7 + $0x8e8] sm:$0xff]
        %v3605 = vld [vmem:[#allocation7 + $0x8f0] sm:$0xff]
        %v3606 = vld [vmem:[#allocation7 + $0x8f8] sm:$0xff]
        %v3607 = vld [vmem:[#allocation7 + $0x900] sm:$0xff]
        %v3608 = vld [vmem:[#allocation7 + $0x908] sm:$0xff]
        %v3609 = vld [vmem:[#allocation7 + $0x910] sm:$0xff]
        %v3610 = vld [vmem:[#allocation7 + $0x918] sm:$0xff]
        %v3611 = vld [vmem:[#allocation7 + $0x920] sm:$0xff]
        %v3612 = vld [vmem:[#allocation7 + $0x928] sm:$0xff]
        %v3613 = vld [vmem:[#allocation7 + $0x930] sm:$0xff]
        %v3614 = vld [vmem:[#allocation7 + $0x938] sm:$0xff]
        %v3615 = vld [vmem:[#allocation7 + $0x940] sm:$0xff]
        %v3616 = vld [vmem:[#allocation7 + $0x948] sm:$0xff]
        %v3617 = vld [vmem:[#allocation7 + $0x950] sm:$0xff]
        %v3618 = vld [vmem:[#allocation7 + $0x958] sm:$0xff]
        %v3619 = vld [vmem:[#allocation7 + $0x960] sm:$0xff]
        %v3620 = vld [vmem:[#allocation7 + $0x968] sm:$0xff]
        %v3621 = vld [vmem:[#allocation7 + $0x970] sm:$0xff]
        %v3622 = vld [vmem:[#allocation7 + $0x978] sm:$0xff]
        %v3623 = vld [vmem:[#allocation7 + $0x980] sm:$0xff]
        %v3624 = vld [vmem:[#allocation7 + $0x988] sm:$0xff]
        %v3625 = vld [vmem:[#allocation7 + $0x990] sm:$0xff]
        %v3626 = vld [vmem:[#allocation7 + $0x998] sm:$0xff]
        %v3627 = vld [vmem:[#allocation7 + $0x9a0] sm:$0xff]
        %v3628 = vld [vmem:[#allocation7 + $0x9a8] sm:$0xff]
        %v3629 = vld [vmem:[#allocation7 + $0x9b0] sm:$0xff]
        %v3630 = vld [vmem:[#allocation7 + $0x9b8] sm:$0xff]
        %v3631 = vld [vmem:[#allocation7 + $0x9c0] sm:$0xff]
        %v3632 = vld [vmem:[#allocation7 + $0x9c8] sm:$0xff]
        %v3633 = vld [vmem:[#allocation7 + $0x9d0] sm:$0xff]
        %v3634 = vld [vmem:[#allocation7 + $0x9d8] sm:$0xff]
        %v3635 = vld [vmem:[#allocation7 + $0x9e0] sm:$0xff]
        %v3636 = vld [vmem:[#allocation7 + $0x9e8] sm:$0xff]
        %v3637 = vld [vmem:[#allocation7 + $0x9f0] sm:$0xff]
        %v3638 = vld [vmem:[#allocation7 + $0x9f8] sm:$0xff]
        %v3639 = vld [vmem:[#allocation7 + $0xa00] sm:$0xff]
        %v3640 = vld [vmem:[#allocation7 + $0xa08] sm:$0xff]
        %v3641 = vld [vmem:[#allocation7 + $0xa10] sm:$0xff]
        %v3642 = vld [vmem:[#allocation7 + $0xa18] sm:$0xff]
        %v3643 = vld [vmem:[#allocation7 + $0xa20] sm:$0xff]
        %v3644 = vld [vmem:[#allocation7 + $0xa28] sm:$0xff]
        %v3645 = vld [vmem:[#allocation7 + $0xa30] sm:$0xff]
        %v3646 = vld [vmem:[#allocation7 + $0xa38] sm:$0xff]
        %v3647 = vld [vmem:[#allocation7 + $0xa40] sm:$0xff]
        %v3648 = vld [vmem:[#allocation7 + $0xa48] sm:$0xff]
        %v3649 = vld [vmem:[#allocation7 + $0xa50] sm:$0xff]
        %v3650 = vld [vmem:[#allocation7 + $0xa58] sm:$0xff]
        %v3651 = vld [vmem:[#allocation7 + $0xa60] sm:$0xff]
        %v3652 = vld [vmem:[#allocation7 + $0xa68] sm:$0xff]
        %v3653 = vld [vmem:[#allocation7 + $0xa70] sm:$0xff]
        %v3654 = vld [vmem:[#allocation7 + $0xa78] sm:$0xff]
        %v3655 = vld [vmem:[#allocation7 + $0xa80] sm:$0xff]
        %v3656 = vld [vmem:[#allocation7 + $0xa88] sm:$0xff]
        %v3657 = vld [vmem:[#allocation7 + $0xa90] sm:$0xff]
        %v3658 = vld [vmem:[#allocation7 + $0xa98] sm:$0xff]
        %v3659 = vld [vmem:[#allocation7 + $0xaa0] sm:$0xff]
        %v3660 = vld [vmem:[#allocation7 + $0xaa8] sm:$0xff]
        %v3661 = vld [vmem:[#allocation7 + $0xab0] sm:$0xff]
        %v3662 = vld [vmem:[#allocation7 + $0xab8] sm:$0xff]
        %v3663 = vld [vmem:[#allocation7 + $0xac0] sm:$0xff]
        %v3664 = vld [vmem:[#allocation7 + $0xac8] sm:$0xff]
        %v3665 = vld [vmem:[#allocation7 + $0xad0] sm:$0xff]
        %v3666 = vld [vmem:[#allocation7 + $0xad8] sm:$0xff]
        %v3667 = vld [vmem:[#allocation7 + $0xae0] sm:$0xff]
        %v3668 = vld [vmem:[#allocation7 + $0xae8] sm:$0xff]
        %v3669 = vld [vmem:[#allocation7 + $0xaf0] sm:$0xff]
        %v3670 = vld [vmem:[#allocation7 + $0xaf8] sm:$0xff]
        %v3671 = vld [vmem:[#allocation7 + $0xb00] sm:$0xff]
        %v3672 = vld [vmem:[#allocation7 + $0xb08] sm:$0xff]
        %v3673 = vld [vmem:[#allocation7 + $0xb10] sm:$0xff]
        %v3674 = vld [vmem:[#allocation7 + $0xb18] sm:$0xff]
        %v3675 = vld [vmem:[#allocation7 + $0xb20] sm:$0xff]
        %v3676 = vld [vmem:[#allocation7 + $0xb28] sm:$0xff]
        %v3677 = vld [vmem:[#allocation7 + $0xb30] sm:$0xff]
        %v3678 = vld [vmem:[#allocation7 + $0xb38] sm:$0xff]
        %v3679 = vld [vmem:[#allocation7 + $0xb40] sm:$0xff]
        %v3680 = vld [vmem:[#allocation7 + $0xb48] sm:$0xff]
        %v3681 = vld [vmem:[#allocation7 + $0xb50] sm:$0xff]
        %v3682 = vld [vmem:[#allocation7 + $0xb58] sm:$0xff]
        %v3683 = vld [vmem:[#allocation7 + $0xb60] sm:$0xff]
        %v3684 = vld [vmem:[#allocation7 + $0xb68] sm:$0xff]
        %v3685 = vld [vmem:[#allocation7 + $0xb70] sm:$0xff]
        %v3686 = vld [vmem:[#allocation7 + $0xb78] sm:$0xff]
        %v3687 = vld [vmem:[#allocation7 + $0xb80] sm:$0xff]
        %v3688 = vld [vmem:[#allocation7 + $0xb88] sm:$0xff]
        %v3689 = vld [vmem:[#allocation7 + $0xb90] sm:$0xff]
        %v3690 = vld [vmem:[#allocation7 + $0xb98] sm:$0xff]
        %v3691 = vld [vmem:[#allocation7 + $0xba0] sm:$0xff]
        %v3692 = vld [vmem:[#allocation7 + $0xba8] sm:$0xff]
        %v3693 = vld [vmem:[#allocation7 + $0xbb0] sm:$0xff]
        %v3694 = vld [vmem:[#allocation7 + $0xbb8] sm:$0xff]
        %v3695 = vld [vmem:[#allocation7 + $0xbc0] sm:$0xff]
        %v3696 = vld [vmem:[#allocation7 + $0xbc8] sm:$0xff]
        %v3697 = vld [vmem:[#allocation7 + $0xbd0] sm:$0xff]
        %v3698 = vld [vmem:[#allocation7 + $0xbd8] sm:$0xff]
        %v3699 = vld [vmem:[#allocation7 + $0xbe0] sm:$0xff]
        %v3700 = vld [vmem:[#allocation7 + $0xbe8] sm:$0xff]
        %v3701 = vld [vmem:[#allocation7 + $0xbf0] sm:$0xff]
        %v3702 = vld [vmem:[#allocation7 + $0xbf8] sm:$0xff]
        %v3703 = vld [vmem:[#allocation7 + $0xc00] sm:$0xff]
        %v3704 = vld [vmem:[#allocation7 + $0xc08] sm:$0xff]
        %v3705 = vld [vmem:[#allocation7 + $0xc10] sm:$0xff]
        %v3706 = vld [vmem:[#allocation7 + $0xc18] sm:$0xff]
        %v3707 = vld [vmem:[#allocation7 + $0xc20] sm:$0xff]
        %v3708 = vld [vmem:[#allocation7 + $0xc28] sm:$0xff]
        %v3709 = vld [vmem:[#allocation7 + $0xc30] sm:$0xff]
        %v3710 = vld [vmem:[#allocation7 + $0xc38] sm:$0xff]
        %v3711 = vld [vmem:[#allocation7 + $0xc40] sm:$0xff]
        %v3712 = vld [vmem:[#allocation7 + $0xc48] sm:$0xff]
        %v3713 = vld [vmem:[#allocation7 + $0xc50] sm:$0xff]
        %v3714 = vld [vmem:[#allocation7 + $0xc58] sm:$0xff]
        %v3715 = vld [vmem:[#allocation7 + $0xc60] sm:$0xff]
        %v3716 = vld [vmem:[#allocation7 + $0xc68] sm:$0xff]
        %v3717 = vld [vmem:[#allocation7 + $0xc70] sm:$0xff]
        %v3718 = vld [vmem:[#allocation7 + $0xc78] sm:$0xff]
        %v3719 = vld [vmem:[#allocation7 + $0xc80] sm:$0xff]
        %v3720 = vld [vmem:[#allocation7 + $0xc88] sm:$0xff]
        %v3721 = vld [vmem:[#allocation7 + $0xc90] sm:$0xff]
        %v3722 = vld [vmem:[#allocation7 + $0xc98] sm:$0xff]
        %v3723 = vld [vmem:[#allocation7 + $0xca0] sm:$0xff]
        %v3724 = vld [vmem:[#allocation7 + $0xca8] sm:$0xff]
        %v3725 = vld [vmem:[#allocation7 + $0xcb0] sm:$0xff]
        %v3726 = vld [vmem:[#allocation7 + $0xcb8] sm:$0xff]
        %v3727 = vld [vmem:[#allocation7 + $0xcc0] sm:$0xff]
        %v3728 = vld [vmem:[#allocation7 + $0xcc8] sm:$0xff]
        %v3729 = vld [vmem:[#allocation7 + $0xcd0] sm:$0xff]
        %v3730 = vld [vmem:[#allocation7 + $0xcd8] sm:$0xff]
        %v3731 = vld [vmem:[#allocation7 + $0xce0] sm:$0xff]
        %v3732 = vld [vmem:[#allocation7 + $0xce8] sm:$0xff]
        %v3733 = vld [vmem:[#allocation7 + $0xcf0] sm:$0xff]
        %v3734 = vld [vmem:[#allocation7 + $0xcf8] sm:$0xff]
        %v3735 = vld [vmem:[#allocation7 + $0xd00] sm:$0xff]
        %v3736 = vld [vmem:[#allocation7 + $0xd08] sm:$0xff]
        %v3737 = vld [vmem:[#allocation7 + $0xd10] sm:$0xff]
        %v3738 = vld [vmem:[#allocation7 + $0xd18] sm:$0xff]
        %v3739 = vld [vmem:[#allocation7 + $0xd20] sm:$0xff]
        %v3740 = vld [vmem:[#allocation7 + $0xd28] sm:$0xff]
        %v3741 = vld [vmem:[#allocation7 + $0xd30] sm:$0xff]
        %v3742 = vld [vmem:[#allocation7 + $0xd38] sm:$0xff]
        %v3743 = vld [vmem:[#allocation7 + $0xd40] sm:$0xff]
        %v3744 = vld [vmem:[#allocation7 + $0xd48] sm:$0xff]
        %v3745 = vld [vmem:[#allocation7 + $0xd50] sm:$0xff]
        %v3746 = vld [vmem:[#allocation7 + $0xd58] sm:$0xff]
        %v3747 = vld [vmem:[#allocation7 + $0xd60] sm:$0xff]
        %v3748 = vld [vmem:[#allocation7 + $0xd68] sm:$0xff]
        %v3749 = vld [vmem:[#allocation7 + $0xd70] sm:$0xff]
        %v3750 = vld [vmem:[#allocation7 + $0xd78] sm:$0xff]
        %v3751 = vld [vmem:[#allocation7 + $0xd80] sm:$0xff]
        %v3752 = vld [vmem:[#allocation7 + $0xd88] sm:$0xff]
        %v3753 = vld [vmem:[#allocation7 + $0xd90] sm:$0xff]
        %v3754 = vld [vmem:[#allocation7 + $0xd98] sm:$0xff]
        %v3755 = vld [vmem:[#allocation7 + $0xda0] sm:$0xff]
        %v3756 = vld [vmem:[#allocation7 + $0xda8] sm:$0xff]
        %v3757 = vld [vmem:[#allocation7 + $0xdb0] sm:$0xff]
        %v3758 = vld [vmem:[#allocation7 + $0xdb8] sm:$0xff]
        %v3759 = vld [vmem:[#allocation7 + $0xdc0] sm:$0xff]
        %v3760 = vld [vmem:[#allocation7 + $0xdc8] sm:$0xff]
        %v3761 = vld [vmem:[#allocation7 + $0xdd0] sm:$0xff]
        %v3762 = vld [vmem:[#allocation7 + $0xdd8] sm:$0xff]
        %v3763 = vld [vmem:[#allocation7 + $0xde0] sm:$0xff]
        %v3764 = vld [vmem:[#allocation7 + $0xde8] sm:$0xff]
        %v3765 = vld [vmem:[#allocation7 + $0xdf0] sm:$0xff]
        %v3766 = vld [vmem:[#allocation7 + $0xdf8] sm:$0xff]
        %v3767 = vld [vmem:[#allocation7 + $0xe00] sm:$0xff]
        %v3768 = vld [vmem:[#allocation7 + $0xe08] sm:$0xff]
        %v3769 = vld [vmem:[#allocation7 + $0xe10] sm:$0xff]
        %v3770 = vld [vmem:[#allocation7 + $0xe18] sm:$0xff]
        %v3771 = vld [vmem:[#allocation7 + $0xe20] sm:$0xff]
        %v3772 = vld [vmem:[#allocation7 + $0xe28] sm:$0xff]
        %v3773 = vld [vmem:[#allocation7 + $0xe30] sm:$0xff]
        %v3774 = vld [vmem:[#allocation7 + $0xe38] sm:$0xff]
        %v3775 = vld [vmem:[#allocation7 + $0xe40] sm:$0xff]
        %v3776 = vld [vmem:[#allocation7 + $0xe48] sm:$0xff]
        %v3777 = vld [vmem:[#allocation7 + $0xe50] sm:$0xff]
        %v3778 = vld [vmem:[#allocation7 + $0xe58] sm:$0xff]
        %v3779 = vld [vmem:[#allocation7 + $0xe60] sm:$0xff]
        %v3780 = vld [vmem:[#allocation7 + $0xe68] sm:$0xff]
        %v3781 = vld [vmem:[#allocation7 + $0xe70] sm:$0xff]
        %v3782 = vld [vmem:[#allocation7 + $0xe78] sm:$0xff]
        %v3783 = vld [vmem:[#allocation7 + $0xe80] sm:$0xff]
        %v3784 = vld [vmem:[#allocation7 + $0xe88] sm:$0xff]
        %v3785 = vld [vmem:[#allocation7 + $0xe90] sm:$0xff]
        %v3786 = vld [vmem:[#allocation7 + $0xe98] sm:$0xff]
        %v3787 = vld [vmem:[#allocation7 + $0xea0] sm:$0xff]
        %v3788 = vld [vmem:[#allocation7 + $0xea8] sm:$0xff]
        %v3789 = vld [vmem:[#allocation7 + $0xeb0] sm:$0xff]
        %v3790 = vld [vmem:[#allocation7 + $0xeb8] sm:$0xff]
        %v3791 = vld [vmem:[#allocation7 + $0xec0] sm:$0xff]
        %v3792 = vld [vmem:[#allocation7 + $0xec8] sm:$0xff]
        %v3793 = vld [vmem:[#allocation7 + $0xed0] sm:$0xff]
        %v3794 = vld [vmem:[#allocation7 + $0xed8] sm:$0xff]
        %v3795 = vld [vmem:[#allocation7 + $0xee0] sm:$0xff]
        %v3796 = vld [vmem:[#allocation7 + $0xee8] sm:$0xff]
        %v3797 = vld [vmem:[#allocation7 + $0xef0] sm:$0xff]
        %v3798 = vld [vmem:[#allocation7 + $0xef8] sm:$0xff]
        %v3799 = vld [vmem:[#allocation7 + $0xf00] sm:$0xff]
        %v3800 = vld [vmem:[#allocation7 + $0xf08] sm:$0xff]
        %v3801 = vld [vmem:[#allocation7 + $0xf10] sm:$0xff]
        %v3802 = vld [vmem:[#allocation7 + $0xf18] sm:$0xff]
        %v3803 = vld [vmem:[#allocation7 + $0xf20] sm:$0xff]
        %v3804 = vld [vmem:[#allocation7 + $0xf28] sm:$0xff]
        %v3805 = vld [vmem:[#allocation7 + $0xf30] sm:$0xff]
        %v3806 = vld [vmem:[#allocation7 + $0xf38] sm:$0xff]
        %v3807 = vld [vmem:[#allocation7 + $0xf40] sm:$0xff]
        %v3808 = vld [vmem:[#allocation7 + $0xf48] sm:$0xff]
        %v3809 = vld [vmem:[#allocation7 + $0xf50] sm:$0xff]
        %v3810 = vld [vmem:[#allocation7 + $0xf58] sm:$0xff]
        %v3811 = vld [vmem:[#allocation7 + $0xf60] sm:$0xff]
        %v3812 = vld [vmem:[#allocation7 + $0xf68] sm:$0xff]
        %v3813 = vld [vmem:[#allocation7 + $0xf70] sm:$0xff]
        %v3814 = vld [vmem:[#allocation7 + $0xf78] sm:$0xff]
        %v3815 = vld [vmem:[#allocation7 + $0xf80] sm:$0xff]
        %v3816 = vld [vmem:[#allocation7 + $0xf88] sm:$0xff]
        %v3817 = vld [vmem:[#allocation7 + $0xf90] sm:$0xff]
        %v3818 = vld [vmem:[#allocation7 + $0xf98] sm:$0xff]
        %v3819 = vld [vmem:[#allocation7 + $0xfa0] sm:$0xff]
        %v3820 = vld [vmem:[#allocation7 + $0xfa8] sm:$0xff]
        %v3821 = vld [vmem:[#allocation7 + $0xfb0] sm:$0xff]
        %v3822 = vld [vmem:[#allocation7 + $0xfb8] sm:$0xff]
        %v3823 = vld [vmem:[#allocation7 + $0xfc0] sm:$0xff]
        %v3824 = vld [vmem:[#allocation7 + $0xfc8] sm:$0xff]
        %v3825 = vld [vmem:[#allocation7 + $0xfd0] sm:$0xff]
        %v3826 = vld [vmem:[#allocation7 + $0xfd8] sm:$0xff]
        %v3827 = vld [vmem:[#allocation7 + $0xfe0] sm:$0xff]
        %v3828 = vld [vmem:[#allocation7 + $0xfe8] sm:$0xff]
        %v3829 = vld [vmem:[#allocation7 + $0xff0] sm:$0xff]
        %v3830 = vld [vmem:[#allocation7 + $0xff8] sm:$0xff]
        %v3831 = vld [vmem:[#allocation7 + $0x1000] sm:$0xff]
        %v3832 = vld [vmem:[#allocation7 + $0x1008] sm:$0xff]
        %v3833 = vld [vmem:[#allocation7 + $0x1010] sm:$0xff]
        %v3834 = vld [vmem:[#allocation7 + $0x1018] sm:$0xff]
        %v3835 = vld [vmem:[#allocation7 + $0x1020] sm:$0xff]
        %v3836 = vld [vmem:[#allocation7 + $0x1028] sm:$0xff]
        %v3837 = vld [vmem:[#allocation7 + $0x1030] sm:$0xff]
        %v3838 = vld [vmem:[#allocation7 + $0x1038] sm:$0xff]
        %v3839 = vld [vmem:[#allocation7 + $0x1040] sm:$0xff]
        %v3840 = vld [vmem:[#allocation7 + $0x1048] sm:$0xff]
        %v3841 = vld [vmem:[#allocation7 + $0x1050] sm:$0xff]
        %v3842 = vld [vmem:[#allocation7 + $0x1058] sm:$0xff]
        %v3843 = vld [vmem:[#allocation7 + $0x1060] sm:$0xff]
        %v3844 = vld [vmem:[#allocation7 + $0x1068] sm:$0xff]
        %v3845 = vld [vmem:[#allocation7 + $0x1070] sm:$0xff]
        %v3846 = vld [vmem:[#allocation7 + $0x1078] sm:$0xff]
        %v3847 = vld [vmem:[#allocation7 + $0x1080] sm:$0xff]
        %v3848 = vld [vmem:[#allocation7 + $0x1088] sm:$0xff]
        %v3849 = vld [vmem:[#allocation7 + $0x1090] sm:$0xff]
        %v3850 = vld [vmem:[#allocation7 + $0x1098] sm:$0xff]
        %v3851 = vld [vmem:[#allocation7 + $0x10a0] sm:$0xff]
        %v3852 = vld [vmem:[#allocation7 + $0x10a8] sm:$0xff]
        %v3853 = vld [vmem:[#allocation7 + $0x10b0] sm:$0xff]
        %v3854 = vld [vmem:[#allocation7 + $0x10b8] sm:$0xff]
        %v3855 = vld [vmem:[#allocation7 + $0x10c0] sm:$0xff]
        %v3856 = vld [vmem:[#allocation7 + $0x10c8] sm:$0xff]
        %v3857 = vld [vmem:[#allocation7 + $0x10d0] sm:$0xff]
        %v3858 = vld [vmem:[#allocation7 + $0x10d8] sm:$0xff]
        %v3859 = vld [vmem:[#allocation7 + $0x10e0] sm:$0xff]
        %v3860 = vld [vmem:[#allocation7 + $0x10e8] sm:$0xff]
        %v3861 = vld [vmem:[#allocation7 + $0x10f0] sm:$0xff]
        %v3862 = vld [vmem:[#allocation7 + $0x10f8] sm:$0xff]
        %v3863 = vld [vmem:[#allocation7 + $0x1100] sm:$0xff]
        %v3864 = vld [vmem:[#allocation7 + $0x1108] sm:$0xff]
        %v3865 = vld [vmem:[#allocation7 + $0x1110] sm:$0xff]
        %v3866 = vld [vmem:[#allocation7 + $0x1118] sm:$0xff]
        %v3867 = vld [vmem:[#allocation7 + $0x1120] sm:$0xff]
        %v3868 = vld [vmem:[#allocation7 + $0x1128] sm:$0xff]
        %v3869 = vld [vmem:[#allocation7 + $0x1130] sm:$0xff]
        %v3870 = vld [vmem:[#allocation7 + $0x1138] sm:$0xff]
        %v3871 = vld [vmem:[#allocation7 + $0x1140] sm:$0xff]
        %v3872 = vld [vmem:[#allocation7 + $0x1148] sm:$0xff]
        %v3873 = vld [vmem:[#allocation7 + $0x1150] sm:$0xff]
        %v3874 = vld [vmem:[#allocation7 + $0x1158] sm:$0xff]
        %v3875 = vld [vmem:[#allocation7 + $0x1160] sm:$0xff]
        %v3876 = vld [vmem:[#allocation7 + $0x1168] sm:$0xff]
        %v3877 = vld [vmem:[#allocation7 + $0x1170] sm:$0xff]
        %v3878 = vld [vmem:[#allocation7 + $0x1178] sm:$0xff]
        %v3879 = vld [vmem:[#allocation7 + $0x1180] sm:$0xff]
        %v3880 = vld [vmem:[#allocation7 + $0x1188] sm:$0xff]
        %v3881 = vld [vmem:[#allocation7 + $0x1190] sm:$0xff]
        %v3882 = vld [vmem:[#allocation7 + $0x1198] sm:$0xff]
        %v3883 = vld [vmem:[#allocation7 + $0x11a0] sm:$0xff]
        %v3884 = vld [vmem:[#allocation7 + $0x11a8] sm:$0xff]
        %v3885 = vld [vmem:[#allocation7 + $0x11b0] sm:$0xff]
        %v3886 = vld [vmem:[#allocation7 + $0x11b8] sm:$0xff]
        %v3887 = vld [vmem:[#allocation7 + $0x11c0] sm:$0xff]
        %v3888 = vld [vmem:[#allocation7 + $0x11c8] sm:$0xff]
        %v3889 = vld [vmem:[#allocation7 + $0x11d0] sm:$0xff]
        %v3890 = vld [vmem:[#allocation7 + $0x11d8] sm:$0xff]
        %v3891 = vld [vmem:[#allocation7 + $0x11e0] sm:$0xff]
        %v3892 = vld [vmem:[#allocation7 + $0x11e8] sm:$0xff]
        %v3893 = vld [vmem:[#allocation7 + $0x11f0] sm:$0xff]
        %v3894 = vld [vmem:[#allocation7 + $0x11f8] sm:$0xff]
        %v3895 = vld [vmem:[#allocation7 + $0x1200] sm:$0xff]
        %v3896 = vld [vmem:[#allocation7 + $0x1208] sm:$0xff]
        %v3897 = vld [vmem:[#allocation7 + $0x1210] sm:$0xff]
        %v3898 = vld [vmem:[#allocation7 + $0x1218] sm:$0xff]
        %v3899 = vld [vmem:[#allocation7 + $0x1220] sm:$0xff]
        %v3900 = vld [vmem:[#allocation7 + $0x1228] sm:$0xff]
        %v3901 = vld [vmem:[#allocation7 + $0x1230] sm:$0xff]
        %v3902 = vld [vmem:[#allocation7 + $0x1238] sm:$0xff]
        %v3903 = vld [vmem:[#allocation7 + $0x1240] sm:$0xff]
        %v3904 = vld [vmem:[#allocation7 + $0x1248] sm:$0xff]
        %v3905 = vld [vmem:[#allocation7 + $0x1250] sm:$0xff]
        %v3906 = vld [vmem:[#allocation7 + $0x1258] sm:$0xff]
        %v3907 = vld [vmem:[#allocation7 + $0x1260] sm:$0xff]
        %v3908 = vld [vmem:[#allocation7 + $0x1268] sm:$0xff]
        %v3909 = vld [vmem:[#allocation7 + $0x1270] sm:$0xff]
        %v3910 = vld [vmem:[#allocation7 + $0x1278] sm:$0xff]
        %v3911 = vld [vmem:[#allocation7 + $0x1280] sm:$0xff]
        %v3912 = vld [vmem:[#allocation7 + $0x1288] sm:$0xff]
        %v3913 = vld [vmem:[#allocation7 + $0x1290] sm:$0xff]
        %v3914 = vld [vmem:[#allocation7 + $0x1298] sm:$0xff]
        %v3915 = vld [vmem:[#allocation7 + $0x12a0] sm:$0xff]
        %v3916 = vld [vmem:[#allocation7 + $0x12a8] sm:$0xff]
        %v3917 = vld [vmem:[#allocation7 + $0x12b0] sm:$0xff]
        %v3918 = vld [vmem:[#allocation7 + $0x12b8] sm:$0xff]
        %v3919 = vld [vmem:[#allocation7 + $0x12c0] sm:$0xff]
        %v3920 = vld [vmem:[#allocation7 + $0x12c8] sm:$0xff]
        %v3921 = vld [vmem:[#allocation7 + $0x12d0] sm:$0xff]
        %v3922 = vld [vmem:[#allocation7 + $0x12d8] sm:$0xff]
        %v3923 = vld [vmem:[#allocation7 + $0x12e0] sm:$0xff]
        %v3924 = vld [vmem:[#allocation7 + $0x12e8] sm:$0xff]
        %v3925 = vld [vmem:[#allocation7 + $0x12f0] sm:$0xff]
        %v3926 = vld [vmem:[#allocation7 + $0x12f8] sm:$0xff]
        %v3927 = vld [vmem:[#allocation7 + $0x1300] sm:$0xff]
        %v3928 = vld [vmem:[#allocation7 + $0x1308] sm:$0xff]
        %v3929 = vld [vmem:[#allocation7 + $0x1310] sm:$0xff]
        %v3930 = vld [vmem:[#allocation7 + $0x1318] sm:$0xff]
        %v3931 = vld [vmem:[#allocation7 + $0x1320] sm:$0xff]
        %v3932 = vld [vmem:[#allocation7 + $0x1328] sm:$0xff]
        %v3933 = vld [vmem:[#allocation7 + $0x1330] sm:$0xff]
        %v3934 = vld [vmem:[#allocation7 + $0x1338] sm:$0xff]
        %v3935 = vld [vmem:[#allocation7 + $0x1340] sm:$0xff]
        %v3936 = vld [vmem:[#allocation7 + $0x1348] sm:$0xff]
        %v3937 = vld [vmem:[#allocation7 + $0x1350] sm:$0xff]
        %v3938 = vld [vmem:[#allocation7 + $0x1358] sm:$0xff]
        %v3939 = vld [vmem:[#allocation7 + $0x1360] sm:$0xff]
        %v3940 = vld [vmem:[#allocation7 + $0x1368] sm:$0xff]
        %v3941 = vld [vmem:[#allocation7 + $0x1370] sm:$0xff]
        %v3942 = vld [vmem:[#allocation7 + $0x1378] sm:$0xff]
        %v3943 = vld [vmem:[#allocation7 + $0x1380] sm:$0xff]
        %v3944 = vld [vmem:[#allocation7 + $0x1388] sm:$0xff]
        %v3945 = vld [vmem:[#allocation7 + $0x1390] sm:$0xff]
        %v3946 = vld [vmem:[#allocation7 + $0x1398] sm:$0xff]
        %v3947 = vld [vmem:[#allocation7 + $0x13a0] sm:$0xff]
        %v3948 = vld [vmem:[#allocation7 + $0x13a8] sm:$0xff]
        %v3949 = vld [vmem:[#allocation7 + $0x13b0] sm:$0xff]
        %v3950 = vld [vmem:[#allocation7 + $0x13b8] sm:$0xff]
        %v3951 = vld [vmem:[#allocation7 + $0x13c0] sm:$0xff]
        %v3952 = vld [vmem:[#allocation7 + $0x13c8] sm:$0xff]
        %v3953 = vld [vmem:[#allocation7 + $0x13d0] sm:$0xff]
        %v3954 = vld [vmem:[#allocation7 + $0x13d8] sm:$0xff]
        %v3955 = vld [vmem:[#allocation7 + $0x13e0] sm:$0xff]
        %v3956 = vld [vmem:[#allocation7 + $0x13e8] sm:$0xff]
        %v3957 = vld [vmem:[#allocation7 + $0x13f0] sm:$0xff]
        %v3958 = vld [vmem:[#allocation7 + $0x13f8] sm:$0xff]
        %v3959 = vld [vmem:[#allocation7 + $0x1400] sm:$0xff]
        %v3960 = vld [vmem:[#allocation7 + $0x1408] sm:$0xff]
        %v3961 = vld [vmem:[#allocation7 + $0x1410] sm:$0xff]
        %v3962 = vld [vmem:[#allocation7 + $0x1418] sm:$0xff]
        %v3963 = vld [vmem:[#allocation7 + $0x1420] sm:$0xff]
        %v3964 = vld [vmem:[#allocation7 + $0x1428] sm:$0xff]
        %v3965 = vld [vmem:[#allocation7 + $0x1430] sm:$0xff]
        %v3966 = vld [vmem:[#allocation7 + $0x1438] sm:$0xff]
        %v3967 = vld [vmem:[#allocation7 + $0x1440] sm:$0xff]
        %v3968 = vld [vmem:[#allocation7 + $0x1448] sm:$0xff]
        %v3969 = vld [vmem:[#allocation7 + $0x1450] sm:$0xff]
        %v3970 = vld [vmem:[#allocation7 + $0x1458] sm:$0xff]
        %v3971 = vld [vmem:[#allocation7 + $0x1460] sm:$0xff]
        %v3972 = vld [vmem:[#allocation7 + $0x1468] sm:$0xff]
        %v3973 = vld [vmem:[#allocation7 + $0x1470] sm:$0xff]
        %v3974 = vld [vmem:[#allocation7 + $0x1478] sm:$0xff]
        %v3975 = vld [vmem:[#allocation7 + $0x1480] sm:$0xff]
        %v3976 = vld [vmem:[#allocation7 + $0x1488] sm:$0xff]
        %v3977 = vld [vmem:[#allocation7 + $0x1490] sm:$0xff]
        %v3978 = vld [vmem:[#allocation7 + $0x1498] sm:$0xff]
        %v3979 = vld [vmem:[#allocation7 + $0x14a0] sm:$0xff]
        %v3980 = vld [vmem:[#allocation7 + $0x14a8] sm:$0xff]
        %v3981 = vld [vmem:[#allocation7 + $0x14b0] sm:$0xff]
        %v3982 = vld [vmem:[#allocation7 + $0x14b8] sm:$0xff]
        %v3983 = vld [vmem:[#allocation7 + $0x14c0] sm:$0xff]
        %v3984 = vld [vmem:[#allocation7 + $0x14c8] sm:$0xff]
        %v3985 = vld [vmem:[#allocation7 + $0x14d0] sm:$0xff]
        %v3986 = vld [vmem:[#allocation7 + $0x14d8] sm:$0xff]
        %v3987 = vld [vmem:[#allocation7 + $0x14e0] sm:$0xff]
        %v3988 = vld [vmem:[#allocation7 + $0x14e8] sm:$0xff]
        %v3989 = vld [vmem:[#allocation7 + $0x14f0] sm:$0xff]
        %v3990 = vld [vmem:[#allocation7 + $0x14f8] sm:$0xff]
        %v3991 = vld [vmem:[#allocation7 + $0x1500] sm:$0xff]
        %v3992 = vld [vmem:[#allocation7 + $0x1508] sm:$0xff]
        %v3993 = vld [vmem:[#allocation7 + $0x1510] sm:$0xff]
        %v3994 = vld [vmem:[#allocation7 + $0x1518] sm:$0xff]
        %v3995 = vld [vmem:[#allocation7 + $0x1520] sm:$0xff]
        %v3996 = vld [vmem:[#allocation7 + $0x1528] sm:$0xff]
        %v3997 = vld [vmem:[#allocation7 + $0x1530] sm:$0xff]
        %v3998 = vld [vmem:[#allocation7 + $0x1538] sm:$0xff]
        %v3999 = vld [vmem:[#allocation7 + $0x1540] sm:$0xff]
        %v4000 = vld [vmem:[#allocation7 + $0x1548] sm:$0xff]
        %v4001 = vld [vmem:[#allocation7 + $0x1550] sm:$0xff]
        %v4002 = vld [vmem:[#allocation7 + $0x1558] sm:$0xff]
        %v4003 = vld [vmem:[#allocation7 + $0x1560] sm:$0xff]
        %v4004 = vld [vmem:[#allocation7 + $0x1568] sm:$0xff]
        %v4005 = vld [vmem:[#allocation7 + $0x1570] sm:$0xff]
        %v4006 = vld [vmem:[#allocation7 + $0x1578] sm:$0xff]
        %v4007 = vld [vmem:[#allocation7 + $0x1580] sm:$0xff]
        %v4008 = vld [vmem:[#allocation7 + $0x1588] sm:$0xff]
        %v4009 = vld [vmem:[#allocation7 + $0x1590] sm:$0xff]
        %v4010 = vld [vmem:[#allocation7 + $0x1598] sm:$0xff]
        %v4011 = vld [vmem:[#allocation7 + $0x15a0] sm:$0xff]
        %v4012 = vld [vmem:[#allocation7 + $0x15a8] sm:$0xff]
        %v4013 = vld [vmem:[#allocation7 + $0x15b0] sm:$0xff]
        %v4014 = vld [vmem:[#allocation7 + $0x15b8] sm:$0xff]
        %v4015 = vld [vmem:[#allocation7 + $0x15c0] sm:$0xff]
        %v4016 = vld [vmem:[#allocation7 + $0x15c8] sm:$0xff]
        %v4017 = vld [vmem:[#allocation7 + $0x15d0] sm:$0xff]
        %v4018 = vld [vmem:[#allocation7 + $0x15d8] sm:$0xff]
        %v4019 = vld [vmem:[#allocation7 + $0x15e0] sm:$0xff]
        %v4020 = vld [vmem:[#allocation7 + $0x15e8] sm:$0xff]
        %v4021 = vld [vmem:[#allocation7 + $0x15f0] sm:$0xff]
        %v4022 = vld [vmem:[#allocation7 + $0x15f8] sm:$0xff]
        %v4023 = vld [vmem:[#allocation7 + $0x1600] sm:$0xff]
        %v4024 = vld [vmem:[#allocation7 + $0x1608] sm:$0xff]
        %v4025 = vld [vmem:[#allocation7 + $0x1610] sm:$0xff]
        %v4026 = vld [vmem:[#allocation7 + $0x1618] sm:$0xff]
        %v4027 = vld [vmem:[#allocation7 + $0x1620] sm:$0xff]
        %v4028 = vld [vmem:[#allocation7 + $0x1628] sm:$0xff]
        %v4029 = vld [vmem:[#allocation7 + $0x1630] sm:$0xff]
        %v4030 = vld [vmem:[#allocation7 + $0x1638] sm:$0xff]
        %v4031 = vld [vmem:[#allocation7 + $0x1640] sm:$0xff]
        %v4032 = vld [vmem:[#allocation7 + $0x1648] sm:$0xff]
        %v4033 = vld [vmem:[#allocation7 + $0x1650] sm:$0xff]
        %v4034 = vld [vmem:[#allocation7 + $0x1658] sm:$0xff]
        %v4035 = vld [vmem:[#allocation7 + $0x1660] sm:$0xff]
        %v4036 = vld [vmem:[#allocation7 + $0x1668] sm:$0xff]
        %v4037 = vld [vmem:[#allocation7 + $0x1670] sm:$0xff]
        %v4038 = vld [vmem:[#allocation7 + $0x1678] sm:$0xff]
        %v4039 = vld [vmem:[#allocation7 + $0x1680] sm:$0xff]
        %v4040 = vld [vmem:[#allocation7 + $0x1688] sm:$0xff]
        %v4041 = vld [vmem:[#allocation7 + $0x1690] sm:$0xff]
        %v4042 = vld [vmem:[#allocation7 + $0x1698] sm:$0xff]
        %v4043 = vld [vmem:[#allocation7 + $0x16a0] sm:$0xff]
        %v4044 = vld [vmem:[#allocation7 + $0x16a8] sm:$0xff]
        %v4045 = vld [vmem:[#allocation7 + $0x16b0] sm:$0xff]
        %v4046 = vld [vmem:[#allocation7 + $0x16b8] sm:$0xff]
        %v4047 = vld [vmem:[#allocation7 + $0x16c0] sm:$0xff]
        %v4048 = vld [vmem:[#allocation7 + $0x16c8] sm:$0xff]
        %v4049 = vld [vmem:[#allocation7 + $0x16d0] sm:$0xff]
        %v4050 = vld [vmem:[#allocation7 + $0x16d8] sm:$0xff]
        %v4051 = vld [vmem:[#allocation7 + $0x16e0] sm:$0xff]
        %v4052 = vld [vmem:[#allocation7 + $0x16e8] sm:$0xff]
        %v4053 = vld [vmem:[#allocation7 + $0x16f0] sm:$0xff]
        %v4054 = vld [vmem:[#allocation7 + $0x16f8] sm:$0xff]
        %v4055 = vld [vmem:[#allocation7 + $0x1700] sm:$0xff]
        %v4056 = vld [vmem:[#allocation7 + $0x1708] sm:$0xff]
        %v4057 = vld [vmem:[#allocation7 + $0x1710] sm:$0xff]
        %v4058 = vld [vmem:[#allocation7 + $0x1718] sm:$0xff]
        %v4059 = vld [vmem:[#allocation7 + $0x1720] sm:$0xff]
        %v4060 = vld [vmem:[#allocation7 + $0x1728] sm:$0xff]
        %v4061 = vld [vmem:[#allocation7 + $0x1730] sm:$0xff]
        %v4062 = vld [vmem:[#allocation7 + $0x1738] sm:$0xff]
        %v4063 = vld [vmem:[#allocation7 + $0x1740] sm:$0xff]
        %v4064 = vld [vmem:[#allocation7 + $0x1748] sm:$0xff]
        %v4065 = vld [vmem:[#allocation7 + $0x1750] sm:$0xff]
        %v4066 = vld [vmem:[#allocation7 + $0x1758] sm:$0xff]
        %v4067 = vld [vmem:[#allocation7 + $0x1760] sm:$0xff]
        %v4068 = vld [vmem:[#allocation7 + $0x1768] sm:$0xff]
        %v4069 = vld [vmem:[#allocation7 + $0x1770] sm:$0xff]
        %v4070 = vld [vmem:[#allocation7 + $0x1778] sm:$0xff]
        %v4071 = vld [vmem:[#allocation7 + $0x1780] sm:$0xff]
        %v4072 = vld [vmem:[#allocation7 + $0x1788] sm:$0xff]
        %v4073 = vld [vmem:[#allocation7 + $0x1790] sm:$0xff]
        %v4074 = vld [vmem:[#allocation7 + $0x1798] sm:$0xff]
        %v4075 = vld [vmem:[#allocation7 + $0x17a0] sm:$0xff]
        %v4076 = vld [vmem:[#allocation7 + $0x17a8] sm:$0xff]
        %v4077 = vld [vmem:[#allocation7 + $0x17b0] sm:$0xff]
        %v4078 = vld [vmem:[#allocation7 + $0x17b8] sm:$0xff]
        %v4079 = vld [vmem:[#allocation7 + $0x17c0] sm:$0xff]
        %v4080 = vld [vmem:[#allocation7 + $0x17c8] sm:$0xff]
        %v4081 = vld [vmem:[#allocation7 + $0x17d0] sm:$0xff]
        %v4082 = vld [vmem:[#allocation7 + $0x17d8] sm:$0xff]
        %v4083 = vld [vmem:[#allocation7 + $0x17e0] sm:$0xff]
        %v4084 = vld [vmem:[#allocation7 + $0x17e8] sm:$0xff]
        %v4085 = vld [vmem:[#allocation7 + $0x17f0] sm:$0xff]
        %v4086 = vld [vmem:[#allocation7 + $0x17f8] sm:$0xff]
        %v4087 = vld [vmem:[#allocation7 + $0x1800] sm:$0xff]
        %v4088 = vld [vmem:[#allocation7 + $0x1808] sm:$0xff]
        %v4089 = vld [vmem:[#allocation7 + $0x1810] sm:$0xff]
        %v4090 = vld [vmem:[#allocation7 + $0x1818] sm:$0xff]
        %v4091 = vld [vmem:[#allocation7 + $0x1820] sm:$0xff]
        %v4092 = vld [vmem:[#allocation7 + $0x1828] sm:$0xff]
        %v4093 = vld [vmem:[#allocation7 + $0x1830] sm:$0xff]
        %v4094 = vld [vmem:[#allocation7 + $0x1838] sm:$0xff]
        %v4095 = vld [vmem:[#allocation7 + $0x1840] sm:$0xff]
        %v4096 = vld [vmem:[#allocation7 + $0x1848] sm:$0xff]
        %v4097 = vld [vmem:[#allocation7 + $0x1850] sm:$0xff]
        %v4098 = vld [vmem:[#allocation7 + $0x1858] sm:$0xff]
        %v4099 = vld [vmem:[#allocation7 + $0x1860] sm:$0xff]
        %v4100 = vld [vmem:[#allocation7 + $0x1868] sm:$0xff]
        %v4101 = vld [vmem:[#allocation7 + $0x1870] sm:$0xff]
        %v4102 = vld [vmem:[#allocation7 + $0x1878] sm:$0xff]
        %v4103 = vld [vmem:[#allocation7 + $0x1880] sm:$0xff]
        %v4104 = vld [vmem:[#allocation7 + $0x1888] sm:$0xff]
        %v4105 = vld [vmem:[#allocation7 + $0x1890] sm:$0xff]
        %v4106 = vld [vmem:[#allocation7 + $0x1898] sm:$0xff]
        %v4107 = vld [vmem:[#allocation7 + $0x18a0] sm:$0xff]
        %v4108 = vld [vmem:[#allocation7 + $0x18a8] sm:$0xff]
        %v4109 = vld [vmem:[#allocation7 + $0x18b0] sm:$0xff]
        %v4110 = vld [vmem:[#allocation7 + $0x18b8] sm:$0xff]
        %v4111 = vld [vmem:[#allocation7 + $0x18c0] sm:$0xff]
        %v4112 = vld [vmem:[#allocation7 + $0x18c8] sm:$0xff]
        %v4113 = vld [vmem:[#allocation7 + $0x18d0] sm:$0xff]
        %v4114 = vld [vmem:[#allocation7 + $0x18d8] sm:$0xff]
        %v4115 = vld [vmem:[#allocation7 + $0x18e0] sm:$0xff]
        %v4116 = vld [vmem:[#allocation7 + $0x18e8] sm:$0xff]
        %v4117 = vld [vmem:[#allocation7 + $0x18f0] sm:$0xff]
        %v4118 = vld [vmem:[#allocation7 + $0x18f8] sm:$0xff]
        %v4119 = vld [vmem:[#allocation7 + $0x1900] sm:$0xff]
        %v4120 = vld [vmem:[#allocation7 + $0x1908] sm:$0xff]
        %v4121 = vld [vmem:[#allocation7 + $0x1910] sm:$0xff]
        %v4122 = vld [vmem:[#allocation7 + $0x1918] sm:$0xff]
        %v4123 = vld [vmem:[#allocation7 + $0x1920] sm:$0xff]
        %v4124 = vld [vmem:[#allocation7 + $0x1928] sm:$0xff]
        %v4125 = vld [vmem:[#allocation7 + $0x1930] sm:$0xff]
        %v4126 = vld [vmem:[#allocation7 + $0x1938] sm:$0xff]
        %v4127 = vld [vmem:[#allocation7 + $0x1940] sm:$0xff]
        %v4128 = vld [vmem:[#allocation7 + $0x1948] sm:$0xff]
        %v4129 = vld [vmem:[#allocation7 + $0x1950] sm:$0xff]
        %v4130 = vld [vmem:[#allocation7 + $0x1958] sm:$0xff]
        %v4131 = vld [vmem:[#allocation7 + $0x1960] sm:$0xff]
        %v4132 = vld [vmem:[#allocation7 + $0x1968] sm:$0xff]
        %v4133 = vld [vmem:[#allocation7 + $0x1970] sm:$0xff]
        %v4134 = vld [vmem:[#allocation7 + $0x1978] sm:$0xff]
        %v4135 = vld [vmem:[#allocation7 + $0x1980] sm:$0xff]
        %v4136 = vld [vmem:[#allocation7 + $0x1988] sm:$0xff]
        %v4137 = vld [vmem:[#allocation7 + $0x1990] sm:$0xff]
        %v4138 = vld [vmem:[#allocation7 + $0x1998] sm:$0xff]
        %v4139 = vld [vmem:[#allocation7 + $0x19a0] sm:$0xff]
        %v4140 = vld [vmem:[#allocation7 + $0x19a8] sm:$0xff]
        %v4141 = vld [vmem:[#allocation7 + $0x19b0] sm:$0xff]
        %v4142 = vld [vmem:[#allocation7 + $0x19b8] sm:$0xff]
        %v4143 = vld [vmem:[#allocation7 + $0x19c0] sm:$0xff]
        %v4144 = vld [vmem:[#allocation7 + $0x19c8] sm:$0xff]
        %v4145 = vld [vmem:[#allocation7 + $0x19d0] sm:$0xff]
        %v4146 = vld [vmem:[#allocation7 + $0x19d8] sm:$0xff]
        %v4147 = vld [vmem:[#allocation7 + $0x19e0] sm:$0xff]
        %v4148 = vld [vmem:[#allocation7 + $0x19e8] sm:$0xff]
        %v4149 = vld [vmem:[#allocation7 + $0x19f0] sm:$0xff]
        %v4150 = vld [vmem:[#allocation7 + $0x19f8] sm:$0xff]
        %v4151 = vld [vmem:[#allocation7 + $0x1a00] sm:$0xff]
        %v4152 = vld [vmem:[#allocation7 + $0x1a08] sm:$0xff]
        %v4153 = vld [vmem:[#allocation7 + $0x1a10] sm:$0xff]
        %v4154 = vld [vmem:[#allocation7 + $0x1a18] sm:$0xff]
        %v4155 = vld [vmem:[#allocation7 + $0x1a20] sm:$0xff]
        %v4156 = vld [vmem:[#allocation7 + $0x1a28] sm:$0xff]
        %v4157 = vld [vmem:[#allocation7 + $0x1a30] sm:$0xff]
        %v4158 = vld [vmem:[#allocation7 + $0x1a38] sm:$0xff]
        %v4159 = vld [vmem:[#allocation7 + $0x1a40] sm:$0xff]
        %v4160 = vld [vmem:[#allocation7 + $0x1a48] sm:$0xff]
        %v4161 = vld [vmem:[#allocation7 + $0x1a50] sm:$0xff]
        %v4162 = vld [vmem:[#allocation7 + $0x1a58] sm:$0xff]
        %v4163 = vld [vmem:[#allocation7 + $0x1a60] sm:$0xff]
        %v4164 = vld [vmem:[#allocation7 + $0x1a68] sm:$0xff]
        %v4165 = vld [vmem:[#allocation7 + $0x1a70] sm:$0xff]
        %v4166 = vld [vmem:[#allocation7 + $0x1a78] sm:$0xff]
        %v4167 = vld [vmem:[#allocation7 + $0x1a80] sm:$0xff]
        %v4168 = vld [vmem:[#allocation7 + $0x1a88] sm:$0xff]
        %v4169 = vld [vmem:[#allocation7 + $0x1a90] sm:$0xff]
        %v4170 = vld [vmem:[#allocation7 + $0x1a98] sm:$0xff]
        %v4171 = vld [vmem:[#allocation7 + $0x1aa0] sm:$0xff]
        %v4172 = vld [vmem:[#allocation7 + $0x1aa8] sm:$0xff]
        %v4173 = vld [vmem:[#allocation7 + $0x1ab0] sm:$0xff]
        %v4174 = vld [vmem:[#allocation7 + $0x1ab8] sm:$0xff]
        %v4175 = vld [vmem:[#allocation7 + $0x1ac0] sm:$0xff]
        %v4176 = vld [vmem:[#allocation7 + $0x1ac8] sm:$0xff]
        %v4177 = vld [vmem:[#allocation7 + $0x1ad0] sm:$0xff]
        %v4178 = vld [vmem:[#allocation7 + $0x1ad8] sm:$0xff]
        %v4179 = vld [vmem:[#allocation7 + $0x1ae0] sm:$0xff]
        %v4180 = vld [vmem:[#allocation7 + $0x1ae8] sm:$0xff]
        %v4181 = vld [vmem:[#allocation7 + $0x1af0] sm:$0xff]
        %v4182 = vld [vmem:[#allocation7 + $0x1af8] sm:$0xff]
        %v4183 = vld [vmem:[#allocation7 + $0x1b00] sm:$0xff]
        %v4184 = vld [vmem:[#allocation7 + $0x1b08] sm:$0xff]
        %v4185 = vld [vmem:[#allocation7 + $0x1b10] sm:$0xff]
        %v4186 = vld [vmem:[#allocation7 + $0x1b18] sm:$0xff]
        %v4187 = vld [vmem:[#allocation7 + $0x1b20] sm:$0xff]
        %v4188 = vld [vmem:[#allocation7 + $0x1b28] sm:$0xff]
        %v4189 = vld [vmem:[#allocation7 + $0x1b30] sm:$0xff]
        %v4190 = vld [vmem:[#allocation7 + $0x1b38] sm:$0xff]
        %v4191 = vld [vmem:[#allocation7 + $0x1b40] sm:$0xff]
        %v4192 = vld [vmem:[#allocation7 + $0x1b48] sm:$0xff]
        %v4193 = vld [vmem:[#allocation7 + $0x1b50] sm:$0xff]
        %v4194 = vld [vmem:[#allocation7 + $0x1b58] sm:$0xff]
        %v4195 = vld [vmem:[#allocation7 + $0x1b60] sm:$0xff]
        %v4196 = vld [vmem:[#allocation7 + $0x1b68] sm:$0xff]
        %v4197 = vld [vmem:[#allocation7 + $0x1b70] sm:$0xff]
        %v4198 = vld [vmem:[#allocation7 + $0x1b78] sm:$0xff]
        %v4199 = vld [vmem:[#allocation7 + $0x1b80] sm:$0xff]
        %v4200 = vld [vmem:[#allocation7 + $0x1b88] sm:$0xff]
        %v4201 = vld [vmem:[#allocation7 + $0x1b90] sm:$0xff]
        %v4202 = vld [vmem:[#allocation7 + $0x1b98] sm:$0xff]
        %v4203 = vld [vmem:[#allocation7 + $0x1ba0] sm:$0xff]
        %v4204 = vld [vmem:[#allocation7 + $0x1ba8] sm:$0xff]
        %v4205 = vld [vmem:[#allocation7 + $0x1bb0] sm:$0xff]
        %v4206 = vld [vmem:[#allocation7 + $0x1bb8] sm:$0xff]
        %v4207 = vld [vmem:[#allocation7 + $0x1bc0] sm:$0xff]
        %v4208 = vld [vmem:[#allocation7 + $0x1bc8] sm:$0xff]
        %v4209 = vld [vmem:[#allocation7 + $0x1bd0] sm:$0xff]
        %v4210 = vld [vmem:[#allocation7 + $0x1bd8] sm:$0xff]
        %v4211 = vld [vmem:[#allocation7 + $0x1be0] sm:$0xff]
        %v4212 = vld [vmem:[#allocation7 + $0x1be8] sm:$0xff]
        %v4213 = vld [vmem:[#allocation7 + $0x1bf0] sm:$0xff]
        %v4214 = vld [vmem:[#allocation7 + $0x1bf8] sm:$0xff]
        %v4215 = vld [vmem:[#allocation7 + $0x1c00] sm:$0xff]
        %v4216 = vld [vmem:[#allocation7 + $0x1c08] sm:$0xff]
        %v4217 = vld [vmem:[#allocation7 + $0x1c10] sm:$0xff]
        %v4218 = vld [vmem:[#allocation7 + $0x1c18] sm:$0xff]
        %v4219 = vld [vmem:[#allocation7 + $0x1c20] sm:$0xff]
        %v4220 = vld [vmem:[#allocation7 + $0x1c28] sm:$0xff]
        %v4221 = vld [vmem:[#allocation7 + $0x1c30] sm:$0xff]
        %v4222 = vld [vmem:[#allocation7 + $0x1c38] sm:$0xff]
        %v4223 = vld [vmem:[#allocation7 + $0x1c40] sm:$0xff]
        %v4224 = vld [vmem:[#allocation7 + $0x1c48] sm:$0xff]
        %v4225 = vld [vmem:[#allocation7 + $0x1c50] sm:$0xff]
        %v4226 = vld [vmem:[#allocation7 + $0x1c58] sm:$0xff]
        %v4227 = vld [vmem:[#allocation7 + $0x1c60] sm:$0xff]
        %v4228 = vld [vmem:[#allocation7 + $0x1c68] sm:$0xff]
        %v4229 = vld [vmem:[#allocation7 + $0x1c70] sm:$0xff]
        %v4230 = vld [vmem:[#allocation7 + $0x1c78] sm:$0xff]
        %v4231 = vld [vmem:[#allocation7 + $0x1c80] sm:$0xff]
        %v4232 = vld [vmem:[#allocation7 + $0x1c88] sm:$0xff]
        %v4233 = vld [vmem:[#allocation7 + $0x1c90] sm:$0xff]
        %v4234 = vld [vmem:[#allocation7 + $0x1c98] sm:$0xff]
        %v4235 = vld [vmem:[#allocation7 + $0x1ca0] sm:$0xff]
        %v4236 = vld [vmem:[#allocation7 + $0x1ca8] sm:$0xff]
        %v4237 = vld [vmem:[#allocation7 + $0x1cb0] sm:$0xff]
        %v4238 = vld [vmem:[#allocation7 + $0x1cb8] sm:$0xff]
        %v4239 = vld [vmem:[#allocation7 + $0x1cc0] sm:$0xff]
        %v4240 = vld [vmem:[#allocation7 + $0x1cc8] sm:$0xff]
        %v4241 = vld [vmem:[#allocation7 + $0x1cd0] sm:$0xff]
        %v4242 = vld [vmem:[#allocation7 + $0x1cd8] sm:$0xff]
        %v4243 = vld [vmem:[#allocation7 + $0x1ce0] sm:$0xff]
        %v4244 = vld [vmem:[#allocation7 + $0x1ce8] sm:$0xff]
        %v4245 = vld [vmem:[#allocation7 + $0x1cf0] sm:$0xff]
        %v4246 = vld [vmem:[#allocation7 + $0x1cf8] sm:$0xff]
        %v4247 = vld [vmem:[#allocation7 + $0x1d00] sm:$0xff]
        %v4248 = vld [vmem:[#allocation7 + $0x1d08] sm:$0xff]
        %v4249 = vld [vmem:[#allocation7 + $0x1d10] sm:$0xff]
        %v4250 = vld [vmem:[#allocation7 + $0x1d18] sm:$0xff]
        %v4251 = vld [vmem:[#allocation7 + $0x1d20] sm:$0xff]
        %v4252 = vld [vmem:[#allocation7 + $0x1d28] sm:$0xff]
        %v4253 = vld [vmem:[#allocation7 + $0x1d30] sm:$0xff]
        %v4254 = vld [vmem:[#allocation7 + $0x1d38] sm:$0xff]
        %v4255 = vld [vmem:[#allocation7 + $0x1d40] sm:$0xff]
        %v4256 = vld [vmem:[#allocation7 + $0x1d48] sm:$0xff]
        %v4257 = vld [vmem:[#allocation7 + $0x1d50] sm:$0xff]
        %v4258 = vld [vmem:[#allocation7 + $0x1d58] sm:$0xff]
        %v4259 = vld [vmem:[#allocation7 + $0x1d60] sm:$0xff]
        %v4260 = vld [vmem:[#allocation7 + $0x1d68] sm:$0xff]
        %v4261 = vld [vmem:[#allocation7 + $0x1d70] sm:$0xff]
        %v4262 = vld [vmem:[#allocation7 + $0x1d78] sm:$0xff]
        %v4263 = vld [vmem:[#allocation7 + $0x1d80] sm:$0xff]
        %v4264 = vld [vmem:[#allocation7 + $0x1d88] sm:$0xff]
        %v4265 = vld [vmem:[#allocation7 + $0x1d90] sm:$0xff]
        %v4266 = vld [vmem:[#allocation7 + $0x1d98] sm:$0xff]
        %v4267 = vld [vmem:[#allocation7 + $0x1da0] sm:$0xff]
        %v4268 = vld [vmem:[#allocation7 + $0x1da8] sm:$0xff]
        %v4269 = vld [vmem:[#allocation7 + $0x1db0] sm:$0xff]
        %v4270 = vld [vmem:[#allocation7 + $0x1db8] sm:$0xff]
        %v4271 = vld [vmem:[#allocation7 + $0x1dc0] sm:$0xff]
        %v4272 = vld [vmem:[#allocation7 + $0x1dc8] sm:$0xff]
        %v4273 = vld [vmem:[#allocation7 + $0x1dd0] sm:$0xff]
        %v4274 = vld [vmem:[#allocation7 + $0x1dd8] sm:$0xff]
        %v4275 = vld [vmem:[#allocation7 + $0x1de0] sm:$0xff]
        %v4276 = vld [vmem:[#allocation7 + $0x1de8] sm:$0xff]
        %v4277 = vld [vmem:[#allocation7 + $0x1df0] sm:$0xff]
        %v4278 = vld [vmem:[#allocation7 + $0x1df8] sm:$0xff]
        %v4279 = vld [vmem:[#allocation7 + $0x1e00] sm:$0xff]
        %v4280 = vld [vmem:[#allocation7 + $0x1e08] sm:$0xff]
        %v4281 = vld [vmem:[#allocation7 + $0x1e10] sm:$0xff]
        %v4282 = vld [vmem:[#allocation7 + $0x1e18] sm:$0xff]
        %v4283 = vld [vmem:[#allocation7 + $0x1e20] sm:$0xff]
        %v4284 = vld [vmem:[#allocation7 + $0x1e28] sm:$0xff]
        %v4285 = vld [vmem:[#allocation7 + $0x1e30] sm:$0xff]
        %v4286 = vld [vmem:[#allocation7 + $0x1e38] sm:$0xff]
        %v4287 = vld [vmem:[#allocation7 + $0x1e40] sm:$0xff]
        %v4288 = vld [vmem:[#allocation7 + $0x1e48] sm:$0xff]
        %v4289 = vld [vmem:[#allocation7 + $0x1e50] sm:$0xff]
        %v4290 = vld [vmem:[#allocation7 + $0x1e58] sm:$0xff]
        %v4291 = vld [vmem:[#allocation7 + $0x1e60] sm:$0xff]
        %v4292 = vld [vmem:[#allocation7 + $0x1e68] sm:$0xff]
        %v4293 = vld [vmem:[#allocation7 + $0x1e70] sm:$0xff]
        %v4294 = vld [vmem:[#allocation7 + $0x1e78] sm:$0xff]
        %v4295 = vld [vmem:[#allocation7 + $0x1e80] sm:$0xff]
        %v4296 = vld [vmem:[#allocation7 + $0x1e88] sm:$0xff]
        %v4297 = vld [vmem:[#allocation7 + $0x1e90] sm:$0xff]
        %v4298 = vld [vmem:[#allocation7 + $0x1e98] sm:$0xff]
        %v4299 = vld [vmem:[#allocation7 + $0x1ea0] sm:$0xff]
        %v4300 = vld [vmem:[#allocation7 + $0x1ea8] sm:$0xff]
        %v4301 = vld [vmem:[#allocation7 + $0x1eb0] sm:$0xff]
        %v4302 = vld [vmem:[#allocation7 + $0x1eb8] sm:$0xff]
        %v4303 = vld [vmem:[#allocation7 + $0x1ec0] sm:$0xff]
        %v4304 = vld [vmem:[#allocation7 + $0x1ec8] sm:$0xff]
        %v4305 = vld [vmem:[#allocation7 + $0x1ed0] sm:$0xff]
        %v4306 = vld [vmem:[#allocation7 + $0x1ed8] sm:$0xff]
        %v4307 = vld [vmem:[#allocation7 + $0x1ee0] sm:$0xff]
        %v4308 = vld [vmem:[#allocation7 + $0x1ee8] sm:$0xff]
        %v4309 = vld [vmem:[#allocation7 + $0x1ef0] sm:$0xff]
        %v4310 = vld [vmem:[#allocation7 + $0x1ef8] sm:$0xff]
        %v4311 = vld [vmem:[#allocation7 + $0x1f00] sm:$0xff]
        %v4312 = vld [vmem:[#allocation7 + $0x1f08] sm:$0xff]
        %v4313 = vld [vmem:[#allocation7 + $0x1f10] sm:$0xff]
        %v4314 = vld [vmem:[#allocation7 + $0x1f18] sm:$0xff]
        %v4315 = vld [vmem:[#allocation7 + $0x1f20] sm:$0xff]
        %v4316 = vld [vmem:[#allocation7 + $0x1f28] sm:$0xff]
        %v4317 = vld [vmem:[#allocation7 + $0x1f30] sm:$0xff]
        %v4318 = vld [vmem:[#allocation7 + $0x1f38] sm:$0xff]
        %v4319 = vld [vmem:[#allocation7 + $0x1f40] sm:$0xff]
        %v4320 = vld [vmem:[#allocation7 + $0x1f48] sm:$0xff]
        %v4321 = vld [vmem:[#allocation7 + $0x1f50] sm:$0xff]
        %v4322 = vld [vmem:[#allocation7 + $0x1f58] sm:$0xff]
        %v4323 = vld [vmem:[#allocation7 + $0x1f60] sm:$0xff]
        %v4324 = vld [vmem:[#allocation7 + $0x1f68] sm:$0xff]
        %v4325 = vld [vmem:[#allocation7 + $0x1f70] sm:$0xff]
        %v4326 = vld [vmem:[#allocation7 + $0x1f78] sm:$0xff]
        %v4327 = vld [vmem:[#allocation7 + $0x1f80] sm:$0xff]
        %v4328 = vld [vmem:[#allocation7 + $0x1f88] sm:$0xff]
        %v4329 = vld [vmem:[#allocation7 + $0x1f90] sm:$0xff]
        %v4330 = vld [vmem:[#allocation7 + $0x1f98] sm:$0xff]
        %v4331 = vld [vmem:[#allocation7 + $0x1fa0] sm:$0xff]
        %v4332 = vld [vmem:[#allocation7 + $0x1fa8] sm:$0xff]
        %v4333 = vld [vmem:[#allocation7 + $0x1fb0] sm:$0xff]
        %v4334 = vld [vmem:[#allocation7 + $0x1fb8] sm:$0xff]
        %v4335 = vld [vmem:[#allocation7 + $0x1fc0] sm:$0xff]
        %v4336 = vld [vmem:[#allocation7 + $0x1fc8] sm:$0xff]
        %v4337 = vld [vmem:[#allocation7 + $0x1fd0] sm:$0xff]
        %v4338 = vld [vmem:[#allocation7 + $0x1fd8] sm:$0xff]
        %v4339 = vld [vmem:[#allocation7 + $0x1fe0] sm:$0xff]
        %v4340 = vld [vmem:[#allocation7 + $0x1fe8] sm:$0xff]
        %v4341 = vld [vmem:[#allocation7 + $0x1ff0] sm:$0xff]
        %v4342 = vld [vmem:[#allocation7 + $0x1ff8] sm:$0xff]
        %4343 = vmatprep.subr.mxu0 %v3560
        %4344 = vmatpush1.msra.mxu0 %v3559
        %4345 = vmatprep.subr.mxu0 %v3544
        %4346 = vmatpush1.msra.mxu0 %v3543
        %4347 = vmatprep.subr.mxu0 %v3528
        %4348 = vmatpush1.msra.mxu0 %v3527
        %4349 = vmatprep.subr.mxu0 %v3512
        %4350 = vmatpush1.msra.mxu0 %v3511
        %4351 = vmatprep.subr.mxu0 %v3496
        %4352 = vmatpush1.msra.mxu0 %v3495
        %4353 = vmatprep.subr.mxu0 %v3480
        %4354 = vmatpush1.msra.mxu0 %v3479
        %4355 = vmatprep.subr.mxu0 %v3464
        %4356 = vmatpush1.msra.mxu0 %v3463
        %4357 = vmatprep.subr.mxu0 %v3448
        %4358 = vmatpush1.msra.mxu0 %v3447
        %4359 = vmatprep.subr.mxu0 %v3432
        %4360 = vmatpush1.msra.mxu0 %v3431
        %4361 = vmatprep.subr.mxu0 %v3416
        %4362 = vmatpush1.msra.mxu0 %v3415
        %4363 = vmatprep.subr.mxu0 %v3400
        %4364 = vmatpush1.msra.mxu0 %v3399
        %4365 = vmatprep.subr.mxu0 %v3384
        %4366 = vmatpush1.msra.mxu0 %v3383
        %4367 = vmatprep.subr.mxu0 %v3368
        %4368 = vmatpush1.msra.mxu0 %v3367
        %4369 = vmatprep.subr.mxu0 %v3352
        %4370 = vmatpush1.msra.mxu0 %v3351
        %4371 = vmatprep.subr.mxu0 %v3336
        %4372 = vmatpush1.msra.mxu0 %v3335
        %4373 = vmatprep.subr.mxu0 %v3320
        %4374 = vmatpush1.msra.mxu0 %v3319
        %4375 = vmatprep.subr.mxu0 %v3816
        %4376 = vmatpush2.msra.mxu0 %v3815
        %4377 = vmatprep.subr.mxu0 %v3800
        %4378 = vmatpush2.msra.mxu0 %v3799
        %4379 = vmatprep.subr.mxu0 %v3784
        %4380 = vmatpush2.msra.mxu0 %v3783
        %4381 = vmatprep.subr.mxu0 %v3768
        %4382 = vmatpush2.msra.mxu0 %v3767
        %4383 = vmatprep.subr.mxu0 %v3752
        %4384 = vmatpush2.msra.mxu0 %v3751
        %4385 = vmatprep.subr.mxu0 %v3736
        %4386 = vmatpush2.msra.mxu0 %v3735
        %4387 = vmatprep.subr.mxu0 %v3720
        %4388 = vmatpush2.msra.mxu0 %v3719
        %4389 = vmatprep.subr.mxu0 %v3704
        %4390 = vmatpush2.msra.mxu0 %v3703
        %4391 = vmatprep.subr.mxu0 %v3688
        %4392 = vmatpush2.msra.mxu0 %v3687
        %4393 = vmatprep.subr.mxu0 %v3672
        %4394 = vmatpush2.msra.mxu0 %v3671
        %4395 = vmatprep.subr.mxu0 %v3656
        %4396 = vmatpush2.msra.mxu0 %v3655
        %4397 = vmatprep.subr.mxu0 %v3640
        %4398 = vmatpush2.msra.mxu0 %v3639
        %4399 = vmatprep.subr.mxu0 %v3624
        %4400 = vmatpush2.msra.mxu0 %v3623
        %4401 = vmatprep.subr.mxu0 %v3608
        %4402 = vmatpush2.msra.mxu0 %v3607
        %4403 = vmatprep.subr.mxu0 %v3592
        %4404 = vmatpush2.msra.mxu0 %v3591
        %4405 = vmatprep.subr.mxu0 %v3576
        %4406 = vmatpush2.msra.mxu0 %v3575
        %4407 = vmatprep.mubr.f32.mxu0 %v3312
        %4408 = vmatmul.mubr.f32.gmra.mxu0 %v3311
        %v4409 = vpop.f32.mrf.mxu0
        %v4410 = vadd.f32 0.0, %v4409
        %v4411 = vpop.f32.mrf.mxu0
        %v4412 = vadd.f32 0.0, %v4411
        %4413 = vmatprep.mubr.f32.mxu0 %v3316
        %4414 = vmatmul.mubr.f32.gmra.mxu0 %v3315
        %v4415 = vpop.f32.mrf.mxu0
        %v4416 = vadd.f32 0.0, %v4415
        %v4417 = vpop.f32.mrf.mxu0
        %v4418 = vadd.f32 0.0, %v4417
        %4419 = vdwg.mxu0
        %4420 = vmatprep.subr.mxu0 %v4072
        %4421 = vmatpush1.msra.mxu0 %v4071
        %4422 = vmatprep.subr.mxu0 %v4056
        %4423 = vmatpush1.msra.mxu0 %v4055
        %4424 = vmatprep.subr.mxu0 %v4040
        %4425 = vmatpush1.msra.mxu0 %v4039
        %4426 = vmatprep.subr.mxu0 %v4024
        %4427 = vmatpush1.msra.mxu0 %v4023
        %4428 = vmatprep.subr.mxu0 %v4008
        %4429 = vmatpush1.msra.mxu0 %v4007
        %4430 = vmatprep.subr.mxu0 %v3992
        %4431 = vmatpush1.msra.mxu0 %v3991
        %4432 = vmatprep.subr.mxu0 %v3976
        %4433 = vmatpush1.msra.mxu0 %v3975
        %4434 = vmatprep.subr.mxu0 %v3960
        %4435 = vmatpush1.msra.mxu0 %v3959
        %4436 = vmatprep.subr.mxu0 %v3944
        %4437 = vmatpush1.msra.mxu0 %v3943
        %4438 = vmatprep.subr.mxu0 %v3928
        %4439 = vmatpush1.msra.mxu0 %v3927
        %4440 = vmatprep.subr.mxu0 %v3912
        %4441 = vmatpush1.msra.mxu0 %v3911
        %4442 = vmatprep.subr.mxu0 %v3896
        %4443 = vmatpush1.msra.mxu0 %v3895
        %4444 = vmatprep.subr.mxu0 %v3880
        %4445 = vmatpush1.msra.mxu0 %v3879
        %4446 = vmatprep.subr.mxu0 %v3864
        %4447 = vmatpush1.msra.mxu0 %v3863
        %4448 = vmatprep.subr.mxu0 %v3848
        %4449 = vmatpush1.msra.mxu0 %v3847
        %4450 = vmatprep.subr.mxu0 %v3832
        %4451 = vmatpush1.msra.mxu0 %v3831
        %4452 = vmatprep.subr.mxu0 %v4328
        %4453 = vmatpush2.msra.mxu0 %v4327
        %4454 = vmatprep.subr.mxu0 %v4312
        %4455 = vmatpush2.msra.mxu0 %v4311
        %4456 = vmatprep.subr.mxu0 %v4296
        %4457 = vmatpush2.msra.mxu0 %v4295
        %4458 = vmatprep.subr.mxu0 %v4280
        %4459 = vmatpush2.msra.mxu0 %v4279
        %4460 = vmatprep.subr.mxu0 %v4264
        %4461 = vmatpush2.msra.mxu0 %v4263
        %4462 = vmatprep.subr.mxu0 %v4248
        %4463 = vmatpush2.msra.mxu0 %v4247
        %4464 = vmatprep.subr.mxu0 %v4232
        %4465 = vmatpush2.msra.mxu0 %v4231
        %4466 = vmatprep.subr.mxu0 %v4216
        %4467 = vmatpush2.msra.mxu0 %v4215
        %4468 = vmatprep.subr.mxu0 %v4200
        %4469 = vmatpush2.msra.mxu0 %v4199
        %4470 = vmatprep.subr.mxu0 %v4184
        %4471 = vmatpush2.msra.mxu0 %v4183
        %4472 = vmatprep.subr.mxu0 %v4168
        %4473 = vmatpush2.msra.mxu0 %v4167
        %4474 = vmatprep.subr.mxu0 %v4152
        %4475 = vmatpush2.msra.mxu0 %v4151
        %4476 = vmatprep.subr.mxu0 %v4136
        %4477 = vmatpush2.msra.mxu0 %v4135
        %4478 = vmatprep.subr.mxu0 %v4120
        %4479 = vmatpush2.msra.mxu0 %v4119
        %4480 = vmatprep.subr.mxu0 %v4104
        %4481 = vmatpush2.msra.mxu0 %v4103
        %4482 = vmatprep.subr.mxu0 %v4088
        %4483 = vmatpush2.msra.mxu0 %v4087
        %4484 = vmatprep.mubr.f32.mxu0 %v3314
        %4485 = vmatmul.mubr.f32.gmra.mxu0 %v3313
        %v4486 = vpop.f32.mrf.mxu0
        %v4487 = vadd.f32 %v4410, %v4486
        %v4488 = vpop.f32.mrf.mxu0
        %v4489 = vadd.f32 %v4412, %v4488
        %4490 = vmatprep.mubr.f32.mxu0 %v3318
        %4491 = vmatmul.mubr.f32.gmra.mxu0 %v3317
        %v4492 = vpop.f32.mrf.mxu0
        %v4493 = vadd.f32 %v4416, %v4492
        %v4494 = vpop.f32.mrf.mxu0
        %v4495 = vadd.f32 %v4418, %v4494
        %4496 = vdwg.mxu0
        %4497 = vmatprep.subr.mxu0 %v3562
        %4498 = vmatpush1.msra.mxu0 %v3561
        %4499 = vmatprep.subr.mxu0 %v3546
        %4500 = vmatpush1.msra.mxu0 %v3545
        %4501 = vmatprep.subr.mxu0 %v3530
        %4502 = vmatpush1.msra.mxu0 %v3529
        %4503 = vmatprep.subr.mxu0 %v3514
        %4504 = vmatpush1.msra.mxu0 %v3513
        %4505 = vmatprep.subr.mxu0 %v3498
        %4506 = vmatpush1.msra.mxu0 %v3497
        %4507 = vmatprep.subr.mxu0 %v3482
        %4508 = vmatpush1.msra.mxu0 %v3481
        %4509 = vmatprep.subr.mxu0 %v3466
        %4510 = vmatpush1.msra.mxu0 %v3465
        %4511 = vmatprep.subr.mxu0 %v3450
        %4512 = vmatpush1.msra.mxu0 %v3449
        %4513 = vmatprep.subr.mxu0 %v3434
        %4514 = vmatpush1.msra.mxu0 %v3433
        %4515 = vmatprep.subr.mxu0 %v3418
        %4516 = vmatpush1.msra.mxu0 %v3417
        %4517 = vmatprep.subr.mxu0 %v3402
        %4518 = vmatpush1.msra.mxu0 %v3401
        %4519 = vmatprep.subr.mxu0 %v3386
        %4520 = vmatpush1.msra.mxu0 %v3385
        %4521 = vmatprep.subr.mxu0 %v3370
        %4522 = vmatpush1.msra.mxu0 %v3369
        %4523 = vmatprep.subr.mxu0 %v3354
        %4524 = vmatpush1.msra.mxu0 %v3353
        %4525 = vmatprep.subr.mxu0 %v3338
        %4526 = vmatpush1.msra.mxu0 %v3337
        %4527 = vmatprep.subr.mxu0 %v3322
        %4528 = vmatpush1.msra.mxu0 %v3321
        %4529 = vmatprep.subr.mxu0 %v3818
        %4530 = vmatpush2.msra.mxu0 %v3817
        %4531 = vmatprep.subr.mxu0 %v3802
        %4532 = vmatpush2.msra.mxu0 %v3801
        %4533 = vmatprep.subr.mxu0 %v3786
        %4534 = vmatpush2.msra.mxu0 %v3785
        %4535 = vmatprep.subr.mxu0 %v3770
        %4536 = vmatpush2.msra.mxu0 %v3769
        %4537 = vmatprep.subr.mxu0 %v3754
        %4538 = vmatpush2.msra.mxu0 %v3753
        %4539 = vmatprep.subr.mxu0 %v3738
        %4540 = vmatpush2.msra.mxu0 %v3737
        %4541 = vmatprep.subr.mxu0 %v3722
        %4542 = vmatpush2.msra.mxu0 %v3721
        %4543 = vmatprep.subr.mxu0 %v3706
        %4544 = vmatpush2.msra.mxu0 %v3705
        %4545 = vmatprep.subr.mxu0 %v3690
        %4546 = vmatpush2.msra.mxu0 %v3689
        %4547 = vmatprep.subr.mxu0 %v3674
        %4548 = vmatpush2.msra.mxu0 %v3673
        %4549 = vmatprep.subr.mxu0 %v3658
        %4550 = vmatpush2.msra.mxu0 %v3657
        %4551 = vmatprep.subr.mxu0 %v3642
        %4552 = vmatpush2.msra.mxu0 %v3641
        %4553 = vmatprep.subr.mxu0 %v3626
        %4554 = vmatpush2.msra.mxu0 %v3625
        %4555 = vmatprep.subr.mxu0 %v3610
        %4556 = vmatpush2.msra.mxu0 %v3609
        %4557 = vmatprep.subr.mxu0 %v3594
        %4558 = vmatpush2.msra.mxu0 %v3593
        %4559 = vmatprep.subr.mxu0 %v3578
        %4560 = vmatpush2.msra.mxu0 %v3577
        %4561 = vmatprep.mubr.f32.mxu0 %v3312
        %4562 = vmatmul.mubr.f32.gmra.mxu0 %v3311
        %v4563 = vpop.f32.mrf.mxu0
        %v4564 = vadd.f32 0.0, %v4563
        %v4565 = vpop.f32.mrf.mxu0
        %v4566 = vadd.f32 0.0, %v4565
        %4567 = vmatprep.mubr.f32.mxu0 %v3316
        %4568 = vmatmul.mubr.f32.gmra.mxu0 %v3315
        %v4569 = vpop.f32.mrf.mxu0
        %v4570 = vadd.f32 0.0, %v4569
        %v4571 = vpop.f32.mrf.mxu0
        %v4572 = vadd.f32 0.0, %v4571
        %4573 = vdwg.mxu0
        %4574 = vmatprep.subr.mxu0 %v4074
        %4575 = vmatpush1.msra.mxu0 %v4073
        %4576 = vmatprep.subr.mxu0 %v4058
        %4577 = vmatpush1.msra.mxu0 %v4057
        %4578 = vmatprep.subr.mxu0 %v4042
        %4579 = vmatpush1.msra.mxu0 %v4041
        %4580 = vmatprep.subr.mxu0 %v4026
        %4581 = vmatpush1.msra.mxu0 %v4025
        %4582 = vmatprep.subr.mxu0 %v4010
        %4583 = vmatpush1.msra.mxu0 %v4009
        %4584 = vmatprep.subr.mxu0 %v3994
        %4585 = vmatpush1.msra.mxu0 %v3993
        %4586 = vmatprep.subr.mxu0 %v3978
        %4587 = vmatpush1.msra.mxu0 %v3977
        %4588 = vmatprep.subr.mxu0 %v3962
        %4589 = vmatpush1.msra.mxu0 %v3961
        %4590 = vmatprep.subr.mxu0 %v3946
        %4591 = vmatpush1.msra.mxu0 %v3945
        %4592 = vmatprep.subr.mxu0 %v3930
        %4593 = vmatpush1.msra.mxu0 %v3929
        %4594 = vmatprep.subr.mxu0 %v3914
        %4595 = vmatpush1.msra.mxu0 %v3913
        %4596 = vmatprep.subr.mxu0 %v3898
        %4597 = vmatpush1.msra.mxu0 %v3897
        %4598 = vmatprep.subr.mxu0 %v3882
        %4599 = vmatpush1.msra.mxu0 %v3881
        %4600 = vmatprep.subr.mxu0 %v3866
        %4601 = vmatpush1.msra.mxu0 %v3865
        %4602 = vmatprep.subr.mxu0 %v3850
        %4603 = vmatpush1.msra.mxu0 %v3849
        %4604 = vmatprep.subr.mxu0 %v3834
        %4605 = vmatpush1.msra.mxu0 %v3833
        %4606 = vmatprep.subr.mxu0 %v4330
        %4607 = vmatpush2.msra.mxu0 %v4329
        %4608 = vmatprep.subr.mxu0 %v4314
        %4609 = vmatpush2.msra.mxu0 %v4313
        %4610 = vmatprep.subr.mxu0 %v4298
        %4611 = vmatpush2.msra.mxu0 %v4297
        %4612 = vmatprep.subr.mxu0 %v4282
        %4613 = vmatpush2.msra.mxu0 %v4281
        %4614 = vmatprep.subr.mxu0 %v4266
        %4615 = vmatpush2.msra.mxu0 %v4265
        %4616 = vmatprep.subr.mxu0 %v4250
        %4617 = vmatpush2.msra.mxu0 %v4249
        %4618 = vmatprep.subr.mxu0 %v4234
        %4619 = vmatpush2.msra.mxu0 %v4233
        %4620 = vmatprep.subr.mxu0 %v4218
        %4621 = vmatpush2.msra.mxu0 %v4217
        %4622 = vmatprep.subr.mxu0 %v4202
        %4623 = vmatpush2.msra.mxu0 %v4201
        %4624 = vmatprep.subr.mxu0 %v4186
        %4625 = vmatpush2.msra.mxu0 %v4185
        %4626 = vmatprep.subr.mxu0 %v4170
        %4627 = vmatpush2.msra.mxu0 %v4169
        %4628 = vmatprep.subr.mxu0 %v4154
        %4629 = vmatpush2.msra.mxu0 %v4153
        %4630 = vmatprep.subr.mxu0 %v4138
        %4631 = vmatpush2.msra.mxu0 %v4137
        %4632 = vmatprep.subr.mxu0 %v4122
        %4633 = vmatpush2.msra.mxu0 %v4121
        %4634 = vmatprep.subr.mxu0 %v4106
        %4635 = vmatpush2.msra.mxu0 %v4105
        %4636 = vmatprep.subr.mxu0 %v4090
        %4637 = vmatpush2.msra.mxu0 %v4089
        %4638 = vmatprep.mubr.f32.mxu0 %v3314
        %4639 = vmatmul.mubr.f32.gmra.mxu0 %v3313
        %v4640 = vpop.f32.mrf.mxu0
        %v4641 = vadd.f32 %v4564, %v4640
        %v4642 = vpop.f32.mrf.mxu0
        %v4643 = vadd.f32 %v4566, %v4642
        %4644 = vmatprep.mubr.f32.mxu0 %v3318
        %4645 = vmatmul.mubr.f32.gmra.mxu0 %v3317
        %v4646 = vpop.f32.mrf.mxu0
        %v4647 = vadd.f32 %v4570, %v4646
        %v4648 = vpop.f32.mrf.mxu0
        %v4649 = vadd.f32 %v4572, %v4648
        %4650 = vdwg.mxu0
        %4651 = vmatprep.subr.mxu0 %v3564
        %4652 = vmatpush1.msra.mxu0 %v3563
        %4653 = vmatprep.subr.mxu0 %v3548
        %4654 = vmatpush1.msra.mxu0 %v3547
        %4655 = vmatprep.subr.mxu0 %v3532
        %4656 = vmatpush1.msra.mxu0 %v3531
        %4657 = vmatprep.subr.mxu0 %v3516
        %4658 = vmatpush1.msra.mxu0 %v3515
        %4659 = vmatprep.subr.mxu0 %v3500
        %4660 = vmatpush1.msra.mxu0 %v3499
        %4661 = vmatprep.subr.mxu0 %v3484
        %4662 = vmatpush1.msra.mxu0 %v3483
        %4663 = vmatprep.subr.mxu0 %v3468
        %4664 = vmatpush1.msra.mxu0 %v3467
        %4665 = vmatprep.subr.mxu0 %v3452
        %4666 = vmatpush1.msra.mxu0 %v3451
        %4667 = vmatprep.subr.mxu0 %v3436
        %4668 = vmatpush1.msra.mxu0 %v3435
        %4669 = vmatprep.subr.mxu0 %v3420
        %4670 = vmatpush1.msra.mxu0 %v3419
        %4671 = vmatprep.subr.mxu0 %v3404
        %4672 = vmatpush1.msra.mxu0 %v3403
        %4673 = vmatprep.subr.mxu0 %v3388
        %4674 = vmatpush1.msra.mxu0 %v3387
        %4675 = vmatprep.subr.mxu0 %v3372
        %4676 = vmatpush1.msra.mxu0 %v3371
        %4677 = vmatprep.subr.mxu0 %v3356
        %4678 = vmatpush1.msra.mxu0 %v3355
        %4679 = vmatprep.subr.mxu0 %v3340
        %4680 = vmatpush1.msra.mxu0 %v3339
        %4681 = vmatprep.subr.mxu0 %v3324
        %4682 = vmatpush1.msra.mxu0 %v3323
        %4683 = vmatprep.subr.mxu0 %v3820
        %4684 = vmatpush2.msra.mxu0 %v3819
        %4685 = vmatprep.subr.mxu0 %v3804
        %4686 = vmatpush2.msra.mxu0 %v3803
        %4687 = vmatprep.subr.mxu0 %v3788
        %4688 = vmatpush2.msra.mxu0 %v3787
        %4689 = vmatprep.subr.mxu0 %v3772
        %4690 = vmatpush2.msra.mxu0 %v3771
        %4691 = vmatprep.subr.mxu0 %v3756
        %4692 = vmatpush2.msra.mxu0 %v3755
        %4693 = vmatprep.subr.mxu0 %v3740
        %4694 = vmatpush2.msra.mxu0 %v3739
        %4695 = vmatprep.subr.mxu0 %v3724
        %4696 = vmatpush2.msra.mxu0 %v3723
        %4697 = vmatprep.subr.mxu0 %v3708
        %4698 = vmatpush2.msra.mxu0 %v3707
        %4699 = vmatprep.subr.mxu0 %v3692
        %4700 = vmatpush2.msra.mxu0 %v3691
        %4701 = vmatprep.subr.mxu0 %v3676
        %4702 = vmatpush2.msra.mxu0 %v3675
        %4703 = vmatprep.subr.mxu0 %v3660
        %4704 = vmatpush2.msra.mxu0 %v3659
        %4705 = vmatprep.subr.mxu0 %v3644
        %4706 = vmatpush2.msra.mxu0 %v3643
        %4707 = vmatprep.subr.mxu0 %v3628
        %4708 = vmatpush2.msra.mxu0 %v3627
        %4709 = vmatprep.subr.mxu0 %v3612
        %4710 = vmatpush2.msra.mxu0 %v3611
        %4711 = vmatprep.subr.mxu0 %v3596
        %4712 = vmatpush2.msra.mxu0 %v3595
        %4713 = vmatprep.subr.mxu0 %v3580
        %4714 = vmatpush2.msra.mxu0 %v3579
        %4715 = vmatprep.mubr.f32.mxu0 %v3312
        %4716 = vmatmul.mubr.f32.gmra.mxu0 %v3311
        %v4717 = vpop.f32.mrf.mxu0
        %v4718 = vadd.f32 0.0, %v4717
        %v4719 = vpop.f32.mrf.mxu0
        %v4720 = vadd.f32 0.0, %v4719
        %4721 = vmatprep.mubr.f32.mxu0 %v3316
        %4722 = vmatmul.mubr.f32.gmra.mxu0 %v3315
        %v4723 = vpop.f32.mrf.mxu0
        %v4724 = vadd.f32 0.0, %v4723
        %v4725 = vpop.f32.mrf.mxu0
        %v4726 = vadd.f32 0.0, %v4725
        %4727 = vdwg.mxu0
        %4728 = vmatprep.subr.mxu0 %v4076
        %4729 = vmatpush1.msra.mxu0 %v4075
        %4730 = vmatprep.subr.mxu0 %v4060
        %4731 = vmatpush1.msra.mxu0 %v4059
        %4732 = vmatprep.subr.mxu0 %v4044
        %4733 = vmatpush1.msra.mxu0 %v4043
        %4734 = vmatprep.subr.mxu0 %v4028
        %4735 = vmatpush1.msra.mxu0 %v4027
        %4736 = vmatprep.subr.mxu0 %v4012
        %4737 = vmatpush1.msra.mxu0 %v4011
        %4738 = vmatprep.subr.mxu0 %v3996
        %4739 = vmatpush1.msra.mxu0 %v3995
        %4740 = vmatprep.subr.mxu0 %v3980
        %4741 = vmatpush1.msra.mxu0 %v3979
        %4742 = vmatprep.subr.mxu0 %v3964
        %4743 = vmatpush1.msra.mxu0 %v3963
        %4744 = vmatprep.subr.mxu0 %v3948
        %4745 = vmatpush1.msra.mxu0 %v3947
        %4746 = vmatprep.subr.mxu0 %v3932
        %4747 = vmatpush1.msra.mxu0 %v3931
        %4748 = vmatprep.subr.mxu0 %v3916
        %4749 = vmatpush1.msra.mxu0 %v3915
        %4750 = vmatprep.subr.mxu0 %v3900
        %4751 = vmatpush1.msra.mxu0 %v3899
        %4752 = vmatprep.subr.mxu0 %v3884
        %4753 = vmatpush1.msra.mxu0 %v3883
        %4754 = vmatprep.subr.mxu0 %v3868
        %4755 = vmatpush1.msra.mxu0 %v3867
        %4756 = vmatprep.subr.mxu0 %v3852
        %4757 = vmatpush1.msra.mxu0 %v3851
        %4758 = vmatprep.subr.mxu0 %v3836
        %4759 = vmatpush1.msra.mxu0 %v3835
        %4760 = vmatprep.subr.mxu0 %v4332
        %4761 = vmatpush2.msra.mxu0 %v4331
        %4762 = vmatprep.subr.mxu0 %v4316
        %4763 = vmatpush2.msra.mxu0 %v4315
        %4764 = vmatprep.subr.mxu0 %v4300
        %4765 = vmatpush2.msra.mxu0 %v4299
        %4766 = vmatprep.subr.mxu0 %v4284
        %4767 = vmatpush2.msra.mxu0 %v4283
        %4768 = vmatprep.subr.mxu0 %v4268
        %4769 = vmatpush2.msra.mxu0 %v4267
        %4770 = vmatprep.subr.mxu0 %v4252
        %4771 = vmatpush2.msra.mxu0 %v4251
        %4772 = vmatprep.subr.mxu0 %v4236
        %4773 = vmatpush2.msra.mxu0 %v4235
        %4774 = vmatprep.subr.mxu0 %v4220
        %4775 = vmatpush2.msra.mxu0 %v4219
        %4776 = vmatprep.subr.mxu0 %v4204
        %4777 = vmatpush2.msra.mxu0 %v4203
        %4778 = vmatprep.subr.mxu0 %v4188
        %4779 = vmatpush2.msra.mxu0 %v4187
        %4780 = vmatprep.subr.mxu0 %v4172
        %4781 = vmatpush2.msra.mxu0 %v4171
        %4782 = vmatprep.subr.mxu0 %v4156
        %4783 = vmatpush2.msra.mxu0 %v4155
        %4784 = vmatprep.subr.mxu0 %v4140
        %4785 = vmatpush2.msra.mxu0 %v4139
        %4786 = vmatprep.subr.mxu0 %v4124
        %4787 = vmatpush2.msra.mxu0 %v4123
        %4788 = vmatprep.subr.mxu0 %v4108
        %4789 = vmatpush2.msra.mxu0 %v4107
        %4790 = vmatprep.subr.mxu0 %v4092
        %4791 = vmatpush2.msra.mxu0 %v4091
        %4792 = vmatprep.mubr.f32.mxu0 %v3314
        %4793 = vmatmul.mubr.f32.gmra.mxu0 %v3313
        %v4794 = vpop.f32.mrf.mxu0
        %v4795 = vadd.f32 %v4718, %v4794
        %v4796 = vpop.f32.mrf.mxu0
        %v4797 = vadd.f32 %v4720, %v4796
        %4798 = vmatprep.mubr.f32.mxu0 %v3318
        %4799 = vmatmul.mubr.f32.gmra.mxu0 %v3317
        %v4800 = vpop.f32.mrf.mxu0
        %v4801 = vadd.f32 %v4724, %v4800
        %v4802 = vpop.f32.mrf.mxu0
        %v4803 = vadd.f32 %v4726, %v4802
        %4804 = vdwg.mxu0
        %4805 = vmatprep.subr.mxu0 %v3566
        %4806 = vmatpush1.msra.mxu0 %v3565
        %4807 = vmatprep.subr.mxu0 %v3550
        %4808 = vmatpush1.msra.mxu0 %v3549
        %4809 = vmatprep.subr.mxu0 %v3534
        %4810 = vmatpush1.msra.mxu0 %v3533
        %4811 = vmatprep.subr.mxu0 %v3518
        %4812 = vmatpush1.msra.mxu0 %v3517
        %4813 = vmatprep.subr.mxu0 %v3502
        %4814 = vmatpush1.msra.mxu0 %v3501
        %4815 = vmatprep.subr.mxu0 %v3486
        %4816 = vmatpush1.msra.mxu0 %v3485
        %4817 = vmatprep.subr.mxu0 %v3470
        %4818 = vmatpush1.msra.mxu0 %v3469
        %4819 = vmatprep.subr.mxu0 %v3454
        %4820 = vmatpush1.msra.mxu0 %v3453
        %4821 = vmatprep.subr.mxu0 %v3438
        %4822 = vmatpush1.msra.mxu0 %v3437
        %4823 = vmatprep.subr.mxu0 %v3422
        %4824 = vmatpush1.msra.mxu0 %v3421
        %4825 = vmatprep.subr.mxu0 %v3406
        %4826 = vmatpush1.msra.mxu0 %v3405
        %4827 = vmatprep.subr.mxu0 %v3390
        %4828 = vmatpush1.msra.mxu0 %v3389
        %4829 = vmatprep.subr.mxu0 %v3374
        %4830 = vmatpush1.msra.mxu0 %v3373
        %4831 = vmatprep.subr.mxu0 %v3358
        %4832 = vmatpush1.msra.mxu0 %v3357
        %4833 = vmatprep.subr.mxu0 %v3342
        %4834 = vmatpush1.msra.mxu0 %v3341
        %4835 = vmatprep.subr.mxu0 %v3326
        %4836 = vmatpush1.msra.mxu0 %v3325
        %4837 = vmatprep.subr.mxu0 %v3822
        %4838 = vmatpush2.msra.mxu0 %v3821
        %4839 = vmatprep.subr.mxu0 %v3806
        %4840 = vmatpush2.msra.mxu0 %v3805
        %4841 = vmatprep.subr.mxu0 %v3790
        %4842 = vmatpush2.msra.mxu0 %v3789
        %4843 = vmatprep.subr.mxu0 %v3774
        %4844 = vmatpush2.msra.mxu0 %v3773
        %4845 = vmatprep.subr.mxu0 %v3758
        %4846 = vmatpush2.msra.mxu0 %v3757
        %4847 = vmatprep.subr.mxu0 %v3742
        %4848 = vmatpush2.msra.mxu0 %v3741
        %4849 = vmatprep.subr.mxu0 %v3726
        %4850 = vmatpush2.msra.mxu0 %v3725
        %4851 = vmatprep.subr.mxu0 %v3710
        %4852 = vmatpush2.msra.mxu0 %v3709
        %4853 = vmatprep.subr.mxu0 %v3694
        %4854 = vmatpush2.msra.mxu0 %v3693
        %4855 = vmatprep.subr.mxu0 %v3678
        %4856 = vmatpush2.msra.mxu0 %v3677
        %4857 = vmatprep.subr.mxu0 %v3662
        %4858 = vmatpush2.msra.mxu0 %v3661
        %4859 = vmatprep.subr.mxu0 %v3646
        %4860 = vmatpush2.msra.mxu0 %v3645
        %4861 = vmatprep.subr.mxu0 %v3630
        %4862 = vmatpush2.msra.mxu0 %v3629
        %4863 = vmatprep.subr.mxu0 %v3614
        %4864 = vmatpush2.msra.mxu0 %v3613
        %4865 = vmatprep.subr.mxu0 %v3598
        %4866 = vmatpush2.msra.mxu0 %v3597
        %4867 = vmatprep.subr.mxu0 %v3582
        %4868 = vmatpush2.msra.mxu0 %v3581
        %4869 = vmatprep.mubr.f32.mxu0 %v3312
        %4870 = vmatmul.mubr.f32.gmra.mxu0 %v3311
        %v4871 = vpop.f32.mrf.mxu0
        %v4872 = vadd.f32 0.0, %v4871
        %v4873 = vpop.f32.mrf.mxu0
        %v4874 = vadd.f32 0.0, %v4873
        %4875 = vmatprep.mubr.f32.mxu0 %v3316
        %4876 = vmatmul.mubr.f32.gmra.mxu0 %v3315
        %v4877 = vpop.f32.mrf.mxu0
        %v4878 = vadd.f32 0.0, %v4877
        %v4879 = vpop.f32.mrf.mxu0
        %v4880 = vadd.f32 0.0, %v4879
        %4881 = vdwg.mxu0
        %4882 = vmatprep.subr.mxu0 %v4078
        %4883 = vmatpush1.msra.mxu0 %v4077
        %4884 = vmatprep.subr.mxu0 %v4062
        %4885 = vmatpush1.msra.mxu0 %v4061
        %4886 = vmatprep.subr.mxu0 %v4046
        %4887 = vmatpush1.msra.mxu0 %v4045
        %4888 = vmatprep.subr.mxu0 %v4030
        %4889 = vmatpush1.msra.mxu0 %v4029
        %4890 = vmatprep.subr.mxu0 %v4014
        %4891 = vmatpush1.msra.mxu0 %v4013
        %4892 = vmatprep.subr.mxu0 %v3998
        %4893 = vmatpush1.msra.mxu0 %v3997
        %4894 = vmatprep.subr.mxu0 %v3982
        %4895 = vmatpush1.msra.mxu0 %v3981
        %4896 = vmatprep.subr.mxu0 %v3966
        %4897 = vmatpush1.msra.mxu0 %v3965
        %4898 = vmatprep.subr.mxu0 %v3950
        %4899 = vmatpush1.msra.mxu0 %v3949
        %4900 = vmatprep.subr.mxu0 %v3934
        %4901 = vmatpush1.msra.mxu0 %v3933
        %4902 = vmatprep.subr.mxu0 %v3918
        %4903 = vmatpush1.msra.mxu0 %v3917
        %4904 = vmatprep.subr.mxu0 %v3902
        %4905 = vmatpush1.msra.mxu0 %v3901
        %4906 = vmatprep.subr.mxu0 %v3886
        %4907 = vmatpush1.msra.mxu0 %v3885
        %4908 = vmatprep.subr.mxu0 %v3870
        %4909 = vmatpush1.msra.mxu0 %v3869
        %4910 = vmatprep.subr.mxu0 %v3854
        %4911 = vmatpush1.msra.mxu0 %v3853
        %4912 = vmatprep.subr.mxu0 %v3838
        %4913 = vmatpush1.msra.mxu0 %v3837
        %4914 = vmatprep.subr.mxu0 %v4334
        %4915 = vmatpush2.msra.mxu0 %v4333
        %4916 = vmatprep.subr.mxu0 %v4318
        %4917 = vmatpush2.msra.mxu0 %v4317
        %4918 = vmatprep.subr.mxu0 %v4302
        %4919 = vmatpush2.msra.mxu0 %v4301
        %4920 = vmatprep.subr.mxu0 %v4286
        %4921 = vmatpush2.msra.mxu0 %v4285
        %4922 = vmatprep.subr.mxu0 %v4270
        %4923 = vmatpush2.msra.mxu0 %v4269
        %4924 = vmatprep.subr.mxu0 %v4254
        %4925 = vmatpush2.msra.mxu0 %v4253
        %4926 = vmatprep.subr.mxu0 %v4238
        %4927 = vmatpush2.msra.mxu0 %v4237
        %4928 = vmatprep.subr.mxu0 %v4222
        %4929 = vmatpush2.msra.mxu0 %v4221
        %4930 = vmatprep.subr.mxu0 %v4206
        %4931 = vmatpush2.msra.mxu0 %v4205
        %4932 = vmatprep.subr.mxu0 %v4190
        %4933 = vmatpush2.msra.mxu0 %v4189
        %4934 = vmatprep.subr.mxu0 %v4174
        %4935 = vmatpush2.msra.mxu0 %v4173
        %4936 = vmatprep.subr.mxu0 %v4158
        %4937 = vmatpush2.msra.mxu0 %v4157
        %4938 = vmatprep.subr.mxu0 %v4142
        %4939 = vmatpush2.msra.mxu0 %v4141
        %4940 = vmatprep.subr.mxu0 %v4126
        %4941 = vmatpush2.msra.mxu0 %v4125
        %4942 = vmatprep.subr.mxu0 %v4110
        %4943 = vmatpush2.msra.mxu0 %v4109
        %4944 = vmatprep.subr.mxu0 %v4094
        %4945 = vmatpush2.msra.mxu0 %v4093
        %4946 = vmatprep.mubr.f32.mxu0 %v3314
        %4947 = vmatmul.mubr.f32.gmra.mxu0 %v3313
        %v4948 = vpop.f32.mrf.mxu0
        %v4949 = vadd.f32 %v4872, %v4948
        %v4950 = vpop.f32.mrf.mxu0
        %v4951 = vadd.f32 %v4874, %v4950
        %4952 = vmatprep.mubr.f32.mxu0 %v3318
        %4953 = vmatmul.mubr.f32.gmra.mxu0 %v3317
        %v4954 = vpop.f32.mrf.mxu0
        %v4955 = vadd.f32 %v4878, %v4954
        %v4956 = vpop.f32.mrf.mxu0
        %v4957 = vadd.f32 %v4880, %v4956
        %4958 = vdwg.mxu0
        %4959 = vmatprep.subr.mxu0 %v3568
        %4960 = vmatpush1.msra.mxu0 %v3567
        %4961 = vmatprep.subr.mxu0 %v3552
        %4962 = vmatpush1.msra.mxu0 %v3551
        %4963 = vmatprep.subr.mxu0 %v3536
        %4964 = vmatpush1.msra.mxu0 %v3535
        %4965 = vmatprep.subr.mxu0 %v3520
        %4966 = vmatpush1.msra.mxu0 %v3519
        %4967 = vmatprep.subr.mxu0 %v3504
        %4968 = vmatpush1.msra.mxu0 %v3503
        %4969 = vmatprep.subr.mxu0 %v3488
        %4970 = vmatpush1.msra.mxu0 %v3487
        %4971 = vmatprep.subr.mxu0 %v3472
        %4972 = vmatpush1.msra.mxu0 %v3471
        %4973 = vmatprep.subr.mxu0 %v3456
        %4974 = vmatpush1.msra.mxu0 %v3455
        %4975 = vmatprep.subr.mxu0 %v3440
        %4976 = vmatpush1.msra.mxu0 %v3439
        %4977 = vmatprep.subr.mxu0 %v3424
        %4978 = vmatpush1.msra.mxu0 %v3423
        %4979 = vmatprep.subr.mxu0 %v3408
        %4980 = vmatpush1.msra.mxu0 %v3407
        %4981 = vmatprep.subr.mxu0 %v3392
        %4982 = vmatpush1.msra.mxu0 %v3391
        %4983 = vmatprep.subr.mxu0 %v3376
        %4984 = vmatpush1.msra.mxu0 %v3375
        %4985 = vmatprep.subr.mxu0 %v3360
        %4986 = vmatpush1.msra.mxu0 %v3359
        %4987 = vmatprep.subr.mxu0 %v3344
        %4988 = vmatpush1.msra.mxu0 %v3343
        %4989 = vmatprep.subr.mxu0 %v3328
        %4990 = vmatpush1.msra.mxu0 %v3327
        %4991 = vmatprep.subr.mxu0 %v3824
        %4992 = vmatpush2.msra.mxu0 %v3823
        %4993 = vmatprep.subr.mxu0 %v3808
        %4994 = vmatpush2.msra.mxu0 %v3807
        %4995 = vmatprep.subr.mxu0 %v3792
        %4996 = vmatpush2.msra.mxu0 %v3791
        %4997 = vmatprep.subr.mxu0 %v3776
        %4998 = vmatpush2.msra.mxu0 %v3775
        %4999 = vmatprep.subr.mxu0 %v3760
        %5000 = vmatpush2.msra.mxu0 %v3759
        %5001 = vmatprep.subr.mxu0 %v3744
        %5002 = vmatpush2.msra.mxu0 %v3743
        %5003 = vmatprep.subr.mxu0 %v3728
        %5004 = vmatpush2.msra.mxu0 %v3727
        %5005 = vmatprep.subr.mxu0 %v3712
        %5006 = vmatpush2.msra.mxu0 %v3711
        %5007 = vmatprep.subr.mxu0 %v3696
        %5008 = vmatpush2.msra.mxu0 %v3695
        %5009 = vmatprep.subr.mxu0 %v3680
        %5010 = vmatpush2.msra.mxu0 %v3679
        %5011 = vmatprep.subr.mxu0 %v3664
        %5012 = vmatpush2.msra.mxu0 %v3663
        %5013 = vmatprep.subr.mxu0 %v3648
        %5014 = vmatpush2.msra.mxu0 %v3647
        %5015 = vmatprep.subr.mxu0 %v3632
        %5016 = vmatpush2.msra.mxu0 %v3631
        %5017 = vmatprep.subr.mxu0 %v3616
        %5018 = vmatpush2.msra.mxu0 %v3615
        %5019 = vmatprep.subr.mxu0 %v3600
        %5020 = vmatpush2.msra.mxu0 %v3599
        %5021 = vmatprep.subr.mxu0 %v3584
        %5022 = vmatpush2.msra.mxu0 %v3583
        %5023 = vmatprep.mubr.f32.mxu0 %v3312
        %5024 = vmatmul.mubr.f32.gmra.mxu0 %v3311
        %v5025 = vpop.f32.mrf.mxu0
        %v5026 = vadd.f32 0.0, %v5025
        %v5027 = vpop.f32.mrf.mxu0
        %v5028 = vadd.f32 0.0, %v5027
        %5029 = vmatprep.mubr.f32.mxu0 %v3316
        %5030 = vmatmul.mubr.f32.gmra.mxu0 %v3315
        %v5031 = vpop.f32.mrf.mxu0
        %v5032 = vadd.f32 0.0, %v5031
        %v5033 = vpop.f32.mrf.mxu0
        %v5034 = vadd.f32 0.0, %v5033
        %5035 = vdwg.mxu0
        %5036 = vmatprep.subr.mxu0 %v4080
        %5037 = vmatpush1.msra.mxu0 %v4079
        %5038 = vmatprep.subr.mxu0 %v4064
        %5039 = vmatpush1.msra.mxu0 %v4063
        %5040 = vmatprep.subr.mxu0 %v4048
        %5041 = vmatpush1.msra.mxu0 %v4047
        %5042 = vmatprep.subr.mxu0 %v4032
        %5043 = vmatpush1.msra.mxu0 %v4031
        %5044 = vmatprep.subr.mxu0 %v4016
        %5045 = vmatpush1.msra.mxu0 %v4015
        %5046 = vmatprep.subr.mxu0 %v4000
        %5047 = vmatpush1.msra.mxu0 %v3999
        %5048 = vmatprep.subr.mxu0 %v3984
        %5049 = vmatpush1.msra.mxu0 %v3983
        %5050 = vmatprep.subr.mxu0 %v3968
        %5051 = vmatpush1.msra.mxu0 %v3967
        %5052 = vmatprep.subr.mxu0 %v3952
        %5053 = vmatpush1.msra.mxu0 %v3951
        %5054 = vmatprep.subr.mxu0 %v3936
        %5055 = vmatpush1.msra.mxu0 %v3935
        %5056 = vmatprep.subr.mxu0 %v3920
        %5057 = vmatpush1.msra.mxu0 %v3919
        %5058 = vmatprep.subr.mxu0 %v3904
        %5059 = vmatpush1.msra.mxu0 %v3903
        %5060 = vmatprep.subr.mxu0 %v3888
        %5061 = vmatpush1.msra.mxu0 %v3887
        %5062 = vmatprep.subr.mxu0 %v3872
        %5063 = vmatpush1.msra.mxu0 %v3871
        %5064 = vmatprep.subr.mxu0 %v3856
        %5065 = vmatpush1.msra.mxu0 %v3855
        %5066 = vmatprep.subr.mxu0 %v3840
        %5067 = vmatpush1.msra.mxu0 %v3839
        %5068 = vmatprep.subr.mxu0 %v4336
        %5069 = vmatpush2.msra.mxu0 %v4335
        %5070 = vmatprep.subr.mxu0 %v4320
        %5071 = vmatpush2.msra.mxu0 %v4319
        %5072 = vmatprep.subr.mxu0 %v4304
        %5073 = vmatpush2.msra.mxu0 %v4303
        %5074 = vmatprep.subr.mxu0 %v4288
        %5075 = vmatpush2.msra.mxu0 %v4287
        %5076 = vmatprep.subr.mxu0 %v4272
        %5077 = vmatpush2.msra.mxu0 %v4271
        %5078 = vmatprep.subr.mxu0 %v4256
        %5079 = vmatpush2.msra.mxu0 %v4255
        %5080 = vmatprep.subr.mxu0 %v4240
        %5081 = vmatpush2.msra.mxu0 %v4239
        %5082 = vmatprep.subr.mxu0 %v4224
        %5083 = vmatpush2.msra.mxu0 %v4223
        %5084 = vmatprep.subr.mxu0 %v4208
        %5085 = vmatpush2.msra.mxu0 %v4207
        %5086 = vmatprep.subr.mxu0 %v4192
        %5087 = vmatpush2.msra.mxu0 %v4191
        %5088 = vmatprep.subr.mxu0 %v4176
        %5089 = vmatpush2.msra.mxu0 %v4175
        %5090 = vmatprep.subr.mxu0 %v4160
        %5091 = vmatpush2.msra.mxu0 %v4159
        %5092 = vmatprep.subr.mxu0 %v4144
        %5093 = vmatpush2.msra.mxu0 %v4143
        %5094 = vmatprep.subr.mxu0 %v4128
        %5095 = vmatpush2.msra.mxu0 %v4127
        %5096 = vmatprep.subr.mxu0 %v4112
        %5097 = vmatpush2.msra.mxu0 %v4111
        %5098 = vmatprep.subr.mxu0 %v4096
        %5099 = vmatpush2.msra.mxu0 %v4095
        %5100 = vmatprep.mubr.f32.mxu0 %v3314
        %5101 = vmatmul.mubr.f32.gmra.mxu0 %v3313
        %v5102 = vpop.f32.mrf.mxu0
        %v5103 = vadd.f32 %v5026, %v5102
        %v5104 = vpop.f32.mrf.mxu0
        %v5105 = vadd.f32 %v5028, %v5104
        %5106 = vmatprep.mubr.f32.mxu0 %v3318
        %5107 = vmatmul.mubr.f32.gmra.mxu0 %v3317
        %v5108 = vpop.f32.mrf.mxu0
        %v5109 = vadd.f32 %v5032, %v5108
        %v5110 = vpop.f32.mrf.mxu0
        %v5111 = vadd.f32 %v5034, %v5110
        %5112 = vdwg.mxu0
        %5113 = vmatprep.subr.mxu0 %v3570
        %5114 = vmatpush1.msra.mxu0 %v3569
        %5115 = vmatprep.subr.mxu0 %v3554
        %5116 = vmatpush1.msra.mxu0 %v3553
        %5117 = vmatprep.subr.mxu0 %v3538
        %5118 = vmatpush1.msra.mxu0 %v3537
        %5119 = vmatprep.subr.mxu0 %v3522
        %5120 = vmatpush1.msra.mxu0 %v3521
        %5121 = vmatprep.subr.mxu0 %v3506
        %5122 = vmatpush1.msra.mxu0 %v3505
        %5123 = vmatprep.subr.mxu0 %v3490
        %5124 = vmatpush1.msra.mxu0 %v3489
        %5125 = vmatprep.subr.mxu0 %v3474
        %5126 = vmatpush1.msra.mxu0 %v3473
        %5127 = vmatprep.subr.mxu0 %v3458
        %5128 = vmatpush1.msra.mxu0 %v3457
        %5129 = vmatprep.subr.mxu0 %v3442
        %5130 = vmatpush1.msra.mxu0 %v3441
        %5131 = vmatprep.subr.mxu0 %v3426
        %5132 = vmatpush1.msra.mxu0 %v3425
        %5133 = vmatprep.subr.mxu0 %v3410
        %5134 = vmatpush1.msra.mxu0 %v3409
        %5135 = vmatprep.subr.mxu0 %v3394
        %5136 = vmatpush1.msra.mxu0 %v3393
        %5137 = vmatprep.subr.mxu0 %v3378
        %5138 = vmatpush1.msra.mxu0 %v3377
        %5139 = vmatprep.subr.mxu0 %v3362
        %5140 = vmatpush1.msra.mxu0 %v3361
        %5141 = vmatprep.subr.mxu0 %v3346
        %5142 = vmatpush1.msra.mxu0 %v3345
        %5143 = vmatprep.subr.mxu0 %v3330
        %5144 = vmatpush1.msra.mxu0 %v3329
        %5145 = vmatprep.subr.mxu0 %v3826
        %5146 = vmatpush2.msra.mxu0 %v3825
        %5147 = vmatprep.subr.mxu0 %v3810
        %5148 = vmatpush2.msra.mxu0 %v3809
        %5149 = vmatprep.subr.mxu0 %v3794
        %5150 = vmatpush2.msra.mxu0 %v3793
        %5151 = vmatprep.subr.mxu0 %v3778
        %5152 = vmatpush2.msra.mxu0 %v3777
        %5153 = vmatprep.subr.mxu0 %v3762
        %5154 = vmatpush2.msra.mxu0 %v3761
        %5155 = vmatprep.subr.mxu0 %v3746
        %5156 = vmatpush2.msra.mxu0 %v3745
        %5157 = vmatprep.subr.mxu0 %v3730
        %5158 = vmatpush2.msra.mxu0 %v3729
        %5159 = vmatprep.subr.mxu0 %v3714
        %5160 = vmatpush2.msra.mxu0 %v3713
        %5161 = vmatprep.subr.mxu0 %v3698
        %5162 = vmatpush2.msra.mxu0 %v3697
        %5163 = vmatprep.subr.mxu0 %v3682
        %5164 = vmatpush2.msra.mxu0 %v3681
        %5165 = vmatprep.subr.mxu0 %v3666
        %5166 = vmatpush2.msra.mxu0 %v3665
        %5167 = vmatprep.subr.mxu0 %v3650
        %5168 = vmatpush2.msra.mxu0 %v3649
        %5169 = vmatprep.subr.mxu0 %v3634
        %5170 = vmatpush2.msra.mxu0 %v3633
        %5171 = vmatprep.subr.mxu0 %v3618
        %5172 = vmatpush2.msra.mxu0 %v3617
        %5173 = vmatprep.subr.mxu0 %v3602
        %5174 = vmatpush2.msra.mxu0 %v3601
        %5175 = vmatprep.subr.mxu0 %v3586
        %5176 = vmatpush2.msra.mxu0 %v3585
        %5177 = vmatprep.mubr.f32.mxu0 %v3312
        %5178 = vmatmul.mubr.f32.gmra.mxu0 %v3311
        %v5179 = vpop.f32.mrf.mxu0
        %v5180 = vadd.f32 0.0, %v5179
        %v5181 = vpop.f32.mrf.mxu0
        %v5182 = vadd.f32 0.0, %v5181
        %5183 = vmatprep.mubr.f32.mxu0 %v3316
        %5184 = vmatmul.mubr.f32.gmra.mxu0 %v3315
        %v5185 = vpop.f32.mrf.mxu0
        %v5186 = vadd.f32 0.0, %v5185
        %v5187 = vpop.f32.mrf.mxu0
        %v5188 = vadd.f32 0.0, %v5187
        %5189 = vdwg.mxu0
        %5190 = vmatprep.subr.mxu0 %v4082
        %5191 = vmatpush1.msra.mxu0 %v4081
        %5192 = vmatprep.subr.mxu0 %v4066
        %5193 = vmatpush1.msra.mxu0 %v4065
        %5194 = vmatprep.subr.mxu0 %v4050
        %5195 = vmatpush1.msra.mxu0 %v4049
        %5196 = vmatprep.subr.mxu0 %v4034
        %5197 = vmatpush1.msra.mxu0 %v4033
        %5198 = vmatprep.subr.mxu0 %v4018
        %5199 = vmatpush1.msra.mxu0 %v4017
        %5200 = vmatprep.subr.mxu0 %v4002
        %5201 = vmatpush1.msra.mxu0 %v4001
        %5202 = vmatprep.subr.mxu0 %v3986
        %5203 = vmatpush1.msra.mxu0 %v3985
        %5204 = vmatprep.subr.mxu0 %v3970
        %5205 = vmatpush1.msra.mxu0 %v3969
        %5206 = vmatprep.subr.mxu0 %v3954
        %5207 = vmatpush1.msra.mxu0 %v3953
        %5208 = vmatprep.subr.mxu0 %v3938
        %5209 = vmatpush1.msra.mxu0 %v3937
        %5210 = vmatprep.subr.mxu0 %v3922
        %5211 = vmatpush1.msra.mxu0 %v3921
        %5212 = vmatprep.subr.mxu0 %v3906
        %5213 = vmatpush1.msra.mxu0 %v3905
        %5214 = vmatprep.subr.mxu0 %v3890
        %5215 = vmatpush1.msra.mxu0 %v3889
        %5216 = vmatprep.subr.mxu0 %v3874
        %5217 = vmatpush1.msra.mxu0 %v3873
        %5218 = vmatprep.subr.mxu0 %v3858
        %5219 = vmatpush1.msra.mxu0 %v3857
        %5220 = vmatprep.subr.mxu0 %v3842
        %5221 = vmatpush1.msra.mxu0 %v3841
        %5222 = vmatprep.subr.mxu0 %v4338
        %5223 = vmatpush2.msra.mxu0 %v4337
        %5224 = vmatprep.subr.mxu0 %v4322
        %5225 = vmatpush2.msra.mxu0 %v4321
        %5226 = vmatprep.subr.mxu0 %v4306
        %5227 = vmatpush2.msra.mxu0 %v4305
        %5228 = vmatprep.subr.mxu0 %v4290
        %5229 = vmatpush2.msra.mxu0 %v4289
        %5230 = vmatprep.subr.mxu0 %v4274
        %5231 = vmatpush2.msra.mxu0 %v4273
        %5232 = vmatprep.subr.mxu0 %v4258
        %5233 = vmatpush2.msra.mxu0 %v4257
        %5234 = vmatprep.subr.mxu0 %v4242
        %5235 = vmatpush2.msra.mxu0 %v4241
        %5236 = vmatprep.subr.mxu0 %v4226
        %5237 = vmatpush2.msra.mxu0 %v4225
        %5238 = vmatprep.subr.mxu0 %v4210
        %5239 = vmatpush2.msra.mxu0 %v4209
        %5240 = vmatprep.subr.mxu0 %v4194
        %5241 = vmatpush2.msra.mxu0 %v4193
        %5242 = vmatprep.subr.mxu0 %v4178
        %5243 = vmatpush2.msra.mxu0 %v4177
        %5244 = vmatprep.subr.mxu0 %v4162
        %5245 = vmatpush2.msra.mxu0 %v4161
        %5246 = vmatprep.subr.mxu0 %v4146
        %5247 = vmatpush2.msra.mxu0 %v4145
        %5248 = vmatprep.subr.mxu0 %v4130
        %5249 = vmatpush2.msra.mxu0 %v4129
        %5250 = vmatprep.subr.mxu0 %v4114
        %5251 = vmatpush2.msra.mxu0 %v4113
        %5252 = vmatprep.subr.mxu0 %v4098
        %5253 = vmatpush2.msra.mxu0 %v4097
        %5254 = vmatprep.mubr.f32.mxu0 %v3314
        %5255 = vmatmul.mubr.f32.gmra.mxu0 %v3313
        %v5256 = vpop.f32.mrf.mxu0
        %v5257 = vadd.f32 %v5180, %v5256
        %v5258 = vpop.f32.mrf.mxu0
        %v5259 = vadd.f32 %v5182, %v5258
        %5260 = vmatprep.mubr.f32.mxu0 %v3318
        %5261 = vmatmul.mubr.f32.gmra.mxu0 %v3317
        %v5262 = vpop.f32.mrf.mxu0
        %v5263 = vadd.f32 %v5186, %v5262
        %v5264 = vpop.f32.mrf.mxu0
        %v5265 = vadd.f32 %v5188, %v5264
        %5266 = vdwg.mxu0
        %5267 = vmatprep.subr.mxu0 %v3572
        %5268 = vmatpush1.msra.mxu0 %v3571
        %5269 = vmatprep.subr.mxu0 %v3556
        %5270 = vmatpush1.msra.mxu0 %v3555
        %5271 = vmatprep.subr.mxu0 %v3540
        %5272 = vmatpush1.msra.mxu0 %v3539
        %5273 = vmatprep.subr.mxu0 %v3524
        %5274 = vmatpush1.msra.mxu0 %v3523
        %5275 = vmatprep.subr.mxu0 %v3508
        %5276 = vmatpush1.msra.mxu0 %v3507
        %5277 = vmatprep.subr.mxu0 %v3492
        %5278 = vmatpush1.msra.mxu0 %v3491
        %5279 = vmatprep.subr.mxu0 %v3476
        %5280 = vmatpush1.msra.mxu0 %v3475
        %5281 = vmatprep.subr.mxu0 %v3460
        %5282 = vmatpush1.msra.mxu0 %v3459
        %5283 = vmatprep.subr.mxu0 %v3444
        %5284 = vmatpush1.msra.mxu0 %v3443
        %5285 = vmatprep.subr.mxu0 %v3428
        %5286 = vmatpush1.msra.mxu0 %v3427
        %5287 = vmatprep.subr.mxu0 %v3412
        %5288 = vmatpush1.msra.mxu0 %v3411
        %5289 = vmatprep.subr.mxu0 %v3396
        %5290 = vmatpush1.msra.mxu0 %v3395
        %5291 = vmatprep.subr.mxu0 %v3380
        %5292 = vmatpush1.msra.mxu0 %v3379
        %5293 = vmatprep.subr.mxu0 %v3364
        %5294 = vmatpush1.msra.mxu0 %v3363
        %5295 = vmatprep.subr.mxu0 %v3348
        %5296 = vmatpush1.msra.mxu0 %v3347
        %5297 = vmatprep.subr.mxu0 %v3332
        %5298 = vmatpush1.msra.mxu0 %v3331
        %5299 = vmatprep.subr.mxu0 %v3828
        %5300 = vmatpush2.msra.mxu0 %v3827
        %5301 = vmatprep.subr.mxu0 %v3812
        %5302 = vmatpush2.msra.mxu0 %v3811
        %5303 = vmatprep.subr.mxu0 %v3796
        %5304 = vmatpush2.msra.mxu0 %v3795
        %5305 = vmatprep.subr.mxu0 %v3780
        %5306 = vmatpush2.msra.mxu0 %v3779
        %5307 = vmatprep.subr.mxu0 %v3764
        %5308 = vmatpush2.msra.mxu0 %v3763
        %5309 = vmatprep.subr.mxu0 %v3748
        %5310 = vmatpush2.msra.mxu0 %v3747
        %5311 = vmatprep.subr.mxu0 %v3732
        %5312 = vmatpush2.msra.mxu0 %v3731
        %5313 = vmatprep.subr.mxu0 %v3716
        %5314 = vmatpush2.msra.mxu0 %v3715
        %5315 = vmatprep.subr.mxu0 %v3700
        %5316 = vmatpush2.msra.mxu0 %v3699
        %5317 = vmatprep.subr.mxu0 %v3684
        %5318 = vmatpush2.msra.mxu0 %v3683
        %5319 = vmatprep.subr.mxu0 %v3668
        %5320 = vmatpush2.msra.mxu0 %v3667
        %5321 = vmatprep.subr.mxu0 %v3652
        %5322 = vmatpush2.msra.mxu0 %v3651
        %5323 = vmatprep.subr.mxu0 %v3636
        %5324 = vmatpush2.msra.mxu0 %v3635
        %5325 = vmatprep.subr.mxu0 %v3620
        %5326 = vmatpush2.msra.mxu0 %v3619
        %5327 = vmatprep.subr.mxu0 %v3604
        %5328 = vmatpush2.msra.mxu0 %v3603
        %5329 = vmatprep.subr.mxu0 %v3588
        %5330 = vmatpush2.msra.mxu0 %v3587
        %5331 = vmatprep.mubr.f32.mxu0 %v3312
        %5332 = vmatmul.mubr.f32.gmra.mxu0 %v3311
        %v5333 = vpop.f32.mrf.mxu0
        %v5334 = vadd.f32 0.0, %v5333
        %v5335 = vpop.f32.mrf.mxu0
        %v5336 = vadd.f32 0.0, %v5335
        %5337 = vmatprep.mubr.f32.mxu0 %v3316
        %5338 = vmatmul.mubr.f32.gmra.mxu0 %v3315
        %v5339 = vpop.f32.mrf.mxu0
        %v5340 = vadd.f32 0.0, %v5339
        %v5341 = vpop.f32.mrf.mxu0
        %v5342 = vadd.f32 0.0, %v5341
        %5343 = vdwg.mxu0
        %5344 = vmatprep.subr.mxu0 %v4084
        %5345 = vmatpush1.msra.mxu0 %v4083
        %5346 = vmatprep.subr.mxu0 %v4068
        %5347 = vmatpush1.msra.mxu0 %v4067
        %5348 = vmatprep.subr.mxu0 %v4052
        %5349 = vmatpush1.msra.mxu0 %v4051
        %5350 = vmatprep.subr.mxu0 %v4036
        %5351 = vmatpush1.msra.mxu0 %v4035
        %5352 = vmatprep.subr.mxu0 %v4020
        %5353 = vmatpush1.msra.mxu0 %v4019
        %5354 = vmatprep.subr.mxu0 %v4004
        %5355 = vmatpush1.msra.mxu0 %v4003
        %5356 = vmatprep.subr.mxu0 %v3988
        %5357 = vmatpush1.msra.mxu0 %v3987
        %5358 = vmatprep.subr.mxu0 %v3972
        %5359 = vmatpush1.msra.mxu0 %v3971
        %5360 = vmatprep.subr.mxu0 %v3956
        %5361 = vmatpush1.msra.mxu0 %v3955
        %5362 = vmatprep.subr.mxu0 %v3940
        %5363 = vmatpush1.msra.mxu0 %v3939
        %5364 = vmatprep.subr.mxu0 %v3924
        %5365 = vmatpush1.msra.mxu0 %v3923
        %5366 = vmatprep.subr.mxu0 %v3908
        %5367 = vmatpush1.msra.mxu0 %v3907
        %5368 = vmatprep.subr.mxu0 %v3892
        %5369 = vmatpush1.msra.mxu0 %v3891
        %5370 = vmatprep.subr.mxu0 %v3876
        %5371 = vmatpush1.msra.mxu0 %v3875
        %5372 = vmatprep.subr.mxu0 %v3860
        %5373 = vmatpush1.msra.mxu0 %v3859
        %5374 = vmatprep.subr.mxu0 %v3844
        %5375 = vmatpush1.msra.mxu0 %v3843
        %5376 = vmatprep.subr.mxu0 %v4340
        %5377 = vmatpush2.msra.mxu0 %v4339
        %5378 = vmatprep.subr.mxu0 %v4324
        %5379 = vmatpush2.msra.mxu0 %v4323
        %5380 = vmatprep.subr.mxu0 %v4308
        %5381 = vmatpush2.msra.mxu0 %v4307
        %5382 = vmatprep.subr.mxu0 %v4292
        %5383 = vmatpush2.msra.mxu0 %v4291
        %5384 = vmatprep.subr.mxu0 %v4276
        %5385 = vmatpush2.msra.mxu0 %v4275
        %5386 = vmatprep.subr.mxu0 %v4260
        %5387 = vmatpush2.msra.mxu0 %v4259
        %5388 = vmatprep.subr.mxu0 %v4244
        %5389 = vmatpush2.msra.mxu0 %v4243
        %5390 = vmatprep.subr.mxu0 %v4228
        %5391 = vmatpush2.msra.mxu0 %v4227
        %5392 = vmatprep.subr.mxu0 %v4212
        %5393 = vmatpush2.msra.mxu0 %v4211
        %5394 = vmatprep.subr.mxu0 %v4196
        %5395 = vmatpush2.msra.mxu0 %v4195
        %5396 = vmatprep.subr.mxu0 %v4180
        %5397 = vmatpush2.msra.mxu0 %v4179
        %5398 = vmatprep.subr.mxu0 %v4164
        %5399 = vmatpush2.msra.mxu0 %v4163
        %5400 = vmatprep.subr.mxu0 %v4148
        %5401 = vmatpush2.msra.mxu0 %v4147
        %5402 = vmatprep.subr.mxu0 %v4132
        %5403 = vmatpush2.msra.mxu0 %v4131
        %5404 = vmatprep.subr.mxu0 %v4116
        %5405 = vmatpush2.msra.mxu0 %v4115
        %5406 = vmatprep.subr.mxu0 %v4100
        %5407 = vmatpush2.msra.mxu0 %v4099
        %5408 = vmatprep.mubr.f32.mxu0 %v3314
        %5409 = vmatmul.mubr.f32.gmra.mxu0 %v3313
        %v5410 = vpop.f32.mrf.mxu0
        %v5411 = vadd.f32 %v5334, %v5410
        %v5412 = vpop.f32.mrf.mxu0
        %v5413 = vadd.f32 %v5336, %v5412
        %5414 = vmatprep.mubr.f32.mxu0 %v3318
        %5415 = vmatmul.mubr.f32.gmra.mxu0 %v3317
        %v5416 = vpop.f32.mrf.mxu0
        %v5417 = vadd.f32 %v5340, %v5416
        %v5418 = vpop.f32.mrf.mxu0
        %v5419 = vadd.f32 %v5342, %v5418
        %5420 = vdwg.mxu0
        %5421 = vmatprep.subr.mxu0 %v3574
        %5422 = vmatpush1.msra.mxu0 %v3573
        %5423 = vmatprep.subr.mxu0 %v3558
        %5424 = vmatpush1.msra.mxu0 %v3557
        %5425 = vmatprep.subr.mxu0 %v3542
        %5426 = vmatpush1.msra.mxu0 %v3541
        %5427 = vmatprep.subr.mxu0 %v3526
        %5428 = vmatpush1.msra.mxu0 %v3525
        %5429 = vmatprep.subr.mxu0 %v3510
        %5430 = vmatpush1.msra.mxu0 %v3509
        %5431 = vmatprep.subr.mxu0 %v3494
        %5432 = vmatpush1.msra.mxu0 %v3493
        %5433 = vmatprep.subr.mxu0 %v3478
        %5434 = vmatpush1.msra.mxu0 %v3477
        %5435 = vmatprep.subr.mxu0 %v3462
        %5436 = vmatpush1.msra.mxu0 %v3461
        %5437 = vmatprep.subr.mxu0 %v3446
        %5438 = vmatpush1.msra.mxu0 %v3445
        %5439 = vmatprep.subr.mxu0 %v3430
        %5440 = vmatpush1.msra.mxu0 %v3429
        %5441 = vmatprep.subr.mxu0 %v3414
        %5442 = vmatpush1.msra.mxu0 %v3413
        %5443 = vmatprep.subr.mxu0 %v3398
        %5444 = vmatpush1.msra.mxu0 %v3397
        %5445 = vmatprep.subr.mxu0 %v3382
        %5446 = vmatpush1.msra.mxu0 %v3381
        %5447 = vmatprep.subr.mxu0 %v3366
        %5448 = vmatpush1.msra.mxu0 %v3365
        %5449 = vmatprep.subr.mxu0 %v3350
        %5450 = vmatpush1.msra.mxu0 %v3349
        %5451 = vmatprep.subr.mxu0 %v3334
        %5452 = vmatpush1.msra.mxu0 %v3333
        %5453 = vmatprep.subr.mxu0 %v3830
        %5454 = vmatpush2.msra.mxu0 %v3829
        %5455 = vmatprep.subr.mxu0 %v3814
        %5456 = vmatpush2.msra.mxu0 %v3813
        %5457 = vmatprep.subr.mxu0 %v3798
        %5458 = vmatpush2.msra.mxu0 %v3797
        %5459 = vmatprep.subr.mxu0 %v3782
        %5460 = vmatpush2.msra.mxu0 %v3781
        %5461 = vmatprep.subr.mxu0 %v3766
        %5462 = vmatpush2.msra.mxu0 %v3765
        %5463 = vmatprep.subr.mxu0 %v3750
        %5464 = vmatpush2.msra.mxu0 %v3749
        %5465 = vmatprep.subr.mxu0 %v3734
        %5466 = vmatpush2.msra.mxu0 %v3733
        %5467 = vmatprep.subr.mxu0 %v3718
        %5468 = vmatpush2.msra.mxu0 %v3717
        %5469 = vmatprep.subr.mxu0 %v3702
        %5470 = vmatpush2.msra.mxu0 %v3701
        %5471 = vmatprep.subr.mxu0 %v3686
        %5472 = vmatpush2.msra.mxu0 %v3685
        %5473 = vmatprep.subr.mxu0 %v3670
        %5474 = vmatpush2.msra.mxu0 %v3669
        %5475 = vmatprep.subr.mxu0 %v3654
        %5476 = vmatpush2.msra.mxu0 %v3653
        %5477 = vmatprep.subr.mxu0 %v3638
        %5478 = vmatpush2.msra.mxu0 %v3637
        %5479 = vmatprep.subr.mxu0 %v3622
        %5480 = vmatpush2.msra.mxu0 %v3621
        %5481 = vmatprep.subr.mxu0 %v3606
        %5482 = vmatpush2.msra.mxu0 %v3605
        %5483 = vmatprep.subr.mxu0 %v3590
        %5484 = vmatpush2.msra.mxu0 %v3589
        %5485 = vmatprep.mubr.f32.mxu0 %v3312
        %5486 = vmatmul.mubr.f32.gmra.mxu0 %v3311
        %v5487 = vpop.f32.mrf.mxu0
        %v5488 = vadd.f32 0.0, %v5487
        %v5489 = vpop.f32.mrf.mxu0
        %v5490 = vadd.f32 0.0, %v5489
        %5491 = vmatprep.mubr.f32.mxu0 %v3316
        %5492 = vmatmul.mubr.f32.gmra.mxu0 %v3315
        %v5493 = vpop.f32.mrf.mxu0
        %v5494 = vadd.f32 0.0, %v5493
        %v5495 = vpop.f32.mrf.mxu0
        %v5496 = vadd.f32 0.0, %v5495
        %5497 = vdwg.mxu0
        %5498 = vmatprep.subr.mxu0 %v4086
        %5499 = vmatpush1.msra.mxu0 %v4085
        %5500 = vmatprep.subr.mxu0 %v4070
        %5501 = vmatpush1.msra.mxu0 %v4069
        %5502 = vmatprep.subr.mxu0 %v4054
        %5503 = vmatpush1.msra.mxu0 %v4053
        %5504 = vmatprep.subr.mxu0 %v4038
        %5505 = vmatpush1.msra.mxu0 %v4037
        %5506 = vmatprep.subr.mxu0 %v4022
        %5507 = vmatpush1.msra.mxu0 %v4021
        %5508 = vmatprep.subr.mxu0 %v4006
        %5509 = vmatpush1.msra.mxu0 %v4005
        %5510 = vmatprep.subr.mxu0 %v3990
        %5511 = vmatpush1.msra.mxu0 %v3989
        %5512 = vmatprep.subr.mxu0 %v3974
        %5513 = vmatpush1.msra.mxu0 %v3973
        %5514 = vmatprep.subr.mxu0 %v3958
        %5515 = vmatpush1.msra.mxu0 %v3957
        %5516 = vmatprep.subr.mxu0 %v3942
        %5517 = vmatpush1.msra.mxu0 %v3941
        %5518 = vmatprep.subr.mxu0 %v3926
        %5519 = vmatpush1.msra.mxu0 %v3925
        %5520 = vmatprep.subr.mxu0 %v3910
        %5521 = vmatpush1.msra.mxu0 %v3909
        %5522 = vmatprep.subr.mxu0 %v3894
        %5523 = vmatpush1.msra.mxu0 %v3893
        %5524 = vmatprep.subr.mxu0 %v3878
        %5525 = vmatpush1.msra.mxu0 %v3877
        %5526 = vmatprep.subr.mxu0 %v3862
        %5527 = vmatpush1.msra.mxu0 %v3861
        %5528 = vmatprep.subr.mxu0 %v3846
        %5529 = vmatpush1.msra.mxu0 %v3845
        %5530 = vmatprep.subr.mxu0 %v4342
        %5531 = vmatpush2.msra.mxu0 %v4341
        %5532 = vmatprep.subr.mxu0 %v4326
        %5533 = vmatpush2.msra.mxu0 %v4325
        %5534 = vmatprep.subr.mxu0 %v4310
        %5535 = vmatpush2.msra.mxu0 %v4309
        %5536 = vmatprep.subr.mxu0 %v4294
        %5537 = vmatpush2.msra.mxu0 %v4293
        %5538 = vmatprep.subr.mxu0 %v4278
        %5539 = vmatpush2.msra.mxu0 %v4277
        %5540 = vmatprep.subr.mxu0 %v4262
        %5541 = vmatpush2.msra.mxu0 %v4261
        %5542 = vmatprep.subr.mxu0 %v4246
        %5543 = vmatpush2.msra.mxu0 %v4245
        %5544 = vmatprep.subr.mxu0 %v4230
        %5545 = vmatpush2.msra.mxu0 %v4229
        %5546 = vmatprep.subr.mxu0 %v4214
        %5547 = vmatpush2.msra.mxu0 %v4213
        %5548 = vmatprep.subr.mxu0 %v4198
        %5549 = vmatpush2.msra.mxu0 %v4197
        %5550 = vmatprep.subr.mxu0 %v4182
        %5551 = vmatpush2.msra.mxu0 %v4181
        %5552 = vmatprep.subr.mxu0 %v4166
        %5553 = vmatpush2.msra.mxu0 %v4165
        %5554 = vmatprep.subr.mxu0 %v4150
        %5555 = vmatpush2.msra.mxu0 %v4149
        %5556 = vmatprep.subr.mxu0 %v4134
        %5557 = vmatpush2.msra.mxu0 %v4133
        %5558 = vmatprep.subr.mxu0 %v4118
        %5559 = vmatpush2.msra.mxu0 %v4117
        %5560 = vmatprep.subr.mxu0 %v4102
        %5561 = vmatpush2.msra.mxu0 %v4101
        %5562 = vmatprep.mubr.f32.mxu0 %v3314
        %5563 = vmatmul.mubr.f32.gmra.mxu0 %v3313
        %v5564 = vpop.f32.mrf.mxu0
        %v5565 = vadd.f32 %v5488, %v5564
        %v5566 = vpop.f32.mrf.mxu0
        %v5567 = vadd.f32 %v5490, %v5566
        %5568 = vmatprep.mubr.f32.mxu0 %v3318
        %5569 = vmatmul.mubr.f32.gmra.mxu0 %v3317
        %v5570 = vpop.f32.mrf.mxu0
        %v5571 = vadd.f32 %v5494, %v5570
        %v5572 = vpop.f32.mrf.mxu0
        %v5573 = vadd.f32 %v5496, %v5572
        %5574 = vdwg.mxu0
        %v5575 = vld [vmem:[#allocation8] sm:$0xf]
        %v5577 = vlaneseq
        %v5578 = vshrl.u32 %v5577, 7
        %v5579 = vsub.s32 0, %v5578
        %v5580 = vrot.slane %v5575, %v5579
        %v5581 = vlaneseq
        %v5582 = vshrl.u32 %v5581, 7
        %v5583 = vsub.s32 1, %v5582
        %v5584 = vrot.slane %v5575, %v5583
        %v5585 = vlaneseq
        %v5586 = vshrl.u32 %v5585, 7
        %v5587 = vsub.s32 2, %v5586
        %v5588 = vrot.slane %v5575, %v5587
        %v5589 = vlaneseq
        %v5590 = vshrl.u32 %v5589, 7
        %v5591 = vsub.s32 3, %v5590
        %v5592 = vrot.slane %v5575, %v5591
        %v5597 = vld [vmem:[%s5] sm:$0xff]
        %v5598 = vld [vmem:[%s5 + $0x8] sm:$0xff]
        %v5599 = vld [vmem:[%s5 + $0x10] sm:$0xff]
        %v5600 = vld [vmem:[%s5 + $0x18] sm:$0xff]
        %vm5601 = vcmask 130048
        %v5603 = vsel %vm5601, %v5597, 0
        %v5606 = vsel %vm5601, %v5598, 0
        %v5609 = vsel %vm5601, %v5599, 0
        %v5612 = vsel %vm5601, %v5600, 0
        %5614 = vmatprep.subr.mxu0 0.0
        %5615 = vmatpush1.msra.mxu0 0.0
        %5616 = vmatprep.subr.mxu0 0.0
        %5617 = vmatpush1.msra.mxu0 0.0
        %5618 = vmatprep.subr.mxu0 0.0
        %5619 = vmatpush1.msra.mxu0 0.0
        %5620 = vmatprep.subr.mxu0 0.0
        %5621 = vmatpush1.msra.mxu0 0.0
        %5622 = vmatprep.subr.mxu0 0.0
        %5623 = vmatpush1.msra.mxu0 0.0
        %5624 = vmatprep.subr.mxu0 0.0
        %5625 = vmatpush1.msra.mxu0 0.0
        %5626 = vmatprep.subr.mxu0 0.0
        %5627 = vmatpush1.msra.mxu0 0.0
        %5628 = vmatprep.subr.mxu0 0.0
        %5629 = vmatpush1.msra.mxu0 0.0
        %5630 = vmatprep.subr.mxu0 0.0
        %5631 = vmatpush1.msra.mxu0 0.0
        %5632 = vmatprep.subr.mxu0 0.0
        %5633 = vmatpush1.msra.mxu0 0.0
        %5634 = vmatprep.subr.mxu0 0.0
        %5635 = vmatpush1.msra.mxu0 0.0
        %5636 = vmatprep.subr.mxu0 0.0
        %5637 = vmatpush1.msra.mxu0 0.0
        %5638 = vmatprep.subr.mxu0 0.0
        %5639 = vmatpush1.msra.mxu0 0.0
        %5640 = vmatprep.subr.mxu0 0.0
        %5641 = vmatpush1.msra.mxu0 0.0
        %5642 = vmatprep.subr.mxu0 %v4495
        %5643 = vmatpush1.msra.mxu0 %v4493
        %5644 = vmatprep.subr.mxu0 %v4489
        %5645 = vmatpush1.msra.mxu0 %v4487
        %5646 = vmatprep.subr.mxu0 0.0
        %5647 = vmatpush2.msra.mxu0 0.0
        %5648 = vmatprep.subr.mxu0 0.0
        %5649 = vmatpush2.msra.mxu0 0.0
        %5650 = vmatprep.subr.mxu0 0.0
        %5651 = vmatpush2.msra.mxu0 0.0
        %5652 = vmatprep.subr.mxu0 0.0
        %5653 = vmatpush2.msra.mxu0 0.0
        %5654 = vmatprep.subr.mxu0 0.0
        %5655 = vmatpush2.msra.mxu0 0.0
        %5656 = vmatprep.subr.mxu0 0.0
        %5657 = vmatpush2.msra.mxu0 0.0
        %5658 = vmatprep.subr.mxu0 0.0
        %5659 = vmatpush2.msra.mxu0 0.0
        %5660 = vmatprep.subr.mxu0 0.0
        %5661 = vmatpush2.msra.mxu0 0.0
        %5662 = vmatprep.subr.mxu0 0.0
        %5663 = vmatpush2.msra.mxu0 0.0
        %5664 = vmatprep.subr.mxu0 0.0
        %5665 = vmatpush2.msra.mxu0 0.0
        %5666 = vmatprep.subr.mxu0 0.0
        %5667 = vmatpush2.msra.mxu0 0.0
        %5668 = vmatprep.subr.mxu0 0.0
        %5669 = vmatpush2.msra.mxu0 0.0
        %5670 = vmatprep.subr.mxu0 0.0
        %5671 = vmatpush2.msra.mxu0 0.0
        %5672 = vmatprep.subr.mxu0 0.0
        %5673 = vmatpush2.msra.mxu0 0.0
        %5674 = vmatprep.subr.mxu0 0.0
        %5675 = vmatpush2.msra.mxu0 0.0
        %5676 = vmatprep.subr.mxu0 0.0
        %5677 = vmatpush2.msra.mxu0 0.0
        %5678 = vmatprep.mubr.f32.mxu0 0.0
        %5679 = vmatmul.mubr.f32.gmra.mxu0 %v5603
        %v5680 = vpop.f32.mrf.mxu0
        %v5681 = vadd.f32 0.0, %v5680
        %v5682 = vpop.f32.mrf.mxu0
        %v5683 = vadd.f32 0.0, %v5682
        %5684 = vmatprep.mubr.f32.mxu0 0.0
        %5685 = vmatmul.mubr.f32.gmra.mxu0 %v5606
        %v5686 = vpop.f32.mrf.mxu0
        %v5687 = vadd.f32 0.0, %v5686
        %v5688 = vpop.f32.mrf.mxu0
        %v5689 = vadd.f32 0.0, %v5688
        %5690 = vmatprep.mubr.f32.mxu0 0.0
        %5691 = vmatmul.mubr.f32.gmra.mxu0 %v5609
        %v5692 = vpop.f32.mrf.mxu0
        %v5693 = vadd.f32 0.0, %v5692
        %v5694 = vpop.f32.mrf.mxu0
        %v5695 = vadd.f32 0.0, %v5694
        %5696 = vmatprep.mubr.f32.mxu0 0.0
        %5697 = vmatmul.mubr.f32.gmra.mxu0 %v5612
        %v5698 = vpop.f32.mrf.mxu0
        %v5699 = vadd.f32 0.0, %v5698
        %v5700 = vpop.f32.mrf.mxu0
        %v5701 = vadd.f32 0.0, %v5700
        %5702 = vdwg.mxu0
        %5703 = vmatprep.subr.mxu0 0.0
        %5704 = vmatpush1.msra.mxu0 0.0
        %5705 = vmatprep.subr.mxu0 0.0
        %5706 = vmatpush1.msra.mxu0 0.0
        %5707 = vmatprep.subr.mxu0 0.0
        %5708 = vmatpush1.msra.mxu0 0.0
        %5709 = vmatprep.subr.mxu0 0.0
        %5710 = vmatpush1.msra.mxu0 0.0
        %5711 = vmatprep.subr.mxu0 0.0
        %5712 = vmatpush1.msra.mxu0 0.0
        %5713 = vmatprep.subr.mxu0 0.0
        %5714 = vmatpush1.msra.mxu0 0.0
        %5715 = vmatprep.subr.mxu0 0.0
        %5716 = vmatpush1.msra.mxu0 0.0
        %5717 = vmatprep.subr.mxu0 0.0
        %5718 = vmatpush1.msra.mxu0 0.0
        %5719 = vmatprep.subr.mxu0 0.0
        %5720 = vmatpush1.msra.mxu0 0.0
        %5721 = vmatprep.subr.mxu0 0.0
        %5722 = vmatpush1.msra.mxu0 0.0
        %5723 = vmatprep.subr.mxu0 0.0
        %5724 = vmatpush1.msra.mxu0 0.0
        %5725 = vmatprep.subr.mxu0 0.0
        %5726 = vmatpush1.msra.mxu0 0.0
        %5727 = vmatprep.subr.mxu0 0.0
        %5728 = vmatpush1.msra.mxu0 0.0
        %5729 = vmatprep.subr.mxu0 0.0
        %5730 = vmatpush1.msra.mxu0 0.0
        %5731 = vmatprep.subr.mxu0 %v4649
        %5732 = vmatpush1.msra.mxu0 %v4647
        %5733 = vmatprep.subr.mxu0 %v4643
        %5734 = vmatpush1.msra.mxu0 %v4641
        %5735 = vmatprep.subr.mxu0 0.0
        %5736 = vmatpush2.msra.mxu0 0.0
        %5737 = vmatprep.subr.mxu0 0.0
        %5738 = vmatpush2.msra.mxu0 0.0
        %5739 = vmatprep.subr.mxu0 0.0
        %5740 = vmatpush2.msra.mxu0 0.0
        %5741 = vmatprep.subr.mxu0 0.0
        %5742 = vmatpush2.msra.mxu0 0.0
        %5743 = vmatprep.subr.mxu0 0.0
        %5744 = vmatpush2.msra.mxu0 0.0
        %5745 = vmatprep.subr.mxu0 0.0
        %5746 = vmatpush2.msra.mxu0 0.0
        %5747 = vmatprep.subr.mxu0 0.0
        %5748 = vmatpush2.msra.mxu0 0.0
        %5749 = vmatprep.subr.mxu0 0.0
        %5750 = vmatpush2.msra.mxu0 0.0
        %5751 = vmatprep.subr.mxu0 0.0
        %5752 = vmatpush2.msra.mxu0 0.0
        %5753 = vmatprep.subr.mxu0 0.0
        %5754 = vmatpush2.msra.mxu0 0.0
        %5755 = vmatprep.subr.mxu0 0.0
        %5756 = vmatpush2.msra.mxu0 0.0
        %5757 = vmatprep.subr.mxu0 0.0
        %5758 = vmatpush2.msra.mxu0 0.0
        %5759 = vmatprep.subr.mxu0 0.0
        %5760 = vmatpush2.msra.mxu0 0.0
        %5761 = vmatprep.subr.mxu0 0.0
        %5762 = vmatpush2.msra.mxu0 0.0
        %5763 = vmatprep.subr.mxu0 0.0
        %5764 = vmatpush2.msra.mxu0 0.0
        %5765 = vmatprep.subr.mxu0 0.0
        %5766 = vmatpush2.msra.mxu0 0.0
        %5767 = vmatprep.mubr.f32.mxu0 0.0
        %5768 = vmatmul.mubr.f32.gmra.mxu0 %v5603
        %v5769 = vpop.f32.mrf.mxu0
        %v5770 = vadd.f32 0.0, %v5769
        %v5771 = vpop.f32.mrf.mxu0
        %v5772 = vadd.f32 0.0, %v5771
        %5773 = vmatprep.mubr.f32.mxu0 0.0
        %5774 = vmatmul.mubr.f32.gmra.mxu0 %v5606
        %v5775 = vpop.f32.mrf.mxu0
        %v5776 = vadd.f32 0.0, %v5775
        %v5777 = vpop.f32.mrf.mxu0
        %v5778 = vadd.f32 0.0, %v5777
        %5779 = vmatprep.mubr.f32.mxu0 0.0
        %5780 = vmatmul.mubr.f32.gmra.mxu0 %v5609
        %v5781 = vpop.f32.mrf.mxu0
        %v5782 = vadd.f32 0.0, %v5781
        %v5783 = vpop.f32.mrf.mxu0
        %v5784 = vadd.f32 0.0, %v5783
        %5785 = vmatprep.mubr.f32.mxu0 0.0
        %5786 = vmatmul.mubr.f32.gmra.mxu0 %v5612
        %v5787 = vpop.f32.mrf.mxu0
        %v5788 = vadd.f32 0.0, %v5787
        %v5789 = vpop.f32.mrf.mxu0
        %v5790 = vadd.f32 0.0, %v5789
        %5791 = vdwg.mxu0
        %v5792 = vadd.f32 %v5580, %v5681
        %v5793 = vadd.f32 %v5584, %v5683
        %v5794 = vadd.f32 %v5588, %v5770
        %v5795 = vadd.f32 %v5592, %v5772
        %v5796 = vadd.f32 %v5580, %v5687
        %v5797 = vadd.f32 %v5584, %v5689
        %v5798 = vadd.f32 %v5588, %v5776
        %v5799 = vadd.f32 %v5592, %v5778
        %v5800 = vadd.f32 %v5580, %v5693
        %v5801 = vadd.f32 %v5584, %v5695
        %v5802 = vadd.f32 %v5588, %v5782
        %v5803 = vadd.f32 %v5592, %v5784
        %v5804 = vadd.f32 %v5580, %v5699
        %v5805 = vadd.f32 %v5584, %v5701
        %v5806 = vadd.f32 %v5588, %v5788
        %v5807 = vadd.f32 %v5592, %v5790
        %s5808 = scalar_lea.vmem %s5, 32
        %v5809 = vld [vmem:[%s5808] sm:$0xff]
        %v5810 = vld [vmem:[%s5808 + $0x8] sm:$0xff]
        %v5811 = vld [vmem:[%s5808 + $0x10] sm:$0xff]
        %v5812 = vld [vmem:[%s5808 + $0x18] sm:$0xff]
        %v5814 = vsel %vm5601, %v5809, 0
        %v5817 = vsel %vm5601, %v5810, 0
        %v5820 = vsel %vm5601, %v5811, 0
        %v5823 = vsel %vm5601, %v5812, 0
        %5825 = vmatprep.subr.mxu0 0.0
        %5826 = vmatpush1.msra.mxu0 0.0
        %5827 = vmatprep.subr.mxu0 0.0
        %5828 = vmatpush1.msra.mxu0 0.0
        %5829 = vmatprep.subr.mxu0 0.0
        %5830 = vmatpush1.msra.mxu0 0.0
        %5831 = vmatprep.subr.mxu0 0.0
        %5832 = vmatpush1.msra.mxu0 0.0
        %5833 = vmatprep.subr.mxu0 0.0
        %5834 = vmatpush1.msra.mxu0 0.0
        %5835 = vmatprep.subr.mxu0 0.0
        %5836 = vmatpush1.msra.mxu0 0.0
        %5837 = vmatprep.subr.mxu0 0.0
        %5838 = vmatpush1.msra.mxu0 0.0
        %5839 = vmatprep.subr.mxu0 0.0
        %5840 = vmatpush1.msra.mxu0 0.0
        %5841 = vmatprep.subr.mxu0 0.0
        %5842 = vmatpush1.msra.mxu0 0.0
        %5843 = vmatprep.subr.mxu0 0.0
        %5844 = vmatpush1.msra.mxu0 0.0
        %5845 = vmatprep.subr.mxu0 0.0
        %5846 = vmatpush1.msra.mxu0 0.0
        %5847 = vmatprep.subr.mxu0 0.0
        %5848 = vmatpush1.msra.mxu0 0.0
        %5849 = vmatprep.subr.mxu0 0.0
        %5850 = vmatpush1.msra.mxu0 0.0
        %5851 = vmatprep.subr.mxu0 0.0
        %5852 = vmatpush1.msra.mxu0 0.0
        %5853 = vmatprep.subr.mxu0 %v4803
        %5854 = vmatpush1.msra.mxu0 %v4801
        %5855 = vmatprep.subr.mxu0 %v4797
        %5856 = vmatpush1.msra.mxu0 %v4795
        %5857 = vmatprep.subr.mxu0 0.0
        %5858 = vmatpush2.msra.mxu0 0.0
        %5859 = vmatprep.subr.mxu0 0.0
        %5860 = vmatpush2.msra.mxu0 0.0
        %5861 = vmatprep.subr.mxu0 0.0
        %5862 = vmatpush2.msra.mxu0 0.0
        %5863 = vmatprep.subr.mxu0 0.0
        %5864 = vmatpush2.msra.mxu0 0.0
        %5865 = vmatprep.subr.mxu0 0.0
        %5866 = vmatpush2.msra.mxu0 0.0
        %5867 = vmatprep.subr.mxu0 0.0
        %5868 = vmatpush2.msra.mxu0 0.0
        %5869 = vmatprep.subr.mxu0 0.0
        %5870 = vmatpush2.msra.mxu0 0.0
        %5871 = vmatprep.subr.mxu0 0.0
        %5872 = vmatpush2.msra.mxu0 0.0
        %5873 = vmatprep.subr.mxu0 0.0
        %5874 = vmatpush2.msra.mxu0 0.0
        %5875 = vmatprep.subr.mxu0 0.0
        %5876 = vmatpush2.msra.mxu0 0.0
        %5877 = vmatprep.subr.mxu0 0.0
        %5878 = vmatpush2.msra.mxu0 0.0
        %5879 = vmatprep.subr.mxu0 0.0
        %5880 = vmatpush2.msra.mxu0 0.0
        %5881 = vmatprep.subr.mxu0 0.0
        %5882 = vmatpush2.msra.mxu0 0.0
        %5883 = vmatprep.subr.mxu0 0.0
        %5884 = vmatpush2.msra.mxu0 0.0
        %5885 = vmatprep.subr.mxu0 0.0
        %5886 = vmatpush2.msra.mxu0 0.0
        %5887 = vmatprep.subr.mxu0 0.0
        %5888 = vmatpush2.msra.mxu0 0.0
        %5889 = vmatprep.mubr.f32.mxu0 0.0
        %5890 = vmatmul.mubr.f32.gmra.mxu0 %v5814
        %v5891 = vpop.f32.mrf.mxu0
        %v5892 = vadd.f32 0.0, %v5891
        %v5893 = vpop.f32.mrf.mxu0
        %v5894 = vadd.f32 0.0, %v5893
        %5895 = vmatprep.mubr.f32.mxu0 0.0
        %5896 = vmatmul.mubr.f32.gmra.mxu0 %v5817
        %v5897 = vpop.f32.mrf.mxu0
        %v5898 = vadd.f32 0.0, %v5897
        %v5899 = vpop.f32.mrf.mxu0
        %v5900 = vadd.f32 0.0, %v5899
        %5901 = vmatprep.mubr.f32.mxu0 0.0
        %5902 = vmatmul.mubr.f32.gmra.mxu0 %v5820
        %v5903 = vpop.f32.mrf.mxu0
        %v5904 = vadd.f32 0.0, %v5903
        %v5905 = vpop.f32.mrf.mxu0
        %v5906 = vadd.f32 0.0, %v5905
        %5907 = vmatprep.mubr.f32.mxu0 0.0
        %5908 = vmatmul.mubr.f32.gmra.mxu0 %v5823
        %v5909 = vpop.f32.mrf.mxu0
        %v5910 = vadd.f32 0.0, %v5909
        %v5911 = vpop.f32.mrf.mxu0
        %v5912 = vadd.f32 0.0, %v5911
        %5913 = vdwg.mxu0
        %5914 = vmatprep.subr.mxu0 0.0
        %5915 = vmatpush1.msra.mxu0 0.0
        %5916 = vmatprep.subr.mxu0 0.0
        %5917 = vmatpush1.msra.mxu0 0.0
        %5918 = vmatprep.subr.mxu0 0.0
        %5919 = vmatpush1.msra.mxu0 0.0
        %5920 = vmatprep.subr.mxu0 0.0
        %5921 = vmatpush1.msra.mxu0 0.0
        %5922 = vmatprep.subr.mxu0 0.0
        %5923 = vmatpush1.msra.mxu0 0.0
        %5924 = vmatprep.subr.mxu0 0.0
        %5925 = vmatpush1.msra.mxu0 0.0
        %5926 = vmatprep.subr.mxu0 0.0
        %5927 = vmatpush1.msra.mxu0 0.0
        %5928 = vmatprep.subr.mxu0 0.0
        %5929 = vmatpush1.msra.mxu0 0.0
        %5930 = vmatprep.subr.mxu0 0.0
        %5931 = vmatpush1.msra.mxu0 0.0
        %5932 = vmatprep.subr.mxu0 0.0
        %5933 = vmatpush1.msra.mxu0 0.0
        %5934 = vmatprep.subr.mxu0 0.0
        %5935 = vmatpush1.msra.mxu0 0.0
        %5936 = vmatprep.subr.mxu0 0.0
        %5937 = vmatpush1.msra.mxu0 0.0
        %5938 = vmatprep.subr.mxu0 0.0
        %5939 = vmatpush1.msra.mxu0 0.0
        %5940 = vmatprep.subr.mxu0 0.0
        %5941 = vmatpush1.msra.mxu0 0.0
        %5942 = vmatprep.subr.mxu0 %v4957
        %5943 = vmatpush1.msra.mxu0 %v4955
        %5944 = vmatprep.subr.mxu0 %v4951
        %5945 = vmatpush1.msra.mxu0 %v4949
        %5946 = vmatprep.subr.mxu0 0.0
        %5947 = vmatpush2.msra.mxu0 0.0
        %5948 = vmatprep.subr.mxu0 0.0
        %5949 = vmatpush2.msra.mxu0 0.0
        %5950 = vmatprep.subr.mxu0 0.0
        %5951 = vmatpush2.msra.mxu0 0.0
        %5952 = vmatprep.subr.mxu0 0.0
        %5953 = vmatpush2.msra.mxu0 0.0
        %5954 = vmatprep.subr.mxu0 0.0
        %5955 = vmatpush2.msra.mxu0 0.0
        %5956 = vmatprep.subr.mxu0 0.0
        %5957 = vmatpush2.msra.mxu0 0.0
        %5958 = vmatprep.subr.mxu0 0.0
        %5959 = vmatpush2.msra.mxu0 0.0
        %5960 = vmatprep.subr.mxu0 0.0
        %5961 = vmatpush2.msra.mxu0 0.0
        %5962 = vmatprep.subr.mxu0 0.0
        %5963 = vmatpush2.msra.mxu0 0.0
        %5964 = vmatprep.subr.mxu0 0.0
        %5965 = vmatpush2.msra.mxu0 0.0
        %5966 = vmatprep.subr.mxu0 0.0
        %5967 = vmatpush2.msra.mxu0 0.0
        %5968 = vmatprep.subr.mxu0 0.0
        %5969 = vmatpush2.msra.mxu0 0.0
        %5970 = vmatprep.subr.mxu0 0.0
        %5971 = vmatpush2.msra.mxu0 0.0
        %5972 = vmatprep.subr.mxu0 0.0
        %5973 = vmatpush2.msra.mxu0 0.0
        %5974 = vmatprep.subr.mxu0 0.0
        %5975 = vmatpush2.msra.mxu0 0.0
        %5976 = vmatprep.subr.mxu0 0.0
        %5977 = vmatpush2.msra.mxu0 0.0
        %5978 = vmatprep.mubr.f32.mxu0 0.0
        %5979 = vmatmul.mubr.f32.gmra.mxu0 %v5814
        %v5980 = vpop.f32.mrf.mxu0
        %v5981 = vadd.f32 0.0, %v5980
        %v5982 = vpop.f32.mrf.mxu0
        %v5983 = vadd.f32 0.0, %v5982
        %5984 = vmatprep.mubr.f32.mxu0 0.0
        %5985 = vmatmul.mubr.f32.gmra.mxu0 %v5817
        %v5986 = vpop.f32.mrf.mxu0
        %v5987 = vadd.f32 0.0, %v5986
        %v5988 = vpop.f32.mrf.mxu0
        %v5989 = vadd.f32 0.0, %v5988
        %5990 = vmatprep.mubr.f32.mxu0 0.0
        %5991 = vmatmul.mubr.f32.gmra.mxu0 %v5820
        %v5992 = vpop.f32.mrf.mxu0
        %v5993 = vadd.f32 0.0, %v5992
        %v5994 = vpop.f32.mrf.mxu0
        %v5995 = vadd.f32 0.0, %v5994
        %5996 = vmatprep.mubr.f32.mxu0 0.0
        %5997 = vmatmul.mubr.f32.gmra.mxu0 %v5823
        %v5998 = vpop.f32.mrf.mxu0
        %v5999 = vadd.f32 0.0, %v5998
        %v6000 = vpop.f32.mrf.mxu0
        %v6001 = vadd.f32 0.0, %v6000
        %6002 = vdwg.mxu0
        %v6003 = vadd.f32 %v5792, %v5892
        %v6004 = vadd.f32 %v5793, %v5894
        %v6005 = vadd.f32 %v5794, %v5981
        %v6006 = vadd.f32 %v5795, %v5983
        %v6007 = vadd.f32 %v5796, %v5898
        %v6008 = vadd.f32 %v5797, %v5900
        %v6009 = vadd.f32 %v5798, %v5987
        %v6010 = vadd.f32 %v5799, %v5989
        %v6011 = vadd.f32 %v5800, %v5904
        %v6012 = vadd.f32 %v5801, %v5906
        %v6013 = vadd.f32 %v5802, %v5993
        %v6014 = vadd.f32 %v5803, %v5995
        %v6015 = vadd.f32 %v5804, %v5910
        %v6016 = vadd.f32 %v5805, %v5912
        %v6017 = vadd.f32 %v5806, %v5999
        %v6018 = vadd.f32 %v5807, %v6001
        %s6019 = scalar_lea.vmem %s5, 64
        %v6020 = vld [vmem:[%s6019] sm:$0xff]
        %v6021 = vld [vmem:[%s6019 + $0x8] sm:$0xff]
        %v6022 = vld [vmem:[%s6019 + $0x10] sm:$0xff]
        %v6023 = vld [vmem:[%s6019 + $0x18] sm:$0xff]
        %v6025 = vsel %vm5601, %v6020, 0
        %v6028 = vsel %vm5601, %v6021, 0
        %v6031 = vsel %vm5601, %v6022, 0
        %v6034 = vsel %vm5601, %v6023, 0
        %6036 = vmatprep.subr.mxu0 0.0
        %6037 = vmatpush1.msra.mxu0 0.0
        %6038 = vmatprep.subr.mxu0 0.0
        %6039 = vmatpush1.msra.mxu0 0.0
        %6040 = vmatprep.subr.mxu0 0.0
        %6041 = vmatpush1.msra.mxu0 0.0
        %6042 = vmatprep.subr.mxu0 0.0
        %6043 = vmatpush1.msra.mxu0 0.0
        %6044 = vmatprep.subr.mxu0 0.0
        %6045 = vmatpush1.msra.mxu0 0.0
        %6046 = vmatprep.subr.mxu0 0.0
        %6047 = vmatpush1.msra.mxu0 0.0
        %6048 = vmatprep.subr.mxu0 0.0
        %6049 = vmatpush1.msra.mxu0 0.0
        %6050 = vmatprep.subr.mxu0 0.0
        %6051 = vmatpush1.msra.mxu0 0.0
        %6052 = vmatprep.subr.mxu0 0.0
        %6053 = vmatpush1.msra.mxu0 0.0
        %6054 = vmatprep.subr.mxu0 0.0
        %6055 = vmatpush1.msra.mxu0 0.0
        %6056 = vmatprep.subr.mxu0 0.0
        %6057 = vmatpush1.msra.mxu0 0.0
        %6058 = vmatprep.subr.mxu0 0.0
        %6059 = vmatpush1.msra.mxu0 0.0
        %6060 = vmatprep.subr.mxu0 0.0
        %6061 = vmatpush1.msra.mxu0 0.0
        %6062 = vmatprep.subr.mxu0 0.0
        %6063 = vmatpush1.msra.mxu0 0.0
        %6064 = vmatprep.subr.mxu0 %v5111
        %6065 = vmatpush1.msra.mxu0 %v5109
        %6066 = vmatprep.subr.mxu0 %v5105
        %6067 = vmatpush1.msra.mxu0 %v5103
        %6068 = vmatprep.subr.mxu0 0.0
        %6069 = vmatpush2.msra.mxu0 0.0
        %6070 = vmatprep.subr.mxu0 0.0
        %6071 = vmatpush2.msra.mxu0 0.0
        %6072 = vmatprep.subr.mxu0 0.0
        %6073 = vmatpush2.msra.mxu0 0.0
        %6074 = vmatprep.subr.mxu0 0.0
        %6075 = vmatpush2.msra.mxu0 0.0
        %6076 = vmatprep.subr.mxu0 0.0
        %6077 = vmatpush2.msra.mxu0 0.0
        %6078 = vmatprep.subr.mxu0 0.0
        %6079 = vmatpush2.msra.mxu0 0.0
        %6080 = vmatprep.subr.mxu0 0.0
        %6081 = vmatpush2.msra.mxu0 0.0
        %6082 = vmatprep.subr.mxu0 0.0
        %6083 = vmatpush2.msra.mxu0 0.0
        %6084 = vmatprep.subr.mxu0 0.0
        %6085 = vmatpush2.msra.mxu0 0.0
        %6086 = vmatprep.subr.mxu0 0.0
        %6087 = vmatpush2.msra.mxu0 0.0
        %6088 = vmatprep.subr.mxu0 0.0
        %6089 = vmatpush2.msra.mxu0 0.0
        %6090 = vmatprep.subr.mxu0 0.0
        %6091 = vmatpush2.msra.mxu0 0.0
        %6092 = vmatprep.subr.mxu0 0.0
        %6093 = vmatpush2.msra.mxu0 0.0
        %6094 = vmatprep.subr.mxu0 0.0
        %6095 = vmatpush2.msra.mxu0 0.0
        %6096 = vmatprep.subr.mxu0 0.0
        %6097 = vmatpush2.msra.mxu0 0.0
        %6098 = vmatprep.subr.mxu0 0.0
        %6099 = vmatpush2.msra.mxu0 0.0
        %6100 = vmatprep.mubr.f32.mxu0 0.0
        %6101 = vmatmul.mubr.f32.gmra.mxu0 %v6025
        %v6102 = vpop.f32.mrf.mxu0
        %v6103 = vadd.f32 0.0, %v6102
        %v6104 = vpop.f32.mrf.mxu0
        %v6105 = vadd.f32 0.0, %v6104
        %6106 = vmatprep.mubr.f32.mxu0 0.0
        %6107 = vmatmul.mubr.f32.gmra.mxu0 %v6028
        %v6108 = vpop.f32.mrf.mxu0
        %v6109 = vadd.f32 0.0, %v6108
        %v6110 = vpop.f32.mrf.mxu0
        %v6111 = vadd.f32 0.0, %v6110
        %6112 = vmatprep.mubr.f32.mxu0 0.0
        %6113 = vmatmul.mubr.f32.gmra.mxu0 %v6031
        %v6114 = vpop.f32.mrf.mxu0
        %v6115 = vadd.f32 0.0, %v6114
        %v6116 = vpop.f32.mrf.mxu0
        %v6117 = vadd.f32 0.0, %v6116
        %6118 = vmatprep.mubr.f32.mxu0 0.0
        %6119 = vmatmul.mubr.f32.gmra.mxu0 %v6034
        %v6120 = vpop.f32.mrf.mxu0
        %v6121 = vadd.f32 0.0, %v6120
        %v6122 = vpop.f32.mrf.mxu0
        %v6123 = vadd.f32 0.0, %v6122
        %6124 = vdwg.mxu0
        %6125 = vmatprep.subr.mxu0 0.0
        %6126 = vmatpush1.msra.mxu0 0.0
        %6127 = vmatprep.subr.mxu0 0.0
        %6128 = vmatpush1.msra.mxu0 0.0
        %6129 = vmatprep.subr.mxu0 0.0
        %6130 = vmatpush1.msra.mxu0 0.0
        %6131 = vmatprep.subr.mxu0 0.0
        %6132 = vmatpush1.msra.mxu0 0.0
        %6133 = vmatprep.subr.mxu0 0.0
        %6134 = vmatpush1.msra.mxu0 0.0
        %6135 = vmatprep.subr.mxu0 0.0
        %6136 = vmatpush1.msra.mxu0 0.0
        %6137 = vmatprep.subr.mxu0 0.0
        %6138 = vmatpush1.msra.mxu0 0.0
        %6139 = vmatprep.subr.mxu0 0.0
        %6140 = vmatpush1.msra.mxu0 0.0
        %6141 = vmatprep.subr.mxu0 0.0
        %6142 = vmatpush1.msra.mxu0 0.0
        %6143 = vmatprep.subr.mxu0 0.0
        %6144 = vmatpush1.msra.mxu0 0.0
        %6145 = vmatprep.subr.mxu0 0.0
        %6146 = vmatpush1.msra.mxu0 0.0
        %6147 = vmatprep.subr.mxu0 0.0
        %6148 = vmatpush1.msra.mxu0 0.0
        %6149 = vmatprep.subr.mxu0 0.0
        %6150 = vmatpush1.msra.mxu0 0.0
        %6151 = vmatprep.subr.mxu0 0.0
        %6152 = vmatpush1.msra.mxu0 0.0
        %6153 = vmatprep.subr.mxu0 %v5265
        %6154 = vmatpush1.msra.mxu0 %v5263
        %6155 = vmatprep.subr.mxu0 %v5259
        %6156 = vmatpush1.msra.mxu0 %v5257
        %6157 = vmatprep.subr.mxu0 0.0
        %6158 = vmatpush2.msra.mxu0 0.0
        %6159 = vmatprep.subr.mxu0 0.0
        %6160 = vmatpush2.msra.mxu0 0.0
        %6161 = vmatprep.subr.mxu0 0.0
        %6162 = vmatpush2.msra.mxu0 0.0
        %6163 = vmatprep.subr.mxu0 0.0
        %6164 = vmatpush2.msra.mxu0 0.0
        %6165 = vmatprep.subr.mxu0 0.0
        %6166 = vmatpush2.msra.mxu0 0.0
        %6167 = vmatprep.subr.mxu0 0.0
        %6168 = vmatpush2.msra.mxu0 0.0
        %6169 = vmatprep.subr.mxu0 0.0
        %6170 = vmatpush2.msra.mxu0 0.0
        %6171 = vmatprep.subr.mxu0 0.0
        %6172 = vmatpush2.msra.mxu0 0.0
        %6173 = vmatprep.subr.mxu0 0.0
        %6174 = vmatpush2.msra.mxu0 0.0
        %6175 = vmatprep.subr.mxu0 0.0
        %6176 = vmatpush2.msra.mxu0 0.0
        %6177 = vmatprep.subr.mxu0 0.0
        %6178 = vmatpush2.msra.mxu0 0.0
        %6179 = vmatprep.subr.mxu0 0.0
        %6180 = vmatpush2.msra.mxu0 0.0
        %6181 = vmatprep.subr.mxu0 0.0
        %6182 = vmatpush2.msra.mxu0 0.0
        %6183 = vmatprep.subr.mxu0 0.0
        %6184 = vmatpush2.msra.mxu0 0.0
        %6185 = vmatprep.subr.mxu0 0.0
        %6186 = vmatpush2.msra.mxu0 0.0
        %6187 = vmatprep.subr.mxu0 0.0
        %6188 = vmatpush2.msra.mxu0 0.0
        %6189 = vmatprep.mubr.f32.mxu0 0.0
        %6190 = vmatmul.mubr.f32.gmra.mxu0 %v6025
        %v6191 = vpop.f32.mrf.mxu0
        %v6192 = vadd.f32 0.0, %v6191
        %v6193 = vpop.f32.mrf.mxu0
        %v6194 = vadd.f32 0.0, %v6193
        %6195 = vmatprep.mubr.f32.mxu0 0.0
        %6196 = vmatmul.mubr.f32.gmra.mxu0 %v6028
        %v6197 = vpop.f32.mrf.mxu0
        %v6198 = vadd.f32 0.0, %v6197
        %v6199 = vpop.f32.mrf.mxu0
        %v6200 = vadd.f32 0.0, %v6199
        %6201 = vmatprep.mubr.f32.mxu0 0.0
        %6202 = vmatmul.mubr.f32.gmra.mxu0 %v6031
        %v6203 = vpop.f32.mrf.mxu0
        %v6204 = vadd.f32 0.0, %v6203
        %v6205 = vpop.f32.mrf.mxu0
        %v6206 = vadd.f32 0.0, %v6205
        %6207 = vmatprep.mubr.f32.mxu0 0.0
        %6208 = vmatmul.mubr.f32.gmra.mxu0 %v6034
        %v6209 = vpop.f32.mrf.mxu0
        %v6210 = vadd.f32 0.0, %v6209
        %v6211 = vpop.f32.mrf.mxu0
        %v6212 = vadd.f32 0.0, %v6211
        %6213 = vdwg.mxu0
        %v6214 = vadd.f32 %v6003, %v6103
        %v6215 = vadd.f32 %v6004, %v6105
        %v6216 = vadd.f32 %v6005, %v6192
        %v6217 = vadd.f32 %v6006, %v6194
        %v6218 = vadd.f32 %v6007, %v6109
        %v6219 = vadd.f32 %v6008, %v6111
        %v6220 = vadd.f32 %v6009, %v6198
        %v6221 = vadd.f32 %v6010, %v6200
        %v6222 = vadd.f32 %v6011, %v6115
        %v6223 = vadd.f32 %v6012, %v6117
        %v6224 = vadd.f32 %v6013, %v6204
        %v6225 = vadd.f32 %v6014, %v6206
        %v6226 = vadd.f32 %v6015, %v6121
        %v6227 = vadd.f32 %v6016, %v6123
        %v6228 = vadd.f32 %v6017, %v6210
        %v6229 = vadd.f32 %v6018, %v6212
        %s6230 = scalar_lea.vmem %s5, 96
        %v6231 = vld [vmem:[%s6230] sm:$0xff]
        %v6232 = vld [vmem:[%s6230 + $0x8] sm:$0xff]
        %v6233 = vld [vmem:[%s6230 + $0x10] sm:$0xff]
        %v6234 = vld [vmem:[%s6230 + $0x18] sm:$0xff]
        %v6236 = vsel %vm5601, %v6231, 0
        %v6239 = vsel %vm5601, %v6232, 0
        %v6242 = vsel %vm5601, %v6233, 0
        %v6245 = vsel %vm5601, %v6234, 0
        %6247 = vmatprep.subr.mxu0 0.0
        %6248 = vmatpush1.msra.mxu0 0.0
        %6249 = vmatprep.subr.mxu0 0.0
        %6250 = vmatpush1.msra.mxu0 0.0
        %6251 = vmatprep.subr.mxu0 0.0
        %6252 = vmatpush1.msra.mxu0 0.0
        %6253 = vmatprep.subr.mxu0 0.0
        %6254 = vmatpush1.msra.mxu0 0.0
        %6255 = vmatprep.subr.mxu0 0.0
        %6256 = vmatpush1.msra.mxu0 0.0
        %6257 = vmatprep.subr.mxu0 0.0
        %6258 = vmatpush1.msra.mxu0 0.0
        %6259 = vmatprep.subr.mxu0 0.0
        %6260 = vmatpush1.msra.mxu0 0.0
        %6261 = vmatprep.subr.mxu0 0.0
        %6262 = vmatpush1.msra.mxu0 0.0
        %6263 = vmatprep.subr.mxu0 0.0
        %6264 = vmatpush1.msra.mxu0 0.0
        %6265 = vmatprep.subr.mxu0 0.0
        %6266 = vmatpush1.msra.mxu0 0.0
        %6267 = vmatprep.subr.mxu0 0.0
        %6268 = vmatpush1.msra.mxu0 0.0
        %6269 = vmatprep.subr.mxu0 0.0
        %6270 = vmatpush1.msra.mxu0 0.0
        %6271 = vmatprep.subr.mxu0 0.0
        %6272 = vmatpush1.msra.mxu0 0.0
        %6273 = vmatprep.subr.mxu0 0.0
        %6274 = vmatpush1.msra.mxu0 0.0
        %6275 = vmatprep.subr.mxu0 %v5419
        %6276 = vmatpush1.msra.mxu0 %v5417
        %6277 = vmatprep.subr.mxu0 %v5413
        %6278 = vmatpush1.msra.mxu0 %v5411
        %6279 = vmatprep.subr.mxu0 0.0
        %6280 = vmatpush2.msra.mxu0 0.0
        %6281 = vmatprep.subr.mxu0 0.0
        %6282 = vmatpush2.msra.mxu0 0.0
        %6283 = vmatprep.subr.mxu0 0.0
        %6284 = vmatpush2.msra.mxu0 0.0
        %6285 = vmatprep.subr.mxu0 0.0
        %6286 = vmatpush2.msra.mxu0 0.0
        %6287 = vmatprep.subr.mxu0 0.0
        %6288 = vmatpush2.msra.mxu0 0.0
        %6289 = vmatprep.subr.mxu0 0.0
        %6290 = vmatpush2.msra.mxu0 0.0
        %6291 = vmatprep.subr.mxu0 0.0
        %6292 = vmatpush2.msra.mxu0 0.0
        %6293 = vmatprep.subr.mxu0 0.0
        %6294 = vmatpush2.msra.mxu0 0.0
        %6295 = vmatprep.subr.mxu0 0.0
        %6296 = vmatpush2.msra.mxu0 0.0
        %6297 = vmatprep.subr.mxu0 0.0
        %6298 = vmatpush2.msra.mxu0 0.0
        %6299 = vmatprep.subr.mxu0 0.0
        %6300 = vmatpush2.msra.mxu0 0.0
        %6301 = vmatprep.subr.mxu0 0.0
        %6302 = vmatpush2.msra.mxu0 0.0
        %6303 = vmatprep.subr.mxu0 0.0
        %6304 = vmatpush2.msra.mxu0 0.0
        %6305 = vmatprep.subr.mxu0 0.0
        %6306 = vmatpush2.msra.mxu0 0.0
        %6307 = vmatprep.subr.mxu0 0.0
        %6308 = vmatpush2.msra.mxu0 0.0
        %6309 = vmatprep.subr.mxu0 0.0
        %6310 = vmatpush2.msra.mxu0 0.0
        %6311 = vmatprep.mubr.f32.mxu0 0.0
        %6312 = vmatmul.mubr.f32.gmra.mxu0 %v6236
        %v6313 = vpop.f32.mrf.mxu0
        %v6314 = vadd.f32 0.0, %v6313
        %v6315 = vpop.f32.mrf.mxu0
        %v6316 = vadd.f32 0.0, %v6315
        %6317 = vmatprep.mubr.f32.mxu0 0.0
        %6318 = vmatmul.mubr.f32.gmra.mxu0 %v6239
        %v6319 = vpop.f32.mrf.mxu0
        %v6320 = vadd.f32 0.0, %v6319
        %v6321 = vpop.f32.mrf.mxu0
        %v6322 = vadd.f32 0.0, %v6321
        %6323 = vmatprep.mubr.f32.mxu0 0.0
        %6324 = vmatmul.mubr.f32.gmra.mxu0 %v6242
        %v6325 = vpop.f32.mrf.mxu0
        %v6326 = vadd.f32 0.0, %v6325
        %v6327 = vpop.f32.mrf.mxu0
        %v6328 = vadd.f32 0.0, %v6327
        %6329 = vmatprep.mubr.f32.mxu0 0.0
        %6330 = vmatmul.mubr.f32.gmra.mxu0 %v6245
        %v6331 = vpop.f32.mrf.mxu0
        %v6332 = vadd.f32 0.0, %v6331
        %v6333 = vpop.f32.mrf.mxu0
        %v6334 = vadd.f32 0.0, %v6333
        %6335 = vdwg.mxu0
        %6336 = vmatprep.subr.mxu0 0.0
        %6337 = vmatpush1.msra.mxu0 0.0
        %6338 = vmatprep.subr.mxu0 0.0
        %6339 = vmatpush1.msra.mxu0 0.0
        %6340 = vmatprep.subr.mxu0 0.0
        %6341 = vmatpush1.msra.mxu0 0.0
        %6342 = vmatprep.subr.mxu0 0.0
        %6343 = vmatpush1.msra.mxu0 0.0
        %6344 = vmatprep.subr.mxu0 0.0
        %6345 = vmatpush1.msra.mxu0 0.0
        %6346 = vmatprep.subr.mxu0 0.0
        %6347 = vmatpush1.msra.mxu0 0.0
        %6348 = vmatprep.subr.mxu0 0.0
        %6349 = vmatpush1.msra.mxu0 0.0
        %6350 = vmatprep.subr.mxu0 0.0
        %6351 = vmatpush1.msra.mxu0 0.0
        %6352 = vmatprep.subr.mxu0 0.0
        %6353 = vmatpush1.msra.mxu0 0.0
        %6354 = vmatprep.subr.mxu0 0.0
        %6355 = vmatpush1.msra.mxu0 0.0
        %6356 = vmatprep.subr.mxu0 0.0
        %6357 = vmatpush1.msra.mxu0 0.0
        %6358 = vmatprep.subr.mxu0 0.0
        %6359 = vmatpush1.msra.mxu0 0.0
        %6360 = vmatprep.subr.mxu0 0.0
        %6361 = vmatpush1.msra.mxu0 0.0
        %6362 = vmatprep.subr.mxu0 0.0
        %6363 = vmatpush1.msra.mxu0 0.0
        %6364 = vmatprep.subr.mxu0 %v5573
        %6365 = vmatpush1.msra.mxu0 %v5571
        %6366 = vmatprep.subr.mxu0 %v5567
        %6367 = vmatpush1.msra.mxu0 %v5565
        %6368 = vmatprep.subr.mxu0 0.0
        %6369 = vmatpush2.msra.mxu0 0.0
        %6370 = vmatprep.subr.mxu0 0.0
        %6371 = vmatpush2.msra.mxu0 0.0
        %6372 = vmatprep.subr.mxu0 0.0
        %6373 = vmatpush2.msra.mxu0 0.0
        %6374 = vmatprep.subr.mxu0 0.0
        %6375 = vmatpush2.msra.mxu0 0.0
        %6376 = vmatprep.subr.mxu0 0.0
        %6377 = vmatpush2.msra.mxu0 0.0
        %6378 = vmatprep.subr.mxu0 0.0
        %6379 = vmatpush2.msra.mxu0 0.0
        %6380 = vmatprep.subr.mxu0 0.0
        %6381 = vmatpush2.msra.mxu0 0.0
        %6382 = vmatprep.subr.mxu0 0.0
        %6383 = vmatpush2.msra.mxu0 0.0
        %6384 = vmatprep.subr.mxu0 0.0
        %6385 = vmatpush2.msra.mxu0 0.0
        %6386 = vmatprep.subr.mxu0 0.0
        %6387 = vmatpush2.msra.mxu0 0.0
        %6388 = vmatprep.subr.mxu0 0.0
        %6389 = vmatpush2.msra.mxu0 0.0
        %6390 = vmatprep.subr.mxu0 0.0
        %6391 = vmatpush2.msra.mxu0 0.0
        %6392 = vmatprep.subr.mxu0 0.0
        %6393 = vmatpush2.msra.mxu0 0.0
        %6394 = vmatprep.subr.mxu0 0.0
        %6395 = vmatpush2.msra.mxu0 0.0
        %6396 = vmatprep.subr.mxu0 0.0
        %6397 = vmatpush2.msra.mxu0 0.0
        %6398 = vmatprep.subr.mxu0 0.0
        %6399 = vmatpush2.msra.mxu0 0.0
        %6400 = vmatprep.mubr.f32.mxu0 0.0
        %6401 = vmatmul.mubr.f32.gmra.mxu0 %v6236
        %v6402 = vpop.f32.mrf.mxu0
        %v6403 = vadd.f32 0.0, %v6402
        %v6404 = vpop.f32.mrf.mxu0
        %v6405 = vadd.f32 0.0, %v6404
        %6406 = vmatprep.mubr.f32.mxu0 0.0
        %6407 = vmatmul.mubr.f32.gmra.mxu0 %v6239
        %v6408 = vpop.f32.mrf.mxu0
        %v6409 = vadd.f32 0.0, %v6408
        %v6410 = vpop.f32.mrf.mxu0
        %v6411 = vadd.f32 0.0, %v6410
        %6412 = vmatprep.mubr.f32.mxu0 0.0
        %6413 = vmatmul.mubr.f32.gmra.mxu0 %v6242
        %v6414 = vpop.f32.mrf.mxu0
        %v6415 = vadd.f32 0.0, %v6414
        %v6416 = vpop.f32.mrf.mxu0
        %v6417 = vadd.f32 0.0, %v6416
        %6418 = vmatprep.mubr.f32.mxu0 0.0
        %6419 = vmatmul.mubr.f32.gmra.mxu0 %v6245
        %v6420 = vpop.f32.mrf.mxu0
        %v6421 = vadd.f32 0.0, %v6420
        %v6422 = vpop.f32.mrf.mxu0
        %v6423 = vadd.f32 0.0, %v6422
        %6424 = vdwg.mxu0
        %v6425 = vadd.f32 %v6214, %v6314
        %v6426 = vadd.f32 %v6215, %v6316
        %v6427 = vadd.f32 %v6216, %v6403
        %v6428 = vadd.f32 %v6217, %v6405
        %v6429 = vadd.f32 %v6218, %v6320
        %v6430 = vadd.f32 %v6219, %v6322
        %v6431 = vadd.f32 %v6220, %v6409
        %v6432 = vadd.f32 %v6221, %v6411
        %v6433 = vadd.f32 %v6222, %v6326
        %v6434 = vadd.f32 %v6223, %v6328
        %v6435 = vadd.f32 %v6224, %v6415
        %v6436 = vadd.f32 %v6225, %v6417
        %v6437 = vadd.f32 %v6226, %v6332
        %v6438 = vadd.f32 %v6227, %v6334
        %v6439 = vadd.f32 %v6228, %v6421
        %v6440 = vadd.f32 %v6229, %v6423
        %v6441 = vmax.f32 %v6425, 0.0
        %v6442 = vmax.f32 %v6426, 0.0
        %v6443 = vmax.f32 %v6427, 0.0
        %v6444 = vmax.f32 %v6428, 0.0
        %v6445 = vmax.f32 %v6429, 0.0
        %v6446 = vmax.f32 %v6430, 0.0
        %v6447 = vmax.f32 %v6431, 0.0
        %v6448 = vmax.f32 %v6432, 0.0
        %v6449 = vmax.f32 %v6433, 0.0
        %v6450 = vmax.f32 %v6434, 0.0
        %v6451 = vmax.f32 %v6435, 0.0
        %v6452 = vmax.f32 %v6436, 0.0
        %v6453 = vmax.f32 %v6437, 0.0
        %v6454 = vmax.f32 %v6438, 0.0
        %v6455 = vmax.f32 %v6439, 0.0
        %v6456 = vmax.f32 %v6440, 0.0
        %v6457 = vld [vmem:[#allocation10] sm:$0xff]
        %v6458 = vld [vmem:[#allocation10 + $0x8] sm:$0xff]
        %v6459 = vld [vmem:[#allocation10 + $0x10] sm:$0xff]
        %v6460 = vld [vmem:[#allocation10 + $0x18] sm:$0xff]
        %v6461 = vld [vmem:[#allocation10 + $0x20] sm:$0xff]
        %v6462 = vld [vmem:[#allocation10 + $0x28] sm:$0xff]
        %v6463 = vld [vmem:[#allocation10 + $0x30] sm:$0xff]
        %v6464 = vld [vmem:[#allocation10 + $0x38] sm:$0xff]
        %v6465 = vld [vmem:[#allocation10 + $0x40] sm:$0xff]
        %v6466 = vld [vmem:[#allocation10 + $0x48] sm:$0xff]
        %v6467 = vld [vmem:[#allocation10 + $0x50] sm:$0xff]
        %v6468 = vld [vmem:[#allocation10 + $0x58] sm:$0xff]
        %v6469 = vld [vmem:[#allocation10 + $0x60] sm:$0xff]
        %v6470 = vld [vmem:[#allocation10 + $0x68] sm:$0xff]
        %v6471 = vld [vmem:[#allocation10 + $0x70] sm:$0xff]
        %v6472 = vld [vmem:[#allocation10 + $0x78] sm:$0xff]
        %v6473 = vld [vmem:[#allocation10 + $0x80] sm:$0xff]
        %v6474 = vld [vmem:[#allocation10 + $0x88] sm:$0xff]
        %v6475 = vld [vmem:[#allocation10 + $0x90] sm:$0xff]
        %v6476 = vld [vmem:[#allocation10 + $0x98] sm:$0xff]
        %v6477 = vld [vmem:[#allocation10 + $0xa0] sm:$0xff]
        %v6478 = vld [vmem:[#allocation10 + $0xa8] sm:$0xff]
        %v6479 = vld [vmem:[#allocation10 + $0xb0] sm:$0xff]
        %v6480 = vld [vmem:[#allocation10 + $0xb8] sm:$0xff]
        %v6481 = vld [vmem:[#allocation10 + $0xc0] sm:$0xff]
        %v6482 = vld [vmem:[#allocation10 + $0xc8] sm:$0xff]
        %v6483 = vld [vmem:[#allocation10 + $0xd0] sm:$0xff]
        %v6484 = vld [vmem:[#allocation10 + $0xd8] sm:$0xff]
        %v6485 = vld [vmem:[#allocation10 + $0xe0] sm:$0xff]
        %v6486 = vld [vmem:[#allocation10 + $0xe8] sm:$0xff]
        %v6487 = vld [vmem:[#allocation10 + $0xf0] sm:$0xff]
        %v6488 = vld [vmem:[#allocation10 + $0xf8] sm:$0xff]
        %v6489 = vld [vmem:[#allocation10 + $0x100] sm:$0xff]
        %v6490 = vld [vmem:[#allocation10 + $0x108] sm:$0xff]
        %v6491 = vld [vmem:[#allocation10 + $0x110] sm:$0xff]
        %v6492 = vld [vmem:[#allocation10 + $0x118] sm:$0xff]
        %v6493 = vld [vmem:[#allocation10 + $0x120] sm:$0xff]
        %v6494 = vld [vmem:[#allocation10 + $0x128] sm:$0xff]
        %v6495 = vld [vmem:[#allocation10 + $0x130] sm:$0xff]
        %v6496 = vld [vmem:[#allocation10 + $0x138] sm:$0xff]
        %v6497 = vld [vmem:[#allocation10 + $0x140] sm:$0xff]
        %v6498 = vld [vmem:[#allocation10 + $0x148] sm:$0xff]
        %v6499 = vld [vmem:[#allocation10 + $0x150] sm:$0xff]
        %v6500 = vld [vmem:[#allocation10 + $0x158] sm:$0xff]
        %v6501 = vld [vmem:[#allocation10 + $0x160] sm:$0xff]
        %v6502 = vld [vmem:[#allocation10 + $0x168] sm:$0xff]
        %v6503 = vld [vmem:[#allocation10 + $0x170] sm:$0xff]
        %v6504 = vld [vmem:[#allocation10 + $0x178] sm:$0xff]
        %v6505 = vld [vmem:[#allocation10 + $0x180] sm:$0xff]
        %v6506 = vld [vmem:[#allocation10 + $0x188] sm:$0xff]
        %v6507 = vld [vmem:[#allocation10 + $0x190] sm:$0xff]
        %v6508 = vld [vmem:[#allocation10 + $0x198] sm:$0xff]
        %v6509 = vld [vmem:[#allocation10 + $0x1a0] sm:$0xff]
        %v6510 = vld [vmem:[#allocation10 + $0x1a8] sm:$0xff]
        %v6511 = vld [vmem:[#allocation10 + $0x1b0] sm:$0xff]
        %v6512 = vld [vmem:[#allocation10 + $0x1b8] sm:$0xff]
        %v6513 = vld [vmem:[#allocation10 + $0x1c0] sm:$0xff]
        %v6514 = vld [vmem:[#allocation10 + $0x1c8] sm:$0xff]
        %v6515 = vld [vmem:[#allocation10 + $0x1d0] sm:$0xff]
        %v6516 = vld [vmem:[#allocation10 + $0x1d8] sm:$0xff]
        %v6517 = vld [vmem:[#allocation10 + $0x1e0] sm:$0xff]
        %v6518 = vld [vmem:[#allocation10 + $0x1e8] sm:$0xff]
        %v6519 = vld [vmem:[#allocation10 + $0x1f0] sm:$0xff]
        %v6520 = vld [vmem:[#allocation10 + $0x1f8] sm:$0xff]
        %v6521 = vld [vmem:[#allocation10 + $0x200] sm:$0xff]
        %v6522 = vld [vmem:[#allocation10 + $0x208] sm:$0xff]
        %v6523 = vld [vmem:[#allocation10 + $0x210] sm:$0xff]
        %v6524 = vld [vmem:[#allocation10 + $0x218] sm:$0xff]
        %v6525 = vld [vmem:[#allocation10 + $0x220] sm:$0xff]
        %v6526 = vld [vmem:[#allocation10 + $0x228] sm:$0xff]
        %v6527 = vld [vmem:[#allocation10 + $0x230] sm:$0xff]
        %v6528 = vld [vmem:[#allocation10 + $0x238] sm:$0xff]
        %v6529 = vld [vmem:[#allocation10 + $0x240] sm:$0xff]
        %v6530 = vld [vmem:[#allocation10 + $0x248] sm:$0xff]
        %v6531 = vld [vmem:[#allocation10 + $0x250] sm:$0xff]
        %v6532 = vld [vmem:[#allocation10 + $0x258] sm:$0xff]
        %v6533 = vld [vmem:[#allocation10 + $0x260] sm:$0xff]
        %v6534 = vld [vmem:[#allocation10 + $0x268] sm:$0xff]
        %v6535 = vld [vmem:[#allocation10 + $0x270] sm:$0xff]
        %v6536 = vld [vmem:[#allocation10 + $0x278] sm:$0xff]
        %v6537 = vld [vmem:[#allocation10 + $0x280] sm:$0xff]
        %v6538 = vld [vmem:[#allocation10 + $0x288] sm:$0xff]
        %v6539 = vld [vmem:[#allocation10 + $0x290] sm:$0xff]
        %v6540 = vld [vmem:[#allocation10 + $0x298] sm:$0xff]
        %v6541 = vld [vmem:[#allocation10 + $0x2a0] sm:$0xff]
        %v6542 = vld [vmem:[#allocation10 + $0x2a8] sm:$0xff]
        %v6543 = vld [vmem:[#allocation10 + $0x2b0] sm:$0xff]
        %v6544 = vld [vmem:[#allocation10 + $0x2b8] sm:$0xff]
        %v6545 = vld [vmem:[#allocation10 + $0x2c0] sm:$0xff]
        %v6546 = vld [vmem:[#allocation10 + $0x2c8] sm:$0xff]
        %v6547 = vld [vmem:[#allocation10 + $0x2d0] sm:$0xff]
        %v6548 = vld [vmem:[#allocation10 + $0x2d8] sm:$0xff]
        %v6549 = vld [vmem:[#allocation10 + $0x2e0] sm:$0xff]
        %v6550 = vld [vmem:[#allocation10 + $0x2e8] sm:$0xff]
        %v6551 = vld [vmem:[#allocation10 + $0x2f0] sm:$0xff]
        %v6552 = vld [vmem:[#allocation10 + $0x2f8] sm:$0xff]
        %v6553 = vld [vmem:[#allocation10 + $0x300] sm:$0xff]
        %v6554 = vld [vmem:[#allocation10 + $0x308] sm:$0xff]
        %v6555 = vld [vmem:[#allocation10 + $0x310] sm:$0xff]
        %v6556 = vld [vmem:[#allocation10 + $0x318] sm:$0xff]
        %v6557 = vld [vmem:[#allocation10 + $0x320] sm:$0xff]
        %v6558 = vld [vmem:[#allocation10 + $0x328] sm:$0xff]
        %v6559 = vld [vmem:[#allocation10 + $0x330] sm:$0xff]
        %v6560 = vld [vmem:[#allocation10 + $0x338] sm:$0xff]
        %v6561 = vld [vmem:[#allocation10 + $0x340] sm:$0xff]
        %v6562 = vld [vmem:[#allocation10 + $0x348] sm:$0xff]
        %v6563 = vld [vmem:[#allocation10 + $0x350] sm:$0xff]
        %v6564 = vld [vmem:[#allocation10 + $0x358] sm:$0xff]
        %v6565 = vld [vmem:[#allocation10 + $0x360] sm:$0xff]
        %v6566 = vld [vmem:[#allocation10 + $0x368] sm:$0xff]
        %v6567 = vld [vmem:[#allocation10 + $0x370] sm:$0xff]
        %v6568 = vld [vmem:[#allocation10 + $0x378] sm:$0xff]
        %v6569 = vld [vmem:[#allocation10 + $0x380] sm:$0xff]
        %v6570 = vld [vmem:[#allocation10 + $0x388] sm:$0xff]
        %v6571 = vld [vmem:[#allocation10 + $0x390] sm:$0xff]
        %v6572 = vld [vmem:[#allocation10 + $0x398] sm:$0xff]
        %v6573 = vld [vmem:[#allocation10 + $0x3a0] sm:$0xff]
        %v6574 = vld [vmem:[#allocation10 + $0x3a8] sm:$0xff]
        %v6575 = vld [vmem:[#allocation10 + $0x3b0] sm:$0xff]
        %v6576 = vld [vmem:[#allocation10 + $0x3b8] sm:$0xff]
        %v6577 = vld [vmem:[#allocation10 + $0x3c0] sm:$0xff]
        %v6578 = vld [vmem:[#allocation10 + $0x3c8] sm:$0xff]
        %v6579 = vld [vmem:[#allocation10 + $0x3d0] sm:$0xff]
        %v6580 = vld [vmem:[#allocation10 + $0x3d8] sm:$0xff]
        %v6581 = vld [vmem:[#allocation10 + $0x3e0] sm:$0xff]
        %v6582 = vld [vmem:[#allocation10 + $0x3e8] sm:$0xff]
        %v6583 = vld [vmem:[#allocation10 + $0x3f0] sm:$0xff]
        %v6584 = vld [vmem:[#allocation10 + $0x3f8] sm:$0xff]
        %6585 = vmatprep.subr.mxu0 %v6488
        %6586 = vmatpush1.msra.mxu0 %v6487
        %6587 = vmatprep.subr.mxu0 %v6486
        %6588 = vmatpush1.msra.mxu0 %v6485
        %6589 = vmatprep.subr.mxu0 %v6484
        %6590 = vmatpush1.msra.mxu0 %v6483
        %6591 = vmatprep.subr.mxu0 %v6482
        %6592 = vmatpush1.msra.mxu0 %v6481
        %6593 = vmatprep.subr.mxu0 %v6480
        %6594 = vmatpush1.msra.mxu0 %v6479
        %6595 = vmatprep.subr.mxu0 %v6478
        %6596 = vmatpush1.msra.mxu0 %v6477
        %6597 = vmatprep.subr.mxu0 %v6476
        %6598 = vmatpush1.msra.mxu0 %v6475
        %6599 = vmatprep.subr.mxu0 %v6474
        %6600 = vmatpush1.msra.mxu0 %v6473
        %6601 = vmatprep.subr.mxu0 %v6472
        %6602 = vmatpush1.msra.mxu0 %v6471
        %6603 = vmatprep.subr.mxu0 %v6470
        %6604 = vmatpush1.msra.mxu0 %v6469
        %6605 = vmatprep.subr.mxu0 %v6468
        %6606 = vmatpush1.msra.mxu0 %v6467
        %6607 = vmatprep.subr.mxu0 %v6466
        %6608 = vmatpush1.msra.mxu0 %v6465
        %6609 = vmatprep.subr.mxu0 %v6464
        %6610 = vmatpush1.msra.mxu0 %v6463
        %6611 = vmatprep.subr.mxu0 %v6462
        %6612 = vmatpush1.msra.mxu0 %v6461
        %6613 = vmatprep.subr.mxu0 %v6460
        %6614 = vmatpush1.msra.mxu0 %v6459
        %6615 = vmatprep.subr.mxu0 %v6458
        %6616 = vmatpush1.msra.mxu0 %v6457
        %6617 = vmatprep.subr.mxu0 %v6520
        %6618 = vmatpush2.msra.mxu0 %v6519
        %6619 = vmatprep.subr.mxu0 %v6518
        %6620 = vmatpush2.msra.mxu0 %v6517
        %6621 = vmatprep.subr.mxu0 %v6516
        %6622 = vmatpush2.msra.mxu0 %v6515
        %6623 = vmatprep.subr.mxu0 %v6514
        %6624 = vmatpush2.msra.mxu0 %v6513
        %6625 = vmatprep.subr.mxu0 %v6512
        %6626 = vmatpush2.msra.mxu0 %v6511
        %6627 = vmatprep.subr.mxu0 %v6510
        %6628 = vmatpush2.msra.mxu0 %v6509
        %6629 = vmatprep.subr.mxu0 %v6508
        %6630 = vmatpush2.msra.mxu0 %v6507
        %6631 = vmatprep.subr.mxu0 %v6506
        %6632 = vmatpush2.msra.mxu0 %v6505
        %6633 = vmatprep.subr.mxu0 %v6504
        %6634 = vmatpush2.msra.mxu0 %v6503
        %6635 = vmatprep.subr.mxu0 %v6502
        %6636 = vmatpush2.msra.mxu0 %v6501
        %6637 = vmatprep.subr.mxu0 %v6500
        %6638 = vmatpush2.msra.mxu0 %v6499
        %6639 = vmatprep.subr.mxu0 %v6498
        %6640 = vmatpush2.msra.mxu0 %v6497
        %6641 = vmatprep.subr.mxu0 %v6496
        %6642 = vmatpush2.msra.mxu0 %v6495
        %6643 = vmatprep.subr.mxu0 %v6494
        %6644 = vmatpush2.msra.mxu0 %v6493
        %6645 = vmatprep.subr.mxu0 %v6492
        %6646 = vmatpush2.msra.mxu0 %v6491
        %6647 = vmatprep.subr.mxu0 %v6490
        %6648 = vmatpush2.msra.mxu0 %v6489
        %6649 = vmatprep.mubr.f32.mxu0 %v6442
        %6650 = vmatmul.mubr.f32.gmra.mxu0 %v6441
        %v6651 = vpop.f32.mrf.mxu0
        %v6652 = vadd.f32 0.0, %v6651
        %v6653 = vpop.f32.mrf.mxu0
        %v6654 = vadd.f32 0.0, %v6653
        %6655 = vmatprep.mubr.f32.mxu0 %v6446
        %6656 = vmatmul.mubr.f32.gmra.mxu0 %v6445
        %v6657 = vpop.f32.mrf.mxu0
        %v6658 = vadd.f32 0.0, %v6657
        %v6659 = vpop.f32.mrf.mxu0
        %v6660 = vadd.f32 0.0, %v6659
        %6661 = vmatprep.mubr.f32.mxu0 %v6450
        %6662 = vmatmul.mubr.f32.gmra.mxu0 %v6449
        %v6663 = vpop.f32.mrf.mxu0
        %v6664 = vadd.f32 0.0, %v6663
        %v6665 = vpop.f32.mrf.mxu0
        %v6666 = vadd.f32 0.0, %v6665
        %6667 = vmatprep.mubr.f32.mxu0 %v6454
        %6668 = vmatmul.mubr.f32.gmra.mxu0 %v6453
        %v6669 = vpop.f32.mrf.mxu0
        %v6670 = vadd.f32 0.0, %v6669
        %v6671 = vpop.f32.mrf.mxu0
        %v6672 = vadd.f32 0.0, %v6671
        %6673 = vdwg.mxu0
        %6674 = vmatprep.subr.mxu0 %v6552
        %6675 = vmatpush1.msra.mxu0 %v6551
        %6676 = vmatprep.subr.mxu0 %v6550
        %6677 = vmatpush1.msra.mxu0 %v6549
        %6678 = vmatprep.subr.mxu0 %v6548
        %6679 = vmatpush1.msra.mxu0 %v6547
        %6680 = vmatprep.subr.mxu0 %v6546
        %6681 = vmatpush1.msra.mxu0 %v6545
        %6682 = vmatprep.subr.mxu0 %v6544
        %6683 = vmatpush1.msra.mxu0 %v6543
        %6684 = vmatprep.subr.mxu0 %v6542
        %6685 = vmatpush1.msra.mxu0 %v6541
        %6686 = vmatprep.subr.mxu0 %v6540
        %6687 = vmatpush1.msra.mxu0 %v6539
        %6688 = vmatprep.subr.mxu0 %v6538
        %6689 = vmatpush1.msra.mxu0 %v6537
        %6690 = vmatprep.subr.mxu0 %v6536
        %6691 = vmatpush1.msra.mxu0 %v6535
        %6692 = vmatprep.subr.mxu0 %v6534
        %6693 = vmatpush1.msra.mxu0 %v6533
        %6694 = vmatprep.subr.mxu0 %v6532
        %6695 = vmatpush1.msra.mxu0 %v6531
        %6696 = vmatprep.subr.mxu0 %v6530
        %6697 = vmatpush1.msra.mxu0 %v6529
        %6698 = vmatprep.subr.mxu0 %v6528
        %6699 = vmatpush1.msra.mxu0 %v6527
        %6700 = vmatprep.subr.mxu0 %v6526
        %6701 = vmatpush1.msra.mxu0 %v6525
        %6702 = vmatprep.subr.mxu0 %v6524
        %6703 = vmatpush1.msra.mxu0 %v6523
        %6704 = vmatprep.subr.mxu0 %v6522
        %6705 = vmatpush1.msra.mxu0 %v6521
        %6706 = vmatprep.subr.mxu0 %v6584
        %6707 = vmatpush2.msra.mxu0 %v6583
        %6708 = vmatprep.subr.mxu0 %v6582
        %6709 = vmatpush2.msra.mxu0 %v6581
        %6710 = vmatprep.subr.mxu0 %v6580
        %6711 = vmatpush2.msra.mxu0 %v6579
        %6712 = vmatprep.subr.mxu0 %v6578
        %6713 = vmatpush2.msra.mxu0 %v6577
        %6714 = vmatprep.subr.mxu0 %v6576
        %6715 = vmatpush2.msra.mxu0 %v6575
        %6716 = vmatprep.subr.mxu0 %v6574
        %6717 = vmatpush2.msra.mxu0 %v6573
        %6718 = vmatprep.subr.mxu0 %v6572
        %6719 = vmatpush2.msra.mxu0 %v6571
        %6720 = vmatprep.subr.mxu0 %v6570
        %6721 = vmatpush2.msra.mxu0 %v6569
        %6722 = vmatprep.subr.mxu0 %v6568
        %6723 = vmatpush2.msra.mxu0 %v6567
        %6724 = vmatprep.subr.mxu0 %v6566
        %6725 = vmatpush2.msra.mxu0 %v6565
        %6726 = vmatprep.subr.mxu0 %v6564
        %6727 = vmatpush2.msra.mxu0 %v6563
        %6728 = vmatprep.subr.mxu0 %v6562
        %6729 = vmatpush2.msra.mxu0 %v6561
        %6730 = vmatprep.subr.mxu0 %v6560
        %6731 = vmatpush2.msra.mxu0 %v6559
        %6732 = vmatprep.subr.mxu0 %v6558
        %6733 = vmatpush2.msra.mxu0 %v6557
        %6734 = vmatprep.subr.mxu0 %v6556
        %6735 = vmatpush2.msra.mxu0 %v6555
        %6736 = vmatprep.subr.mxu0 %v6554
        %6737 = vmatpush2.msra.mxu0 %v6553
        %6738 = vmatprep.mubr.f32.mxu0 %v6444
        %6739 = vmatmul.mubr.f32.gmra.mxu0 %v6443
        %v6740 = vpop.f32.mrf.mxu0
        %v6741 = vadd.f32 %v6652, %v6740
        %v6742 = vpop.f32.mrf.mxu0
        %v6743 = vadd.f32 %v6654, %v6742
        %6744 = vmatprep.mubr.f32.mxu0 %v6448
        %6745 = vmatmul.mubr.f32.gmra.mxu0 %v6447
        %v6746 = vpop.f32.mrf.mxu0
        %v6747 = vadd.f32 %v6658, %v6746
        %v6748 = vpop.f32.mrf.mxu0
        %v6749 = vadd.f32 %v6660, %v6748
        %6750 = vmatprep.mubr.f32.mxu0 %v6452
        %6751 = vmatmul.mubr.f32.gmra.mxu0 %v6451
        %v6752 = vpop.f32.mrf.mxu0
        %v6753 = vadd.f32 %v6664, %v6752
        %v6754 = vpop.f32.mrf.mxu0
        %v6755 = vadd.f32 %v6666, %v6754
        %6756 = vmatprep.mubr.f32.mxu0 %v6456
        %6757 = vmatmul.mubr.f32.gmra.mxu0 %v6455
        %v6758 = vpop.f32.mrf.mxu0
        %v6759 = vadd.f32 %v6670, %v6758
        %v6760 = vpop.f32.mrf.mxu0
        %v6761 = vadd.f32 %v6672, %v6760
        %6762 = vdwg.mxu0
        %v6763 = vld [vmem:[#allocation11] sm:$0x1]
        %v6765 = vlaneseq
        %v6766 = vshrl.u32 %v6765, 7
        %v6767 = vsub.s32 0, %v6766
        %v6768 = vrot.slane %v6763, %v6767
        %v6770 = vld [vmem:[%s8] sm:$0xff]
        %v6771 = vld [vmem:[%s8 + $0x8] sm:$0xff]
        %v6772 = vld [vmem:[%s8 + $0x10] sm:$0xff]
        %v6773 = vld [vmem:[%s8 + $0x18] sm:$0xff]
        %v6774 = vld [vmem:[%s8 + $0x20] sm:$0xff]
        %v6775 = vld [vmem:[%s8 + $0x28] sm:$0xff]
        %v6776 = vld [vmem:[%s8 + $0x30] sm:$0xff]
        %v6777 = vld [vmem:[%s8 + $0x38] sm:$0xff]
        %vm6778 = vcmask 261120
        %v6780 = vsel %vm6778, %v6770, 0
        %v6783 = vsel %vm6778, %v6771, 0
        %v6786 = vsel %vm6778, %v6772, 0
        %v6789 = vsel %vm6778, %v6773, 0
        %v6792 = vsel %vm6778, %v6774, 0
        %v6795 = vsel %vm6778, %v6775, 0
        %v6798 = vsel %vm6778, %v6776, 0
        %v6801 = vsel %vm6778, %v6777, 0
        %6803 = vmatprep.subr.mxu0 0.0
        %6804 = vmatpush1.msra.mxu0 0.0
        %6805 = vmatprep.subr.mxu0 0.0
        %6806 = vmatpush1.msra.mxu0 0.0
        %6807 = vmatprep.subr.mxu0 0.0
        %6808 = vmatpush1.msra.mxu0 0.0
        %6809 = vmatprep.subr.mxu0 0.0
        %6810 = vmatpush1.msra.mxu0 0.0
        %6811 = vmatprep.subr.mxu0 0.0
        %6812 = vmatpush1.msra.mxu0 0.0
        %6813 = vmatprep.subr.mxu0 0.0
        %6814 = vmatpush1.msra.mxu0 0.0
        %6815 = vmatprep.subr.mxu0 0.0
        %6816 = vmatpush1.msra.mxu0 0.0
        %6817 = vmatprep.subr.mxu0 0.0
        %6818 = vmatpush1.msra.mxu0 0.0
        %6819 = vmatprep.subr.mxu0 0.0
        %6820 = vmatpush1.msra.mxu0 0.0
        %6821 = vmatprep.subr.mxu0 0.0
        %6822 = vmatpush1.msra.mxu0 0.0
        %6823 = vmatprep.subr.mxu0 0.0
        %6824 = vmatpush1.msra.mxu0 0.0
        %6825 = vmatprep.subr.mxu0 0.0
        %6826 = vmatpush1.msra.mxu0 0.0
        %6827 = vmatprep.subr.mxu0 0.0
        %6828 = vmatpush1.msra.mxu0 %v6759
        %6829 = vmatprep.subr.mxu0 0.0
        %6830 = vmatpush1.msra.mxu0 %v6753
        %6831 = vmatprep.subr.mxu0 0.0
        %6832 = vmatpush1.msra.mxu0 %v6747
        %6833 = vmatprep.subr.mxu0 0.0
        %6834 = vmatpush1.msra.mxu0 %v6741
        %6835 = vmatprep.subr.mxu0 0.0
        %6836 = vmatpush2.msra.mxu0 0.0
        %6837 = vmatprep.subr.mxu0 0.0
        %6838 = vmatpush2.msra.mxu0 0.0
        %6839 = vmatprep.subr.mxu0 0.0
        %6840 = vmatpush2.msra.mxu0 0.0
        %6841 = vmatprep.subr.mxu0 0.0
        %6842 = vmatpush2.msra.mxu0 0.0
        %6843 = vmatprep.subr.mxu0 0.0
        %6844 = vmatpush2.msra.mxu0 0.0
        %6845 = vmatprep.subr.mxu0 0.0
        %6846 = vmatpush2.msra.mxu0 0.0
        %6847 = vmatprep.subr.mxu0 0.0
        %6848 = vmatpush2.msra.mxu0 0.0
        %6849 = vmatprep.subr.mxu0 0.0
        %6850 = vmatpush2.msra.mxu0 0.0
        %6851 = vmatprep.subr.mxu0 0.0
        %6852 = vmatpush2.msra.mxu0 0.0
        %6853 = vmatprep.subr.mxu0 0.0
        %6854 = vmatpush2.msra.mxu0 0.0
        %6855 = vmatprep.subr.mxu0 0.0
        %6856 = vmatpush2.msra.mxu0 0.0
        %6857 = vmatprep.subr.mxu0 0.0
        %6858 = vmatpush2.msra.mxu0 0.0
        %6859 = vmatprep.subr.mxu0 0.0
        %6860 = vmatpush2.msra.mxu0 0.0
        %6861 = vmatprep.subr.mxu0 0.0
        %6862 = vmatpush2.msra.mxu0 0.0
        %6863 = vmatprep.subr.mxu0 0.0
        %6864 = vmatpush2.msra.mxu0 0.0
        %6865 = vmatprep.subr.mxu0 0.0
        %6866 = vmatpush2.msra.mxu0 0.0
        %6867 = vmatprep.mubr.f32.mxu0 0.0
        %6868 = vmatmul.mubr.f32.gmra.mxu0 %v6780
        %v6869 = vpop.f32.mrf.mxu0
        %v6870 = vadd.f32 0.0, %v6869
        %v6871 = vpop.f32.mrf.mxu0
        %6872 = vmatprep.mubr.f32.mxu0 0.0
        %6873 = vmatmul.mubr.f32.gmra.mxu0 %v6783
        %v6874 = vpop.f32.mrf.mxu0
        %v6875 = vadd.f32 0.0, %v6874
        %v6876 = vpop.f32.mrf.mxu0
        %6877 = vmatprep.mubr.f32.mxu0 0.0
        %6878 = vmatmul.mubr.f32.gmra.mxu0 %v6786
        %v6879 = vpop.f32.mrf.mxu0
        %v6880 = vadd.f32 0.0, %v6879
        %v6881 = vpop.f32.mrf.mxu0
        %6882 = vmatprep.mubr.f32.mxu0 0.0
        %6883 = vmatmul.mubr.f32.gmra.mxu0 %v6789
        %v6884 = vpop.f32.mrf.mxu0
        %v6885 = vadd.f32 0.0, %v6884
        %v6886 = vpop.f32.mrf.mxu0
        %6887 = vmatprep.mubr.f32.mxu0 0.0
        %6888 = vmatmul.mubr.f32.gmra.mxu0 %v6792
        %v6889 = vpop.f32.mrf.mxu0
        %v6890 = vadd.f32 0.0, %v6889
        %v6891 = vpop.f32.mrf.mxu0
        %6892 = vmatprep.mubr.f32.mxu0 0.0
        %6893 = vmatmul.mubr.f32.gmra.mxu0 %v6795
        %v6894 = vpop.f32.mrf.mxu0
        %v6895 = vadd.f32 0.0, %v6894
        %v6896 = vpop.f32.mrf.mxu0
        %6897 = vmatprep.mubr.f32.mxu0 0.0
        %6898 = vmatmul.mubr.f32.gmra.mxu0 %v6798
        %v6899 = vpop.f32.mrf.mxu0
        %v6900 = vadd.f32 0.0, %v6899
        %v6901 = vpop.f32.mrf.mxu0
        %6902 = vmatprep.mubr.f32.mxu0 0.0
        %6903 = vmatmul.mubr.f32.gmra.mxu0 %v6801
        %v6904 = vpop.f32.mrf.mxu0
        %v6905 = vadd.f32 0.0, %v6904
        %v6906 = vpop.f32.mrf.mxu0
        %6907 = vdwg.mxu0
        %v6908 = vadd.f32 %v6768, %v6870
        %v6909 = vadd.f32 %v6768, %v6875
        %v6910 = vadd.f32 %v6768, %v6880
        %v6911 = vadd.f32 %v6768, %v6885
        %v6912 = vadd.f32 %v6768, %v6890
        %v6913 = vadd.f32 %v6768, %v6895
        %v6914 = vadd.f32 %v6768, %v6900
        %v6915 = vadd.f32 %v6768, %v6905
        %s6916 = scalar_lea.vmem %s8, 64
        %v6917 = vld [vmem:[%s6916] sm:$0xff]
        %v6918 = vld [vmem:[%s6916 + $0x8] sm:$0xff]
        %v6919 = vld [vmem:[%s6916 + $0x10] sm:$0xff]
        %v6920 = vld [vmem:[%s6916 + $0x18] sm:$0xff]
        %v6921 = vld [vmem:[%s6916 + $0x20] sm:$0xff]
        %v6922 = vld [vmem:[%s6916 + $0x28] sm:$0xff]
        %v6923 = vld [vmem:[%s6916 + $0x30] sm:$0xff]
        %v6924 = vld [vmem:[%s6916 + $0x38] sm:$0xff]
        %6929 = vrot.lane.b32.xlu0 %v6741, 64
        %v6930 = vpop.permute.xlu0 %6929
        %6931 = vrot.lane.b32.xlu0 %v6747, 64
        %v6932 = vpop.permute.xlu0 %6931
        %6933 = vrot.lane.b32.xlu0 %v6753, 64
        %v6934 = vpop.permute.xlu0 %6933
        %6935 = vrot.lane.b32.xlu0 %v6759, 64
        %v6936 = vpop.permute.xlu0 %6935
        %v6942 = vsel %vm6778, %v6917, 0
        %v6945 = vsel %vm6778, %v6918, 0
        %v6948 = vsel %vm6778, %v6919, 0
        %v6951 = vsel %vm6778, %v6920, 0
        %v6954 = vsel %vm6778, %v6921, 0
        %v6957 = vsel %vm6778, %v6922, 0
        %v6960 = vsel %vm6778, %v6923, 0
        %v6963 = vsel %vm6778, %v6924, 0
        %6965 = vmatprep.subr.mxu0 0.0
        %6966 = vmatpush1.msra.mxu0 0.0
        %6967 = vmatprep.subr.mxu0 0.0
        %6968 = vmatpush1.msra.mxu0 0.0
        %6969 = vmatprep.subr.mxu0 0.0
        %6970 = vmatpush1.msra.mxu0 0.0
        %6971 = vmatprep.subr.mxu0 0.0
        %6972 = vmatpush1.msra.mxu0 0.0
        %6973 = vmatprep.subr.mxu0 0.0
        %6974 = vmatpush1.msra.mxu0 0.0
        %6975 = vmatprep.subr.mxu0 0.0
        %6976 = vmatpush1.msra.mxu0 0.0
        %6977 = vmatprep.subr.mxu0 0.0
        %6978 = vmatpush1.msra.mxu0 0.0
        %6979 = vmatprep.subr.mxu0 0.0
        %6980 = vmatpush1.msra.mxu0 0.0
        %6981 = vmatprep.subr.mxu0 0.0
        %6982 = vmatpush1.msra.mxu0 0.0
        %6983 = vmatprep.subr.mxu0 0.0
        %6984 = vmatpush1.msra.mxu0 0.0
        %6985 = vmatprep.subr.mxu0 0.0
        %6986 = vmatpush1.msra.mxu0 0.0
        %6987 = vmatprep.subr.mxu0 0.0
        %6988 = vmatpush1.msra.mxu0 0.0
        %6989 = vmatprep.subr.mxu0 0.0
        %6990 = vmatpush1.msra.mxu0 %v6936
        %6991 = vmatprep.subr.mxu0 0.0
        %6992 = vmatpush1.msra.mxu0 %v6934
        %6993 = vmatprep.subr.mxu0 0.0
        %6994 = vmatpush1.msra.mxu0 %v6932
        %6995 = vmatprep.subr.mxu0 0.0
        %6996 = vmatpush1.msra.mxu0 %v6930
        %6997 = vmatprep.subr.mxu0 0.0
        %6998 = vmatpush2.msra.mxu0 0.0
        %6999 = vmatprep.subr.mxu0 0.0
        %7000 = vmatpush2.msra.mxu0 0.0
        %7001 = vmatprep.subr.mxu0 0.0
        %7002 = vmatpush2.msra.mxu0 0.0
        %7003 = vmatprep.subr.mxu0 0.0
        %7004 = vmatpush2.msra.mxu0 0.0
        %7005 = vmatprep.subr.mxu0 0.0
        %7006 = vmatpush2.msra.mxu0 0.0
        %7007 = vmatprep.subr.mxu0 0.0
        %7008 = vmatpush2.msra.mxu0 0.0
        %7009 = vmatprep.subr.mxu0 0.0
        %7010 = vmatpush2.msra.mxu0 0.0
        %7011 = vmatprep.subr.mxu0 0.0
        %7012 = vmatpush2.msra.mxu0 0.0
        %7013 = vmatprep.subr.mxu0 0.0
        %7014 = vmatpush2.msra.mxu0 0.0
        %7015 = vmatprep.subr.mxu0 0.0
        %7016 = vmatpush2.msra.mxu0 0.0
        %7017 = vmatprep.subr.mxu0 0.0
        %7018 = vmatpush2.msra.mxu0 0.0
        %7019 = vmatprep.subr.mxu0 0.0
        %7020 = vmatpush2.msra.mxu0 0.0
        %7021 = vmatprep.subr.mxu0 0.0
        %7022 = vmatpush2.msra.mxu0 0.0
        %7023 = vmatprep.subr.mxu0 0.0
        %7024 = vmatpush2.msra.mxu0 0.0
        %7025 = vmatprep.subr.mxu0 0.0
        %7026 = vmatpush2.msra.mxu0 0.0
        %7027 = vmatprep.subr.mxu0 0.0
        %7028 = vmatpush2.msra.mxu0 0.0
        %7029 = vmatprep.mubr.f32.mxu0 0.0
        %7030 = vmatmul.mubr.f32.gmra.mxu0 %v6942
        %v7031 = vpop.f32.mrf.mxu0
        %v7032 = vadd.f32 0.0, %v7031
        %v7033 = vpop.f32.mrf.mxu0
        %7034 = vmatprep.mubr.f32.mxu0 0.0
        %7035 = vmatmul.mubr.f32.gmra.mxu0 %v6945
        %v7036 = vpop.f32.mrf.mxu0
        %v7037 = vadd.f32 0.0, %v7036
        %v7038 = vpop.f32.mrf.mxu0
        %7039 = vmatprep.mubr.f32.mxu0 0.0
        %7040 = vmatmul.mubr.f32.gmra.mxu0 %v6948
        %v7041 = vpop.f32.mrf.mxu0
        %v7042 = vadd.f32 0.0, %v7041
        %v7043 = vpop.f32.mrf.mxu0
        %7044 = vmatprep.mubr.f32.mxu0 0.0
        %7045 = vmatmul.mubr.f32.gmra.mxu0 %v6951
        %v7046 = vpop.f32.mrf.mxu0
        %v7047 = vadd.f32 0.0, %v7046
        %v7048 = vpop.f32.mrf.mxu0
        %7049 = vmatprep.mubr.f32.mxu0 0.0
        %7050 = vmatmul.mubr.f32.gmra.mxu0 %v6954
        %v7051 = vpop.f32.mrf.mxu0
        %v7052 = vadd.f32 0.0, %v7051
        %v7053 = vpop.f32.mrf.mxu0
        %7054 = vmatprep.mubr.f32.mxu0 0.0
        %7055 = vmatmul.mubr.f32.gmra.mxu0 %v6957
        %v7056 = vpop.f32.mrf.mxu0
        %v7057 = vadd.f32 0.0, %v7056
        %v7058 = vpop.f32.mrf.mxu0
        %7059 = vmatprep.mubr.f32.mxu0 0.0
        %7060 = vmatmul.mubr.f32.gmra.mxu0 %v6960
        %v7061 = vpop.f32.mrf.mxu0
        %v7062 = vadd.f32 0.0, %v7061
        %v7063 = vpop.f32.mrf.mxu0
        %7064 = vmatprep.mubr.f32.mxu0 0.0
        %7065 = vmatmul.mubr.f32.gmra.mxu0 %v6963
        %v7066 = vpop.f32.mrf.mxu0
        %v7067 = vadd.f32 0.0, %v7066
        %v7068 = vpop.f32.mrf.mxu0
        %7069 = vdwg.mxu0
        %v7070 = vadd.f32 %v6908, %v7032
        %v7071 = vadd.f32 %v6909, %v7037
        %v7072 = vadd.f32 %v6910, %v7042
        %v7073 = vadd.f32 %v6911, %v7047
        %v7074 = vadd.f32 %v6912, %v7052
        %v7075 = vadd.f32 %v6913, %v7057
        %v7076 = vadd.f32 %v6914, %v7062
        %v7077 = vadd.f32 %v6915, %v7067
        %s7078 = scalar_lea.vmem %s8, 128
        %v7079 = vld [vmem:[%s7078] sm:$0xff]
        %v7080 = vld [vmem:[%s7078 + $0x8] sm:$0xff]
        %v7081 = vld [vmem:[%s7078 + $0x10] sm:$0xff]
        %v7082 = vld [vmem:[%s7078 + $0x18] sm:$0xff]
        %v7083 = vld [vmem:[%s7078 + $0x20] sm:$0xff]
        %v7084 = vld [vmem:[%s7078 + $0x28] sm:$0xff]
        %v7085 = vld [vmem:[%s7078 + $0x30] sm:$0xff]
        %v7086 = vld [vmem:[%s7078 + $0x38] sm:$0xff]
        %v7088 = vsel %vm6778, %v7079, 0
        %v7091 = vsel %vm6778, %v7080, 0
        %v7094 = vsel %vm6778, %v7081, 0
        %v7097 = vsel %vm6778, %v7082, 0
        %v7100 = vsel %vm6778, %v7083, 0
        %v7103 = vsel %vm6778, %v7084, 0
        %v7106 = vsel %vm6778, %v7085, 0
        %v7109 = vsel %vm6778, %v7086, 0
        %7111 = vmatprep.subr.mxu0 0.0
        %7112 = vmatpush1.msra.mxu0 0.0
        %7113 = vmatprep.subr.mxu0 0.0
        %7114 = vmatpush1.msra.mxu0 0.0
        %7115 = vmatprep.subr.mxu0 0.0
        %7116 = vmatpush1.msra.mxu0 0.0
        %7117 = vmatprep.subr.mxu0 0.0
        %7118 = vmatpush1.msra.mxu0 0.0
        %7119 = vmatprep.subr.mxu0 0.0
        %7120 = vmatpush1.msra.mxu0 0.0
        %7121 = vmatprep.subr.mxu0 0.0
        %7122 = vmatpush1.msra.mxu0 0.0
        %7123 = vmatprep.subr.mxu0 0.0
        %7124 = vmatpush1.msra.mxu0 0.0
        %7125 = vmatprep.subr.mxu0 0.0
        %7126 = vmatpush1.msra.mxu0 0.0
        %7127 = vmatprep.subr.mxu0 0.0
        %7128 = vmatpush1.msra.mxu0 0.0
        %7129 = vmatprep.subr.mxu0 0.0
        %7130 = vmatpush1.msra.mxu0 0.0
        %7131 = vmatprep.subr.mxu0 0.0
        %7132 = vmatpush1.msra.mxu0 0.0
        %7133 = vmatprep.subr.mxu0 0.0
        %7134 = vmatpush1.msra.mxu0 0.0
        %7135 = vmatprep.subr.mxu0 0.0
        %7136 = vmatpush1.msra.mxu0 %v6761
        %7137 = vmatprep.subr.mxu0 0.0
        %7138 = vmatpush1.msra.mxu0 %v6755
        %7139 = vmatprep.subr.mxu0 0.0
        %7140 = vmatpush1.msra.mxu0 %v6749
        %7141 = vmatprep.subr.mxu0 0.0
        %7142 = vmatpush1.msra.mxu0 %v6743
        %7143 = vmatprep.subr.mxu0 0.0
        %7144 = vmatpush2.msra.mxu0 0.0
        %7145 = vmatprep.subr.mxu0 0.0
        %7146 = vmatpush2.msra.mxu0 0.0
        %7147 = vmatprep.subr.mxu0 0.0
        %7148 = vmatpush2.msra.mxu0 0.0
        %7149 = vmatprep.subr.mxu0 0.0
        %7150 = vmatpush2.msra.mxu0 0.0
        %7151 = vmatprep.subr.mxu0 0.0
        %7152 = vmatpush2.msra.mxu0 0.0
        %7153 = vmatprep.subr.mxu0 0.0
        %7154 = vmatpush2.msra.mxu0 0.0
        %7155 = vmatprep.subr.mxu0 0.0
        %7156 = vmatpush2.msra.mxu0 0.0
        %7157 = vmatprep.subr.mxu0 0.0
        %7158 = vmatpush2.msra.mxu0 0.0
        %7159 = vmatprep.subr.mxu0 0.0
        %7160 = vmatpush2.msra.mxu0 0.0
        %7161 = vmatprep.subr.mxu0 0.0
        %7162 = vmatpush2.msra.mxu0 0.0
        %7163 = vmatprep.subr.mxu0 0.0
        %7164 = vmatpush2.msra.mxu0 0.0
        %7165 = vmatprep.subr.mxu0 0.0
        %7166 = vmatpush2.msra.mxu0 0.0
        %7167 = vmatprep.subr.mxu0 0.0
        %7168 = vmatpush2.msra.mxu0 0.0
        %7169 = vmatprep.subr.mxu0 0.0
        %7170 = vmatpush2.msra.mxu0 0.0
        %7171 = vmatprep.subr.mxu0 0.0
        %7172 = vmatpush2.msra.mxu0 0.0
        %7173 = vmatprep.subr.mxu0 0.0
        %7174 = vmatpush2.msra.mxu0 0.0
        %7175 = vmatprep.mubr.f32.mxu0 0.0
        %7176 = vmatmul.mubr.f32.gmra.mxu0 %v7088
        %v7177 = vpop.f32.mrf.mxu0
        %v7178 = vadd.f32 0.0, %v7177
        %v7179 = vpop.f32.mrf.mxu0
        %7180 = vmatprep.mubr.f32.mxu0 0.0
        %7181 = vmatmul.mubr.f32.gmra.mxu0 %v7091
        %v7182 = vpop.f32.mrf.mxu0
        %v7183 = vadd.f32 0.0, %v7182
        %v7184 = vpop.f32.mrf.mxu0
        %7185 = vmatprep.mubr.f32.mxu0 0.0
        %7186 = vmatmul.mubr.f32.gmra.mxu0 %v7094
        %v7187 = vpop.f32.mrf.mxu0
        %v7188 = vadd.f32 0.0, %v7187
        %v7189 = vpop.f32.mrf.mxu0
        %7190 = vmatprep.mubr.f32.mxu0 0.0
        %7191 = vmatmul.mubr.f32.gmra.mxu0 %v7097
        %v7192 = vpop.f32.mrf.mxu0
        %v7193 = vadd.f32 0.0, %v7192
        %v7194 = vpop.f32.mrf.mxu0
        %7195 = vmatprep.mubr.f32.mxu0 0.0
        %7196 = vmatmul.mubr.f32.gmra.mxu0 %v7100
        %v7197 = vpop.f32.mrf.mxu0
        %v7198 = vadd.f32 0.0, %v7197
        %v7199 = vpop.f32.mrf.mxu0
        %7200 = vmatprep.mubr.f32.mxu0 0.0
        %7201 = vmatmul.mubr.f32.gmra.mxu0 %v7103
        %v7202 = vpop.f32.mrf.mxu0
        %v7203 = vadd.f32 0.0, %v7202
        %v7204 = vpop.f32.mrf.mxu0
        %7205 = vmatprep.mubr.f32.mxu0 0.0
        %7206 = vmatmul.mubr.f32.gmra.mxu0 %v7106
        %v7207 = vpop.f32.mrf.mxu0
        %v7208 = vadd.f32 0.0, %v7207
        %v7209 = vpop.f32.mrf.mxu0
        %7210 = vmatprep.mubr.f32.mxu0 0.0
        %7211 = vmatmul.mubr.f32.gmra.mxu0 %v7109
        %v7212 = vpop.f32.mrf.mxu0
        %v7213 = vadd.f32 0.0, %v7212
        %v7214 = vpop.f32.mrf.mxu0
        %7215 = vdwg.mxu0
        %v7216 = vadd.f32 %v7070, %v7178
        %v7217 = vadd.f32 %v7071, %v7183
        %v7218 = vadd.f32 %v7072, %v7188
        %v7219 = vadd.f32 %v7073, %v7193
        %v7220 = vadd.f32 %v7074, %v7198
        %v7221 = vadd.f32 %v7075, %v7203
        %v7222 = vadd.f32 %v7076, %v7208
        %v7223 = vadd.f32 %v7077, %v7213
        %s7224 = scalar_lea.vmem %s8, 192
        %v7225 = vld [vmem:[%s7224] sm:$0xff]
        %v7226 = vld [vmem:[%s7224 + $0x8] sm:$0xff]
        %v7227 = vld [vmem:[%s7224 + $0x10] sm:$0xff]
        %v7228 = vld [vmem:[%s7224 + $0x18] sm:$0xff]
        %v7229 = vld [vmem:[%s7224 + $0x20] sm:$0xff]
        %v7230 = vld [vmem:[%s7224 + $0x28] sm:$0xff]
        %v7231 = vld [vmem:[%s7224 + $0x30] sm:$0xff]
        %v7232 = vld [vmem:[%s7224 + $0x38] sm:$0xff]
        %7237 = vrot.lane.b32.xlu0 %v6743, 64
        %v7238 = vpop.permute.xlu0 %7237
        %7239 = vrot.lane.b32.xlu0 %v6749, 64
        %v7240 = vpop.permute.xlu0 %7239
        %7241 = vrot.lane.b32.xlu0 %v6755, 64
        %v7242 = vpop.permute.xlu0 %7241
        %7243 = vrot.lane.b32.xlu0 %v6761, 64
        %v7244 = vpop.permute.xlu0 %7243
        %v7250 = vsel %vm6778, %v7225, 0
        %v7253 = vsel %vm6778, %v7226, 0
        %v7256 = vsel %vm6778, %v7227, 0
        %v7259 = vsel %vm6778, %v7228, 0
        %v7262 = vsel %vm6778, %v7229, 0
        %v7265 = vsel %vm6778, %v7230, 0
        %v7268 = vsel %vm6778, %v7231, 0
        %v7271 = vsel %vm6778, %v7232, 0
        %7273 = vmatprep.subr.mxu0 0.0
        %7274 = vmatpush1.msra.mxu0 0.0
        %7275 = vmatprep.subr.mxu0 0.0
        %7276 = vmatpush1.msra.mxu0 0.0
        %7277 = vmatprep.subr.mxu0 0.0
        %7278 = vmatpush1.msra.mxu0 0.0
        %7279 = vmatprep.subr.mxu0 0.0
        %7280 = vmatpush1.msra.mxu0 0.0
        %7281 = vmatprep.subr.mxu0 0.0
        %7282 = vmatpush1.msra.mxu0 0.0
        %7283 = vmatprep.subr.mxu0 0.0
        %7284 = vmatpush1.msra.mxu0 0.0
        %7285 = vmatprep.subr.mxu0 0.0
        %7286 = vmatpush1.msra.mxu0 0.0
        %7287 = vmatprep.subr.mxu0 0.0
        %7288 = vmatpush1.msra.mxu0 0.0
        %7289 = vmatprep.subr.mxu0 0.0
        %7290 = vmatpush1.msra.mxu0 0.0
        %7291 = vmatprep.subr.mxu0 0.0
        %7292 = vmatpush1.msra.mxu0 0.0
        %7293 = vmatprep.subr.mxu0 0.0
        %7294 = vmatpush1.msra.mxu0 0.0
        %7295 = vmatprep.subr.mxu0 0.0
        %7296 = vmatpush1.msra.mxu0 0.0
        %7297 = vmatprep.subr.mxu0 0.0
        %7298 = vmatpush1.msra.mxu0 %v7244
        %7299 = vmatprep.subr.mxu0 0.0
        %7300 = vmatpush1.msra.mxu0 %v7242
        %7301 = vmatprep.subr.mxu0 0.0
        %7302 = vmatpush1.msra.mxu0 %v7240
        %7303 = vmatprep.subr.mxu0 0.0
        %7304 = vmatpush1.msra.mxu0 %v7238
        %7305 = vmatprep.subr.mxu0 0.0
        %7306 = vmatpush2.msra.mxu0 0.0
        %7307 = vmatprep.subr.mxu0 0.0
        %7308 = vmatpush2.msra.mxu0 0.0
        %7309 = vmatprep.subr.mxu0 0.0
        %7310 = vmatpush2.msra.mxu0 0.0
        %7311 = vmatprep.subr.mxu0 0.0
        %7312 = vmatpush2.msra.mxu0 0.0
        %7313 = vmatprep.subr.mxu0 0.0
        %7314 = vmatpush2.msra.mxu0 0.0
        %7315 = vmatprep.subr.mxu0 0.0
        %7316 = vmatpush2.msra.mxu0 0.0
        %7317 = vmatprep.subr.mxu0 0.0
        %7318 = vmatpush2.msra.mxu0 0.0
        %7319 = vmatprep.subr.mxu0 0.0
        %7320 = vmatpush2.msra.mxu0 0.0
        %7321 = vmatprep.subr.mxu0 0.0
        %7322 = vmatpush2.msra.mxu0 0.0
        %7323 = vmatprep.subr.mxu0 0.0
        %7324 = vmatpush2.msra.mxu0 0.0
        %7325 = vmatprep.subr.mxu0 0.0
        %7326 = vmatpush2.msra.mxu0 0.0
        %7327 = vmatprep.subr.mxu0 0.0
        %7328 = vmatpush2.msra.mxu0 0.0
        %7329 = vmatprep.subr.mxu0 0.0
        %7330 = vmatpush2.msra.mxu0 0.0
        %7331 = vmatprep.subr.mxu0 0.0
        %7332 = vmatpush2.msra.mxu0 0.0
        %7333 = vmatprep.subr.mxu0 0.0
        %7334 = vmatpush2.msra.mxu0 0.0
        %7335 = vmatprep.subr.mxu0 0.0
        %7336 = vmatpush2.msra.mxu0 0.0
        %7337 = vmatprep.mubr.f32.mxu0 0.0
        %7338 = vmatmul.mubr.f32.gmra.mxu0 %v7250
        %v7339 = vpop.f32.mrf.mxu0
        %v7340 = vadd.f32 0.0, %v7339
        %v7341 = vpop.f32.mrf.mxu0
        %7342 = vmatprep.mubr.f32.mxu0 0.0
        %7343 = vmatmul.mubr.f32.gmra.mxu0 %v7253
        %v7344 = vpop.f32.mrf.mxu0
        %v7345 = vadd.f32 0.0, %v7344
        %v7346 = vpop.f32.mrf.mxu0
        %7347 = vmatprep.mubr.f32.mxu0 0.0
        %7348 = vmatmul.mubr.f32.gmra.mxu0 %v7256
        %v7349 = vpop.f32.mrf.mxu0
        %v7350 = vadd.f32 0.0, %v7349
        %v7351 = vpop.f32.mrf.mxu0
        %7352 = vmatprep.mubr.f32.mxu0 0.0
        %7353 = vmatmul.mubr.f32.gmra.mxu0 %v7259
        %v7354 = vpop.f32.mrf.mxu0
        %v7355 = vadd.f32 0.0, %v7354
        %v7356 = vpop.f32.mrf.mxu0
        %7357 = vmatprep.mubr.f32.mxu0 0.0
        %7358 = vmatmul.mubr.f32.gmra.mxu0 %v7262
        %v7359 = vpop.f32.mrf.mxu0
        %v7360 = vadd.f32 0.0, %v7359
        %v7361 = vpop.f32.mrf.mxu0
        %7362 = vmatprep.mubr.f32.mxu0 0.0
        %7363 = vmatmul.mubr.f32.gmra.mxu0 %v7265
        %v7364 = vpop.f32.mrf.mxu0
        %v7365 = vadd.f32 0.0, %v7364
        %v7366 = vpop.f32.mrf.mxu0
        %7367 = vmatprep.mubr.f32.mxu0 0.0
        %7368 = vmatmul.mubr.f32.gmra.mxu0 %v7268
        %v7369 = vpop.f32.mrf.mxu0
        %v7370 = vadd.f32 0.0, %v7369
        %v7371 = vpop.f32.mrf.mxu0
        %7372 = vmatprep.mubr.f32.mxu0 0.0
        %7373 = vmatmul.mubr.f32.gmra.mxu0 %v7271
        %v7374 = vpop.f32.mrf.mxu0
        %v7375 = vadd.f32 0.0, %v7374
        %v7376 = vpop.f32.mrf.mxu0
        %7377 = vdwg.mxu0
        %v7378 = vadd.f32 %v7216, %v7340
        %v7379 = vadd.f32 %v7217, %v7345
        %v7380 = vadd.f32 %v7218, %v7350
        %v7381 = vadd.f32 %v7219, %v7355
        %v7382 = vadd.f32 %v7220, %v7360
        %v7383 = vadd.f32 %v7221, %v7365
        %v7384 = vadd.f32 %v7222, %v7370
        %v7385 = vadd.f32 %v7223, %v7375
        %v7386 = vsub.f32 0.0, %v7378
        %v7387 = vsub.f32 0.0, %v7379
        %v7388 = vsub.f32 0.0, %v7380
        %v7389 = vsub.f32 0.0, %v7381
        %v7390 = vsub.f32 0.0, %v7382
        %v7391 = vsub.f32 0.0, %v7383
        %v7392 = vsub.f32 0.0, %v7384
        %v7393 = vsub.f32 0.0, %v7385
        %v7394 = vmul.f32 %v7386, 1.442695
        %v7395 = vpow.pop %v7394
        %v7396 = vmul.f32 %v7387, 1.442695
        %v7397 = vpow.pop %v7396
        %v7398 = vmul.f32 %v7388, 1.442695
        %v7399 = vpow.pop %v7398
        %v7400 = vmul.f32 %v7389, 1.442695
        %v7401 = vpow.pop %v7400
        %v7402 = vmul.f32 %v7390, 1.442695
        %v7403 = vpow.pop %v7402
        %v7404 = vmul.f32 %v7391, 1.442695
        %v7405 = vpow.pop %v7404
        %v7406 = vmul.f32 %v7392, 1.442695
        %v7407 = vpow.pop %v7406
        %v7408 = vmul.f32 %v7393, 1.442695
        %v7409 = vpow.pop %v7408
        %v7410 = vadd.f32 %v7395, 1.0
        %v7411 = vadd.f32 %v7397, 1.0
        %v7412 = vadd.f32 %v7399, 1.0
        %v7413 = vadd.f32 %v7401, 1.0
        %v7414 = vadd.f32 %v7403, 1.0
        %v7415 = vadd.f32 %v7405, 1.0
        %v7416 = vadd.f32 %v7407, 1.0
        %v7417 = vadd.f32 %v7409, 1.0
        %v7418 = vrcp.pop %v7410
        %v7419 = vmul.f32 1.0, %v7418
        %v7420 = vrcp.pop %v7411
        %v7421 = vmul.f32 1.0, %v7420
        %v7422 = vrcp.pop %v7412
        %v7423 = vmul.f32 1.0, %v7422
        %v7424 = vrcp.pop %v7413
        %v7425 = vmul.f32 1.0, %v7424
        %v7426 = vrcp.pop %v7414
        %v7427 = vmul.f32 1.0, %v7426
        %v7428 = vrcp.pop %v7415
        %v7429 = vmul.f32 1.0, %v7428
        %v7430 = vrcp.pop %v7416
        %v7431 = vmul.f32 1.0, %v7430
        %v7432 = vrcp.pop %v7417
        %v7433 = vmul.f32 1.0, %v7432
        %vm7434 = vcmask 523264
        %7435 = vst.msk [vmem:[%s434] sm:$0xff] %vm7434, %v7419
        %7436 = vst.msk [vmem:[%s434 + $0x8] sm:$0xff] %vm7434, %v7421
        %7437 = vst.msk [vmem:[%s434 + $0x10] sm:$0xff] %vm7434, %v7423
        %7438 = vst.msk [vmem:[%s434 + $0x18] sm:$0xff] %vm7434, %v7425
        %7439 = vst.msk [vmem:[%s434 + $0x20] sm:$0xff] %vm7434, %v7427
        %7440 = vst.msk [vmem:[%s434 + $0x28] sm:$0xff] %vm7434, %v7429
        %7441 = vst.msk [vmem:[%s434 + $0x30] sm:$0xff] %vm7434, %v7431
        %7442 = vst.msk [vmem:[%s434 + $0x38] sm:$0xff] %vm7434, %v7433
        %s7443 = sand.u32 %s251, 1
        %s7444 = scalar_lea.sflag [#allocation4], %s7443
        %s7445 = sand.u32 %s251, 1
        %s7446 = smul.addr %s7445, 64
        %s7447 = scalar_lea.vmem [#allocation13], %s7446
        // Predicated region
        $region85: #{vae_decoder_forward.1} parent=59 // pred_check
          %p7448 = pneg %p261
        $region86: #{vae_decoder_forward.1} parent=59 // pred_check_branch
          %7450 = sbr.rel (%p7448) target = $region88
        $region87: #{vae_decoder_forward.1} parent=59 // pred_region
          %s7451 = smul.u32 8, %s28
          %s7453 = ssub.s32 1024, 1024
          %7454 = vsyncadd %s7444, %s7453
          %s7455 = smul.addr %s7451, 128
          %s7456 = scalar_lea.hbm %s10, %s7455
          %s7457 = sshll.u32 %s7447, 4
          %s7458 = int_to_ptr.vmem [resolvable:$true] %s7457
          %7463 = dma.vmem_to_hbm [thread:$0]  %s7458, 1024, %s7456, %s7444, 128, 128, 8
        $region88: #{vae_decoder_forward.1} parent=59 // pred_fallthru
          _
      $region60: #{vae_decoder_forward.1} parent=5 // pred_fallthru
        _
      %p7464 = scmp.le.s32.totalorder 2, %s23
      // Predicated region
      $region89: #{vae_decoder_forward.1} parent=5 // pred_check
        %p7465 = pneg %p7464
      $region90: #{vae_decoder_forward.1} parent=5 // pred_check_branch
        %7467 = sbr.rel (%p7465) target = $region92
      $region91: #{vae_decoder_forward.1} parent=5 // pred_region
        %s7468 = ssub.s32 %s23, 2
        // Predicated region
        $region93: #{vae_decoder_forward.1} parent=91 // pred_check
          %p7469 = pneg %p267
        $region94: #{vae_decoder_forward.1} parent=91 // pred_check_branch
          %7471 = sbr.rel (%p7469) target = $region96
        $region95: #{vae_decoder_forward.1} parent=91 // pred_region
          %s7472 = sand.u32 %s252, 1
          %s7473 = scalar_lea.sflag [#allocation4], %s7472
          %s7474 = sand.u32 %s252, 1
          %s7475 = smul.addr %s7474, 64
          %s7476 = scalar_lea.vmem [#allocation13], %s7475
          %7477 = dma.done %s7473, 1024
        $region96: #{vae_decoder_forward.1} parent=91 // pred_fallthru
          _
      $region92: #{vae_decoder_forward.1} parent=5 // pred_fallthru
        _
    $region6: #{vae_decoder_forward.1} parent=1 // loop_footer
      %s27 = sadd.s32 1, %s23
    $region7: #{vae_decoder_forward.1} parent=1 // loop_footer_branch
      %22 = sbr.rel target = $region3
    $region8: #{vae_decoder_forward.1} parent=1 // loop_exit
      _
    %7478 = vsyncpa [#allocation3], 1
    %s7479 = scalar_lea.sflag [#allocation3], 1
    %7480 = vsyncpa %s7479, 1
    %7481 = vsyncpa [#allocation6], 1
    %7482 = vsyncpa [#allocation9], 1
    %7483 = vsyncpa [#allocation12], 1
    %7484 = vsyncpa [#allocation4], 1
    %s7485 = scalar_lea.sflag [#allocation4], 1
    %7486 = vsyncpa %s7485, 1

</llo_original>
